<compile_context>
chip_gen: v5e
topology: v5e:2x2
jax: 0.10.0
libtpu: 0.0.40
codegen_flags: <defaults>
</compile_context>

<pallas_src>
import functools

import jax
import jax.numpy as jnp
import numpy as np
from jax.experimental import pallas as pl
from jax.experimental.pallas import tpu as pltpu

ENC_CH = (3, 8, 8, 16, 16, 32)   # synthetic stand-in for encoder.out_channels
_BF16 = jnp.bfloat16


# ----------------------------------------------------------------------------
# In-kernel helpers (operate on (C, S = H*W) values, spatial on lanes)
# ----------------------------------------------------------------------------

def _shift_flat(x, off):
    """y[:, p] = x[:, p + off], zero-filled outside [0, S).

    NOTE: pltpu.roll(x, (-off) % S, axis=1) is the XLU-slot alternative; the
    static slice+concat form is used because the out-of-range lanes are masked
    by the caller anyway and its semantics/lowering are fully pinned.
    """
    C, S = x.shape
    if off == 0:
        return x
    if off > 0:
        return jnp.concatenate([x[:, off:], jnp.zeros((C, off), x.dtype)], axis=1)
    return jnp.concatenate([jnp.zeros((C, -off), x.dtype), x[:, :S + off]], axis=1)


def _row_col_iota(S, Ws):
    """Per-lane (row, col) indices of the flat spatial axis."""
    lane = jax.lax.broadcasted_iota(jnp.int32, (1, S), 1)
    if Ws & (Ws - 1) == 0:                       # power of two (usual case)
        row = jnp.right_shift(lane, Ws.bit_length() - 1)
        col = jnp.bitwise_and(lane, Ws - 1)
    else:                                        # safe general fallback
        row = jnp.floor((lane.astype(jnp.float32) + 0.5) * (1.0 / Ws)).astype(jnp.int32)
        col = lane - row * Ws
    return row, col


def _conv_patch(x, Hs, Ws, offsets):
    """im2col patch (T*C, S) in bf16 for a conv on a (C, S=Hs*Ws) f32 map."""
    xb = x.astype(_BF16)                         # cast once, BEFORE tap extraction
    C, S = xb.shape
    row, col = _row_col_iota(S, Ws)
    taps = []
    for dh, dw in offsets:
        t = _shift_flat(xb, dh * Ws + dw)
        conds = []
        if dh > 0:
            conds.append(row < Hs - dh)
        elif dh < 0:
            conds.append(row >= -dh)
        if dw > 0:
            conds.append(col < Ws - dw)
        elif dw < 0:
            conds.append(col >= -dw)
        if conds:
            m = conds[0]
            for cnd in conds[1:]:
                m = jnp.logical_and(m, cnd)
            t = jnp.where(m, t, jnp.zeros_like(t))
        taps.append(t)
    return jnp.concatenate(taps, axis=0)         # (T*C, S), tap-major rows


# ----------------------------------------------------------------------------
# The single fused kernel (whole network, one grid step per sample)
# ----------------------------------------------------------------------------

def _medlightnet_kernel(meta, x2_ref, x3_ref, x4_ref, x5_ref,
                        w_ref, b_ref, p1_ref, p2_ref, p3_ref, bres_ref, out_ref):
    wplan, bplan = meta['wplan'], meta['bplan']

    def weight(name):                             # bf16 slice of the packed blob
        r, off, c = wplan[name]
        return w_ref[0:r, off:off + c]

    def bias(name):                               # (n, 1) f32 column
        n, idx = bplan[name]
        return b_ref[0:n, idx:idx + 1]

    def mm(a, b):                                 # MXU: bf16 operands, f32 acc
        return jnp.dot(a, b, preferred_element_type=jnp.float32)

    def relu(v):
        return jnp.maximum(v, 0.0)

    # ---- synthetic encoder: per-level patchify matmuls --------------------
    # TODO(synk): stand-in for the pretrained timm-efficientnet-b5 encoder.
    f2 = relu(mm(weight('enc2_w'), x2_ref[0]) + bias('enc2_b'))   # (8,  H/4*W/4)
    f3 = relu(mm(weight('enc3_w'), x3_ref[0]) + bias('enc3_b'))   # (16, H/8*W/8)
    f4 = relu(mm(weight('enc4_w'), x4_ref[0]) + bias('enc4_b'))   # (16, H/16*W/16)
    f5 = relu(mm(weight('enc5_w'), x5_ref[0]) + bias('enc5_b'))   # (32, H/32*W/32)

    # ---- BoundaryRefinementAndEnhancementModule ----------------------------
    # The three dilated 3x3 convs are ONE matmul over all surviving taps.
    Hb, Wb = meta['bneck']
    patch = _conv_patch(f5, Hb, Wb, meta['brem_offs'])
    edges = mm(weight('brem_w'), patch) + bias('brem_b')          # b1+b2+b3 folded
    g = relu(mm(weight('gf1_w'), edges.astype(_BF16)) + bias('gf1_b'))
    refined = mm(weight('gf2_w'), g.astype(_BF16)) + bias('gf2_b')
    h = f5 + refined                             # dropout == identity (inference)

    # ---- LightweightChannelAttentiveDecoder --------------------------------
    skips = {1: f4, 2: f3, 3: f2}
    perms = {1: p1_ref, 2: p2_ref, 3: p3_ref}
    for i in (1, 2, 3):
        h_bf = h.astype(_BF16)
        a = relu(mm(weight(f'att{i}_w1'), h_bf) + bias(f'att{i}_b1'))
        s = jax.nn.sigmoid(mm(weight(f'att{i}_w2'), a.astype(_BF16)) + bias(f'att{i}_b2'))
        h = h * s
        # ConvTranspose2d(k=2, s=2): one matmul for the 4 taps, then one matmul
        # against a constant 0/1 permutation that interleaves into the flat
        # 2x-upsampled map (no activation reshapes / transposes).
        t = mm(weight(f'up{i}_w'), h.astype(_BF16))               # (4*Co, S)
        co = t.shape[0] // 4
        tcat = jnp.concatenate([t[k * co:(k + 1) * co, :] for k in range(4)], axis=1)
        up = mm(tcat.astype(_BF16), perms[i][...]) + bias(f'up{i}_b')   # (Co, 4S)
        # F.interpolate(..., size=skip) is an exact identity here: the 2x upconv
        # lands exactly on the skip resolution for inputs divisible by 32.
        h = up + skips[i]
        Hs, Ws = meta['conv_dims'][i]
        patch = _conv_patch(h, Hs, Ws, meta['dec_offs'][i])
        h = mm(weight(f'dec{i}_w'), patch) + bias(f'dec{i}_b')    # dropout == id

    # ---- final 1x1 conv fused with the 4x bilinear upsample ----------------
    # Bias commutes with the resize because each interpolation row sums to 1.
    v = mm(weight('final_w'), h.astype(_BF16)) + bias('final_b')  # (1, H/4*W/4)
    out_ref[0] = mm(v.astype(_BF16), bres_ref[...])               # (1, H*W)


# ----------------------------------------------------------------------------
# Parameters (deterministic, in-script, PyTorch-like layer shapes)
# ----------------------------------------------------------------------------

def init_params(seed=0):
    keys = iter(jax.random.split(jax.random.PRNGKey(seed), 48))

    def w(shape, fan_in):
        return jax.random.normal(next(keys), shape, jnp.float32) / np.sqrt(fan_in)

    def b(n):
        return 0.01 * jax.random.normal(next(keys), (n,), jnp.float32)

    p = {}
    # synthetic encoder: per-level patchify conv (kernel = stride = 2^level),
    # weight columns ordered as (c, fh, fw) == conv_weight.reshape(Cout, -1)
    for lvl in (2, 3, 4, 5):
        f = 2 ** lvl
        k = ENC_CH[0] * f * f
        p[f'enc{lvl}_w'] = w((ENC_CH[lvl], k), k)
        p[f'enc{lvl}_b'] = b(ENC_CH[lvl])
    c = ENC_CH[-1]
    for d in (1, 2, 3):
        p[f'brem_w{d}'] = w((c, c, 3, 3), 9 * c)
        p[f'brem_b{d}'] = b(c)
    p['gf1_w'] = w((c // 2, c), c);       p['gf1_b'] = b(c // 2)
    p['gf2_w'] = w((c, c // 2), c // 2);  p['gf2_b'] = b(c)
    stages = ((ENC_CH[5], ENC_CH[4]), (ENC_CH[4], ENC_CH[3]), (ENC_CH[3], ENC_CH[2]))
    for i, (ci, co) in enumerate(stages, start=1):
        p[f'att{i}_w1'] = w((ci // 4, ci), ci);       p[f'att{i}_b1'] = b(ci // 4)
        p[f'att{i}_w2'] = w((ci, ci // 4), ci // 4);  p[f'att{i}_b2'] = b(ci)
        p[f'up{i}_w'] = w((ci, co, 2, 2), ci);        p[f'up{i}_b'] = b(co)
        p[f'dec{i}_w'] = w((co, co, 3, 3), 9 * co);   p[f'dec{i}_b'] = b(co)
    p['final_w'] = w((1, ENC_CH[2]), ENC_CH[2]);      p['final_b'] = b(1)
    return p


# ----------------------------------------------------------------------------
# Host-side constant builders
# ----------------------------------------------------------------------------

def _resize_matrix(out_size, in_size):
    """Bilinear row-interp matrix matching F.interpolate(align_corners=False)."""
    o = np.arange(out_size)
    src = np.clip((o + 0.5) * (in_size / out_size) - 0.5, 0.0, in_size - 1)
    i0 = np.floor(src).astype(np.int64)
    i1 = np.minimum(i0 + 1, in_size - 1)
    frac = src - i0
    m = np.zeros((out_size, in_size), np.float64)
    np.add.at(m, (o, i0), 1.0 - frac)
    np.add.at(m, (o, i1), frac)
    return m


def _interleave_perm(hc, wc):
    """0/1 matrix P so that Tcat(Co, 4S) @ P is the k=2,s=2 transposed-conv
    interleave of the 4 tap planes into the flat (2hc, 2wc) map."""
    s = hc * wc
    q = np.arange(4 * s)
    ab, p = q // s, q % s
    a, b = ab // 2, ab % 2
    i, j = p // wc, p % wc
    dst = (2 * i + a) * (2 * wc) + (2 * j + b)
    m = np.zeros((4 * s, 4 * s), np.float32)
    m[q, dst] = 1.0
    return m


def _surviving_taps(hs, ws, dil):
    """3x3 taps whose receptive field is not entirely in the zero padding."""
    out = []
    for kh in range(3):
        for kw in range(3):
            dh, dw = (kh - 1) * dil, (kw - 1) * dil
            if abs(dh) >= hs or abs(dw) >= ws:
                continue
            out.append((kh, kw, dh, dw))
    return out


def _space_to_depth(x, f):
    """(N, C, H, W) -> (N, C*f*f, (H/f)*(W/f)) bf16, lane-dense per-level input."""
    n, c, hh, ww = x.shape
    y = x.reshape(n, c, hh // f, f, ww // f, f)
    y = y.transpose(0, 1, 3, 5, 2, 4)
    return y.reshape(n, c * f * f, (hh // f) * (ww // f)).astype(_BF16)


# ----------------------------------------------------------------------------
# MedLightNet forward (public wrapper: NCHW in, NCHW out)
# ----------------------------------------------------------------------------

def medlightnet_forward(params, x_nchw):
    N, C, H, W = x_nchw.shape
    assert C == ENC_CH[0] and H % 32 == 0 and W % 32 == 0, "need 3xHxW, H,W % 32 == 0"

    dims = {lvl: (H // 2 ** lvl, W // 2 ** lvl) for lvl in (2, 3, 4, 5)}
    H2, W2 = dims[2]

    # ---- static tap plans + fused / reoriented weights ----------------------
    brem_offs, brem_cols = [], []
    for d in (1, 2, 3):
        wd = params[f'brem_w{d}']
        for kh, kw, dh, dw in _surviving_taps(dims[5][0], dims[5][1], d):
            brem_offs.append((dh, dw))
            brem_cols.append(wd[:, :, kh, kw])
    brem_w = jnp.concatenate(brem_cols, axis=1)
    brem_b = params['brem_b1'] + params['brem_b2'] + params['brem_b3']

    conv_dims = {1: dims[4], 2: dims[3], 3: dims[2]}
    dec_offs, dec_w, up_w = {}, {}, {}
    for i in (1, 2, 3):
        hs, ws = conv_dims[i]
        wd = params[f'dec{i}_w']
        offs, cols = [], []
        for kh, kw, dh, dw in _surviving_taps(hs, ws, 1):
            offs.append((dh, dw))
            cols.append(wd[:, :, kh, kw])
        dec_offs[i] = tuple(offs)
        dec_w[i] = jnp.concatenate(cols, axis=1)               # (Co, T*Ci)
        wu = params[f'up{i}_w']                                # (Ci, Co, 2, 2)
        up_w[i] = wu.transpose(2, 3, 1, 0).reshape(4 * wu.shape[1], wu.shape[0])

    # ---- pack all matmul weights into ONE bf16 blob (128-aligned columns) ---
    wlist = [(f'enc{l}_w', params[f'enc{l}_w']) for l in (2, 3, 4, 5)]
    wlist += [('brem_w', brem_w), ('gf1_w', params['gf1_w']), ('gf2_w', params['gf2_w'])]
    for i in (1, 2, 3):
        wlist += [(f'att{i}_w1', params[f'att{i}_w1']),
                  (f'att{i}_w2', params[f'att{i}_w2']),
                  (f'up{i}_w', up_w[i]),
                  (f'dec{i}_w', dec_w[i])]
    wlist.append(('final_w', params['final_w']))

    rows = max(8, -(-max(a.shape[0] for _, a in wlist) // 8) * 8)
    blocks, wplan, off = [], {}, 0
    for name, arr in wlist:
        r, c = arr.shape
        cpad = -(-c // 128) * 128
        blocks.append(jnp.zeros((rows, cpad), _BF16).at[:r, :c].set(arr.astype(_BF16)))
        wplan[name] = (r, off, c)
        off += cpad
    wblob = jnp.concatenate(blocks, axis=1)

    # ---- pack all biases into ONE f32 blob (one column per bias) ------------
    blist = [(f'enc{l}_b', params[f'enc{l}_b']) for l in (2, 3, 4, 5)]
    blist += [('brem_b', brem_b), ('gf1_b', params['gf1_b']), ('gf2_b', params['gf2_b'])]
    for i in (1, 2, 3):
        blist += [(f'att{i}_b1', params[f'att{i}_b1']),
                  (f'att{i}_b2', params[f'att{i}_b2']),
                  (f'up{i}_b', params[f'up{i}_b']),
                  (f'dec{i}_b', params[f'dec{i}_b'])]
    blist.append(('final_b', params['final_b']))
    bplan, bcols = {}, []
    for idx, (name, vec) in enumerate(blist):
        n = vec.shape[0]
        bcols.append(jnp.zeros((32, 1), jnp.float32).at[:n, 0].set(vec.astype(jnp.float32)))
        bplan[name] = (n, idx)
    bblob = jnp.concatenate(bcols, axis=1)

    # ---- constant operators --------------------------------------------------
    perms = [jnp.asarray(_interleave_perm(*dims[l]), _BF16) for l in (5, 4, 3)]
    a_h = _resize_matrix(H, H2)
    a_w = _resize_matrix(W, W2)
    # Fused W/H bilinear 4x upsample over the flat spatial axis.  For the fixed
    # 4x ratio every interpolation product is exactly representable in bf16.
    bres = jnp.asarray(np.kron(a_h.T, a_w.T), _BF16)           # (H2*W2, H*W)

    # ---- lane-dense per-sample inputs (synthetic-encoder patch extraction) --
    xs = [_space_to_depth(x_nchw.astype(jnp.float32), 2 ** l) for l in (2, 3, 4, 5)]

    meta = dict(bneck=dims[5],
                conv_dims=conv_dims,
                brem_offs=tuple(brem_offs),
                dec_offs=dec_offs,
                wplan=wplan, bplan=bplan)

    consts = [wblob, bblob, perms[0], perms[1], perms[2], bres]
    in_specs = [pl.BlockSpec((1,) + a.shape[1:], lambda n: (n, 0, 0)) for a in xs]
    in_specs += [pl.BlockSpec(a.shape, lambda n, nd=a.ndim: (0,) * nd) for a in consts]

    out = pl.pallas_call(
        functools.partial(_medlightnet_kernel, meta),
        out_shape=jax.ShapeDtypeStruct((N, 1, H * W), jnp.float32),
        grid=(N,),
        in_specs=in_specs,
        out_specs=pl.BlockSpec((1, 1, H * W), lambda n: (n, 0, 0)),
        compiler_params=pltpu.CompilerParams(
            dimension_semantics=("parallel",),      # v7x megacore: keep N even
            vmem_limit_bytes=48 * 1024 * 1024),
    )(*xs, *consts)

    # (N, 1, H*W) -> (N, 1, H, W): free reshape, no transpose.
    return out.reshape(N, 1, H, W)


# ----------------------------------------------------------------------------
# main
# ----------------------------------------------------------------------------

if __name__ == "__main__":
    x = jax.random.normal(jax.random.PRNGKey(0), (2, 3, 64, 64), dtype=jnp.float32)
    params = init_params(seed=0)

    fwd = jax.jit(medlightnet_forward)
    out = jax.block_until_ready(fwd(params, x))

    assert out.shape == (2, 1, 64, 64), out.shape
    assert bool(jnp.all(jnp.isfinite(out)))
    print("KERNEL_OK")
</pallas_src>

<mosaic_0001>
module attributes {stable_mosaic.version = 11 : i64} {
  func.func @_medlightnet_kernel(%arg0: i32, %arg1: memref<1x48x256xbf16, #tpu.memory_space<vmem>>, %arg2: memref<1x192x64xbf16, #tpu.memory_space<vmem>>, %arg3: memref<1x768x16xbf16, #tpu.memory_space<vmem>>, %arg4: memref<1x3072x4xbf16, #tpu.memory_space<vmem>>, %arg5: memref<64x6784xbf16, #tpu.memory_space<vmem>>, %arg6: memref<32x20xf32, #tpu.memory_space<vmem>>, %arg7: memref<16x16xbf16, #tpu.memory_space<vmem>>, %arg8: memref<64x64xbf16, #tpu.memory_space<vmem>>, %arg9: memref<256x256xbf16, #tpu.memory_space<vmem>>, %arg10: memref<256x4096xbf16, #tpu.memory_space<vmem>>, %arg11: memref<1x1x4096xf32, #tpu.memory_space<vmem>>) attributes {dimension_semantics = [#tpu.dimension_semantics<parallel>], iteration_bounds = array<i64: 2>, scalar_prefetch = 0 : i64, scratch_operands = 0 : i64, tpu.core_type = #tpu.core_type<tc>, window_params = [{transform_indices = @transform_0, window_bounds = array<i64: 1, 48, 256>}, {transform_indices = @transform_1, window_bounds = array<i64: 1, 192, 64>}, {transform_indices = @transform_2, window_bounds = array<i64: 1, 768, 16>}, {transform_indices = @transform_3, window_bounds = array<i64: 1, 3072, 4>}, {pipeline_mode = #tpu.pipeline_mode<synchronous>, transform_indices = @transform_4, window_bounds = array<i64: 64, 6784>}, {pipeline_mode = #tpu.pipeline_mode<synchronous>, transform_indices = @transform_5, window_bounds = array<i64: 32, 20>}, {pipeline_mode = #tpu.pipeline_mode<synchronous>, transform_indices = @transform_6, window_bounds = array<i64: 16, 16>}, {pipeline_mode = #tpu.pipeline_mode<synchronous>, transform_indices = @transform_7, window_bounds = array<i64: 64, 64>}, {pipeline_mode = #tpu.pipeline_mode<synchronous>, transform_indices = @transform_8, window_bounds = array<i64: 256, 256>}, {pipeline_mode = #tpu.pipeline_mode<synchronous>, transform_indices = @transform_9, window_bounds = array<i64: 256, 4096>}, {transform_indices = @transform_10, window_bounds = array<i64: 1, 1, 4096>}]} {
    %c0 = arith.constant 0 : index
    %c0_0 = arith.constant 0 : index
    %0 = vector.load %arg5[%c0, %c0_0] : memref<64x6784xbf16, #tpu.memory_space<vmem>>, vector<8x48xbf16>
    %c0_1 = arith.constant 0 : index
    %c0_2 = arith.constant 0 : index
    %c0_3 = arith.constant 0 : index
    %1 = vector.load %arg1[%c0_1, %c0_2, %c0_3] : memref<1x48x256xbf16, #tpu.memory_space<vmem>>, vector<1x48x256xbf16>
    %2 = vector.shape_cast %1 : vector<1x48x256xbf16> to vector<48x256xbf16>
    %cst = arith.constant dense<0.000000e+00> : vector<8x256xf32>
    %3 = tpu.matmul %0, %2, %cst {dimension_numbers = #tpu.dot_dimension_numbers<[1], [0], [0], [1], [0, 0, 1, 1], [], []>} : vector<8x48xbf16>, vector<48x256xbf16>, vector<8x256xf32> -> vector<8x256xf32>
    %c0_4 = arith.constant 0 : index
    %c0_5 = arith.constant 0 : index
    %4 = vector.load %arg6[%c0_4, %c0_5] : memref<32x20xf32, #tpu.memory_space<vmem>>, vector<8x1xf32>
    %5 = vector.broadcast %4 : vector<8x1xf32> to vector<8x256xf32>
    %6 = arith.addf %3, %5 : vector<8x256xf32>
    %cst_6 = arith.constant 0.000000e+00 : f32
    %7 = vector.broadcast %cst_6 : f32 to vector<8x256xf32>
    %8 = arith.maximumf %6, %7 : vector<8x256xf32>
    %c0_7 = arith.constant 0 : index
    %c128 = arith.constant 128 : index
    %9 = vector.load %arg5[%c0_7, %c128] : memref<64x6784xbf16, #tpu.memory_space<vmem>>, vector<16x192xbf16>
    %c0_8 = arith.constant 0 : index
    %c0_9 = arith.constant 0 : index
    %c0_10 = arith.constant 0 : index
    %10 = vector.load %arg2[%c0_8, %c0_9, %c0_10] : memref<1x192x64xbf16, #tpu.memory_space<vmem>>, vector<1x192x64xbf16>
    %11 = vector.shape_cast %10 : vector<1x192x64xbf16> to vector<192x64xbf16>
    %cst_11 = arith.constant dense<0.000000e+00> : vector<16x64xf32>
    %12 = tpu.matmul %9, %11, %cst_11 {dimension_numbers = #tpu.dot_dimension_numbers<[1], [0], [0], [1], [0, 0, 1, 1], [], []>} : vector<16x192xbf16>, vector<192x64xbf16>, vector<16x64xf32> -> vector<16x64xf32>
    %c0_12 = arith.constant 0 : index
    %c1 = arith.constant 1 : index
    %13 = vector.load %arg6[%c0_12, %c1] : memref<32x20xf32, #tpu.memory_space<vmem>>, vector<16x1xf32>
    %14 = vector.broadcast %13 : vector<16x1xf32> to vector<16x64xf32>
    %15 = arith.addf %12, %14 : vector<16x64xf32>
    %cst_13 = arith.constant 0.000000e+00 : f32
    %16 = vector.broadcast %cst_13 : f32 to vector<16x64xf32>
    %17 = arith.maximumf %15, %16 : vector<16x64xf32>
    %c0_14 = arith.constant 0 : index
    %c384 = arith.constant 384 : index
    %18 = vector.load %arg5[%c0_14, %c384] : memref<64x6784xbf16, #tpu.memory_space<vmem>>, vector<16x768xbf16>
    %c0_15 = arith.constant 0 : index
    %c0_16 = arith.constant 0 : index
    %c0_17 = arith.constant 0 : index
    %19 = vector.load %arg3[%c0_15, %c0_16, %c0_17] : memref<1x768x16xbf16, #tpu.memory_space<vmem>>, vector<1x768x16xbf16>
    %20 = vector.shape_cast %19 : vector<1x768x16xbf16> to vector<768x16xbf16>
    %cst_18 = arith.constant dense<0.000000e+00> : vector<16x16xf32>
    %21 = tpu.matmul %18, %20, %cst_18 {dimension_numbers = #tpu.dot_dimension_numbers<[1], [0], [0], [1], [0, 0, 1, 1], [], []>} : vector<16x768xbf16>, vector<768x16xbf16>, vector<16x16xf32> -> vector<16x16xf32>
    %c0_19 = arith.constant 0 : index
    %c2 = arith.constant 2 : index
    %22 = vector.load %arg6[%c0_19, %c2] : memref<32x20xf32, #tpu.memory_space<vmem>>, vector<16x1xf32>
    %23 = vector.broadcast %22 : vector<16x1xf32> to vector<16x16xf32>
    %24 = arith.addf %21, %23 : vector<16x16xf32>
    %cst_20 = arith.constant 0.000000e+00 : f32
    %25 = vector.broadcast %cst_20 : f32 to vector<16x16xf32>
    %26 = arith.maximumf %24, %25 : vector<16x16xf32>
    %c0_21 = arith.constant 0 : index
    %c1152 = arith.constant 1152 : index
    %27 = vector.load %arg5[%c0_21, %c1152] : memref<64x6784xbf16, #tpu.memory_space<vmem>>, vector<32x3072xbf16>
    %c0_22 = arith.constant 0 : index
    %c0_23 = arith.constant 0 : index
    %c0_24 = arith.constant 0 : index
    %28 = vector.load %arg4[%c0_22, %c0_23, %c0_24] : memref<1x3072x4xbf16, #tpu.memory_space<vmem>>, vector<1x3072x4xbf16>
    %29 = vector.shape_cast %28 : vector<1x3072x4xbf16> to vector<3072x4xbf16>
    %cst_25 = arith.constant dense<0.000000e+00> : vector<32x4xf32>
    %30 = tpu.matmul %27, %29, %cst_25 {dimension_numbers = #tpu.dot_dimension_numbers<[1], [0], [0], [1], [0, 0, 1, 1], [], []>} : vector<32x3072xbf16>, vector<3072x4xbf16>, vector<32x4xf32> -> vector<32x4xf32>
    %c0_26 = arith.constant 0 : index
    %c3 = arith.constant 3 : index
    %31 = vector.load %arg6[%c0_26, %c3] : memref<32x20xf32, #tpu.memory_space<vmem>>, vector<32x1xf32>
    %32 = vector.broadcast %31 : vector<32x1xf32> to vector<32x4xf32>
    %33 = arith.addf %30, %32 : vector<32x4xf32>
    %cst_27 = arith.constant 0.000000e+00 : f32
    %34 = vector.broadcast %cst_27 : f32 to vector<32x4xf32>
    %35 = arith.maximumf %33, %34 : vector<32x4xf32>
    %36 = arith.truncf %35 : vector<32x4xf32> to vector<32x4xbf16>
    %37 = tpu.iota {dimensions = array<i32: 1>} : vector<1x4xi32>
    %c1_i32 = arith.constant 1 : i32
    %38 = vector.broadcast %c1_i32 : i32 to vector<1x4xi32>
    %39 = arith.shrsi %37, %38 : vector<1x4xi32>
    %c1_i32_28 = arith.constant 1 : i32
    %40 = vector.broadcast %c1_i32_28 : i32 to vector<1x4xi32>
    %41 = arith.andi %37, %40 : vector<1x4xi32>
    %cst_29 = arith.constant 0.000000e+00 : bf16
    %42 = vector.broadcast %cst_29 : bf16 to vector<32x3xbf16>
    %43 = vector.extract_strided_slice %36 {offsets = [0, 0], sizes = [32, 1], strides = [1, 1]} : vector<32x4xbf16> to vector<32x1xbf16>
    %44 = tpu.concatenate %42, %43 in 1 : vector<32x3xbf16>, vector<32x1xbf16> -> vector<32x4xbf16>
    %c1_i32_30 = arith.constant 1 : i32
    %45 = vector.broadcast %c1_i32_30 : i32 to vector<1x4xi32>
    %46 = arith.cmpi sge, %39, %45 : vector<1x4xi32>
    %c1_i32_31 = arith.constant 1 : i32
    %47 = vector.broadcast %c1_i32_31 : i32 to vector<1x4xi32>
    %48 = arith.cmpi sge, %41, %47 : vector<1x4xi32>
    %49 = arith.andi %46, %48 : vector<1x4xi1>
    %cst_32 = arith.constant 0.000000e+00 : bf16
    %50 = vector.broadcast %cst_32 : bf16 to vector<32x4xbf16>
    %51 = vector.shape_cast %49 : vector<1x4xi1> to vector<1x4xi1>
    %52 = vector.broadcast %51 : vector<1x4xi1> to vector<32x4xi1>
    %53 = arith.select %52, %44, %50 : vector<32x4xi1>, vector<32x4xbf16>
    %cst_33 = arith.constant 0.000000e+00 : bf16
    %54 = vector.broadcast %cst_33 : bf16 to vector<32x2xbf16>
    %55 = vector.extract_strided_slice %36 {offsets = [0, 0], sizes = [32, 2], strides = [1, 1]} : vector<32x4xbf16> to vector<32x2xbf16>
    %56 = tpu.concatenate %54, %55 in 1 : vector<32x2xbf16>, vector<32x2xbf16> -> vector<32x4xbf16>
    %c1_i32_34 = arith.constant 1 : i32
    %57 = vector.broadcast %c1_i32_34 : i32 to vector<1x4xi32>
    %58 = arith.cmpi sge, %39, %57 : vector<1x4xi32>
    %cst_35 = arith.constant 0.000000e+00 : bf16
    %59 = vector.broadcast %cst_35 : bf16 to vector<32x4xbf16>
    %60 = vector.shape_cast %58 : vector<1x4xi1> to vector<1x4xi1>
    %61 = vector.broadcast %60 : vector<1x4xi1> to vector<32x4xi1>
    %62 = arith.select %61, %56, %59 : vector<32x4xi1>, vector<32x4xbf16>
    %cst_36 = arith.constant 0.000000e+00 : bf16
    %63 = vector.broadcast %cst_36 : bf16 to vector<32x1xbf16>
    %64 = vector.extract_strided_slice %36 {offsets = [0, 0], sizes = [32, 3], strides = [1, 1]} : vector<32x4xbf16> to vector<32x3xbf16>
    %65 = tpu.concatenate %63, %64 in 1 : vector<32x1xbf16>, vector<32x3xbf16> -> vector<32x4xbf16>
    %c1_i32_37 = arith.constant 1 : i32
    %66 = vector.broadcast %c1_i32_37 : i32 to vector<1x4xi32>
    %67 = arith.cmpi sge, %39, %66 : vector<1x4xi32>
    %c1_i32_38 = arith.constant 1 : i32
    %68 = vector.broadcast %c1_i32_38 : i32 to vector<1x4xi32>
    %69 = arith.cmpi slt, %41, %68 : vector<1x4xi32>
    %70 = arith.andi %67, %69 : vector<1x4xi1>
    %cst_39 = arith.constant 0.000000e+00 : bf16
    %71 = vector.broadcast %cst_39 : bf16 to vector<32x4xbf16>
    %72 = vector.shape_cast %70 : vector<1x4xi1> to vector<1x4xi1>
    %73 = vector.broadcast %72 : vector<1x4xi1> to vector<32x4xi1>
    %74 = arith.select %73, %65, %71 : vector<32x4xi1>, vector<32x4xbf16>
    %cst_40 = arith.constant 0.000000e+00 : bf16
    %75 = vector.broadcast %cst_40 : bf16 to vector<32x1xbf16>
    %76 = vector.extract_strided_slice %36 {offsets = [0, 0], sizes = [32, 3], strides = [1, 1]} : vector<32x4xbf16> to vector<32x3xbf16>
    %77 = tpu.concatenate %75, %76 in 1 : vector<32x1xbf16>, vector<32x3xbf16> -> vector<32x4xbf16>
    %c1_i32_41 = arith.constant 1 : i32
    %78 = vector.broadcast %c1_i32_41 : i32 to vector<1x4xi32>
    %79 = arith.cmpi sge, %41, %78 : vector<1x4xi32>
    %cst_42 = arith.constant 0.000000e+00 : bf16
    %80 = vector.broadcast %cst_42 : bf16 to vector<32x4xbf16>
    %81 = vector.shape_cast %79 : vector<1x4xi1> to vector<1x4xi1>
    %82 = vector.broadcast %81 : vector<1x4xi1> to vector<32x4xi1>
    %83 = arith.select %82, %77, %80 : vector<32x4xi1>, vector<32x4xbf16>
    %84 = vector.extract_strided_slice %36 {offsets = [0, 1], sizes = [32, 3], strides = [1, 1]} : vector<32x4xbf16> to vector<32x3xbf16>
    %cst_43 = arith.constant 0.000000e+00 : bf16
    %85 = vector.broadcast %cst_43 : bf16 to vector<32x1xbf16>
    %86 = tpu.concatenate %84, %85 in 1 : vector<32x3xbf16>, vector<32x1xbf16> -> vector<32x4xbf16>
    %c1_i32_44 = arith.constant 1 : i32
    %87 = vector.broadcast %c1_i32_44 : i32 to vector<1x4xi32>
    %88 = arith.cmpi slt, %41, %87 : vector<1x4xi32>
    %cst_45 = arith.constant 0.000000e+00 : bf16
    %89 = vector.broadcast %cst_45 : bf16 to vector<32x4xbf16>
    %90 = vector.shape_cast %88 : vector<1x4xi1> to vector<1x4xi1>
    %91 = vector.broadcast %90 : vector<1x4xi1> to vector<32x4xi1>
    %92 = arith.select %91, %86, %89 : vector<32x4xi1>, vector<32x4xbf16>
    %93 = vector.extract_strided_slice %36 {offsets = [0, 1], sizes = [32, 3], strides = [1, 1]} : vector<32x4xbf16> to vector<32x3xbf16>
    %cst_46 = arith.constant 0.000000e+00 : bf16
    %94 = vector.broadcast %cst_46 : bf16 to vector<32x1xbf16>
    %95 = tpu.concatenate %93, %94 in 1 : vector<32x3xbf16>, vector<32x1xbf16> -> vector<32x4xbf16>
    %c1_i32_47 = arith.constant 1 : i32
    %96 = vector.broadcast %c1_i32_47 : i32 to vector<1x4xi32>
    %97 = arith.cmpi slt, %39, %96 : vector<1x4xi32>
    %c1_i32_48 = arith.constant 1 : i32
    %98 = vector.broadcast %c1_i32_48 : i32 to vector<1x4xi32>
    %99 = arith.cmpi sge, %41, %98 : vector<1x4xi32>
    %100 = arith.andi %97, %99 : vector<1x4xi1>
    %cst_49 = arith.constant 0.000000e+00 : bf16
    %101 = vector.broadcast %cst_49 : bf16 to vector<32x4xbf16>
    %102 = vector.shape_cast %100 : vector<1x4xi1> to vector<1x4xi1>
    %103 = vector.broadcast %102 : vector<1x4xi1> to vector<32x4xi1>
    %104 = arith.select %103, %95, %101 : vector<32x4xi1>, vector<32x4xbf16>
    %105 = vector.extract_strided_slice %36 {offsets = [0, 2], sizes = [32, 2], strides = [1, 1]} : vector<32x4xbf16> to vector<32x2xbf16>
    %cst_50 = arith.constant 0.000000e+00 : bf16
    %106 = vector.broadcast %cst_50 : bf16 to vector<32x2xbf16>
    %107 = tpu.concatenate %105, %106 in 1 : vector<32x2xbf16>, vector<32x2xbf16> -> vector<32x4xbf16>
    %c1_i32_51 = arith.constant 1 : i32
    %108 = vector.broadcast %c1_i32_51 : i32 to vector<1x4xi32>
    %109 = arith.cmpi slt, %39, %108 : vector<1x4xi32>
    %cst_52 = arith.constant 0.000000e+00 : bf16
    %110 = vector.broadcast %cst_52 : bf16 to vector<32x4xbf16>
    %111 = vector.shape_cast %109 : vector<1x4xi1> to vector<1x4xi1>
    %112 = vector.broadcast %111 : vector<1x4xi1> to vector<32x4xi1>
    %113 = arith.select %112, %107, %110 : vector<32x4xi1>, vector<32x4xbf16>
    %114 = vector.extract_strided_slice %36 {offsets = [0, 3], sizes = [32, 1], strides = [1, 1]} : vector<32x4xbf16> to vector<32x1xbf16>
    %cst_53 = arith.constant 0.000000e+00 : bf16
    %115 = vector.broadcast %cst_53 : bf16 to vector<32x3xbf16>
    %116 = tpu.concatenate %114, %115 in 1 : vector<32x1xbf16>, vector<32x3xbf16> -> vector<32x4xbf16>
    %c1_i32_54 = arith.constant 1 : i32
    %117 = vector.broadcast %c1_i32_54 : i32 to vector<1x4xi32>
    %118 = arith.cmpi slt, %39, %117 : vector<1x4xi32>
    %c1_i32_55 = arith.constant 1 : i32
    %119 = vector.broadcast %c1_i32_55 : i32 to vector<1x4xi32>
    %120 = arith.cmpi slt, %41, %119 : vector<1x4xi32>
    %121 = arith.andi %118, %120 : vector<1x4xi1>
    %cst_56 = arith.constant 0.000000e+00 : bf16
    %122 = vector.broadcast %cst_56 : bf16 to vector<32x4xbf16>
    %123 = vector.shape_cast %121 : vector<1x4xi1> to vector<1x4xi1>
    %124 = vector.broadcast %123 : vector<1x4xi1> to vector<32x4xi1>
    %125 = arith.select %124, %116, %122 : vector<32x4xi1>, vector<32x4xbf16>
    %126 = tpu.concatenate %53, %62, %74, %83, %36, %92, %104, %113, %125, %36, %36 in 0 : vector<32x4xbf16>, vector<32x4xbf16>, vector<32x4xbf16>, vector<32x4xbf16>, vector<32x4xbf16>, vector<32x4xbf16>, vector<32x4xbf16>, vector<32x4xbf16>, vector<32x4xbf16>, vector<32x4xbf16>, vector<32x4xbf16> -> vector<352x4xbf16>
    %c0_57 = arith.constant 0 : index
    %c4224 = arith.constant 4224 : index
    %127 = vector.load %arg5[%c0_57, %c4224] : memref<64x6784xbf16, #tpu.memory_space<vmem>>, vector<32x352xbf16>
    %cst_58 = arith.constant dense<0.000000e+00> : vector<32x4xf32>
    %128 = tpu.matmul %127, %126, %cst_58 {dimension_numbers = #tpu.dot_dimension_numbers<[1], [0], [0], [1], [0, 0, 1, 1], [], []>} : vector<32x352xbf16>, vector<352x4xbf16>, vector<32x4xf32> -> vector<32x4xf32>
    %c0_59 = arith.constant 0 : index
    %c4 = arith.constant 4 : index
    %129 = vector.load %arg6[%c0_59, %c4] : memref<32x20xf32, #tpu.memory_space<vmem>>, vector<32x1xf32>
    %130 = vector.broadcast %129 : vector<32x1xf32> to vector<32x4xf32>
    %131 = arith.addf %128, %130 : vector<32x4xf32>
    %c0_60 = arith.constant 0 : index
    %c4608 = arith.constant 4608 : index
    %132 = vector.load %arg5[%c0_60, %c4608] : memref<64x6784xbf16, #tpu.memory_space<vmem>>, vector<16x32xbf16>
    %133 = arith.truncf %131 : vector<32x4xf32> to vector<32x4xbf16>
    %cst_61 = arith.constant dense<0.000000e+00> : vector<16x4xf32>
    %134 = tpu.matmul %132, %133, %cst_61 {dimension_numbers = #tpu.dot_dimension_numbers<[1], [0], [0], [1], [0, 0, 1, 1], [], []>} : vector<16x32xbf16>, vector<32x4xbf16>, vector<16x4xf32> -> vector<16x4xf32>
    %c0_62 = arith.constant 0 : index
    %c5 = arith.constant 5 : index
    %135 = vector.load %arg6[%c0_62, %c5] : memref<32x20xf32, #tpu.memory_space<vmem>>, vector<16x1xf32>
    %136 = vector.broadcast %135 : vector<16x1xf32> to vector<16x4xf32>
    %137 = arith.addf %134, %136 : vector<16x4xf32>
    %cst_63 = arith.constant 0.000000e+00 : f32
    %138 = vector.broadcast %cst_63 : f32 to vector<16x4xf32>
    %139 = arith.maximumf %137, %138 : vector<16x4xf32>
    %c0_64 = arith.constant 0 : index
    %c4736 = arith.constant 4736 : index
    %140 = vector.load %arg5[%c0_64, %c4736] : memref<64x6784xbf16, #tpu.memory_space<vmem>>, vector<32x16xbf16>
    %141 = arith.truncf %139 : vector<16x4xf32> to vector<16x4xbf16>
    %cst_65 = arith.constant dense<0.000000e+00> : vector<32x4xf32>
    %142 = tpu.matmul %140, %141, %cst_65 {dimension_numbers = #tpu.dot_dimension_numbers<[1], [0], [0], [1], [0, 0, 1, 1], [], []>} : vector<32x16xbf16>, vector<16x4xbf16>, vector<32x4xf32> -> vector<32x4xf32>
    %c0_66 = arith.constant 0 : index
    %c6 = arith.constant 6 : index
    %143 = vector.load %arg6[%c0_66, %c6] : memref<32x20xf32, #tpu.memory_space<vmem>>, vector<32x1xf32>
    %144 = vector.broadcast %143 : vector<32x1xf32> to vector<32x4xf32>
    %145 = arith.addf %142, %144 : vector<32x4xf32>
    %146 = arith.addf %35, %145 : vector<32x4xf32>
    %147 = arith.truncf %146 : vector<32x4xf32> to vector<32x4xbf16>
    %c0_67 = arith.constant 0 : index
    %c4864 = arith.constant 4864 : index
    %148 = vector.load %arg5[%c0_67, %c4864] : memref<64x6784xbf16, #tpu.memory_space<vmem>>, vector<8x32xbf16>
    %cst_68 = arith.constant dense<0.000000e+00> : vector<8x4xf32>
    %149 = tpu.matmul %148, %147, %cst_68 {dimension_numbers = #tpu.dot_dimension_numbers<[1], [0], [0], [1], [0, 0, 1, 1], [], []>} : vector<8x32xbf16>, vector<32x4xbf16>, vector<8x4xf32> -> vector<8x4xf32>
    %c0_69 = arith.constant 0 : index
    %c7 = arith.constant 7 : index
    %150 = vector.load %arg6[%c0_69, %c7] : memref<32x20xf32, #tpu.memory_space<vmem>>, vector<8x1xf32>
    %151 = vector.broadcast %150 : vector<8x1xf32> to vector<8x4xf32>
    %152 = arith.addf %149, %151 : vector<8x4xf32>
    %cst_70 = arith.constant 0.000000e+00 : f32
    %153 = vector.broadcast %cst_70 : f32 to vector<8x4xf32>
    %154 = arith.maximumf %152, %153 : vector<8x4xf32>
    %c0_71 = arith.constant 0 : index
    %c4992 = arith.constant 4992 : index
    %155 = vector.load %arg5[%c0_71, %c4992] : memref<64x6784xbf16, #tpu.memory_space<vmem>>, vector<32x8xbf16>
    %156 = arith.truncf %154 : vector<8x4xf32> to vector<8x4xbf16>
    %cst_72 = arith.constant dense<0.000000e+00> : vector<32x4xf32>
    %157 = tpu.matmul %155, %156, %cst_72 {dimension_numbers = #tpu.dot_dimension_numbers<[1], [0], [0], [1], [0, 0, 1, 1], [], []>} : vector<32x8xbf16>, vector<8x4xbf16>, vector<32x4xf32> -> vector<32x4xf32>
    %c0_73 = arith.constant 0 : index
    %c8 = arith.constant 8 : index
    %158 = vector.load %arg6[%c0_73, %c8] : memref<32x20xf32, #tpu.memory_space<vmem>>, vector<32x1xf32>
    %159 = vector.broadcast %158 : vector<32x1xf32> to vector<32x4xf32>
    %160 = arith.addf %157, %159 : vector<32x4xf32>
    %161 = arith.negf %160 : vector<32x4xf32>
    %162 = math.exp %161 : vector<32x4xf32>
    %cst_74 = arith.constant 1.000000e+00 : f32
    %163 = vector.broadcast %cst_74 : f32 to vector<32x4xf32>
    %164 = arith.addf %163, %162 : vector<32x4xf32>
    %165 = arith.divf %163, %164 : vector<32x4xf32>
    %166 = arith.mulf %146, %165 : vector<32x4xf32>
    %c0_75 = arith.constant 0 : index
    %c5120 = arith.constant 5120 : index
    %167 = vector.load %arg5[%c0_75, %c5120] : memref<64x6784xbf16, #tpu.memory_space<vmem>>, vector<64x32xbf16>
    %168 = arith.truncf %166 : vector<32x4xf32> to vector<32x4xbf16>
    %cst_76 = arith.constant dense<0.000000e+00> : vector<64x4xf32>
    %169 = tpu.matmul %167, %168, %cst_76 {dimension_numbers = #tpu.dot_dimension_numbers<[1], [0], [0], [1], [0, 0, 1, 1], [], []>} : vector<64x32xbf16>, vector<32x4xbf16>, vector<64x4xf32> -> vector<64x4xf32>
    %170 = vector.extract_strided_slice %169 {offsets = [0, 0], sizes = [16, 4], strides = [1, 1]} : vector<64x4xf32> to vector<16x4xf32>
    %171 = vector.extract_strided_slice %169 {offsets = [16, 0], sizes = [16, 4], strides = [1, 1]} : vector<64x4xf32> to vector<16x4xf32>
    %172 = vector.extract_strided_slice %169 {offsets = [32, 0], sizes = [16, 4], strides = [1, 1]} : vector<64x4xf32> to vector<16x4xf32>
    %173 = vector.extract_strided_slice %169 {offsets = [48, 0], sizes = [16, 4], strides = [1, 1]} : vector<64x4xf32> to vector<16x4xf32>
    %174 = tpu.concatenate %170, %171, %172, %173 in 1 : vector<16x4xf32>, vector<16x4xf32>, vector<16x4xf32>, vector<16x4xf32> -> vector<16x16xf32>
    %175 = arith.truncf %174 : vector<16x16xf32> to vector<16x16xbf16>
    %c0_77 = arith.constant 0 : index
    %c0_78 = arith.constant 0 : index
    %176 = vector.load %arg7[%c0_77, %c0_78] : memref<16x16xbf16, #tpu.memory_space<vmem>>, vector<16x16xbf16>
    %cst_79 = arith.constant dense<0.000000e+00> : vector<16x16xf32>
    %177 = tpu.matmul %175, %176, %cst_79 {dimension_numbers = #tpu.dot_dimension_numbers<[1], [0], [0], [1], [0, 0, 1, 1], [], []>} : vector<16x16xbf16>, vector<16x16xbf16>, vector<16x16xf32> -> vector<16x16xf32>
    %c0_80 = arith.constant 0 : index
    %c9 = arith.constant 9 : index
    %178 = vector.load %arg6[%c0_80, %c9] : memref<32x20xf32, #tpu.memory_space<vmem>>, vector<16x1xf32>
    %179 = vector.broadcast %178 : vector<16x1xf32> to vector<16x16xf32>
    %180 = arith.addf %177, %179 : vector<16x16xf32>
    %181 = arith.addf %180, %26 : vector<16x16xf32>
    %182 = arith.truncf %181 : vector<16x16xf32> to vector<16x16xbf16>
    %183 = tpu.iota {dimensions = array<i32: 1>} : vector<1x16xi32>
    %c2_i32 = arith.constant 2 : i32
    %184 = vector.broadcast %c2_i32 : i32 to vector<1x16xi32>
    %185 = arith.shrsi %183, %184 : vector<1x16xi32>
    %c3_i32 = arith.constant 3 : i32
    %186 = vector.broadcast %c3_i32 : i32 to vector<1x16xi32>
    %187 = arith.andi %183, %186 : vector<1x16xi32>
    %cst_81 = arith.constant 0.000000e+00 : bf16
    %188 = vector.broadcast %cst_81 : bf16 to vector<16x5xbf16>
    %189 = vector.extract_strided_slice %182 {offsets = [0, 0], sizes = [16, 11], strides = [1, 1]} : vector<16x16xbf16> to vector<16x11xbf16>
    %190 = tpu.concatenate %188, %189 in 1 : vector<16x5xbf16>, vector<16x11xbf16> -> vector<16x16xbf16>
    %c1_i32_82 = arith.constant 1 : i32
    %191 = vector.broadcast %c1_i32_82 : i32 to vector<1x16xi32>
    %192 = arith.cmpi sge, %185, %191 : vector<1x16xi32>
    %c1_i32_83 = arith.constant 1 : i32
    %193 = vector.broadcast %c1_i32_83 : i32 to vector<1x16xi32>
    %194 = arith.cmpi sge, %187, %193 : vector<1x16xi32>
    %195 = arith.andi %192, %194 : vector<1x16xi1>
    %cst_84 = arith.constant 0.000000e+00 : bf16
    %196 = vector.broadcast %cst_84 : bf16 to vector<16x16xbf16>
    %197 = vector.shape_cast %195 : vector<1x16xi1> to vector<1x16xi1>
    %198 = vector.broadcast %197 : vector<1x16xi1> to vector<16x16xi1>
    %199 = arith.select %198, %190, %196 : vector<16x16xi1>, vector<16x16xbf16>
    %cst_85 = arith.constant 0.000000e+00 : bf16
    %200 = vector.broadcast %cst_85 : bf16 to vector<16x4xbf16>
    %201 = vector.extract_strided_slice %182 {offsets = [0, 0], sizes = [16, 12], strides = [1, 1]} : vector<16x16xbf16> to vector<16x12xbf16>
    %202 = tpu.concatenate %200, %201 in 1 : vector<16x4xbf16>, vector<16x12xbf16> -> vector<16x16xbf16>
    %c1_i32_86 = arith.constant 1 : i32
    %203 = vector.broadcast %c1_i32_86 : i32 to vector<1x16xi32>
    %204 = arith.cmpi sge, %185, %203 : vector<1x16xi32>
    %cst_87 = arith.constant 0.000000e+00 : bf16
    %205 = vector.broadcast %cst_87 : bf16 to vector<16x16xbf16>
    %206 = vector.shape_cast %204 : vector<1x16xi1> to vector<1x16xi1>
    %207 = vector.broadcast %206 : vector<1x16xi1> to vector<16x16xi1>
    %208 = arith.select %207, %202, %205 : vector<16x16xi1>, vector<16x16xbf16>
    %cst_88 = arith.constant 0.000000e+00 : bf16
    %209 = vector.broadcast %cst_88 : bf16 to vector<16x3xbf16>
    %210 = vector.extract_strided_slice %182 {offsets = [0, 0], sizes = [16, 13], strides = [1, 1]} : vector<16x16xbf16> to vector<16x13xbf16>
    %211 = tpu.concatenate %209, %210 in 1 : vector<16x3xbf16>, vector<16x13xbf16> -> vector<16x16xbf16>
    %c1_i32_89 = arith.constant 1 : i32
    %212 = vector.broadcast %c1_i32_89 : i32 to vector<1x16xi32>
    %213 = arith.cmpi sge, %185, %212 : vector<1x16xi32>
    %c3_i32_90 = arith.constant 3 : i32
    %214 = vector.broadcast %c3_i32_90 : i32 to vector<1x16xi32>
    %215 = arith.cmpi slt, %187, %214 : vector<1x16xi32>
    %216 = arith.andi %213, %215 : vector<1x16xi1>
    %cst_91 = arith.constant 0.000000e+00 : bf16
    %217 = vector.broadcast %cst_91 : bf16 to vector<16x16xbf16>
    %218 = vector.shape_cast %216 : vector<1x16xi1> to vector<1x16xi1>
    %219 = vector.broadcast %218 : vector<1x16xi1> to vector<16x16xi1>
    %220 = arith.select %219, %211, %217 : vector<16x16xi1>, vector<16x16xbf16>
    %cst_92 = arith.constant 0.000000e+00 : bf16
    %221 = vector.broadcast %cst_92 : bf16 to vector<16x1xbf16>
    %222 = vector.extract_strided_slice %182 {offsets = [0, 0], sizes = [16, 15], strides = [1, 1]} : vector<16x16xbf16> to vector<16x15xbf16>
    %223 = tpu.concatenate %221, %222 in 1 : vector<16x1xbf16>, vector<16x15xbf16> -> vector<16x16xbf16>
    %c1_i32_93 = arith.constant 1 : i32
    %224 = vector.broadcast %c1_i32_93 : i32 to vector<1x16xi32>
    %225 = arith.cmpi sge, %187, %224 : vector<1x16xi32>
    %cst_94 = arith.constant 0.000000e+00 : bf16
    %226 = vector.broadcast %cst_94 : bf16 to vector<16x16xbf16>
    %227 = vector.shape_cast %225 : vector<1x16xi1> to vector<1x16xi1>
    %228 = vector.broadcast %227 : vector<1x16xi1> to vector<16x16xi1>
    %229 = arith.select %228, %223, %226 : vector<16x16xi1>, vector<16x16xbf16>
    %230 = vector.extract_strided_slice %182 {offsets = [0, 1], sizes = [16, 15], strides = [1, 1]} : vector<16x16xbf16> to vector<16x15xbf16>
    %cst_95 = arith.constant 0.000000e+00 : bf16
    %231 = vector.broadcast %cst_95 : bf16 to vector<16x1xbf16>
    %232 = tpu.concatenate %230, %231 in 1 : vector<16x15xbf16>, vector<16x1xbf16> -> vector<16x16xbf16>
    %c3_i32_96 = arith.constant 3 : i32
    %233 = vector.broadcast %c3_i32_96 : i32 to vector<1x16xi32>
    %234 = arith.cmpi slt, %187, %233 : vector<1x16xi32>
    %cst_97 = arith.constant 0.000000e+00 : bf16
    %235 = vector.broadcast %cst_97 : bf16 to vector<16x16xbf16>
    %236 = vector.shape_cast %234 : vector<1x16xi1> to vector<1x16xi1>
    %237 = vector.broadcast %236 : vector<1x16xi1> to vector<16x16xi1>
    %238 = arith.select %237, %232, %235 : vector<16x16xi1>, vector<16x16xbf16>
    %239 = vector.extract_strided_slice %182 {offsets = [0, 3], sizes = [16, 13], strides = [1, 1]} : vector<16x16xbf16> to vector<16x13xbf16>
    %cst_98 = arith.constant 0.000000e+00 : bf16
    %240 = vector.broadcast %cst_98 : bf16 to vector<16x3xbf16>
    %241 = tpu.concatenate %239, %240 in 1 : vector<16x13xbf16>, vector<16x3xbf16> -> vector<16x16xbf16>
    %c3_i32_99 = arith.constant 3 : i32
    %242 = vector.broadcast %c3_i32_99 : i32 to vector<1x16xi32>
    %243 = arith.cmpi slt, %185, %242 : vector<1x16xi32>
    %c1_i32_100 = arith.constant 1 : i32
    %244 = vector.broadcast %c1_i32_100 : i32 to vector<1x16xi32>
    %245 = arith.cmpi sge, %187, %244 : vector<1x16xi32>
    %246 = arith.andi %243, %245 : vector<1x16xi1>
    %cst_101 = arith.constant 0.000000e+00 : bf16
    %247 = vector.broadcast %cst_101 : bf16 to vector<16x16xbf16>
    %248 = vector.shape_cast %246 : vector<1x16xi1> to vector<1x16xi1>
    %249 = vector.broadcast %248 : vector<1x16xi1> to vector<16x16xi1>
    %250 = arith.select %249, %241, %247 : vector<16x16xi1>, vector<16x16xbf16>
    %251 = vector.extract_strided_slice %182 {offsets = [0, 4], sizes = [16, 12], strides = [1, 1]} : vector<16x16xbf16> to vector<16x12xbf16>
    %cst_102 = arith.constant 0.000000e+00 : bf16
    %252 = vector.broadcast %cst_102 : bf16 to vector<16x4xbf16>
    %253 = tpu.concatenate %251, %252 in 1 : vector<16x12xbf16>, vector<16x4xbf16> -> vector<16x16xbf16>
    %c3_i32_103 = arith.constant 3 : i32
    %254 = vector.broadcast %c3_i32_103 : i32 to vector<1x16xi32>
    %255 = arith.cmpi slt, %185, %254 : vector<1x16xi32>
    %cst_104 = arith.constant 0.000000e+00 : bf16
    %256 = vector.broadcast %cst_104 : bf16 to vector<16x16xbf16>
    %257 = vector.shape_cast %255 : vector<1x16xi1> to vector<1x16xi1>
    %258 = vector.broadcast %257 : vector<1x16xi1> to vector<16x16xi1>
    %259 = arith.select %258, %253, %256 : vector<16x16xi1>, vector<16x16xbf16>
    %260 = vector.extract_strided_slice %182 {offsets = [0, 5], sizes = [16, 11], strides = [1, 1]} : vector<16x16xbf16> to vector<16x11xbf16>
    %cst_105 = arith.constant 0.000000e+00 : bf16
    %261 = vector.broadcast %cst_105 : bf16 to vector<16x5xbf16>
    %262 = tpu.concatenate %260, %261 in 1 : vector<16x11xbf16>, vector<16x5xbf16> -> vector<16x16xbf16>
    %c3_i32_106 = arith.constant 3 : i32
    %263 = vector.broadcast %c3_i32_106 : i32 to vector<1x16xi32>
    %264 = arith.cmpi slt, %185, %263 : vector<1x16xi32>
    %c3_i32_107 = arith.constant 3 : i32
    %265 = vector.broadcast %c3_i32_107 : i32 to vector<1x16xi32>
    %266 = arith.cmpi slt, %187, %265 : vector<1x16xi32>
    %267 = arith.andi %264, %266 : vector<1x16xi1>
    %cst_108 = arith.constant 0.000000e+00 : bf16
    %268 = vector.broadcast %cst_108 : bf16 to vector<16x16xbf16>
    %269 = vector.shape_cast %267 : vector<1x16xi1> to vector<1x16xi1>
    %270 = vector.broadcast %269 : vector<1x16xi1> to vector<16x16xi1>
    %271 = arith.select %270, %262, %268 : vector<16x16xi1>, vector<16x16xbf16>
    %272 = tpu.concatenate %199, %208, %220, %229, %182, %238, %250, %259, %271 in 0 : vector<16x16xbf16>, vector<16x16xbf16>, vector<16x16xbf16>, vector<16x16xbf16>, vector<16x16xbf16>, vector<16x16xbf16>, vector<16x16xbf16>, vector<16x16xbf16>, vector<16x16xbf16> -> vector<144x16xbf16>
    %c0_109 = arith.constant 0 : index
    %c5248 = arith.constant 5248 : index
    %273 = vector.load %arg5[%c0_109, %c5248] : memref<64x6784xbf16, #tpu.memory_space<vmem>>, vector<16x144xbf16>
    %cst_110 = arith.constant dense<0.000000e+00> : vector<16x16xf32>
    %274 = tpu.matmul %273, %272, %cst_110 {dimension_numbers = #tpu.dot_dimension_numbers<[1], [0], [0], [1], [0, 0, 1, 1], [], []>} : vector<16x144xbf16>, vector<144x16xbf16>, vector<16x16xf32> -> vector<16x16xf32>
    %c0_111 = arith.constant 0 : index
    %c10 = arith.constant 10 : index
    %275 = vector.load %arg6[%c0_111, %c10] : memref<32x20xf32, #tpu.memory_space<vmem>>, vector<16x1xf32>
    %276 = vector.broadcast %275 : vector<16x1xf32> to vector<16x16xf32>
    %277 = arith.addf %274, %276 : vector<16x16xf32>
    %278 = arith.truncf %277 : vector<16x16xf32> to vector<16x16xbf16>
    %c0_112 = arith.constant 0 : index
    %c5504 = arith.constant 5504 : index
    %279 = vector.load %arg5[%c0_112, %c5504] : memref<64x6784xbf16, #tpu.memory_space<vmem>>, vector<4x16xbf16>
    %cst_113 = arith.constant dense<0.000000e+00> : vector<4x16xf32>
    %280 = tpu.matmul %279, %278, %cst_113 {dimension_numbers = #tpu.dot_dimension_numbers<[1], [0], [0], [1], [0, 0, 1, 1], [], []>} : vector<4x16xbf16>, vector<16x16xbf16>, vector<4x16xf32> -> vector<4x16xf32>
    %c0_114 = arith.constant 0 : index
    %c11 = arith.constant 11 : index
    %281 = vector.load %arg6[%c0_114, %c11] : memref<32x20xf32, #tpu.memory_space<vmem>>, vector<4x1xf32>
    %282 = vector.broadcast %281 : vector<4x1xf32> to vector<4x16xf32>
    %283 = arith.addf %280, %282 : vector<4x16xf32>
    %cst_115 = arith.constant 0.000000e+00 : f32
    %284 = vector.broadcast %cst_115 : f32 to vector<4x16xf32>
    %285 = arith.maximumf %283, %284 : vector<4x16xf32>
    %c0_116 = arith.constant 0 : index
    %c5632 = arith.constant 5632 : index
    %286 = vector.load %arg5[%c0_116, %c5632] : memref<64x6784xbf16, #tpu.memory_space<vmem>>, vector<16x4xbf16>
    %287 = arith.truncf %285 : vector<4x16xf32> to vector<4x16xbf16>
    %cst_117 = arith.constant dense<0.000000e+00> : vector<16x16xf32>
    %288 = tpu.matmul %286, %287, %cst_117 {dimension_numbers = #tpu.dot_dimension_numbers<[1], [0], [0], [1], [0, 0, 1, 1], [], []>} : vector<16x4xbf16>, vector<4x16xbf16>, vector<16x16xf32> -> vector<16x16xf32>
    %c0_118 = arith.constant 0 : index
    %c12 = arith.constant 12 : index
    %289 = vector.load %arg6[%c0_118, %c12] : memref<32x20xf32, #tpu.memory_space<vmem>>, vector<16x1xf32>
    %290 = vector.broadcast %289 : vector<16x1xf32> to vector<16x16xf32>
    %291 = arith.addf %288, %290 : vector<16x16xf32>
    %292 = arith.negf %291 : vector<16x16xf32>
    %293 = math.exp %292 : vector<16x16xf32>
    %cst_119 = arith.constant 1.000000e+00 : f32
    %294 = vector.broadcast %cst_119 : f32 to vector<16x16xf32>
    %295 = arith.addf %294, %293 : vector<16x16xf32>
    %296 = arith.divf %294, %295 : vector<16x16xf32>
    %297 = arith.mulf %277, %296 : vector<16x16xf32>
    %c0_120 = arith.constant 0 : index
    %c5760 = arith.constant 5760 : index
    %298 = vector.load %arg5[%c0_120, %c5760] : memref<64x6784xbf16, #tpu.memory_space<vmem>>, vector<64x16xbf16>
    %299 = arith.truncf %297 : vector<16x16xf32> to vector<16x16xbf16>
    %cst_121 = arith.constant dense<0.000000e+00> : vector<64x16xf32>
    %300 = tpu.matmul %298, %299, %cst_121 {dimension_numbers = #tpu.dot_dimension_numbers<[1], [0], [0], [1], [0, 0, 1, 1], [], []>} : vector<64x16xbf16>, vector<16x16xbf16>, vector<64x16xf32> -> vector<64x16xf32>
    %301 = vector.extract_strided_slice %300 {offsets = [0, 0], sizes = [16, 16], strides = [1, 1]} : vector<64x16xf32> to vector<16x16xf32>
    %302 = vector.extract_strided_slice %300 {offsets = [16, 0], sizes = [16, 16], strides = [1, 1]} : vector<64x16xf32> to vector<16x16xf32>
    %303 = vector.extract_strided_slice %300 {offsets = [32, 0], sizes = [16, 16], strides = [1, 1]} : vector<64x16xf32> to vector<16x16xf32>
    %304 = vector.extract_strided_slice %300 {offsets = [48, 0], sizes = [16, 16], strides = [1, 1]} : vector<64x16xf32> to vector<16x16xf32>
    %305 = tpu.concatenate %301, %302, %303, %304 in 1 : vector<16x16xf32>, vector<16x16xf32>, vector<16x16xf32>, vector<16x16xf32> -> vector<16x64xf32>
    %306 = arith.truncf %305 : vector<16x64xf32> to vector<16x64xbf16>
    %c0_122 = arith.constant 0 : index
    %c0_123 = arith.constant 0 : index
    %307 = vector.load %arg8[%c0_122, %c0_123] : memref<64x64xbf16, #tpu.memory_space<vmem>>, vector<64x64xbf16>
    %cst_124 = arith.constant dense<0.000000e+00> : vector<16x64xf32>
    %308 = tpu.matmul %306, %307, %cst_124 {dimension_numbers = #tpu.dot_dimension_numbers<[1], [0], [0], [1], [0, 0, 1, 1], [], []>} : vector<16x64xbf16>, vector<64x64xbf16>, vector<16x64xf32> -> vector<16x64xf32>
    %c0_125 = arith.constant 0 : index
    %c13 = arith.constant 13 : index
    %309 = vector.load %arg6[%c0_125, %c13] : memref<32x20xf32, #tpu.memory_space<vmem>>, vector<16x1xf32>
    %310 = vector.broadcast %309 : vector<16x1xf32> to vector<16x64xf32>
    %311 = arith.addf %308, %310 : vector<16x64xf32>
    %312 = arith.addf %311, %17 : vector<16x64xf32>
    %313 = arith.truncf %312 : vector<16x64xf32> to vector<16x64xbf16>
    %314 = tpu.iota {dimensions = array<i32: 1>} : vector<1x64xi32>
    %c3_i32_126 = arith.constant 3 : i32
    %315 = vector.broadcast %c3_i32_126 : i32 to vector<1x64xi32>
    %316 = arith.shrsi %314, %315 : vector<1x64xi32>
    %c7_i32 = arith.constant 7 : i32
    %317 = vector.broadcast %c7_i32 : i32 to vector<1x64xi32>
    %318 = arith.andi %314, %317 : vector<1x64xi32>
    %cst_127 = arith.constant 0.000000e+00 : bf16
    %319 = vector.broadcast %cst_127 : bf16 to vector<16x9xbf16>
    %320 = vector.extract_strided_slice %313 {offsets = [0, 0], sizes = [16, 55], strides = [1, 1]} : vector<16x64xbf16> to vector<16x55xbf16>
    %321 = tpu.concatenate %319, %320 in 1 : vector<16x9xbf16>, vector<16x55xbf16> -> vector<16x64xbf16>
    %c1_i32_128 = arith.constant 1 : i32
    %322 = vector.broadcast %c1_i32_128 : i32 to vector<1x64xi32>
    %323 = arith.cmpi sge, %316, %322 : vector<1x64xi32>
    %c1_i32_129 = arith.constant 1 : i32
    %324 = vector.broadcast %c1_i32_129 : i32 to vector<1x64xi32>
    %325 = arith.cmpi sge, %318, %324 : vector<1x64xi32>
    %326 = arith.andi %323, %325 : vector<1x64xi1>
    %cst_130 = arith.constant 0.000000e+00 : bf16
    %327 = vector.broadcast %cst_130 : bf16 to vector<16x64xbf16>
    %328 = vector.shape_cast %326 : vector<1x64xi1> to vector<1x64xi1>
    %329 = vector.broadcast %328 : vector<1x64xi1> to vector<16x64xi1>
    %330 = arith.select %329, %321, %327 : vector<16x64xi1>, vector<16x64xbf16>
    %cst_131 = arith.constant 0.000000e+00 : bf16
    %331 = vector.broadcast %cst_131 : bf16 to vector<16x8xbf16>
    %332 = vector.extract_strided_slice %313 {offsets = [0, 0], sizes = [16, 56], strides = [1, 1]} : vector<16x64xbf16> to vector<16x56xbf16>
    %333 = tpu.concatenate %331, %332 in 1 : vector<16x8xbf16>, vector<16x56xbf16> -> vector<16x64xbf16>
    %c1_i32_132 = arith.constant 1 : i32
    %334 = vector.broadcast %c1_i32_132 : i32 to vector<1x64xi32>
    %335 = arith.cmpi sge, %316, %334 : vector<1x64xi32>
    %cst_133 = arith.constant 0.000000e+00 : bf16
    %336 = vector.broadcast %cst_133 : bf16 to vector<16x64xbf16>
    %337 = vector.shape_cast %335 : vector<1x64xi1> to vector<1x64xi1>
    %338 = vector.broadcast %337 : vector<1x64xi1> to vector<16x64xi1>
    %339 = arith.select %338, %333, %336 : vector<16x64xi1>, vector<16x64xbf16>
    %cst_134 = arith.constant 0.000000e+00 : bf16
    %340 = vector.broadcast %cst_134 : bf16 to vector<16x7xbf16>
    %341 = vector.extract_strided_slice %313 {offsets = [0, 0], sizes = [16, 57], strides = [1, 1]} : vector<16x64xbf16> to vector<16x57xbf16>
    %342 = tpu.concatenate %340, %341 in 1 : vector<16x7xbf16>, vector<16x57xbf16> -> vector<16x64xbf16>
    %c1_i32_135 = arith.constant 1 : i32
    %343 = vector.broadcast %c1_i32_135 : i32 to vector<1x64xi32>
    %344 = arith.cmpi sge, %316, %343 : vector<1x64xi32>
    %c7_i32_136 = arith.constant 7 : i32
    %345 = vector.broadcast %c7_i32_136 : i32 to vector<1x64xi32>
    %346 = arith.cmpi slt, %318, %345 : vector<1x64xi32>
    %347 = arith.andi %344, %346 : vector<1x64xi1>
    %cst_137 = arith.constant 0.000000e+00 : bf16
    %348 = vector.broadcast %cst_137 : bf16 to vector<16x64xbf16>
    %349 = vector.shape_cast %347 : vector<1x64xi1> to vector<1x64xi1>
    %350 = vector.broadcast %349 : vector<1x64xi1> to vector<16x64xi1>
    %351 = arith.select %350, %342, %348 : vector<16x64xi1>, vector<16x64xbf16>
    %cst_138 = arith.constant 0.000000e+00 : bf16
    %352 = vector.broadcast %cst_138 : bf16 to vector<16x1xbf16>
    %353 = vector.extract_strided_slice %313 {offsets = [0, 0], sizes = [16, 63], strides = [1, 1]} : vector<16x64xbf16> to vector<16x63xbf16>
    %354 = tpu.concatenate %352, %353 in 1 : vector<16x1xbf16>, vector<16x63xbf16> -> vector<16x64xbf16>
    %c1_i32_139 = arith.constant 1 : i32
    %355 = vector.broadcast %c1_i32_139 : i32 to vector<1x64xi32>
    %356 = arith.cmpi sge, %318, %355 : vector<1x64xi32>
    %cst_140 = arith.constant 0.000000e+00 : bf16
    %357 = vector.broadcast %cst_140 : bf16 to vector<16x64xbf16>
    %358 = vector.shape_cast %356 : vector<1x64xi1> to vector<1x64xi1>
    %359 = vector.broadcast %358 : vector<1x64xi1> to vector<16x64xi1>
    %360 = arith.select %359, %354, %357 : vector<16x64xi1>, vector<16x64xbf16>
    %361 = vector.extract_strided_slice %313 {offsets = [0, 1], sizes = [16, 63], strides = [1, 1]} : vector<16x64xbf16> to vector<16x63xbf16>
    %cst_141 = arith.constant 0.000000e+00 : bf16
    %362 = vector.broadcast %cst_141 : bf16 to vector<16x1xbf16>
    %363 = tpu.concatenate %361, %362 in 1 : vector<16x63xbf16>, vector<16x1xbf16> -> vector<16x64xbf16>
    %c7_i32_142 = arith.constant 7 : i32
    %364 = vector.broadcast %c7_i32_142 : i32 to vector<1x64xi32>
    %365 = arith.cmpi slt, %318, %364 : vector<1x64xi32>
    %cst_143 = arith.constant 0.000000e+00 : bf16
    %366 = vector.broadcast %cst_143 : bf16 to vector<16x64xbf16>
    %367 = vector.shape_cast %365 : vector<1x64xi1> to vector<1x64xi1>
    %368 = vector.broadcast %367 : vector<1x64xi1> to vector<16x64xi1>
    %369 = arith.select %368, %363, %366 : vector<16x64xi1>, vector<16x64xbf16>
    %370 = vector.extract_strided_slice %313 {offsets = [0, 7], sizes = [16, 57], strides = [1, 1]} : vector<16x64xbf16> to vector<16x57xbf16>
    %cst_144 = arith.constant 0.000000e+00 : bf16
    %371 = vector.broadcast %cst_144 : bf16 to vector<16x7xbf16>
    %372 = tpu.concatenate %370, %371 in 1 : vector<16x57xbf16>, vector<16x7xbf16> -> vector<16x64xbf16>
    %c7_i32_145 = arith.constant 7 : i32
    %373 = vector.broadcast %c7_i32_145 : i32 to vector<1x64xi32>
    %374 = arith.cmpi slt, %316, %373 : vector<1x64xi32>
    %c1_i32_146 = arith.constant 1 : i32
    %375 = vector.broadcast %c1_i32_146 : i32 to vector<1x64xi32>
    %376 = arith.cmpi sge, %318, %375 : vector<1x64xi32>
    %377 = arith.andi %374, %376 : vector<1x64xi1>
    %cst_147 = arith.constant 0.000000e+00 : bf16
    %378 = vector.broadcast %cst_147 : bf16 to vector<16x64xbf16>
    %379 = vector.shape_cast %377 : vector<1x64xi1> to vector<1x64xi1>
    %380 = vector.broadcast %379 : vector<1x64xi1> to vector<16x64xi1>
    %381 = arith.select %380, %372, %378 : vector<16x64xi1>, vector<16x64xbf16>
    %382 = vector.extract_strided_slice %313 {offsets = [0, 8], sizes = [16, 56], strides = [1, 1]} : vector<16x64xbf16> to vector<16x56xbf16>
    %cst_148 = arith.constant 0.000000e+00 : bf16
    %383 = vector.broadcast %cst_148 : bf16 to vector<16x8xbf16>
    %384 = tpu.concatenate %382, %383 in 1 : vector<16x56xbf16>, vector<16x8xbf16> -> vector<16x64xbf16>
    %c7_i32_149 = arith.constant 7 : i32
    %385 = vector.broadcast %c7_i32_149 : i32 to vector<1x64xi32>
    %386 = arith.cmpi slt, %316, %385 : vector<1x64xi32>
    %cst_150 = arith.constant 0.000000e+00 : bf16
    %387 = vector.broadcast %cst_150 : bf16 to vector<16x64xbf16>
    %388 = vector.shape_cast %386 : vector<1x64xi1> to vector<1x64xi1>
    %389 = vector.broadcast %388 : vector<1x64xi1> to vector<16x64xi1>
    %390 = arith.select %389, %384, %387 : vector<16x64xi1>, vector<16x64xbf16>
    %391 = vector.extract_strided_slice %313 {offsets = [0, 9], sizes = [16, 55], strides = [1, 1]} : vector<16x64xbf16> to vector<16x55xbf16>
    %cst_151 = arith.constant 0.000000e+00 : bf16
    %392 = vector.broadcast %cst_151 : bf16 to vector<16x9xbf16>
    %393 = tpu.concatenate %391, %392 in 1 : vector<16x55xbf16>, vector<16x9xbf16> -> vector<16x64xbf16>
    %c7_i32_152 = arith.constant 7 : i32
    %394 = vector.broadcast %c7_i32_152 : i32 to vector<1x64xi32>
    %395 = arith.cmpi slt, %316, %394 : vector<1x64xi32>
    %c7_i32_153 = arith.constant 7 : i32
    %396 = vector.broadcast %c7_i32_153 : i32 to vector<1x64xi32>
    %397 = arith.cmpi slt, %318, %396 : vector<1x64xi32>
    %398 = arith.andi %395, %397 : vector<1x64xi1>
    %cst_154 = arith.constant 0.000000e+00 : bf16
    %399 = vector.broadcast %cst_154 : bf16 to vector<16x64xbf16>
    %400 = vector.shape_cast %398 : vector<1x64xi1> to vector<1x64xi1>
    %401 = vector.broadcast %400 : vector<1x64xi1> to vector<16x64xi1>
    %402 = arith.select %401, %393, %399 : vector<16x64xi1>, vector<16x64xbf16>
    %403 = tpu.concatenate %330, %339, %351, %360, %313, %369, %381, %390, %402 in 0 : vector<16x64xbf16>, vector<16x64xbf16>, vector<16x64xbf16>, vector<16x64xbf16>, vector<16x64xbf16>, vector<16x64xbf16>, vector<16x64xbf16>, vector<16x64xbf16>, vector<16x64xbf16> -> vector<144x64xbf16>
    %c0_155 = arith.constant 0 : index
    %c5888 = arith.constant 5888 : index
    %404 = vector.load %arg5[%c0_155, %c5888] : memref<64x6784xbf16, #tpu.memory_space<vmem>>, vector<16x144xbf16>
    %cst_156 = arith.constant dense<0.000000e+00> : vector<16x64xf32>
    %405 = tpu.matmul %404, %403, %cst_156 {dimension_numbers = #tpu.dot_dimension_numbers<[1], [0], [0], [1], [0, 0, 1, 1], [], []>} : vector<16x144xbf16>, vector<144x64xbf16>, vector<16x64xf32> -> vector<16x64xf32>
    %c0_157 = arith.constant 0 : index
    %c14 = arith.constant 14 : index
    %406 = vector.load %arg6[%c0_157, %c14] : memref<32x20xf32, #tpu.memory_space<vmem>>, vector<16x1xf32>
    %407 = vector.broadcast %406 : vector<16x1xf32> to vector<16x64xf32>
    %408 = arith.addf %405, %407 : vector<16x64xf32>
    %409 = arith.truncf %408 : vector<16x64xf32> to vector<16x64xbf16>
    %c0_158 = arith.constant 0 : index
    %c6144 = arith.constant 6144 : index
    %410 = vector.load %arg5[%c0_158, %c6144] : memref<64x6784xbf16, #tpu.memory_space<vmem>>, vector<4x16xbf16>
    %cst_159 = arith.constant dense<0.000000e+00> : vector<4x64xf32>
    %411 = tpu.matmul %410, %409, %cst_159 {dimension_numbers = #tpu.dot_dimension_numbers<[1], [0], [0], [1], [0, 0, 1, 1], [], []>} : vector<4x16xbf16>, vector<16x64xbf16>, vector<4x64xf32> -> vector<4x64xf32>
    %c0_160 = arith.constant 0 : index
    %c15 = arith.constant 15 : index
    %412 = vector.load %arg6[%c0_160, %c15] : memref<32x20xf32, #tpu.memory_space<vmem>>, vector<4x1xf32>
    %413 = vector.broadcast %412 : vector<4x1xf32> to vector<4x64xf32>
    %414 = arith.addf %411, %413 : vector<4x64xf32>
    %cst_161 = arith.constant 0.000000e+00 : f32
    %415 = vector.broadcast %cst_161 : f32 to vector<4x64xf32>
    %416 = arith.maximumf %414, %415 : vector<4x64xf32>
    %c0_162 = arith.constant 0 : index
    %c6272 = arith.constant 6272 : index
    %417 = vector.load %arg5[%c0_162, %c6272] : memref<64x6784xbf16, #tpu.memory_space<vmem>>, vector<16x4xbf16>
    %418 = arith.truncf %416 : vector<4x64xf32> to vector<4x64xbf16>
    %cst_163 = arith.constant dense<0.000000e+00> : vector<16x64xf32>
    %419 = tpu.matmul %417, %418, %cst_163 {dimension_numbers = #tpu.dot_dimension_numbers<[1], [0], [0], [1], [0, 0, 1, 1], [], []>} : vector<16x4xbf16>, vector<4x64xbf16>, vector<16x64xf32> -> vector<16x64xf32>
    %c0_164 = arith.constant 0 : index
    %c16 = arith.constant 16 : index
    %420 = vector.load %arg6[%c0_164, %c16] : memref<32x20xf32, #tpu.memory_space<vmem>>, vector<16x1xf32>
    %421 = vector.broadcast %420 : vector<16x1xf32> to vector<16x64xf32>
    %422 = arith.addf %419, %421 : vector<16x64xf32>
    %423 = arith.negf %422 : vector<16x64xf32>
    %424 = math.exp %423 : vector<16x64xf32>
    %cst_165 = arith.constant 1.000000e+00 : f32
    %425 = vector.broadcast %cst_165 : f32 to vector<16x64xf32>
    %426 = arith.addf %425, %424 : vector<16x64xf32>
    %427 = arith.divf %425, %426 : vector<16x64xf32>
    %428 = arith.mulf %408, %427 : vector<16x64xf32>
    %c0_166 = arith.constant 0 : index
    %c6400 = arith.constant 6400 : index
    %429 = vector.load %arg5[%c0_166, %c6400] : memref<64x6784xbf16, #tpu.memory_space<vmem>>, vector<32x16xbf16>
    %430 = arith.truncf %428 : vector<16x64xf32> to vector<16x64xbf16>
    %cst_167 = arith.constant dense<0.000000e+00> : vector<32x64xf32>
    %431 = tpu.matmul %429, %430, %cst_167 {dimension_numbers = #tpu.dot_dimension_numbers<[1], [0], [0], [1], [0, 0, 1, 1], [], []>} : vector<32x16xbf16>, vector<16x64xbf16>, vector<32x64xf32> -> vector<32x64xf32>
    %432 = vector.extract_strided_slice %431 {offsets = [0, 0], sizes = [8, 64], strides = [1, 1]} : vector<32x64xf32> to vector<8x64xf32>
    %433 = vector.extract_strided_slice %431 {offsets = [8, 0], sizes = [8, 64], strides = [1, 1]} : vector<32x64xf32> to vector<8x64xf32>
    %434 = vector.extract_strided_slice %431 {offsets = [16, 0], sizes = [8, 64], strides = [1, 1]} : vector<32x64xf32> to vector<8x64xf32>
    %435 = vector.extract_strided_slice %431 {offsets = [24, 0], sizes = [8, 64], strides = [1, 1]} : vector<32x64xf32> to vector<8x64xf32>
    %436 = tpu.concatenate %432, %433, %434, %435 in 1 : vector<8x64xf32>, vector<8x64xf32>, vector<8x64xf32>, vector<8x64xf32> -> vector<8x256xf32>
    %437 = arith.truncf %436 : vector<8x256xf32> to vector<8x256xbf16>
    %c0_168 = arith.constant 0 : index
    %c0_169 = arith.constant 0 : index
    %438 = vector.load %arg9[%c0_168, %c0_169] : memref<256x256xbf16, #tpu.memory_space<vmem>>, vector<256x256xbf16>
    %cst_170 = arith.constant dense<0.000000e+00> : vector<8x256xf32>
    %439 = tpu.matmul %437, %438, %cst_170 {dimension_numbers = #tpu.dot_dimension_numbers<[1], [0], [0], [1], [0, 0, 1, 1], [], []>} : vector<8x256xbf16>, vector<256x256xbf16>, vector<8x256xf32> -> vector<8x256xf32>
    %c0_171 = arith.constant 0 : index
    %c17 = arith.constant 17 : index
    %440 = vector.load %arg6[%c0_171, %c17] : memref<32x20xf32, #tpu.memory_space<vmem>>, vector<8x1xf32>
    %441 = vector.broadcast %440 : vector<8x1xf32> to vector<8x256xf32>
    %442 = arith.addf %439, %441 : vector<8x256xf32>
    %443 = arith.addf %442, %8 : vector<8x256xf32>
    %444 = arith.truncf %443 : vector<8x256xf32> to vector<8x256xbf16>
    %445 = tpu.iota {dimensions = array<i32: 1>} : vector<1x256xi32>
    %c4_i32 = arith.constant 4 : i32
    %446 = vector.broadcast %c4_i32 : i32 to vector<1x256xi32>
    %447 = arith.shrsi %445, %446 : vector<1x256xi32>
    %c15_i32 = arith.constant 15 : i32
    %448 = vector.broadcast %c15_i32 : i32 to vector<1x256xi32>
    %449 = arith.andi %445, %448 : vector<1x256xi32>
    %cst_172 = arith.constant 0.000000e+00 : bf16
    %450 = vector.broadcast %cst_172 : bf16 to vector<8x17xbf16>
    %451 = vector.extract_strided_slice %444 {offsets = [0, 0], sizes = [8, 239], strides = [1, 1]} : vector<8x256xbf16> to vector<8x239xbf16>
    %452 = tpu.concatenate %450, %451 in 1 : vector<8x17xbf16>, vector<8x239xbf16> -> vector<8x256xbf16>
    %c1_i32_173 = arith.constant 1 : i32
    %453 = vector.broadcast %c1_i32_173 : i32 to vector<1x256xi32>
    %454 = arith.cmpi sge, %447, %453 : vector<1x256xi32>
    %c1_i32_174 = arith.constant 1 : i32
    %455 = vector.broadcast %c1_i32_174 : i32 to vector<1x256xi32>
    %456 = arith.cmpi sge, %449, %455 : vector<1x256xi32>
    %457 = arith.andi %454, %456 : vector<1x256xi1>
    %cst_175 = arith.constant 0.000000e+00 : bf16
    %458 = vector.broadcast %cst_175 : bf16 to vector<8x256xbf16>
    %459 = vector.shape_cast %457 : vector<1x256xi1> to vector<1x256xi1>
    %460 = vector.broadcast %459 : vector<1x256xi1> to vector<8x256xi1>
    %461 = arith.select %460, %452, %458 : vector<8x256xi1>, vector<8x256xbf16>
    %cst_176 = arith.constant 0.000000e+00 : bf16
    %462 = vector.broadcast %cst_176 : bf16 to vector<8x16xbf16>
    %463 = vector.extract_strided_slice %444 {offsets = [0, 0], sizes = [8, 240], strides = [1, 1]} : vector<8x256xbf16> to vector<8x240xbf16>
    %464 = tpu.concatenate %462, %463 in 1 : vector<8x16xbf16>, vector<8x240xbf16> -> vector<8x256xbf16>
    %c1_i32_177 = arith.constant 1 : i32
    %465 = vector.broadcast %c1_i32_177 : i32 to vector<1x256xi32>
    %466 = arith.cmpi sge, %447, %465 : vector<1x256xi32>
    %cst_178 = arith.constant 0.000000e+00 : bf16
    %467 = vector.broadcast %cst_178 : bf16 to vector<8x256xbf16>
    %468 = vector.shape_cast %466 : vector<1x256xi1> to vector<1x256xi1>
    %469 = vector.broadcast %468 : vector<1x256xi1> to vector<8x256xi1>
    %470 = arith.select %469, %464, %467 : vector<8x256xi1>, vector<8x256xbf16>
    %cst_179 = arith.constant 0.000000e+00 : bf16
    %471 = vector.broadcast %cst_179 : bf16 to vector<8x15xbf16>
    %472 = vector.extract_strided_slice %444 {offsets = [0, 0], sizes = [8, 241], strides = [1, 1]} : vector<8x256xbf16> to vector<8x241xbf16>
    %473 = tpu.concatenate %471, %472 in 1 : vector<8x15xbf16>, vector<8x241xbf16> -> vector<8x256xbf16>
    %c1_i32_180 = arith.constant 1 : i32
    %474 = vector.broadcast %c1_i32_180 : i32 to vector<1x256xi32>
    %475 = arith.cmpi sge, %447, %474 : vector<1x256xi32>
    %c15_i32_181 = arith.constant 15 : i32
    %476 = vector.broadcast %c15_i32_181 : i32 to vector<1x256xi32>
    %477 = arith.cmpi slt, %449, %476 : vector<1x256xi32>
    %478 = arith.andi %475, %477 : vector<1x256xi1>
    %cst_182 = arith.constant 0.000000e+00 : bf16
    %479 = vector.broadcast %cst_182 : bf16 to vector<8x256xbf16>
    %480 = vector.shape_cast %478 : vector<1x256xi1> to vector<1x256xi1>
    %481 = vector.broadcast %480 : vector<1x256xi1> to vector<8x256xi1>
    %482 = arith.select %481, %473, %479 : vector<8x256xi1>, vector<8x256xbf16>
    %cst_183 = arith.constant 0.000000e+00 : bf16
    %483 = vector.broadcast %cst_183 : bf16 to vector<8x1xbf16>
    %484 = vector.extract_strided_slice %444 {offsets = [0, 0], sizes = [8, 255], strides = [1, 1]} : vector<8x256xbf16> to vector<8x255xbf16>
    %485 = tpu.concatenate %483, %484 in 1 : vector<8x1xbf16>, vector<8x255xbf16> -> vector<8x256xbf16>
    %c1_i32_184 = arith.constant 1 : i32
    %486 = vector.broadcast %c1_i32_184 : i32 to vector<1x256xi32>
    %487 = arith.cmpi sge, %449, %486 : vector<1x256xi32>
    %cst_185 = arith.constant 0.000000e+00 : bf16
    %488 = vector.broadcast %cst_185 : bf16 to vector<8x256xbf16>
    %489 = vector.shape_cast %487 : vector<1x256xi1> to vector<1x256xi1>
    %490 = vector.broadcast %489 : vector<1x256xi1> to vector<8x256xi1>
    %491 = arith.select %490, %485, %488 : vector<8x256xi1>, vector<8x256xbf16>
    %492 = vector.extract_strided_slice %444 {offsets = [0, 1], sizes = [8, 255], strides = [1, 1]} : vector<8x256xbf16> to vector<8x255xbf16>
    %cst_186 = arith.constant 0.000000e+00 : bf16
    %493 = vector.broadcast %cst_186 : bf16 to vector<8x1xbf16>
    %494 = tpu.concatenate %492, %493 in 1 : vector<8x255xbf16>, vector<8x1xbf16> -> vector<8x256xbf16>
    %c15_i32_187 = arith.constant 15 : i32
    %495 = vector.broadcast %c15_i32_187 : i32 to vector<1x256xi32>
    %496 = arith.cmpi slt, %449, %495 : vector<1x256xi32>
    %cst_188 = arith.constant 0.000000e+00 : bf16
    %497 = vector.broadcast %cst_188 : bf16 to vector<8x256xbf16>
    %498 = vector.shape_cast %496 : vector<1x256xi1> to vector<1x256xi1>
    %499 = vector.broadcast %498 : vector<1x256xi1> to vector<8x256xi1>
    %500 = arith.select %499, %494, %497 : vector<8x256xi1>, vector<8x256xbf16>
    %501 = vector.extract_strided_slice %444 {offsets = [0, 15], sizes = [8, 241], strides = [1, 1]} : vector<8x256xbf16> to vector<8x241xbf16>
    %cst_189 = arith.constant 0.000000e+00 : bf16
    %502 = vector.broadcast %cst_189 : bf16 to vector<8x15xbf16>
    %503 = tpu.concatenate %501, %502 in 1 : vector<8x241xbf16>, vector<8x15xbf16> -> vector<8x256xbf16>
    %c15_i32_190 = arith.constant 15 : i32
    %504 = vector.broadcast %c15_i32_190 : i32 to vector<1x256xi32>
    %505 = arith.cmpi slt, %447, %504 : vector<1x256xi32>
    %c1_i32_191 = arith.constant 1 : i32
    %506 = vector.broadcast %c1_i32_191 : i32 to vector<1x256xi32>
    %507 = arith.cmpi sge, %449, %506 : vector<1x256xi32>
    %508 = arith.andi %505, %507 : vector<1x256xi1>
    %cst_192 = arith.constant 0.000000e+00 : bf16
    %509 = vector.broadcast %cst_192 : bf16 to vector<8x256xbf16>
    %510 = vector.shape_cast %508 : vector<1x256xi1> to vector<1x256xi1>
    %511 = vector.broadcast %510 : vector<1x256xi1> to vector<8x256xi1>
    %512 = arith.select %511, %503, %509 : vector<8x256xi1>, vector<8x256xbf16>
    %513 = vector.extract_strided_slice %444 {offsets = [0, 16], sizes = [8, 240], strides = [1, 1]} : vector<8x256xbf16> to vector<8x240xbf16>
    %cst_193 = arith.constant 0.000000e+00 : bf16
    %514 = vector.broadcast %cst_193 : bf16 to vector<8x16xbf16>
    %515 = tpu.concatenate %513, %514 in 1 : vector<8x240xbf16>, vector<8x16xbf16> -> vector<8x256xbf16>
    %c15_i32_194 = arith.constant 15 : i32
    %516 = vector.broadcast %c15_i32_194 : i32 to vector<1x256xi32>
    %517 = arith.cmpi slt, %447, %516 : vector<1x256xi32>
    %cst_195 = arith.constant 0.000000e+00 : bf16
    %518 = vector.broadcast %cst_195 : bf16 to vector<8x256xbf16>
    %519 = vector.shape_cast %517 : vector<1x256xi1> to vector<1x256xi1>
    %520 = vector.broadcast %519 : vector<1x256xi1> to vector<8x256xi1>
    %521 = arith.select %520, %515, %518 : vector<8x256xi1>, vector<8x256xbf16>
    %522 = vector.extract_strided_slice %444 {offsets = [0, 17], sizes = [8, 239], strides = [1, 1]} : vector<8x256xbf16> to vector<8x239xbf16>
    %cst_196 = arith.constant 0.000000e+00 : bf16
    %523 = vector.broadcast %cst_196 : bf16 to vector<8x17xbf16>
    %524 = tpu.concatenate %522, %523 in 1 : vector<8x239xbf16>, vector<8x17xbf16> -> vector<8x256xbf16>
    %c15_i32_197 = arith.constant 15 : i32
    %525 = vector.broadcast %c15_i32_197 : i32 to vector<1x256xi32>
    %526 = arith.cmpi slt, %447, %525 : vector<1x256xi32>
    %c15_i32_198 = arith.constant 15 : i32
    %527 = vector.broadcast %c15_i32_198 : i32 to vector<1x256xi32>
    %528 = arith.cmpi slt, %449, %527 : vector<1x256xi32>
    %529 = arith.andi %526, %528 : vector<1x256xi1>
    %cst_199 = arith.constant 0.000000e+00 : bf16
    %530 = vector.broadcast %cst_199 : bf16 to vector<8x256xbf16>
    %531 = vector.shape_cast %529 : vector<1x256xi1> to vector<1x256xi1>
    %532 = vector.broadcast %531 : vector<1x256xi1> to vector<8x256xi1>
    %533 = arith.select %532, %524, %530 : vector<8x256xi1>, vector<8x256xbf16>
    %534 = tpu.concatenate %461, %470, %482, %491, %444, %500, %512, %521, %533 in 0 : vector<8x256xbf16>, vector<8x256xbf16>, vector<8x256xbf16>, vector<8x256xbf16>, vector<8x256xbf16>, vector<8x256xbf16>, vector<8x256xbf16>, vector<8x256xbf16>, vector<8x256xbf16> -> vector<72x256xbf16>
    %c0_200 = arith.constant 0 : index
    %c6528 = arith.constant 6528 : index
    %535 = vector.load %arg5[%c0_200, %c6528] : memref<64x6784xbf16, #tpu.memory_space<vmem>>, vector<8x72xbf16>
    %cst_201 = arith.constant dense<0.000000e+00> : vector<8x256xf32>
    %536 = tpu.matmul %535, %534, %cst_201 {dimension_numbers = #tpu.dot_dimension_numbers<[1], [0], [0], [1], [0, 0, 1, 1], [], []>} : vector<8x72xbf16>, vector<72x256xbf16>, vector<8x256xf32> -> vector<8x256xf32>
    %c0_202 = arith.constant 0 : index
    %c18 = arith.constant 18 : index
    %537 = vector.load %arg6[%c0_202, %c18] : memref<32x20xf32, #tpu.memory_space<vmem>>, vector<8x1xf32>
    %538 = vector.broadcast %537 : vector<8x1xf32> to vector<8x256xf32>
    %539 = arith.addf %536, %538 : vector<8x256xf32>
    %c0_203 = arith.constant 0 : index
    %c6656 = arith.constant 6656 : index
    %540 = vector.load %arg5[%c0_203, %c6656] : memref<64x6784xbf16, #tpu.memory_space<vmem>>, vector<1x8xbf16>
    %541 = arith.truncf %539 : vector<8x256xf32> to vector<8x256xbf16>
    %cst_204 = arith.constant dense<0.000000e+00> : vector<1x256xf32>
    %542 = tpu.matmul %540, %541, %cst_204 {dimension_numbers = #tpu.dot_dimension_numbers<[1], [0], [0], [1], [0, 0, 1, 1], [], []>} : vector<1x8xbf16>, vector<8x256xbf16>, vector<1x256xf32> -> vector<1x256xf32>
    %c0_205 = arith.constant 0 : index
    %c19 = arith.constant 19 : index
    %543 = vector.load %arg6[%c0_205, %c19] : memref<32x20xf32, #tpu.memory_space<vmem>>, vector<1x1xf32>
    %544 = vector.broadcast %543 : vector<1x1xf32> to vector<1x256xf32>
    %545 = arith.addf %542, %544 : vector<1x256xf32>
    %546 = arith.truncf %545 : vector<1x256xf32> to vector<1x256xbf16>
    %c0_206 = arith.constant 0 : index
    %c0_207 = arith.constant 0 : index
    %547 = vector.load %arg10[%c0_206, %c0_207] : memref<256x4096xbf16, #tpu.memory_space<vmem>>, vector<256x4096xbf16>
    %cst_208 = arith.constant dense<0.000000e+00> : vector<1x4096xf32>
    %548 = tpu.matmul %546, %547, %cst_208 {dimension_numbers = #tpu.dot_dimension_numbers<[1], [0], [0], [1], [0, 0, 1, 1], [], []>} : vector<1x256xbf16>, vector<256x4096xbf16>, vector<1x4096xf32> -> vector<1x4096xf32>
    %c0_209 = arith.constant 0 : index
    %c0_210 = arith.constant 0 : index
    %c0_211 = arith.constant 0 : index
    %549 = vector.load %arg11[%c0_209, %c0_210, %c0_211] : memref<1x1x4096xf32, #tpu.memory_space<vmem>>, vector<1x1x4096xf32>
    %550 = vector.shape_cast %549 : vector<1x1x4096xf32> to vector<1x4096xf32>
    %551 = vector.shape_cast %548 : vector<1x4096xf32> to vector<1x1x4096xf32>
    tpu.vector_store %arg11[%c0_209, %c0_210, %c0_211], %551 {strides = array<i32>} : memref<1x1x4096xf32, #tpu.memory_space<vmem>>, vector<1x1x4096xf32>,
    return
  }
  func.func @transform_0(%arg0: i32) -> (i32, i32, i32) {
    %c0_i32 = arith.constant 0 : i32
    %c0_i32_0 = arith.constant 0 : i32
    %c0_i32_1 = arith.constant 0 : i32
    return %arg0, %c0_i32, %c0_i32_0 : i32, i32, i32
  }
  func.func @transform_1(%arg0: i32) -> (i32, i32, i32) {
    %c0_i32 = arith.constant 0 : i32
    %c0_i32_0 = arith.constant 0 : i32
    %c0_i32_1 = arith.constant 0 : i32
    return %arg0, %c0_i32, %c0_i32_0 : i32, i32, i32
  }
  func.func @transform_2(%arg0: i32) -> (i32, i32, i32) {
    %c0_i32 = arith.constant 0 : i32
    %c0_i32_0 = arith.constant 0 : i32
    %c0_i32_1 = arith.constant 0 : i32
    return %arg0, %c0_i32, %c0_i32_0 : i32, i32, i32
  }
  func.func @transform_3(%arg0: i32) -> (i32, i32, i32) {
    %c0_i32 = arith.constant 0 : i32
    %c0_i32_0 = arith.constant 0 : i32
    %c0_i32_1 = arith.constant 0 : i32
    return %arg0, %c0_i32, %c0_i32_0 : i32, i32, i32
  }
  func.func @transform_4(%arg0: i32) -> (i32, i32) {
    %c0_i32 = arith.constant 0 : i32
    %c0_i32_0 = arith.constant 0 : i32
    %c0_i32_1 = arith.constant 0 : i32
    return %c0_i32, %c0_i32_0 : i32, i32
  }
  func.func @transform_5(%arg0: i32) -> (i32, i32) {
    %c0_i32 = arith.constant 0 : i32
    %c0_i32_0 = arith.constant 0 : i32
    %c0_i32_1 = arith.constant 0 : i32
    return %c0_i32, %c0_i32_0 : i32, i32
  }
  func.func @transform_6(%arg0: i32) -> (i32, i32) {
    %c0_i32 = arith.constant 0 : i32
    %c0_i32_0 = arith.constant 0 : i32
    %c0_i32_1 = arith.constant 0 : i32
    return %c0_i32, %c0_i32_0 : i32, i32
  }
  func.func @transform_7(%arg0: i32) -> (i32, i32) {
    %c0_i32 = arith.constant 0 : i32
    %c0_i32_0 = arith.constant 0 : i32
    %c0_i32_1 = arith.constant 0 : i32
    return %c0_i32, %c0_i32_0 : i32, i32
  }
  func.func @transform_8(%arg0: i32) -> (i32, i32) {
    %c0_i32 = arith.constant 0 : i32
    %c0_i32_0 = arith.constant 0 : i32
    %c0_i32_1 = arith.constant 0 : i32
    return %c0_i32, %c0_i32_0 : i32, i32
  }
  func.func @transform_9(%arg0: i32) -> (i32, i32) {
    %c0_i32 = arith.constant 0 : i32
    %c0_i32_0 = arith.constant 0 : i32
    %c0_i32_1 = arith.constant 0 : i32
    return %c0_i32, %c0_i32_0 : i32, i32
  }
  func.func @transform_10(%arg0: i32) -> (i32, i32, i32) {
    %c0_i32 = arith.constant 0 : i32
    %c0_i32_0 = arith.constant 0 : i32
    %c0_i32_1 = arith.constant 0 : i32
    return %arg0, %c0_i32, %c0_i32_0 : i32, i32, i32
  }
}

</mosaic_0001>

<llo_original>
// kernel: medlightnet_forward.1
$region0: #{medlightnet_forward.1}
  #allocation0 [shape = 'u32[]', space=smem, size = 0x4, offset = 0x4, fixed_abs, tag = 'smem constant byte address 0x4 - core index']
  #allocation1 [shape = 'u32[72,128]{1,0:T(1,128)}', space=vmem, size = 0x9000, scoped, tag = 'internal scratch']
  %s0 = inlined_call_operand.vmem [shape: bf16[2,48,256], index: 0, kind: input, shape index: {}]
  %s1 = inlined_call_operand.vmem [shape: bf16[2,192,64], index: 1, kind: input, shape index: {}]
  %s2 = inlined_call_operand.vmem [shape: bf16[2,768,16], index: 2, kind: input, shape index: {}]
  %s3 = inlined_call_operand.vmem [shape: bf16[2,3072,4], index: 3, kind: input, shape index: {}]
  %s4 = inlined_call_operand.vmem [shape: bf16[64,6784], index: 4, kind: input, shape index: {}]
  %s5 = inlined_call_operand.vmem [shape: f32[32,20], index: 5, kind: input, shape index: {}]
  %s6 = inlined_call_operand.vmem [shape: bf16[16,16], index: 6, kind: input, shape index: {}]
  %s7 = inlined_call_operand.vmem [shape: bf16[64,64], index: 7, kind: input, shape index: {}]
  %s8 = inlined_call_operand.vmem [shape: bf16[256,256], index: 8, kind: input, shape index: {}]
  %s9 = inlined_call_operand.vmem [shape: bf16[256,4096], index: 9, kind: input, shape index: {}]
  %s10 = inlined_call_operand.vmem [shape: f32[2,1,4096], index: 10, kind: output, shape index: {}]
  %s11 = sld [smem:[#allocation0]]
  $region73: #{medlightnet_forward.1} parent=0
    _
  %s13 = ssub.s32 1, %s11
  %s14 = scalar_select 0, %s13, %s11
  loop: start=0, step=1, limit=4
  $region2: #{medlightnet_forward.1} parent=0 // loop_pre_header
    _
  $region3: #{medlightnet_forward.1} parent=0 // loop_header
    %s16 = sphi 0, %s20
    %p17 = scmp.ge.s32.totalorder %s16, 4
    %s26 = sphi 0, %s28
    %s29 = sphi 0, %s26
    %s30 = sphi 0, %s29
    %s46 = sphi 0, %s30
    %s52 = sphi 0, %s54
    %s55 = sphi 0, %s52
    %s56 = sphi 0, %s55
    %s72 = sphi 0, %s56
    %s78 = sphi 0, %s80
    %s81 = sphi 0, %s78
    %s82 = sphi 0, %s81
    %s98 = sphi 0, %s82
    %s104 = sphi 0, %s106
    %s107 = sphi 0, %s104
    %s108 = sphi 0, %s107
    %s124 = sphi 0, %s108
    %s128 = sphi 0, %s128
    %s130 = sphi 0, %s128
    %s131 = sphi 0, %s130
    %s145 = sphi 0, %s131
    %s149 = sphi 0, %s149
    %s151 = sphi 0, %s149
    %s152 = sphi 0, %s151
    %s166 = sphi 0, %s152
    %s170 = sphi 0, %s170
    %s172 = sphi 0, %s170
    %s173 = sphi 0, %s172
    %s187 = sphi 0, %s173
    %s191 = sphi 0, %s191
    %s193 = sphi 0, %s191
    %s194 = sphi 0, %s193
    %s208 = sphi 0, %s194
    %s212 = sphi 0, %s212
    %s214 = sphi 0, %s212
    %s215 = sphi 0, %s214
    %s229 = sphi 0, %s215
    %s233 = sphi 0, %s233
    %s235 = sphi 0, %s233
    %s236 = sphi 0, %s235
    %s250 = sphi 0, %s236
    %s256 = sphi 0, %s258
    %s259 = sphi 0, %s256
    %s260 = sphi 0, %s259
    %s276 = sphi 0, %s260
  $region4: #{medlightnet_forward.1} parent=0 // loop_header_branch
    %19 = sbr.rel (%p17) target = $region8
  $region5: #{medlightnet_forward.1} parent=0 // loop_body
    %s21 = ssub.s32 %s16, 1
    %s22 = ssub.s32 %s16, 2
    %s23 = sadd.s32 %s16, 1
    %s24 = ssub.s32 %s16, %s23
    %p25 = scmp.eq.s32.totalorder %s24, 0
    %s27 = sadd.s32 %s26, 1
    %s28 = scalar_select %p25, %s26, %s27
    %p31 = pneg %p25
    %p32 = scmp.eq.s32.totalorder %s16, 1
    %p33 = por %p31, %p32
    %p34 = scmp.ne.s32.totalorder %s26, %s29
    %p35 = scmp.eq.s32.totalorder %s16, 0
    %p36 = por %p34, %p35
    %p37 = scmp.ne.s32.totalorder %s26, %s29
    %p38 = scmp.eq.s32.totalorder %s21, 1
    %p39 = por %p37, %p38
    %p40 = scmp.ne.s32.totalorder %s29, %s30
    %p41 = scmp.eq.s32.totalorder %s21, 0
    %p42 = por %p40, %p41
    %p43 = scmp.ne.s32.totalorder %s29, %s30
    %p44 = scmp.eq.s32.totalorder %s22, 1
    %p45 = por %p43, %p44
    %p47 = scmp.ne.s32.totalorder %s30, %s46
    %p48 = scmp.eq.s32.totalorder %s22, 0
    %p49 = por %p47, %p48
    %s50 = ssub.s32 %s16, %s23
    %p51 = scmp.eq.s32.totalorder %s50, 0
    %s53 = sadd.s32 %s52, 1
    %s54 = scalar_select %p51, %s52, %s53
    %p57 = pneg %p51
    %p58 = scmp.eq.s32.totalorder %s16, 1
    %p59 = por %p57, %p58
    %p60 = scmp.ne.s32.totalorder %s52, %s55
    %p61 = scmp.eq.s32.totalorder %s16, 0
    %p62 = por %p60, %p61
    %p63 = scmp.ne.s32.totalorder %s52, %s55
    %p64 = scmp.eq.s32.totalorder %s21, 1
    %p65 = por %p63, %p64
    %p66 = scmp.ne.s32.totalorder %s55, %s56
    %p67 = scmp.eq.s32.totalorder %s21, 0
    %p68 = por %p66, %p67
    %p69 = scmp.ne.s32.totalorder %s55, %s56
    %p70 = scmp.eq.s32.totalorder %s22, 1
    %p71 = por %p69, %p70
    %p73 = scmp.ne.s32.totalorder %s56, %s72
    %p74 = scmp.eq.s32.totalorder %s22, 0
    %p75 = por %p73, %p74
    %s76 = ssub.s32 %s16, %s23
    %p77 = scmp.eq.s32.totalorder %s76, 0
    %s79 = sadd.s32 %s78, 1
    %s80 = scalar_select %p77, %s78, %s79
    %p83 = pneg %p77
    %p84 = scmp.eq.s32.totalorder %s16, 1
    %p85 = por %p83, %p84
    %p86 = scmp.ne.s32.totalorder %s78, %s81
    %p87 = scmp.eq.s32.totalorder %s16, 0
    %p88 = por %p86, %p87
    %p89 = scmp.ne.s32.totalorder %s78, %s81
    %p90 = scmp.eq.s32.totalorder %s21, 1
    %p91 = por %p89, %p90
    %p92 = scmp.ne.s32.totalorder %s81, %s82
    %p93 = scmp.eq.s32.totalorder %s21, 0
    %p94 = por %p92, %p93
    %p95 = scmp.ne.s32.totalorder %s81, %s82
    %p96 = scmp.eq.s32.totalorder %s22, 1
    %p97 = por %p95, %p96
    %p99 = scmp.ne.s32.totalorder %s82, %s98
    %p100 = scmp.eq.s32.totalorder %s22, 0
    %p101 = por %p99, %p100
    %s102 = ssub.s32 %s16, %s23
    %p103 = scmp.eq.s32.totalorder %s102, 0
    %s105 = sadd.s32 %s104, 1
    %s106 = scalar_select %p103, %s104, %s105
    %p109 = pneg %p103
    %p110 = scmp.eq.s32.totalorder %s16, 1
    %p111 = por %p109, %p110
    %p112 = scmp.ne.s32.totalorder %s104, %s107
    %p113 = scmp.eq.s32.totalorder %s16, 0
    %p114 = por %p112, %p113
    %p115 = scmp.ne.s32.totalorder %s104, %s107
    %p116 = scmp.eq.s32.totalorder %s21, 1
    %p117 = por %p115, %p116
    %p118 = scmp.ne.s32.totalorder %s107, %s108
    %p119 = scmp.eq.s32.totalorder %s21, 0
    %p120 = por %p118, %p119
    %p121 = scmp.ne.s32.totalorder %s107, %s108
    %p122 = scmp.eq.s32.totalorder %s22, 1
    %p123 = por %p121, %p122
    %p125 = scmp.ne.s32.totalorder %s108, %s124
    %p126 = scmp.eq.s32.totalorder %s22, 0
    %p127 = por %p125, %p126
    %s129 = sadd.s32 %s128, 1
    %p132 = scmp.eq.s32.totalorder %s16, 1
    %p133 = scmp.ne.s32.totalorder %s128, %s130
    %p134 = scmp.eq.s32.totalorder %s16, 0
    %p135 = por %p133, %p134
    %p136 = scmp.ne.s32.totalorder %s128, %s130
    %p137 = scmp.eq.s32.totalorder %s21, 1
    %p138 = por %p136, %p137
    %p139 = scmp.ne.s32.totalorder %s130, %s131
    %p140 = scmp.eq.s32.totalorder %s21, 0
    %p141 = por %p139, %p140
    %p142 = scmp.ne.s32.totalorder %s130, %s131
    %p143 = scmp.eq.s32.totalorder %s22, 1
    %p144 = por %p142, %p143
    %p146 = scmp.ne.s32.totalorder %s131, %s145
    %p147 = scmp.eq.s32.totalorder %s22, 0
    %p148 = por %p146, %p147
    %s150 = sadd.s32 %s149, 1
    %p153 = scmp.eq.s32.totalorder %s16, 1
    %p154 = scmp.ne.s32.totalorder %s149, %s151
    %p155 = scmp.eq.s32.totalorder %s16, 0
    %p156 = por %p154, %p155
    %p157 = scmp.ne.s32.totalorder %s149, %s151
    %p158 = scmp.eq.s32.totalorder %s21, 1
    %p159 = por %p157, %p158
    %p160 = scmp.ne.s32.totalorder %s151, %s152
    %p161 = scmp.eq.s32.totalorder %s21, 0
    %p162 = por %p160, %p161
    %p163 = scmp.ne.s32.totalorder %s151, %s152
    %p164 = scmp.eq.s32.totalorder %s22, 1
    %p165 = por %p163, %p164
    %p167 = scmp.ne.s32.totalorder %s152, %s166
    %p168 = scmp.eq.s32.totalorder %s22, 0
    %p169 = por %p167, %p168
    %s171 = sadd.s32 %s170, 1
    %p174 = scmp.eq.s32.totalorder %s16, 1
    %p175 = scmp.ne.s32.totalorder %s170, %s172
    %p176 = scmp.eq.s32.totalorder %s16, 0
    %p177 = por %p175, %p176
    %p178 = scmp.ne.s32.totalorder %s170, %s172
    %p179 = scmp.eq.s32.totalorder %s21, 1
    %p180 = por %p178, %p179
    %p181 = scmp.ne.s32.totalorder %s172, %s173
    %p182 = scmp.eq.s32.totalorder %s21, 0
    %p183 = por %p181, %p182
    %p184 = scmp.ne.s32.totalorder %s172, %s173
    %p185 = scmp.eq.s32.totalorder %s22, 1
    %p186 = por %p184, %p185
    %p188 = scmp.ne.s32.totalorder %s173, %s187
    %p189 = scmp.eq.s32.totalorder %s22, 0
    %p190 = por %p188, %p189
    %s192 = sadd.s32 %s191, 1
    %p195 = scmp.eq.s32.totalorder %s16, 1
    %p196 = scmp.ne.s32.totalorder %s191, %s193
    %p197 = scmp.eq.s32.totalorder %s16, 0
    %p198 = por %p196, %p197
    %p199 = scmp.ne.s32.totalorder %s191, %s193
    %p200 = scmp.eq.s32.totalorder %s21, 1
    %p201 = por %p199, %p200
    %p202 = scmp.ne.s32.totalorder %s193, %s194
    %p203 = scmp.eq.s32.totalorder %s21, 0
    %p204 = por %p202, %p203
    %p205 = scmp.ne.s32.totalorder %s193, %s194
    %p206 = scmp.eq.s32.totalorder %s22, 1
    %p207 = por %p205, %p206
    %p209 = scmp.ne.s32.totalorder %s194, %s208
    %p210 = scmp.eq.s32.totalorder %s22, 0
    %p211 = por %p209, %p210
    %s213 = sadd.s32 %s212, 1
    %p216 = scmp.eq.s32.totalorder %s16, 1
    %p217 = scmp.ne.s32.totalorder %s212, %s214
    %p218 = scmp.eq.s32.totalorder %s16, 0
    %p219 = por %p217, %p218
    %p220 = scmp.ne.s32.totalorder %s212, %s214
    %p221 = scmp.eq.s32.totalorder %s21, 1
    %p222 = por %p220, %p221
    %p223 = scmp.ne.s32.totalorder %s214, %s215
    %p224 = scmp.eq.s32.totalorder %s21, 0
    %p225 = por %p223, %p224
    %p226 = scmp.ne.s32.totalorder %s214, %s215
    %p227 = scmp.eq.s32.totalorder %s22, 1
    %p228 = por %p226, %p227
    %p230 = scmp.ne.s32.totalorder %s215, %s229
    %p231 = scmp.eq.s32.totalorder %s22, 0
    %p232 = por %p230, %p231
    %s234 = sadd.s32 %s233, 1
    %p237 = scmp.eq.s32.totalorder %s16, 1
    %p238 = scmp.ne.s32.totalorder %s233, %s235
    %p239 = scmp.eq.s32.totalorder %s16, 0
    %p240 = por %p238, %p239
    %p241 = scmp.ne.s32.totalorder %s233, %s235
    %p242 = scmp.eq.s32.totalorder %s21, 1
    %p243 = por %p241, %p242
    %p244 = scmp.ne.s32.totalorder %s235, %s236
    %p245 = scmp.eq.s32.totalorder %s21, 0
    %p246 = por %p244, %p245
    %p247 = scmp.ne.s32.totalorder %s235, %s236
    %p248 = scmp.eq.s32.totalorder %s22, 1
    %p249 = por %p247, %p248
    %p251 = scmp.ne.s32.totalorder %s236, %s250
    %p252 = scmp.eq.s32.totalorder %s22, 0
    %p253 = por %p251, %p252
    %s254 = ssub.s32 %s16, %s23
    %p255 = scmp.eq.s32.totalorder %s254, 0
    %s257 = sadd.s32 %s256, 1
    %s258 = scalar_select %p255, %s256, %s257
    %p261 = pneg %p255
    %p262 = scmp.eq.s32.totalorder %s16, 1
    %p263 = por %p261, %p262
    %p264 = scmp.ne.s32.totalorder %s256, %s259
    %p265 = scmp.eq.s32.totalorder %s16, 0
    %p266 = por %p264, %p265
    %p267 = scmp.ne.s32.totalorder %s256, %s259
    %p268 = scmp.eq.s32.totalorder %s21, 1
    %p269 = por %p267, %p268
    %p270 = scmp.ne.s32.totalorder %s259, %s260
    %p271 = scmp.eq.s32.totalorder %s21, 0
    %p272 = por %p270, %p271
    %p273 = scmp.ne.s32.totalorder %s259, %s260
    %p274 = scmp.eq.s32.totalorder %s22, 1
    %p275 = por %p273, %p274
    %p277 = scmp.ne.s32.totalorder %s260, %s276
    %p278 = scmp.eq.s32.totalorder %s22, 0
    %p279 = por %p277, %p278
    %p280 = scmp.le.s32.totalorder 1, %s16
    %p281 = scmp.lt.s32.totalorder %s16, 3
    %p282 = pnand %p280, %p281
    %p283 = pneg %p282
    // Predicated region
    $region9: #{medlightnet_forward.1} parent=5 // pred_check
      _
    $region10: #{medlightnet_forward.1} parent=5 // pred_check_branch
      %285 = sbr.rel (%p282) target = $region12
    $region11: #{medlightnet_forward.1} parent=5 // pred_region
      %s286 = ssub.s32 %s16, 1
      // Predicated region
      $region13: #{medlightnet_forward.1} parent=11 // pred_check
        %p287 = pneg %p141
      $region14: #{medlightnet_forward.1} parent=11 // pred_check_branch
        %289 = sbr.rel (%p287) target = $region16
      $region15: #{medlightnet_forward.1} parent=11 // pred_region
        _
      $region16: #{medlightnet_forward.1} parent=11 // pred_fallthru
        _
      // Predicated region
      $region17: #{medlightnet_forward.1} parent=11 // pred_check
        %p290 = pneg %p162
      $region18: #{medlightnet_forward.1} parent=11 // pred_check_branch
        %292 = sbr.rel (%p290) target = $region20
      $region19: #{medlightnet_forward.1} parent=11 // pred_region
        _
      $region20: #{medlightnet_forward.1} parent=11 // pred_fallthru
        _
      // Predicated region
      $region21: #{medlightnet_forward.1} parent=11 // pred_check
        %p293 = pneg %p183
      $region22: #{medlightnet_forward.1} parent=11 // pred_check_branch
        %295 = sbr.rel (%p293) target = $region24
      $region23: #{medlightnet_forward.1} parent=11 // pred_region
        _
      $region24: #{medlightnet_forward.1} parent=11 // pred_fallthru
        _
      // Predicated region
      $region25: #{medlightnet_forward.1} parent=11 // pred_check
        %p296 = pneg %p204
      $region26: #{medlightnet_forward.1} parent=11 // pred_check_branch
        %298 = sbr.rel (%p296) target = $region28
      $region27: #{medlightnet_forward.1} parent=11 // pred_region
        _
      $region28: #{medlightnet_forward.1} parent=11 // pred_fallthru
        _
      // Predicated region
      $region29: #{medlightnet_forward.1} parent=11 // pred_check
        %p299 = pneg %p225
      $region30: #{medlightnet_forward.1} parent=11 // pred_check_branch
        %301 = sbr.rel (%p299) target = $region32
      $region31: #{medlightnet_forward.1} parent=11 // pred_region
        _
      $region32: #{medlightnet_forward.1} parent=11 // pred_fallthru
        _
      // Predicated region
      $region33: #{medlightnet_forward.1} parent=11 // pred_check
        %p302 = pneg %p246
      $region34: #{medlightnet_forward.1} parent=11 // pred_check_branch
        %304 = sbr.rel (%p302) target = $region36
      $region35: #{medlightnet_forward.1} parent=11 // pred_region
        _
      $region36: #{medlightnet_forward.1} parent=11 // pred_fallthru
        _
    $region12: #{medlightnet_forward.1} parent=5 // pred_fallthru
      _
    %p305 = scmp.lt.s32.totalorder %s16, 2
    // Predicated region
    $region37: #{medlightnet_forward.1} parent=5 // pred_check
      %p306 = pneg %p305
    $region38: #{medlightnet_forward.1} parent=5 // pred_check_branch
      %308 = sbr.rel (%p306) target = $region40
    $region39: #{medlightnet_forward.1} parent=5 // pred_region
      // Predicated region
      $region41: #{medlightnet_forward.1} parent=39 // pred_check
        %p309 = pneg %p36
      $region42: #{medlightnet_forward.1} parent=39 // pred_check_branch
        %311 = sbr.rel (%p309) target = $region44
      $region43: #{medlightnet_forward.1} parent=39 // pred_region
        %p312 = scmp.lt.s32.totalorder %s16, 1
        %s313 = scalar_select %p312, %s16, 1
        %s314 = smul.addr %s313, 12
        %s315 = smul.addr %s314, 4
        %s316 = scalar_lea.vmem %s0, %s315
      $region44: #{medlightnet_forward.1} parent=39 // pred_fallthru
        _
      // Predicated region
      $region45: #{medlightnet_forward.1} parent=39 // pred_check
        %p317 = pneg %p62
      $region46: #{medlightnet_forward.1} parent=39 // pred_check_branch
        %319 = sbr.rel (%p317) target = $region48
      $region47: #{medlightnet_forward.1} parent=39 // pred_region
        %p320 = scmp.lt.s32.totalorder %s16, 1
        %s321 = scalar_select %p320, %s16, 1
        %s322 = smul.addr %s321, 24
        %s323 = smul.addr %s322, 4
        %s324 = scalar_lea.vmem %s1, %s323
      $region48: #{medlightnet_forward.1} parent=39 // pred_fallthru
        _
      // Predicated region
      $region49: #{medlightnet_forward.1} parent=39 // pred_check
        %p325 = pneg %p88
      $region50: #{medlightnet_forward.1} parent=39 // pred_check_branch
        %327 = sbr.rel (%p325) target = $region52
      $region51: #{medlightnet_forward.1} parent=39 // pred_region
        %p328 = scmp.lt.s32.totalorder %s16, 1
        %s329 = scalar_select %p328, %s16, 1
        %s330 = smul.addr %s329, 96
        %s331 = smul.addr %s330, 4
        %s332 = scalar_lea.vmem %s2, %s331
      $region52: #{medlightnet_forward.1} parent=39 // pred_fallthru
        _
      // Predicated region
      $region53: #{medlightnet_forward.1} parent=39 // pred_check
        %p333 = pneg %p114
      $region54: #{medlightnet_forward.1} parent=39 // pred_check_branch
        %335 = sbr.rel (%p333) target = $region56
      $region55: #{medlightnet_forward.1} parent=39 // pred_region
        %p336 = scmp.lt.s32.totalorder %s16, 1
        %s337 = scalar_select %p336, %s16, 1
        %s338 = smul.addr %s337, 384
        %s339 = smul.addr %s338, 4
        %s340 = scalar_lea.vmem %s3, %s339
      $region56: #{medlightnet_forward.1} parent=39 // pred_fallthru
        _
    $region40: #{medlightnet_forward.1} parent=5 // pred_fallthru
      _
    %p341 = scmp.le.s32.totalorder 1, %s16
    %p342 = scmp.lt.s32.totalorder %s16, 3
    %p343 = pnand %p341, %p342
    %p344 = pneg %p343
    // Predicated region
    $region57: #{medlightnet_forward.1} parent=5 // pred_check
      _
    $region58: #{medlightnet_forward.1} parent=5 // pred_check_branch
      %346 = sbr.rel (%p343) target = $region60
    $region59: #{medlightnet_forward.1} parent=5 // pred_region
      %s347 = ssub.s32 %s16, 1
      %p348 = scmp.lt.s32.totalorder %s21, 1
      %s349 = scalar_select %p348, %s21, 1
      %s350 = smul.addr %s349, 12
      %s351 = smul.addr %s350, 4
      %s352 = scalar_lea.vmem %s0, %s351
      %p353 = pneg %p42
      %p354 = pneg %p39
      %p355 = scmp.lt.s32.totalorder %s21, 1
      %s356 = scalar_select %p355, %s21, 1
      %s357 = smul.addr %s356, 24
      %s358 = smul.addr %s357, 4
      %s359 = scalar_lea.vmem %s1, %s358
      %p360 = pneg %p68
      %p361 = pneg %p65
      %p362 = scmp.lt.s32.totalorder %s21, 1
      %s363 = scalar_select %p362, %s21, 1
      %s364 = smul.addr %s363, 96
      %s365 = smul.addr %s364, 4
      %s366 = scalar_lea.vmem %s2, %s365
      %p367 = pneg %p94
      %p368 = pneg %p91
      %p369 = scmp.lt.s32.totalorder %s21, 1
      %s370 = scalar_select %p369, %s21, 1
      %s371 = smul.addr %s370, 384
      %s372 = smul.addr %s371, 4
      %s373 = scalar_lea.vmem %s3, %s372
      %p374 = pneg %p120
      %p375 = pneg %p117
      %p376 = pneg %p141
      %p377 = pneg %p138
      %p378 = pneg %p162
      %p379 = pneg %p159
      %p380 = pneg %p183
      %p381 = pneg %p180
      %p382 = pneg %p204
      %p383 = pneg %p201
      %p384 = pneg %p225
      %p385 = pneg %p222
      %p386 = pneg %p246
      %p387 = pneg %p243
      %p388 = pneg %p272
      %p389 = pneg %p269
      %p390 = scmp.lt.s32.totalorder %s21, 1
      %s391 = scalar_select %p390, %s21, 1
      %s392 = smul.addr %s391, 32
      %s393 = scalar_lea.vmem %s10, %s392
      %p394 = scmp.lt.s32.totalorder %s21, 1
      %s395 = scalar_select %p394, %s21, 1
      %s396 = smul.addr %s395, 12
      %s397 = smul.addr %s396, 4
      %s398 = scalar_lea.vmem %s0, %s397
      %p399 = scmp.lt.s32.totalorder %s21, 1
      %s400 = scalar_select %p399, %s21, 1
      %s401 = smul.addr %s400, 24
      %s402 = smul.addr %s401, 4
      %s403 = scalar_lea.vmem %s1, %s402
      %p404 = scmp.lt.s32.totalorder %s21, 1
      %s405 = scalar_select %p404, %s21, 1
      %s406 = smul.addr %s405, 96
      %s407 = smul.addr %s406, 4
      %s408 = scalar_lea.vmem %s2, %s407
      %p409 = scmp.lt.s32.totalorder %s21, 1
      %s410 = scalar_select %p409, %s21, 1
      %s411 = smul.addr %s410, 384
      %s412 = smul.addr %s411, 4
      %s413 = scalar_lea.vmem %s3, %s412
      %p414 = scmp.lt.s32.totalorder %s21, 1
      %s415 = scalar_select %p414, %s21, 1
      %s416 = smul.addr %s415, 32
      %s417 = scalar_lea.vmem %s10, %s416
      %v421 = vld [vmem:[%s4] sm:$0xf]
      %v422 = vld [vmem:[%s398] sm:$0xff]
      %v423 = vld [vmem:[%s398 + $0x8] sm:$0xff]
      %v424 = vld [vmem:[%s398 + $0x10] sm:$0xff]
      %v425 = vld [vmem:[%s398 + $0x18] sm:$0xff]
      %v426 = vld [vmem:[%s398 + $0x20] sm:$0xff]
      %v427 = vld [vmem:[%s398 + $0x28] sm:$0xff]
      %v428 = vld [vmem:[%s5] sm:$0xff]
      %430 = vset.pattern.permute.xlu0 0
      %431 = vperm.xlu0 %430, %v428
      %v432 = vpop.permute.xlu0 %431
      %v440 = vunpack.c.l.b16 %v422
      %v441 = vunpack.c.h.b16 %v422
      %v442 = vunpack.c.l.b16 %v423
      %v443 = vunpack.c.h.b16 %v423
      %v444 = vunpack.c.l.b16 %v424
      %v445 = vunpack.c.h.b16 %v424
      %v446 = vunpack.c.l.b16 %v425
      %v447 = vunpack.c.h.b16 %v425
      %v448 = vunpack.c.l.b16 %v426
      %v449 = vunpack.c.h.b16 %v426
      %v450 = vunpack.c.l.b16 %v427
      %v451 = vunpack.c.h.b16 %v427
      %v452 = vpack.c.b16 %v442, %v440
      %v453 = vpack.c.b16 %v443, %v441
      %v454 = vpack.c.b16 %v446, %v444
      %v455 = vpack.c.b16 %v447, %v445
      %v456 = vpack.c.b16 %v450, %v448
      %v457 = vpack.c.b16 %v451, %v449
      %vm464 = vcmask 392192
      %v466 = vsel %vm464, %v421, 0
      %468 = vmatpush.bf16.msra.mxu0 0
      %469 = vmatpush.bf16.msra.mxu0 0
      %470 = vmatpush.bf16.msra.mxu0 0
      %471 = vmatpush.bf16.msra.mxu0 0
      %472 = vmatpush.bf16.msra.mxu0 0
      %473 = vmatpush.bf16.msra.mxu0 %v456
      %474 = vmatpush.bf16.msra.mxu0 %v454
      %475 = vmatpush.bf16.msra.mxu0 %v452
      %476 = vmatmul.bf16.gmra.mxu0 %v466
      %v477 = vpop.f32.mrf.mxu0
      %v478 = vadd.f32 %v432, %v477
      %v479 = vpop.f32.mrf.mxu0
      %480 = vdwg.mxu0
      %481 = vmatpush.bf16.msra.mxu0 0
      %482 = vmatpush.bf16.msra.mxu0 0
      %483 = vmatpush.bf16.msra.mxu0 0
      %484 = vmatpush.bf16.msra.mxu0 0
      %485 = vmatpush.bf16.msra.mxu0 0
      %486 = vmatpush.bf16.msra.mxu0 %v457
      %487 = vmatpush.bf16.msra.mxu0 %v455
      %488 = vmatpush.bf16.msra.mxu0 %v453
      %489 = vmatmul.bf16.gmra.mxu0 %v466
      %v490 = vpop.f32.mrf.mxu0
      %v491 = vadd.f32 %v432, %v490
      %v492 = vpop.f32.mrf.mxu0
      %493 = vdwg.mxu0
      %v494 = vmax.f32 %v478, 0.0
      %v495 = vmax.f32 %v491, 0.0
      %v496 = vld [vmem:[%s4 + $0x4] sm:$0xff]
      %v497 = vld [vmem:[%s4 + $0xd8] sm:$0xff]
      %v498 = vld [vmem:[%s403] sm:$0xf]
      %v499 = vld [vmem:[%s403 + $0x4] sm:$0xf]
      %v500 = vld [vmem:[%s403 + $0x8] sm:$0xf]
      %v501 = vld [vmem:[%s403 + $0xc] sm:$0xf]
      %v502 = vld [vmem:[%s403 + $0x10] sm:$0xf]
      %v503 = vld [vmem:[%s403 + $0x14] sm:$0xf]
      %v504 = vld [vmem:[%s403 + $0x18] sm:$0xf]
      %v505 = vld [vmem:[%s403 + $0x1c] sm:$0xf]
      %v506 = vld [vmem:[%s403 + $0x20] sm:$0xf]
      %v507 = vld [vmem:[%s403 + $0x24] sm:$0xf]
      %v508 = vld [vmem:[%s403 + $0x28] sm:$0xf]
      %v509 = vld [vmem:[%s403 + $0x2c] sm:$0xf]
      %v510 = vld [vmem:[%s403 + $0x30] sm:$0xf]
      %v511 = vld [vmem:[%s403 + $0x34] sm:$0xf]
      %v512 = vld [vmem:[%s403 + $0x38] sm:$0xf]
      %v513 = vld [vmem:[%s403 + $0x3c] sm:$0xf]
      %v514 = vld [vmem:[%s403 + $0x40] sm:$0xf]
      %v515 = vld [vmem:[%s403 + $0x44] sm:$0xf]
      %v516 = vld [vmem:[%s403 + $0x48] sm:$0xf]
      %v517 = vld [vmem:[%s403 + $0x4c] sm:$0xf]
      %v518 = vld [vmem:[%s403 + $0x50] sm:$0xf]
      %v519 = vld [vmem:[%s403 + $0x54] sm:$0xf]
      %v520 = vld [vmem:[%s403 + $0x58] sm:$0xf]
      %v521 = vld [vmem:[%s403 + $0x5c] sm:$0xf]
      %v522 = vld [vmem:[%s5] sm:$0xff]
      %v523 = vld [vmem:[%s5 + $0x8] sm:$0xff]
      %525 = vset.pattern.permute.xlu0 1
      %526 = vperm.xlu0 %525, %v522
      %v527 = vpop.permute.xlu0 %526
      %530 = vset.pattern.permute.xlu0 1
      %531 = vperm.xlu0 %530, %v523
      %v532 = vpop.permute.xlu0 %531
      %v536 = vunpack.c.l.b16 %v496
      %v537 = vunpack.c.h.b16 %v496
      %v538 = vunpack.c.l.b16 %v497
      %v539 = vunpack.c.h.b16 %v497
      %v540 = vpack.c.b16 %v538, %v536
      %v541 = vpack.c.b16 %v539, %v537
      %v567 = vunpack.c.l.b16 %v498
      %v568 = vunpack.c.l.b16 %v499
      %v569 = vunpack.c.l.b16 %v500
      %v570 = vunpack.c.l.b16 %v501
      %v571 = vunpack.c.l.b16 %v502
      %v572 = vunpack.c.l.b16 %v503
      %v573 = vunpack.c.l.b16 %v504
      %v574 = vunpack.c.l.b16 %v505
      %v575 = vunpack.c.l.b16 %v506
      %v576 = vunpack.c.l.b16 %v507
      %v577 = vunpack.c.l.b16 %v508
      %v578 = vunpack.c.l.b16 %v509
      %v579 = vunpack.c.l.b16 %v510
      %v580 = vunpack.c.l.b16 %v511
      %v581 = vunpack.c.l.b16 %v512
      %v582 = vunpack.c.l.b16 %v513
      %v583 = vunpack.c.l.b16 %v514
      %v584 = vunpack.c.l.b16 %v515
      %v585 = vunpack.c.l.b16 %v516
      %v586 = vunpack.c.l.b16 %v517
      %v587 = vunpack.c.l.b16 %v518
      %v588 = vunpack.c.l.b16 %v519
      %v589 = vunpack.c.l.b16 %v520
      %v590 = vunpack.c.l.b16 %v521
      %v591 = vpack.c.b16 %v568, %v567
      %v592 = vpack.c.b16 %v570, %v569
      %v593 = vpack.c.b16 %v572, %v571
      %v594 = vpack.c.b16 %v574, %v573
      %v595 = vpack.c.b16 %v576, %v575
      %v596 = vpack.c.b16 %v578, %v577
      %v597 = vpack.c.b16 %v580, %v579
      %v598 = vpack.c.b16 %v582, %v581
      %v599 = vpack.c.b16 %v584, %v583
      %v600 = vpack.c.b16 %v586, %v585
      %v601 = vpack.c.b16 %v588, %v587
      %v602 = vpack.c.b16 %v590, %v589
      %vm615 = vcmask 523264
      %v617 = vsel %vm615, %v541, 0
      %619 = vmatpush.bf16.msra.mxu0 %v598
      %620 = vmatpush.bf16.msra.mxu0 %v597
      %621 = vmatpush.bf16.msra.mxu0 %v596
      %622 = vmatpush.bf16.msra.mxu0 %v595
      %623 = vmatpush.bf16.msra.mxu0 %v594
      %624 = vmatpush.bf16.msra.mxu0 %v593
      %625 = vmatpush.bf16.msra.mxu0 %v592
      %626 = vmatpush.bf16.msra.mxu0 %v591
      %627 = vmatmul.bf16.gmra.mxu0 %v540
      %v628 = vpop.f32.mrf.mxu0
      %v629 = vadd.f32 %v527, %v628
      %v630 = vpop.f32.mrf.mxu0
      %v631 = vadd.f32 %v532, %v630
      %632 = vdwg.mxu0
      %633 = vmatpush.bf16.msra.mxu0 0
      %634 = vmatpush.bf16.msra.mxu0 0
      %635 = vmatpush.bf16.msra.mxu0 0
      %636 = vmatpush.bf16.msra.mxu0 0
      %637 = vmatpush.bf16.msra.mxu0 %v602
      %638 = vmatpush.bf16.msra.mxu0 %v601
      %639 = vmatpush.bf16.msra.mxu0 %v600
      %640 = vmatpush.bf16.msra.mxu0 %v599
      %641 = vmatmul.bf16.gmra.mxu0 %v617
      %v642 = vpop.f32.mrf.mxu0
      %v643 = vadd.f32 %v629, %v642
      %v644 = vpop.f32.mrf.mxu0
      %v645 = vadd.f32 %v631, %v644
      %646 = vdwg.mxu0
      %v647 = vmax.f32 %v643, 0.0
      %v648 = vmax.f32 %v645, 0.0
      %v649 = vld [vmem:[%s4 + $0xc] sm:$0xff]
      %v650 = vld [vmem:[%s4 + $0x14] sm:$0xff]
      %v651 = vld [vmem:[%s4 + $0x1c] sm:$0xff]
      %v652 = vld [vmem:[%s4 + $0xe0] sm:$0xff]
      %v653 = vld [vmem:[%s4 + $0xe8] sm:$0xff]
      %v654 = vld [vmem:[%s4 + $0xf0] sm:$0xff]
      %v655 = vld [vmem:[%s408] sm:$0xf]
      %v656 = vld [vmem:[%s408 + $0x4] sm:$0xf]
      %v657 = vld [vmem:[%s408 + $0x8] sm:$0xf]
      %v658 = vld [vmem:[%s408 + $0xc] sm:$0xf]
      %v659 = vld [vmem:[%s408 + $0x10] sm:$0xf]
      %v660 = vld [vmem:[%s408 + $0x14] sm:$0xf]
      %v661 = vld [vmem:[%s408 + $0x18] sm:$0xf]
      %v662 = vld [vmem:[%s408 + $0x1c] sm:$0xf]
      %v663 = vld [vmem:[%s408 + $0x20] sm:$0xf]
      %v664 = vld [vmem:[%s408 + $0x24] sm:$0xf]
      %v665 = vld [vmem:[%s408 + $0x28] sm:$0xf]
      %v666 = vld [vmem:[%s408 + $0x2c] sm:$0xf]
      %v667 = vld [vmem:[%s408 + $0x30] sm:$0xf]
      %v668 = vld [vmem:[%s408 + $0x34] sm:$0xf]
      %v669 = vld [vmem:[%s408 + $0x38] sm:$0xf]
      %v670 = vld [vmem:[%s408 + $0x3c] sm:$0xf]
      %v671 = vld [vmem:[%s408 + $0x40] sm:$0xf]
      %v672 = vld [vmem:[%s408 + $0x44] sm:$0xf]
      %v673 = vld [vmem:[%s408 + $0x48] sm:$0xf]
      %v674 = vld [vmem:[%s408 + $0x4c] sm:$0xf]
      %v675 = vld [vmem:[%s408 + $0x50] sm:$0xf]
      %v676 = vld [vmem:[%s408 + $0x54] sm:$0xf]
      %v677 = vld [vmem:[%s408 + $0x58] sm:$0xf]
      %v678 = vld [vmem:[%s408 + $0x5c] sm:$0xf]
      %v679 = vld [vmem:[%s408 + $0x60] sm:$0xf]
      %v680 = vld [vmem:[%s408 + $0x64] sm:$0xf]
      %v681 = vld [vmem:[%s408 + $0x68] sm:$0xf]
      %v682 = vld [vmem:[%s408 + $0x6c] sm:$0xf]
      %v683 = vld [vmem:[%s408 + $0x70] sm:$0xf]
      %v684 = vld [vmem:[%s408 + $0x74] sm:$0xf]
      %v685 = vld [vmem:[%s408 + $0x78] sm:$0xf]
      %v686 = vld [vmem:[%s408 + $0x7c] sm:$0xf]
      %v687 = vld [vmem:[%s408 + $0x80] sm:$0xf]
      %v688 = vld [vmem:[%s408 + $0x84] sm:$0xf]
      %v689 = vld [vmem:[%s408 + $0x88] sm:$0xf]
      %v690 = vld [vmem:[%s408 + $0x8c] sm:$0xf]
      %v691 = vld [vmem:[%s408 + $0x90] sm:$0xf]
      %v692 = vld [vmem:[%s408 + $0x94] sm:$0xf]
      %v693 = vld [vmem:[%s408 + $0x98] sm:$0xf]
      %v694 = vld [vmem:[%s408 + $0x9c] sm:$0xf]
      %v695 = vld [vmem:[%s408 + $0xa0] sm:$0xf]
      %v696 = vld [vmem:[%s408 + $0xa4] sm:$0xf]
      %v697 = vld [vmem:[%s408 + $0xa8] sm:$0xf]
      %v698 = vld [vmem:[%s408 + $0xac] sm:$0xf]
      %v699 = vld [vmem:[%s408 + $0xb0] sm:$0xf]
      %v700 = vld [vmem:[%s408 + $0xb4] sm:$0xf]
      %v701 = vld [vmem:[%s408 + $0xb8] sm:$0xf]
      %v702 = vld [vmem:[%s408 + $0xbc] sm:$0xf]
      %v703 = vld [vmem:[%s408 + $0xc0] sm:$0xf]
      %v704 = vld [vmem:[%s408 + $0xc4] sm:$0xf]
      %v705 = vld [vmem:[%s408 + $0xc8] sm:$0xf]
      %v706 = vld [vmem:[%s408 + $0xcc] sm:$0xf]
      %v707 = vld [vmem:[%s408 + $0xd0] sm:$0xf]
      %v708 = vld [vmem:[%s408 + $0xd4] sm:$0xf]
      %v709 = vld [vmem:[%s408 + $0xd8] sm:$0xf]
      %v710 = vld [vmem:[%s408 + $0xdc] sm:$0xf]
      %v711 = vld [vmem:[%s408 + $0xe0] sm:$0xf]
      %v712 = vld [vmem:[%s408 + $0xe4] sm:$0xf]
      %v713 = vld [vmem:[%s408 + $0xe8] sm:$0xf]
      %v714 = vld [vmem:[%s408 + $0xec] sm:$0xf]
      %v715 = vld [vmem:[%s408 + $0xf0] sm:$0xf]
      %v716 = vld [vmem:[%s408 + $0xf4] sm:$0xf]
      %v717 = vld [vmem:[%s408 + $0xf8] sm:$0xf]
      %v718 = vld [vmem:[%s408 + $0xfc] sm:$0xf]
      %v719 = vld [vmem:[%s408 + $0x100] sm:$0xf]
      %v720 = vld [vmem:[%s408 + $0x104] sm:$0xf]
      %v721 = vld [vmem:[%s408 + $0x108] sm:$0xf]
      %v722 = vld [vmem:[%s408 + $0x10c] sm:$0xf]
      %v723 = vld [vmem:[%s408 + $0x110] sm:$0xf]
      %v724 = vld [vmem:[%s408 + $0x114] sm:$0xf]
      %v725 = vld [vmem:[%s408 + $0x118] sm:$0xf]
      %v726 = vld [vmem:[%s408 + $0x11c] sm:$0xf]
      %v727 = vld [vmem:[%s408 + $0x120] sm:$0xf]
      %v728 = vld [vmem:[%s408 + $0x124] sm:$0xf]
      %v729 = vld [vmem:[%s408 + $0x128] sm:$0xf]
      %v730 = vld [vmem:[%s408 + $0x12c] sm:$0xf]
      %v731 = vld [vmem:[%s408 + $0x130] sm:$0xf]
      %v732 = vld [vmem:[%s408 + $0x134] sm:$0xf]
      %v733 = vld [vmem:[%s408 + $0x138] sm:$0xf]
      %v734 = vld [vmem:[%s408 + $0x13c] sm:$0xf]
      %v735 = vld [vmem:[%s408 + $0x140] sm:$0xf]
      %v736 = vld [vmem:[%s408 + $0x144] sm:$0xf]
      %v737 = vld [vmem:[%s408 + $0x148] sm:$0xf]
      %v738 = vld [vmem:[%s408 + $0x14c] sm:$0xf]
      %v739 = vld [vmem:[%s408 + $0x150] sm:$0xf]
      %v740 = vld [vmem:[%s408 + $0x154] sm:$0xf]
      %v741 = vld [vmem:[%s408 + $0x158] sm:$0xf]
      %v742 = vld [vmem:[%s408 + $0x15c] sm:$0xf]
      %v743 = vld [vmem:[%s408 + $0x160] sm:$0xf]
      %v744 = vld [vmem:[%s408 + $0x164] sm:$0xf]
      %v745 = vld [vmem:[%s408 + $0x168] sm:$0xf]
      %v746 = vld [vmem:[%s408 + $0x16c] sm:$0xf]
      %v747 = vld [vmem:[%s408 + $0x170] sm:$0xf]
      %v748 = vld [vmem:[%s408 + $0x174] sm:$0xf]
      %v749 = vld [vmem:[%s408 + $0x178] sm:$0xf]
      %v750 = vld [vmem:[%s408 + $0x17c] sm:$0xf]
      %751 = vset.pattern.permute.xlu0 2
      %752 = vperm.xlu0 %751, %v522
      %v753 = vpop.permute.xlu0 %752
      %755 = vset.pattern.permute.xlu0 2
      %756 = vperm.xlu0 %755, %v523
      %v757 = vpop.permute.xlu0 %756
      %v765 = vunpack.c.l.b16 %v649
      %v766 = vunpack.c.h.b16 %v649
      %v767 = vunpack.c.l.b16 %v650
      %v768 = vunpack.c.h.b16 %v650
      %v769 = vunpack.c.l.b16 %v651
      %v770 = vunpack.c.h.b16 %v651
      %v771 = vunpack.c.l.b16 %v652
      %v772 = vunpack.c.h.b16 %v652
      %v773 = vunpack.c.l.b16 %v653
      %v774 = vunpack.c.h.b16 %v653
      %v775 = vunpack.c.l.b16 %v654
      %v776 = vunpack.c.h.b16 %v654
      %v777 = vpack.c.b16 %v771, %v765
      %v778 = vpack.c.b16 %v772, %v766
      %v779 = vpack.c.b16 %v773, %v767
      %v780 = vpack.c.b16 %v774, %v768
      %v781 = vpack.c.b16 %v775, %v769
      %v782 = vpack.c.b16 %v776, %v770
      %v885 = vunpack.c.l.b16 %v655
      %v886 = vunpack.c.l.b16 %v656
      %v887 = vunpack.c.l.b16 %v657
      %v888 = vunpack.c.l.b16 %v658
      %v889 = vunpack.c.l.b16 %v659
      %v890 = vunpack.c.l.b16 %v660
      %v891 = vunpack.c.l.b16 %v661
      %v892 = vunpack.c.l.b16 %v662
      %v893 = vunpack.c.l.b16 %v663
      %v894 = vunpack.c.l.b16 %v664
      %v895 = vunpack.c.l.b16 %v665
      %v896 = vunpack.c.l.b16 %v666
      %v897 = vunpack.c.l.b16 %v667
      %v898 = vunpack.c.l.b16 %v668
      %v899 = vunpack.c.l.b16 %v669
      %v900 = vunpack.c.l.b16 %v670
      %v901 = vunpack.c.l.b16 %v671
      %v902 = vunpack.c.l.b16 %v672
      %v903 = vunpack.c.l.b16 %v673
      %v904 = vunpack.c.l.b16 %v674
      %v905 = vunpack.c.l.b16 %v675
      %v906 = vunpack.c.l.b16 %v676
      %v907 = vunpack.c.l.b16 %v677
      %v908 = vunpack.c.l.b16 %v678
      %v909 = vunpack.c.l.b16 %v679
      %v910 = vunpack.c.l.b16 %v680
      %v911 = vunpack.c.l.b16 %v681
      %v912 = vunpack.c.l.b16 %v682
      %v913 = vunpack.c.l.b16 %v683
      %v914 = vunpack.c.l.b16 %v684
      %v915 = vunpack.c.l.b16 %v685
      %v916 = vunpack.c.l.b16 %v686
      %v917 = vunpack.c.l.b16 %v687
      %v918 = vunpack.c.l.b16 %v688
      %v919 = vunpack.c.l.b16 %v689
      %v920 = vunpack.c.l.b16 %v690
      %v921 = vunpack.c.l.b16 %v691
      %v922 = vunpack.c.l.b16 %v692
      %v923 = vunpack.c.l.b16 %v693
      %v924 = vunpack.c.l.b16 %v694
      %v925 = vunpack.c.l.b16 %v695
      %v926 = vunpack.c.l.b16 %v696
      %v927 = vunpack.c.l.b16 %v697
      %v928 = vunpack.c.l.b16 %v698
      %v929 = vunpack.c.l.b16 %v699
      %v930 = vunpack.c.l.b16 %v700
      %v931 = vunpack.c.l.b16 %v701
      %v932 = vunpack.c.l.b16 %v702
      %v933 = vunpack.c.l.b16 %v703
      %v934 = vunpack.c.l.b16 %v704
      %v935 = vunpack.c.l.b16 %v705
      %v936 = vunpack.c.l.b16 %v706
      %v937 = vunpack.c.l.b16 %v707
      %v938 = vunpack.c.l.b16 %v708
      %v939 = vunpack.c.l.b16 %v709
      %v940 = vunpack.c.l.b16 %v710
      %v941 = vunpack.c.l.b16 %v711
      %v942 = vunpack.c.l.b16 %v712
      %v943 = vunpack.c.l.b16 %v713
      %v944 = vunpack.c.l.b16 %v714
      %v945 = vunpack.c.l.b16 %v715
      %v946 = vunpack.c.l.b16 %v716
      %v947 = vunpack.c.l.b16 %v717
      %v948 = vunpack.c.l.b16 %v718
      %v949 = vunpack.c.l.b16 %v719
      %v950 = vunpack.c.l.b16 %v720
      %v951 = vunpack.c.l.b16 %v721
      %v952 = vunpack.c.l.b16 %v722
      %v953 = vunpack.c.l.b16 %v723
      %v954 = vunpack.c.l.b16 %v724
      %v955 = vunpack.c.l.b16 %v725
      %v956 = vunpack.c.l.b16 %v726
      %v957 = vunpack.c.l.b16 %v727
      %v958 = vunpack.c.l.b16 %v728
      %v959 = vunpack.c.l.b16 %v729
      %v960 = vunpack.c.l.b16 %v730
      %v961 = vunpack.c.l.b16 %v731
      %v962 = vunpack.c.l.b16 %v732
      %v963 = vunpack.c.l.b16 %v733
      %v964 = vunpack.c.l.b16 %v734
      %v965 = vunpack.c.l.b16 %v735
      %v966 = vunpack.c.l.b16 %v736
      %v967 = vunpack.c.l.b16 %v737
      %v968 = vunpack.c.l.b16 %v738
      %v969 = vunpack.c.l.b16 %v739
      %v970 = vunpack.c.l.b16 %v740
      %v971 = vunpack.c.l.b16 %v741
      %v972 = vunpack.c.l.b16 %v742
      %v973 = vunpack.c.l.b16 %v743
      %v974 = vunpack.c.l.b16 %v744
      %v975 = vunpack.c.l.b16 %v745
      %v976 = vunpack.c.l.b16 %v746
      %v977 = vunpack.c.l.b16 %v747
      %v978 = vunpack.c.l.b16 %v748
      %v979 = vunpack.c.l.b16 %v749
      %v980 = vunpack.c.l.b16 %v750
      %v981 = vpack.c.b16 %v886, %v885
      %v982 = vpack.c.b16 %v888, %v887
      %v983 = vpack.c.b16 %v890, %v889
      %v984 = vpack.c.b16 %v892, %v891
      %v985 = vpack.c.b16 %v894, %v893
      %v986 = vpack.c.b16 %v896, %v895
      %v987 = vpack.c.b16 %v898, %v897
      %v988 = vpack.c.b16 %v900, %v899
      %v989 = vpack.c.b16 %v902, %v901
      %v990 = vpack.c.b16 %v904, %v903
      %v991 = vpack.c.b16 %v906, %v905
      %v992 = vpack.c.b16 %v908, %v907
      %v993 = vpack.c.b16 %v910, %v909
      %v994 = vpack.c.b16 %v912, %v911
      %v995 = vpack.c.b16 %v914, %v913
      %v996 = vpack.c.b16 %v916, %v915
      %v997 = vpack.c.b16 %v918, %v917
      %v998 = vpack.c.b16 %v920, %v919
      %v999 = vpack.c.b16 %v922, %v921
      %v1000 = vpack.c.b16 %v924, %v923
      %v1001 = vpack.c.b16 %v926, %v925
      %v1002 = vpack.c.b16 %v928, %v927
      %v1003 = vpack.c.b16 %v930, %v929
      %v1004 = vpack.c.b16 %v932, %v931
      %v1005 = vpack.c.b16 %v934, %v933
      %v1006 = vpack.c.b16 %v936, %v935
      %v1007 = vpack.c.b16 %v938, %v937
      %v1008 = vpack.c.b16 %v940, %v939
      %v1009 = vpack.c.b16 %v942, %v941
      %v1010 = vpack.c.b16 %v944, %v943
      %v1011 = vpack.c.b16 %v946, %v945
      %v1012 = vpack.c.b16 %v948, %v947
      %v1013 = vpack.c.b16 %v950, %v949
      %v1014 = vpack.c.b16 %v952, %v951
      %v1015 = vpack.c.b16 %v954, %v953
      %v1016 = vpack.c.b16 %v956, %v955
      %v1017 = vpack.c.b16 %v958, %v957
      %v1018 = vpack.c.b16 %v960, %v959
      %v1019 = vpack.c.b16 %v962, %v961
      %v1020 = vpack.c.b16 %v964, %v963
      %v1021 = vpack.c.b16 %v966, %v965
      %v1022 = vpack.c.b16 %v968, %v967
      %v1023 = vpack.c.b16 %v970, %v969
      %v1024 = vpack.c.b16 %v972, %v971
      %v1025 = vpack.c.b16 %v974, %v973
      %v1026 = vpack.c.b16 %v976, %v975
      %v1027 = vpack.c.b16 %v978, %v977
      %v1028 = vpack.c.b16 %v980, %v979
      %1077 = vmatpush.bf16.msra.mxu0 %v988
      %1078 = vmatpush.bf16.msra.mxu0 %v987
      %1079 = vmatpush.bf16.msra.mxu0 %v986
      %1080 = vmatpush.bf16.msra.mxu0 %v985
      %1081 = vmatpush.bf16.msra.mxu0 %v984
      %1082 = vmatpush.bf16.msra.mxu0 %v983
      %1083 = vmatpush.bf16.msra.mxu0 %v982
      %1084 = vmatpush.bf16.msra.mxu0 %v981
      %1085 = vmatmul.bf16.gmra.mxu0 %v777
      %v1086 = vpop.f32.mrf.mxu0
      %v1087 = vadd.f32 %v753, %v1086
      %v1088 = vpop.f32.mrf.mxu0
      %v1089 = vadd.f32 %v757, %v1088
      %1090 = vdwg.mxu0
      %1091 = vmatpush.bf16.msra.mxu0 %v996
      %1092 = vmatpush.bf16.msra.mxu0 %v995
      %1093 = vmatpush.bf16.msra.mxu0 %v994
      %1094 = vmatpush.bf16.msra.mxu0 %v993
      %1095 = vmatpush.bf16.msra.mxu0 %v992
      %1096 = vmatpush.bf16.msra.mxu0 %v991
      %1097 = vmatpush.bf16.msra.mxu0 %v990
      %1098 = vmatpush.bf16.msra.mxu0 %v989
      %1099 = vmatmul.bf16.gmra.mxu0 %v778
      %v1100 = vpop.f32.mrf.mxu0
      %v1101 = vadd.f32 %v1087, %v1100
      %v1102 = vpop.f32.mrf.mxu0
      %v1103 = vadd.f32 %v1089, %v1102
      %1104 = vdwg.mxu0
      %1105 = vmatpush.bf16.msra.mxu0 %v1004
      %1106 = vmatpush.bf16.msra.mxu0 %v1003
      %1107 = vmatpush.bf16.msra.mxu0 %v1002
      %1108 = vmatpush.bf16.msra.mxu0 %v1001
      %1109 = vmatpush.bf16.msra.mxu0 %v1000
      %1110 = vmatpush.bf16.msra.mxu0 %v999
      %1111 = vmatpush.bf16.msra.mxu0 %v998
      %1112 = vmatpush.bf16.msra.mxu0 %v997
      %1113 = vmatmul.bf16.gmra.mxu0 %v779
      %v1114 = vpop.f32.mrf.mxu0
      %v1115 = vadd.f32 %v1101, %v1114
      %v1116 = vpop.f32.mrf.mxu0
      %v1117 = vadd.f32 %v1103, %v1116
      %1118 = vdwg.mxu0
      %1119 = vmatpush.bf16.msra.mxu0 %v1012
      %1120 = vmatpush.bf16.msra.mxu0 %v1011
      %1121 = vmatpush.bf16.msra.mxu0 %v1010
      %1122 = vmatpush.bf16.msra.mxu0 %v1009
      %1123 = vmatpush.bf16.msra.mxu0 %v1008
      %1124 = vmatpush.bf16.msra.mxu0 %v1007
      %1125 = vmatpush.bf16.msra.mxu0 %v1006
      %1126 = vmatpush.bf16.msra.mxu0 %v1005
      %1127 = vmatmul.bf16.gmra.mxu0 %v780
      %v1128 = vpop.f32.mrf.mxu0
      %v1129 = vadd.f32 %v1115, %v1128
      %v1130 = vpop.f32.mrf.mxu0
      %v1131 = vadd.f32 %v1117, %v1130
      %1132 = vdwg.mxu0
      %1133 = vmatpush.bf16.msra.mxu0 %v1020
      %1134 = vmatpush.bf16.msra.mxu0 %v1019
      %1135 = vmatpush.bf16.msra.mxu0 %v1018
      %1136 = vmatpush.bf16.msra.mxu0 %v1017
      %1137 = vmatpush.bf16.msra.mxu0 %v1016
      %1138 = vmatpush.bf16.msra.mxu0 %v1015
      %1139 = vmatpush.bf16.msra.mxu0 %v1014
      %1140 = vmatpush.bf16.msra.mxu0 %v1013
      %1141 = vmatmul.bf16.gmra.mxu0 %v781
      %v1142 = vpop.f32.mrf.mxu0
      %v1143 = vadd.f32 %v1129, %v1142
      %v1144 = vpop.f32.mrf.mxu0
      %v1145 = vadd.f32 %v1131, %v1144
      %1146 = vdwg.mxu0
      %1147 = vmatpush.bf16.msra.mxu0 %v1028
      %1148 = vmatpush.bf16.msra.mxu0 %v1027
      %1149 = vmatpush.bf16.msra.mxu0 %v1026
      %1150 = vmatpush.bf16.msra.mxu0 %v1025
      %1151 = vmatpush.bf16.msra.mxu0 %v1024
      %1152 = vmatpush.bf16.msra.mxu0 %v1023
      %1153 = vmatpush.bf16.msra.mxu0 %v1022
      %1154 = vmatpush.bf16.msra.mxu0 %v1021
      %1155 = vmatmul.bf16.gmra.mxu0 %v782
      %v1156 = vpop.f32.mrf.mxu0
      %v1157 = vadd.f32 %v1143, %v1156
      %v1158 = vpop.f32.mrf.mxu0
      %v1159 = vadd.f32 %v1145, %v1158
      %1160 = vdwg.mxu0
      %v1161 = vmax.f32 %v1157, 0.0
      %v1162 = vmax.f32 %v1159, 0.0
      %v1163 = vld [vmem:[%s4 + $0x24] sm:$0xff]
      %v1164 = vld [vmem:[%s4 + $0x2c] sm:$0xff]
      %v1165 = vld [vmem:[%s4 + $0x34] sm:$0xff]
      %v1166 = vld [vmem:[%s4 + $0x3c] sm:$0xff]
      %v1167 = vld [vmem:[%s4 + $0x44] sm:$0xff]
      %v1168 = vld [vmem:[%s4 + $0x4c] sm:$0xff]
      %v1169 = vld [vmem:[%s4 + $0x54] sm:$0xff]
      %v1170 = vld [vmem:[%s4 + $0x5c] sm:$0xff]
      %v1171 = vld [vmem:[%s4 + $0x64] sm:$0xff]
      %v1172 = vld [vmem:[%s4 + $0x6c] sm:$0xff]
      %v1173 = vld [vmem:[%s4 + $0x74] sm:$0xff]
      %v1174 = vld [vmem:[%s4 + $0x7c] sm:$0xff]
      %v1175 = vld [vmem:[%s4 + $0xf8] sm:$0xff]
      %v1176 = vld [vmem:[%s4 + $0x100] sm:$0xff]
      %v1177 = vld [vmem:[%s4 + $0x108] sm:$0xff]
      %v1178 = vld [vmem:[%s4 + $0x110] sm:$0xff]
      %v1179 = vld [vmem:[%s4 + $0x118] sm:$0xff]
      %v1180 = vld [vmem:[%s4 + $0x120] sm:$0xff]
      %v1181 = vld [vmem:[%s4 + $0x128] sm:$0xff]
      %v1182 = vld [vmem:[%s4 + $0x130] sm:$0xff]
      %v1183 = vld [vmem:[%s4 + $0x138] sm:$0xff]
      %v1184 = vld [vmem:[%s4 + $0x140] sm:$0xff]
      %v1185 = vld [vmem:[%s4 + $0x148] sm:$0xff]
      %v1186 = vld [vmem:[%s4 + $0x150] sm:$0xff]
      %v1187 = vld [vmem:[%s4 + $0x1cc] sm:$0xff]
      %v1188 = vld [vmem:[%s4 + $0x1d4] sm:$0xff]
      %v1189 = vld [vmem:[%s4 + $0x1dc] sm:$0xff]
      %v1190 = vld [vmem:[%s4 + $0x1e4] sm:$0xff]
      %v1191 = vld [vmem:[%s4 + $0x1ec] sm:$0xff]
      %v1192 = vld [vmem:[%s4 + $0x1f4] sm:$0xff]
      %v1193 = vld [vmem:[%s4 + $0x1fc] sm:$0xff]
      %v1194 = vld [vmem:[%s4 + $0x204] sm:$0xff]
      %v1195 = vld [vmem:[%s4 + $0x20c] sm:$0xff]
      %v1196 = vld [vmem:[%s4 + $0x214] sm:$0xff]
      %v1197 = vld [vmem:[%s4 + $0x21c] sm:$0xff]
      %v1198 = vld [vmem:[%s4 + $0x224] sm:$0xff]
      %v1199 = vld [vmem:[%s4 + $0x2a0] sm:$0xff]
      %v1200 = vld [vmem:[%s4 + $0x2a8] sm:$0xff]
      %v1201 = vld [vmem:[%s4 + $0x2b0] sm:$0xff]
      %v1202 = vld [vmem:[%s4 + $0x2b8] sm:$0xff]
      %v1203 = vld [vmem:[%s4 + $0x2c0] sm:$0xff]
      %v1204 = vld [vmem:[%s4 + $0x2c8] sm:$0xff]
      %v1205 = vld [vmem:[%s4 + $0x2d0] sm:$0xff]
      %v1206 = vld [vmem:[%s4 + $0x2d8] sm:$0xff]
      %v1207 = vld [vmem:[%s4 + $0x2e0] sm:$0xff]
      %v1208 = vld [vmem:[%s4 + $0x2e8] sm:$0xff]
      %v1209 = vld [vmem:[%s4 + $0x2f0] sm:$0xff]
      %v1210 = vld [vmem:[%s4 + $0x2f8] sm:$0xff]
      %v1211 = vld [vmem:[%s413] sm:$0xf]
      %v1212 = vld [vmem:[%s413 + $0x4] sm:$0xf]
      %v1213 = vld [vmem:[%s413 + $0x8] sm:$0xf]
      %v1214 = vld [vmem:[%s413 + $0xc] sm:$0xf]
      %v1215 = vld [vmem:[%s413 + $0x10] sm:$0xf]
      %v1216 = vld [vmem:[%s413 + $0x14] sm:$0xf]
      %v1217 = vld [vmem:[%s413 + $0x18] sm:$0xf]
      %v1218 = vld [vmem:[%s413 + $0x1c] sm:$0xf]
      %v1219 = vld [vmem:[%s413 + $0x20] sm:$0xf]
      %v1220 = vld [vmem:[%s413 + $0x24] sm:$0xf]
      %v1221 = vld [vmem:[%s413 + $0x28] sm:$0xf]
      %v1222 = vld [vmem:[%s413 + $0x2c] sm:$0xf]
      %v1223 = vld [vmem:[%s413 + $0x30] sm:$0xf]
      %v1224 = vld [vmem:[%s413 + $0x34] sm:$0xf]
      %v1225 = vld [vmem:[%s413 + $0x38] sm:$0xf]
      %v1226 = vld [vmem:[%s413 + $0x3c] sm:$0xf]
      %v1227 = vld [vmem:[%s413 + $0x40] sm:$0xf]
      %v1228 = vld [vmem:[%s413 + $0x44] sm:$0xf]
      %v1229 = vld [vmem:[%s413 + $0x48] sm:$0xf]
      %v1230 = vld [vmem:[%s413 + $0x4c] sm:$0xf]
      %v1231 = vld [vmem:[%s413 + $0x50] sm:$0xf]
      %v1232 = vld [vmem:[%s413 + $0x54] sm:$0xf]
      %v1233 = vld [vmem:[%s413 + $0x58] sm:$0xf]
      %v1234 = vld [vmem:[%s413 + $0x5c] sm:$0xf]
      %v1235 = vld [vmem:[%s413 + $0x60] sm:$0xf]
      %v1236 = vld [vmem:[%s413 + $0x64] sm:$0xf]
      %v1237 = vld [vmem:[%s413 + $0x68] sm:$0xf]
      %v1238 = vld [vmem:[%s413 + $0x6c] sm:$0xf]
      %v1239 = vld [vmem:[%s413 + $0x70] sm:$0xf]
      %v1240 = vld [vmem:[%s413 + $0x74] sm:$0xf]
      %v1241 = vld [vmem:[%s413 + $0x78] sm:$0xf]
      %v1242 = vld [vmem:[%s413 + $0x7c] sm:$0xf]
      %v1243 = vld [vmem:[%s413 + $0x80] sm:$0xf]
      %v1244 = vld [vmem:[%s413 + $0x84] sm:$0xf]
      %v1245 = vld [vmem:[%s413 + $0x88] sm:$0xf]
      %v1246 = vld [vmem:[%s413 + $0x8c] sm:$0xf]
      %v1247 = vld [vmem:[%s413 + $0x90] sm:$0xf]
      %v1248 = vld [vmem:[%s413 + $0x94] sm:$0xf]
      %v1249 = vld [vmem:[%s413 + $0x98] sm:$0xf]
      %v1250 = vld [vmem:[%s413 + $0x9c] sm:$0xf]
      %v1251 = vld [vmem:[%s413 + $0xa0] sm:$0xf]
      %v1252 = vld [vmem:[%s413 + $0xa4] sm:$0xf]
      %v1253 = vld [vmem:[%s413 + $0xa8] sm:$0xf]
      %v1254 = vld [vmem:[%s413 + $0xac] sm:$0xf]
      %v1255 = vld [vmem:[%s413 + $0xb0] sm:$0xf]
      %v1256 = vld [vmem:[%s413 + $0xb4] sm:$0xf]
      %v1257 = vld [vmem:[%s413 + $0xb8] sm:$0xf]
      %v1258 = vld [vmem:[%s413 + $0xbc] sm:$0xf]
      %v1259 = vld [vmem:[%s413 + $0xc0] sm:$0xf]
      %v1260 = vld [vmem:[%s413 + $0xc4] sm:$0xf]
      %v1261 = vld [vmem:[%s413 + $0xc8] sm:$0xf]
      %v1262 = vld [vmem:[%s413 + $0xcc] sm:$0xf]
      %v1263 = vld [vmem:[%s413 + $0xd0] sm:$0xf]
      %v1264 = vld [vmem:[%s413 + $0xd4] sm:$0xf]
      %v1265 = vld [vmem:[%s413 + $0xd8] sm:$0xf]
      %v1266 = vld [vmem:[%s413 + $0xdc] sm:$0xf]
      %v1267 = vld [vmem:[%s413 + $0xe0] sm:$0xf]
      %v1268 = vld [vmem:[%s413 + $0xe4] sm:$0xf]
      %v1269 = vld [vmem:[%s413 + $0xe8] sm:$0xf]
      %v1270 = vld [vmem:[%s413 + $0xec] sm:$0xf]
      %v1271 = vld [vmem:[%s413 + $0xf0] sm:$0xf]
      %v1272 = vld [vmem:[%s413 + $0xf4] sm:$0xf]
      %v1273 = vld [vmem:[%s413 + $0xf8] sm:$0xf]
      %v1274 = vld [vmem:[%s413 + $0xfc] sm:$0xf]
      %v1275 = vld [vmem:[%s413 + $0x100] sm:$0xf]
      %v1276 = vld [vmem:[%s413 + $0x104] sm:$0xf]
      %v1277 = vld [vmem:[%s413 + $0x108] sm:$0xf]
      %v1278 = vld [vmem:[%s413 + $0x10c] sm:$0xf]
      %v1279 = vld [vmem:[%s413 + $0x110] sm:$0xf]
      %v1280 = vld [vmem:[%s413 + $0x114] sm:$0xf]
      %v1281 = vld [vmem:[%s413 + $0x118] sm:$0xf]
      %v1282 = vld [vmem:[%s413 + $0x11c] sm:$0xf]
      %v1283 = vld [vmem:[%s413 + $0x120] sm:$0xf]
      %v1284 = vld [vmem:[%s413 + $0x124] sm:$0xf]
      %v1285 = vld [vmem:[%s413 + $0x128] sm:$0xf]
      %v1286 = vld [vmem:[%s413 + $0x12c] sm:$0xf]
      %v1287 = vld [vmem:[%s413 + $0x130] sm:$0xf]
      %v1288 = vld [vmem:[%s413 + $0x134] sm:$0xf]
      %v1289 = vld [vmem:[%s413 + $0x138] sm:$0xf]
      %v1290 = vld [vmem:[%s413 + $0x13c] sm:$0xf]
      %v1291 = vld [vmem:[%s413 + $0x140] sm:$0xf]
      %v1292 = vld [vmem:[%s413 + $0x144] sm:$0xf]
      %v1293 = vld [vmem:[%s413 + $0x148] sm:$0xf]
      %v1294 = vld [vmem:[%s413 + $0x14c] sm:$0xf]
      %v1295 = vld [vmem:[%s413 + $0x150] sm:$0xf]
      %v1296 = vld [vmem:[%s413 + $0x154] sm:$0xf]
      %v1297 = vld [vmem:[%s413 + $0x158] sm:$0xf]
      %v1298 = vld [vmem:[%s413 + $0x15c] sm:$0xf]
      %v1299 = vld [vmem:[%s413 + $0x160] sm:$0xf]
      %v1300 = vld [vmem:[%s413 + $0x164] sm:$0xf]
      %v1301 = vld [vmem:[%s413 + $0x168] sm:$0xf]
      %v1302 = vld [vmem:[%s413 + $0x16c] sm:$0xf]
      %v1303 = vld [vmem:[%s413 + $0x170] sm:$0xf]
      %v1304 = vld [vmem:[%s413 + $0x174] sm:$0xf]
      %v1305 = vld [vmem:[%s413 + $0x178] sm:$0xf]
      %v1306 = vld [vmem:[%s413 + $0x17c] sm:$0xf]
      %v1307 = vld [vmem:[%s413 + $0x180] sm:$0xf]
      %v1308 = vld [vmem:[%s413 + $0x184] sm:$0xf]
      %v1309 = vld [vmem:[%s413 + $0x188] sm:$0xf]
      %v1310 = vld [vmem:[%s413 + $0x18c] sm:$0xf]
      %v1311 = vld [vmem:[%s413 + $0x190] sm:$0xf]
      %v1312 = vld [vmem:[%s413 + $0x194] sm:$0xf]
      %v1313 = vld [vmem:[%s413 + $0x198] sm:$0xf]
      %v1314 = vld [vmem:[%s413 + $0x19c] sm:$0xf]
      %v1315 = vld [vmem:[%s413 + $0x1a0] sm:$0xf]
      %v1316 = vld [vmem:[%s413 + $0x1a4] sm:$0xf]
      %v1317 = vld [vmem:[%s413 + $0x1a8] sm:$0xf]
      %v1318 = vld [vmem:[%s413 + $0x1ac] sm:$0xf]
      %v1319 = vld [vmem:[%s413 + $0x1b0] sm:$0xf]
      %v1320 = vld [vmem:[%s413 + $0x1b4] sm:$0xf]
      %v1321 = vld [vmem:[%s413 + $0x1b8] sm:$0xf]
      %v1322 = vld [vmem:[%s413 + $0x1bc] sm:$0xf]
      %v1323 = vld [vmem:[%s413 + $0x1c0] sm:$0xf]
      %v1324 = vld [vmem:[%s413 + $0x1c4] sm:$0xf]
      %v1325 = vld [vmem:[%s413 + $0x1c8] sm:$0xf]
      %v1326 = vld [vmem:[%s413 + $0x1cc] sm:$0xf]
      %v1327 = vld [vmem:[%s413 + $0x1d0] sm:$0xf]
      %v1328 = vld [vmem:[%s413 + $0x1d4] sm:$0xf]
      %v1329 = vld [vmem:[%s413 + $0x1d8] sm:$0xf]
      %v1330 = vld [vmem:[%s413 + $0x1dc] sm:$0xf]
      %v1331 = vld [vmem:[%s413 + $0x1e0] sm:$0xf]
      %v1332 = vld [vmem:[%s413 + $0x1e4] sm:$0xf]
      %v1333 = vld [vmem:[%s413 + $0x1e8] sm:$0xf]
      %v1334 = vld [vmem:[%s413 + $0x1ec] sm:$0xf]
      %v1335 = vld [vmem:[%s413 + $0x1f0] sm:$0xf]
      %v1336 = vld [vmem:[%s413 + $0x1f4] sm:$0xf]
      %v1337 = vld [vmem:[%s413 + $0x1f8] sm:$0xf]
      %v1338 = vld [vmem:[%s413 + $0x1fc] sm:$0xf]
      %v1339 = vld [vmem:[%s413 + $0x200] sm:$0xf]
      %v1340 = vld [vmem:[%s413 + $0x204] sm:$0xf]
      %v1341 = vld [vmem:[%s413 + $0x208] sm:$0xf]
      %v1342 = vld [vmem:[%s413 + $0x20c] sm:$0xf]
      %v1343 = vld [vmem:[%s413 + $0x210] sm:$0xf]
      %v1344 = vld [vmem:[%s413 + $0x214] sm:$0xf]
      %v1345 = vld [vmem:[%s413 + $0x218] sm:$0xf]
      %v1346 = vld [vmem:[%s413 + $0x21c] sm:$0xf]
      %v1347 = vld [vmem:[%s413 + $0x220] sm:$0xf]
      %v1348 = vld [vmem:[%s413 + $0x224] sm:$0xf]
      %v1349 = vld [vmem:[%s413 + $0x228] sm:$0xf]
      %v1350 = vld [vmem:[%s413 + $0x22c] sm:$0xf]
      %v1351 = vld [vmem:[%s413 + $0x230] sm:$0xf]
      %v1352 = vld [vmem:[%s413 + $0x234] sm:$0xf]
      %v1353 = vld [vmem:[%s413 + $0x238] sm:$0xf]
      %v1354 = vld [vmem:[%s413 + $0x23c] sm:$0xf]
      %v1355 = vld [vmem:[%s413 + $0x240] sm:$0xf]
      %v1356 = vld [vmem:[%s413 + $0x244] sm:$0xf]
      %v1357 = vld [vmem:[%s413 + $0x248] sm:$0xf]
      %v1358 = vld [vmem:[%s413 + $0x24c] sm:$0xf]
      %v1359 = vld [vmem:[%s413 + $0x250] sm:$0xf]
      %v1360 = vld [vmem:[%s413 + $0x254] sm:$0xf]
      %v1361 = vld [vmem:[%s413 + $0x258] sm:$0xf]
      %v1362 = vld [vmem:[%s413 + $0x25c] sm:$0xf]
      %v1363 = vld [vmem:[%s413 + $0x260] sm:$0xf]
      %v1364 = vld [vmem:[%s413 + $0x264] sm:$0xf]
      %v1365 = vld [vmem:[%s413 + $0x268] sm:$0xf]
      %v1366 = vld [vmem:[%s413 + $0x26c] sm:$0xf]
      %v1367 = vld [vmem:[%s413 + $0x270] sm:$0xf]
      %v1368 = vld [vmem:[%s413 + $0x274] sm:$0xf]
      %v1369 = vld [vmem:[%s413 + $0x278] sm:$0xf]
      %v1370 = vld [vmem:[%s413 + $0x27c] sm:$0xf]
      %v1371 = vld [vmem:[%s413 + $0x280] sm:$0xf]
      %v1372 = vld [vmem:[%s413 + $0x284] sm:$0xf]
      %v1373 = vld [vmem:[%s413 + $0x288] sm:$0xf]
      %v1374 = vld [vmem:[%s413 + $0x28c] sm:$0xf]
      %v1375 = vld [vmem:[%s413 + $0x290] sm:$0xf]
      %v1376 = vld [vmem:[%s413 + $0x294] sm:$0xf]
      %v1377 = vld [vmem:[%s413 + $0x298] sm:$0xf]
      %v1378 = vld [vmem:[%s413 + $0x29c] sm:$0xf]
      %v1379 = vld [vmem:[%s413 + $0x2a0] sm:$0xf]
      %v1380 = vld [vmem:[%s413 + $0x2a4] sm:$0xf]
      %v1381 = vld [vmem:[%s413 + $0x2a8] sm:$0xf]
      %v1382 = vld [vmem:[%s413 + $0x2ac] sm:$0xf]
      %v1383 = vld [vmem:[%s413 + $0x2b0] sm:$0xf]
      %v1384 = vld [vmem:[%s413 + $0x2b4] sm:$0xf]
      %v1385 = vld [vmem:[%s413 + $0x2b8] sm:$0xf]
      %v1386 = vld [vmem:[%s413 + $0x2bc] sm:$0xf]
      %v1387 = vld [vmem:[%s413 + $0x2c0] sm:$0xf]
      %v1388 = vld [vmem:[%s413 + $0x2c4] sm:$0xf]
      %v1389 = vld [vmem:[%s413 + $0x2c8] sm:$0xf]
      %v1390 = vld [vmem:[%s413 + $0x2cc] sm:$0xf]
      %v1391 = vld [vmem:[%s413 + $0x2d0] sm:$0xf]
      %v1392 = vld [vmem:[%s413 + $0x2d4] sm:$0xf]
      %v1393 = vld [vmem:[%s413 + $0x2d8] sm:$0xf]
      %v1394 = vld [vmem:[%s413 + $0x2dc] sm:$0xf]
      %v1395 = vld [vmem:[%s413 + $0x2e0] sm:$0xf]
      %v1396 = vld [vmem:[%s413 + $0x2e4] sm:$0xf]
      %v1397 = vld [vmem:[%s413 + $0x2e8] sm:$0xf]
      %v1398 = vld [vmem:[%s413 + $0x2ec] sm:$0xf]
      %v1399 = vld [vmem:[%s413 + $0x2f0] sm:$0xf]
      %v1400 = vld [vmem:[%s413 + $0x2f4] sm:$0xf]
      %v1401 = vld [vmem:[%s413 + $0x2f8] sm:$0xf]
      %v1402 = vld [vmem:[%s413 + $0x2fc] sm:$0xf]
      %v1403 = vld [vmem:[%s413 + $0x300] sm:$0xf]
      %v1404 = vld [vmem:[%s413 + $0x304] sm:$0xf]
      %v1405 = vld [vmem:[%s413 + $0x308] sm:$0xf]
      %v1406 = vld [vmem:[%s413 + $0x30c] sm:$0xf]
      %v1407 = vld [vmem:[%s413 + $0x310] sm:$0xf]
      %v1408 = vld [vmem:[%s413 + $0x314] sm:$0xf]
      %v1409 = vld [vmem:[%s413 + $0x318] sm:$0xf]
      %v1410 = vld [vmem:[%s413 + $0x31c] sm:$0xf]
      %v1411 = vld [vmem:[%s413 + $0x320] sm:$0xf]
      %v1412 = vld [vmem:[%s413 + $0x324] sm:$0xf]
      %v1413 = vld [vmem:[%s413 + $0x328] sm:$0xf]
      %v1414 = vld [vmem:[%s413 + $0x32c] sm:$0xf]
      %v1415 = vld [vmem:[%s413 + $0x330] sm:$0xf]
      %v1416 = vld [vmem:[%s413 + $0x334] sm:$0xf]
      %v1417 = vld [vmem:[%s413 + $0x338] sm:$0xf]
      %v1418 = vld [vmem:[%s413 + $0x33c] sm:$0xf]
      %v1419 = vld [vmem:[%s413 + $0x340] sm:$0xf]
      %v1420 = vld [vmem:[%s413 + $0x344] sm:$0xf]
      %v1421 = vld [vmem:[%s413 + $0x348] sm:$0xf]
      %v1422 = vld [vmem:[%s413 + $0x34c] sm:$0xf]
      %v1423 = vld [vmem:[%s413 + $0x350] sm:$0xf]
      %v1424 = vld [vmem:[%s413 + $0x354] sm:$0xf]
      %v1425 = vld [vmem:[%s413 + $0x358] sm:$0xf]
      %v1426 = vld [vmem:[%s413 + $0x35c] sm:$0xf]
      %v1427 = vld [vmem:[%s413 + $0x360] sm:$0xf]
      %v1428 = vld [vmem:[%s413 + $0x364] sm:$0xf]
      %v1429 = vld [vmem:[%s413 + $0x368] sm:$0xf]
      %v1430 = vld [vmem:[%s413 + $0x36c] sm:$0xf]
      %v1431 = vld [vmem:[%s413 + $0x370] sm:$0xf]
      %v1432 = vld [vmem:[%s413 + $0x374] sm:$0xf]
      %v1433 = vld [vmem:[%s413 + $0x378] sm:$0xf]
      %v1434 = vld [vmem:[%s413 + $0x37c] sm:$0xf]
      %v1435 = vld [vmem:[%s413 + $0x380] sm:$0xf]
      %v1436 = vld [vmem:[%s413 + $0x384] sm:$0xf]
      %v1437 = vld [vmem:[%s413 + $0x388] sm:$0xf]
      %v1438 = vld [vmem:[%s413 + $0x38c] sm:$0xf]
      %v1439 = vld [vmem:[%s413 + $0x390] sm:$0xf]
      %v1440 = vld [vmem:[%s413 + $0x394] sm:$0xf]
      %v1441 = vld [vmem:[%s413 + $0x398] sm:$0xf]
      %v1442 = vld [vmem:[%s413 + $0x39c] sm:$0xf]
      %v1443 = vld [vmem:[%s413 + $0x3a0] sm:$0xf]
      %v1444 = vld [vmem:[%s413 + $0x3a4] sm:$0xf]
      %v1445 = vld [vmem:[%s413 + $0x3a8] sm:$0xf]
      %v1446 = vld [vmem:[%s413 + $0x3ac] sm:$0xf]
      %v1447 = vld [vmem:[%s413 + $0x3b0] sm:$0xf]
      %v1448 = vld [vmem:[%s413 + $0x3b4] sm:$0xf]
      %v1449 = vld [vmem:[%s413 + $0x3b8] sm:$0xf]
      %v1450 = vld [vmem:[%s413 + $0x3bc] sm:$0xf]
      %v1451 = vld [vmem:[%s413 + $0x3c0] sm:$0xf]
      %v1452 = vld [vmem:[%s413 + $0x3c4] sm:$0xf]
      %v1453 = vld [vmem:[%s413 + $0x3c8] sm:$0xf]
      %v1454 = vld [vmem:[%s413 + $0x3cc] sm:$0xf]
      %v1455 = vld [vmem:[%s413 + $0x3d0] sm:$0xf]
      %v1456 = vld [vmem:[%s413 + $0x3d4] sm:$0xf]
      %v1457 = vld [vmem:[%s413 + $0x3d8] sm:$0xf]
      %v1458 = vld [vmem:[%s413 + $0x3dc] sm:$0xf]
      %v1459 = vld [vmem:[%s413 + $0x3e0] sm:$0xf]
      %v1460 = vld [vmem:[%s413 + $0x3e4] sm:$0xf]
      %v1461 = vld [vmem:[%s413 + $0x3e8] sm:$0xf]
      %v1462 = vld [vmem:[%s413 + $0x3ec] sm:$0xf]
      %v1463 = vld [vmem:[%s413 + $0x3f0] sm:$0xf]
      %v1464 = vld [vmem:[%s413 + $0x3f4] sm:$0xf]
      %v1465 = vld [vmem:[%s413 + $0x3f8] sm:$0xf]
      %v1466 = vld [vmem:[%s413 + $0x3fc] sm:$0xf]
      %v1467 = vld [vmem:[%s413 + $0x400] sm:$0xf]
      %v1468 = vld [vmem:[%s413 + $0x404] sm:$0xf]
      %v1469 = vld [vmem:[%s413 + $0x408] sm:$0xf]
      %v1470 = vld [vmem:[%s413 + $0x40c] sm:$0xf]
      %v1471 = vld [vmem:[%s413 + $0x410] sm:$0xf]
      %v1472 = vld [vmem:[%s413 + $0x414] sm:$0xf]
      %v1473 = vld [vmem:[%s413 + $0x418] sm:$0xf]
      %v1474 = vld [vmem:[%s413 + $0x41c] sm:$0xf]
      %v1475 = vld [vmem:[%s413 + $0x420] sm:$0xf]
      %v1476 = vld [vmem:[%s413 + $0x424] sm:$0xf]
      %v1477 = vld [vmem:[%s413 + $0x428] sm:$0xf]
      %v1478 = vld [vmem:[%s413 + $0x42c] sm:$0xf]
      %v1479 = vld [vmem:[%s413 + $0x430] sm:$0xf]
      %v1480 = vld [vmem:[%s413 + $0x434] sm:$0xf]
      %v1481 = vld [vmem:[%s413 + $0x438] sm:$0xf]
      %v1482 = vld [vmem:[%s413 + $0x43c] sm:$0xf]
      %v1483 = vld [vmem:[%s413 + $0x440] sm:$0xf]
      %v1484 = vld [vmem:[%s413 + $0x444] sm:$0xf]
      %v1485 = vld [vmem:[%s413 + $0x448] sm:$0xf]
      %v1486 = vld [vmem:[%s413 + $0x44c] sm:$0xf]
      %v1487 = vld [vmem:[%s413 + $0x450] sm:$0xf]
      %v1488 = vld [vmem:[%s413 + $0x454] sm:$0xf]
      %v1489 = vld [vmem:[%s413 + $0x458] sm:$0xf]
      %v1490 = vld [vmem:[%s413 + $0x45c] sm:$0xf]
      %v1491 = vld [vmem:[%s413 + $0x460] sm:$0xf]
      %v1492 = vld [vmem:[%s413 + $0x464] sm:$0xf]
      %v1493 = vld [vmem:[%s413 + $0x468] sm:$0xf]
      %v1494 = vld [vmem:[%s413 + $0x46c] sm:$0xf]
      %v1495 = vld [vmem:[%s413 + $0x470] sm:$0xf]
      %v1496 = vld [vmem:[%s413 + $0x474] sm:$0xf]
      %v1497 = vld [vmem:[%s413 + $0x478] sm:$0xf]
      %v1498 = vld [vmem:[%s413 + $0x47c] sm:$0xf]
      %v1499 = vld [vmem:[%s413 + $0x480] sm:$0xf]
      %v1500 = vld [vmem:[%s413 + $0x484] sm:$0xf]
      %v1501 = vld [vmem:[%s413 + $0x488] sm:$0xf]
      %v1502 = vld [vmem:[%s413 + $0x48c] sm:$0xf]
      %v1503 = vld [vmem:[%s413 + $0x490] sm:$0xf]
      %v1504 = vld [vmem:[%s413 + $0x494] sm:$0xf]
      %v1505 = vld [vmem:[%s413 + $0x498] sm:$0xf]
      %v1506 = vld [vmem:[%s413 + $0x49c] sm:$0xf]
      %v1507 = vld [vmem:[%s413 + $0x4a0] sm:$0xf]
      %v1508 = vld [vmem:[%s413 + $0x4a4] sm:$0xf]
      %v1509 = vld [vmem:[%s413 + $0x4a8] sm:$0xf]
      %v1510 = vld [vmem:[%s413 + $0x4ac] sm:$0xf]
      %v1511 = vld [vmem:[%s413 + $0x4b0] sm:$0xf]
      %v1512 = vld [vmem:[%s413 + $0x4b4] sm:$0xf]
      %v1513 = vld [vmem:[%s413 + $0x4b8] sm:$0xf]
      %v1514 = vld [vmem:[%s413 + $0x4bc] sm:$0xf]
      %v1515 = vld [vmem:[%s413 + $0x4c0] sm:$0xf]
      %v1516 = vld [vmem:[%s413 + $0x4c4] sm:$0xf]
      %v1517 = vld [vmem:[%s413 + $0x4c8] sm:$0xf]
      %v1518 = vld [vmem:[%s413 + $0x4cc] sm:$0xf]
      %v1519 = vld [vmem:[%s413 + $0x4d0] sm:$0xf]
      %v1520 = vld [vmem:[%s413 + $0x4d4] sm:$0xf]
      %v1521 = vld [vmem:[%s413 + $0x4d8] sm:$0xf]
      %v1522 = vld [vmem:[%s413 + $0x4dc] sm:$0xf]
      %v1523 = vld [vmem:[%s413 + $0x4e0] sm:$0xf]
      %v1524 = vld [vmem:[%s413 + $0x4e4] sm:$0xf]
      %v1525 = vld [vmem:[%s413 + $0x4e8] sm:$0xf]
      %v1526 = vld [vmem:[%s413 + $0x4ec] sm:$0xf]
      %v1527 = vld [vmem:[%s413 + $0x4f0] sm:$0xf]
      %v1528 = vld [vmem:[%s413 + $0x4f4] sm:$0xf]
      %v1529 = vld [vmem:[%s413 + $0x4f8] sm:$0xf]
      %v1530 = vld [vmem:[%s413 + $0x4fc] sm:$0xf]
      %v1531 = vld [vmem:[%s413 + $0x500] sm:$0xf]
      %v1532 = vld [vmem:[%s413 + $0x504] sm:$0xf]
      %v1533 = vld [vmem:[%s413 + $0x508] sm:$0xf]
      %v1534 = vld [vmem:[%s413 + $0x50c] sm:$0xf]
      %v1535 = vld [vmem:[%s413 + $0x510] sm:$0xf]
      %v1536 = vld [vmem:[%s413 + $0x514] sm:$0xf]
      %v1537 = vld [vmem:[%s413 + $0x518] sm:$0xf]
      %v1538 = vld [vmem:[%s413 + $0x51c] sm:$0xf]
      %v1539 = vld [vmem:[%s413 + $0x520] sm:$0xf]
      %v1540 = vld [vmem:[%s413 + $0x524] sm:$0xf]
      %v1541 = vld [vmem:[%s413 + $0x528] sm:$0xf]
      %v1542 = vld [vmem:[%s413 + $0x52c] sm:$0xf]
      %v1543 = vld [vmem:[%s413 + $0x530] sm:$0xf]
      %v1544 = vld [vmem:[%s413 + $0x534] sm:$0xf]
      %v1545 = vld [vmem:[%s413 + $0x538] sm:$0xf]
      %v1546 = vld [vmem:[%s413 + $0x53c] sm:$0xf]
      %v1547 = vld [vmem:[%s413 + $0x540] sm:$0xf]
      %v1548 = vld [vmem:[%s413 + $0x544] sm:$0xf]
      %v1549 = vld [vmem:[%s413 + $0x548] sm:$0xf]
      %v1550 = vld [vmem:[%s413 + $0x54c] sm:$0xf]
      %v1551 = vld [vmem:[%s413 + $0x550] sm:$0xf]
      %v1552 = vld [vmem:[%s413 + $0x554] sm:$0xf]
      %v1553 = vld [vmem:[%s413 + $0x558] sm:$0xf]
      %v1554 = vld [vmem:[%s413 + $0x55c] sm:$0xf]
      %v1555 = vld [vmem:[%s413 + $0x560] sm:$0xf]
      %v1556 = vld [vmem:[%s413 + $0x564] sm:$0xf]
      %v1557 = vld [vmem:[%s413 + $0x568] sm:$0xf]
      %v1558 = vld [vmem:[%s413 + $0x56c] sm:$0xf]
      %v1559 = vld [vmem:[%s413 + $0x570] sm:$0xf]
      %v1560 = vld [vmem:[%s413 + $0x574] sm:$0xf]
      %v1561 = vld [vmem:[%s413 + $0x578] sm:$0xf]
      %v1562 = vld [vmem:[%s413 + $0x57c] sm:$0xf]
      %v1563 = vld [vmem:[%s413 + $0x580] sm:$0xf]
      %v1564 = vld [vmem:[%s413 + $0x584] sm:$0xf]
      %v1565 = vld [vmem:[%s413 + $0x588] sm:$0xf]
      %v1566 = vld [vmem:[%s413 + $0x58c] sm:$0xf]
      %v1567 = vld [vmem:[%s413 + $0x590] sm:$0xf]
      %v1568 = vld [vmem:[%s413 + $0x594] sm:$0xf]
      %v1569 = vld [vmem:[%s413 + $0x598] sm:$0xf]
      %v1570 = vld [vmem:[%s413 + $0x59c] sm:$0xf]
      %v1571 = vld [vmem:[%s413 + $0x5a0] sm:$0xf]
      %v1572 = vld [vmem:[%s413 + $0x5a4] sm:$0xf]
      %v1573 = vld [vmem:[%s413 + $0x5a8] sm:$0xf]
      %v1574 = vld [vmem:[%s413 + $0x5ac] sm:$0xf]
      %v1575 = vld [vmem:[%s413 + $0x5b0] sm:$0xf]
      %v1576 = vld [vmem:[%s413 + $0x5b4] sm:$0xf]
      %v1577 = vld [vmem:[%s413 + $0x5b8] sm:$0xf]
      %v1578 = vld [vmem:[%s413 + $0x5bc] sm:$0xf]
      %v1579 = vld [vmem:[%s413 + $0x5c0] sm:$0xf]
      %v1580 = vld [vmem:[%s413 + $0x5c4] sm:$0xf]
      %v1581 = vld [vmem:[%s413 + $0x5c8] sm:$0xf]
      %v1582 = vld [vmem:[%s413 + $0x5cc] sm:$0xf]
      %v1583 = vld [vmem:[%s413 + $0x5d0] sm:$0xf]
      %v1584 = vld [vmem:[%s413 + $0x5d4] sm:$0xf]
      %v1585 = vld [vmem:[%s413 + $0x5d8] sm:$0xf]
      %v1586 = vld [vmem:[%s413 + $0x5dc] sm:$0xf]
      %v1587 = vld [vmem:[%s413 + $0x5e0] sm:$0xf]
      %v1588 = vld [vmem:[%s413 + $0x5e4] sm:$0xf]
      %v1589 = vld [vmem:[%s413 + $0x5e8] sm:$0xf]
      %v1590 = vld [vmem:[%s413 + $0x5ec] sm:$0xf]
      %v1591 = vld [vmem:[%s413 + $0x5f0] sm:$0xf]
      %v1592 = vld [vmem:[%s413 + $0x5f4] sm:$0xf]
      %v1593 = vld [vmem:[%s413 + $0x5f8] sm:$0xf]
      %v1594 = vld [vmem:[%s413 + $0x5fc] sm:$0xf]
      %v1595 = vld [vmem:[%s5] sm:$0xff]
      %v1596 = vld [vmem:[%s5 + $0x8] sm:$0xff]
      %v1597 = vld [vmem:[%s5 + $0x10] sm:$0xff]
      %v1598 = vld [vmem:[%s5 + $0x18] sm:$0xff]
      %1600 = vset.pattern.permute.xlu0 3
      %1601 = vperm.xlu0 %1600, %v1595
      %v1602 = vpop.permute.xlu0 %1601
      %1605 = vset.pattern.permute.xlu0 3
      %1606 = vperm.xlu0 %1605, %v1596
      %v1607 = vpop.permute.xlu0 %1606
      %1610 = vset.pattern.permute.xlu0 3
      %1611 = vperm.xlu0 %1610, %v1597
      %v1612 = vpop.permute.xlu0 %1611
      %1615 = vset.pattern.permute.xlu0 3
      %1616 = vperm.xlu0 %1615, %v1598
      %v1617 = vpop.permute.xlu0 %1616
      %v1667 = vunpack.c.l.b16 %v1163
      %v1668 = vunpack.c.h.b16 %v1163
      %v1669 = vunpack.c.l.b16 %v1164
      %v1670 = vunpack.c.h.b16 %v1164
      %v1671 = vunpack.c.l.b16 %v1165
      %v1672 = vunpack.c.h.b16 %v1165
      %v1673 = vunpack.c.l.b16 %v1166
      %v1674 = vunpack.c.h.b16 %v1166
      %v1675 = vunpack.c.l.b16 %v1167
      %v1676 = vunpack.c.h.b16 %v1167
      %v1677 = vunpack.c.l.b16 %v1168
      %v1678 = vunpack.c.h.b16 %v1168
      %v1679 = vunpack.c.l.b16 %v1169
      %v1680 = vunpack.c.h.b16 %v1169
      %v1681 = vunpack.c.l.b16 %v1170
      %v1682 = vunpack.c.h.b16 %v1170
      %v1683 = vunpack.c.l.b16 %v1171
      %v1684 = vunpack.c.h.b16 %v1171
      %v1685 = vunpack.c.l.b16 %v1172
      %v1686 = vunpack.c.h.b16 %v1172
      %v1687 = vunpack.c.l.b16 %v1173
      %v1688 = vunpack.c.h.b16 %v1173
      %v1689 = vunpack.c.l.b16 %v1174
      %v1690 = vunpack.c.h.b16 %v1174
      %v1691 = vunpack.c.l.b16 %v1175
      %v1692 = vunpack.c.h.b16 %v1175
      %v1693 = vunpack.c.l.b16 %v1176
      %v1694 = vunpack.c.h.b16 %v1176
      %v1695 = vunpack.c.l.b16 %v1177
      %v1696 = vunpack.c.h.b16 %v1177
      %v1697 = vunpack.c.l.b16 %v1178
      %v1698 = vunpack.c.h.b16 %v1178
      %v1699 = vunpack.c.l.b16 %v1179
      %v1700 = vunpack.c.h.b16 %v1179
      %v1701 = vunpack.c.l.b16 %v1180
      %v1702 = vunpack.c.h.b16 %v1180
      %v1703 = vunpack.c.l.b16 %v1181
      %v1704 = vunpack.c.h.b16 %v1181
      %v1705 = vunpack.c.l.b16 %v1182
      %v1706 = vunpack.c.h.b16 %v1182
      %v1707 = vunpack.c.l.b16 %v1183
      %v1708 = vunpack.c.h.b16 %v1183
      %v1709 = vunpack.c.l.b16 %v1184
      %v1710 = vunpack.c.h.b16 %v1184
      %v1711 = vunpack.c.l.b16 %v1185
      %v1712 = vunpack.c.h.b16 %v1185
      %v1713 = vunpack.c.l.b16 %v1186
      %v1714 = vunpack.c.h.b16 %v1186
      %v1715 = vunpack.c.l.b16 %v1187
      %v1716 = vunpack.c.h.b16 %v1187
      %v1717 = vunpack.c.l.b16 %v1188
      %v1718 = vunpack.c.h.b16 %v1188
      %v1719 = vunpack.c.l.b16 %v1189
      %v1720 = vunpack.c.h.b16 %v1189
      %v1721 = vunpack.c.l.b16 %v1190
      %v1722 = vunpack.c.h.b16 %v1190
      %v1723 = vunpack.c.l.b16 %v1191
      %v1724 = vunpack.c.h.b16 %v1191
      %v1725 = vunpack.c.l.b16 %v1192
      %v1726 = vunpack.c.h.b16 %v1192
      %v1727 = vunpack.c.l.b16 %v1193
      %v1728 = vunpack.c.h.b16 %v1193
      %v1729 = vunpack.c.l.b16 %v1194
      %v1730 = vunpack.c.h.b16 %v1194
      %v1731 = vunpack.c.l.b16 %v1195
      %v1732 = vunpack.c.h.b16 %v1195
      %v1733 = vunpack.c.l.b16 %v1196
      %v1734 = vunpack.c.h.b16 %v1196
      %v1735 = vunpack.c.l.b16 %v1197
      %v1736 = vunpack.c.h.b16 %v1197
      %v1737 = vunpack.c.l.b16 %v1198
      %v1738 = vunpack.c.h.b16 %v1198
      %v1739 = vunpack.c.l.b16 %v1199
      %v1740 = vunpack.c.h.b16 %v1199
      %v1741 = vunpack.c.l.b16 %v1200
      %v1742 = vunpack.c.h.b16 %v1200
      %v1743 = vunpack.c.l.b16 %v1201
      %v1744 = vunpack.c.h.b16 %v1201
      %v1745 = vunpack.c.l.b16 %v1202
      %v1746 = vunpack.c.h.b16 %v1202
      %v1747 = vunpack.c.l.b16 %v1203
      %v1748 = vunpack.c.h.b16 %v1203
      %v1749 = vunpack.c.l.b16 %v1204
      %v1750 = vunpack.c.h.b16 %v1204
      %v1751 = vunpack.c.l.b16 %v1205
      %v1752 = vunpack.c.h.b16 %v1205
      %v1753 = vunpack.c.l.b16 %v1206
      %v1754 = vunpack.c.h.b16 %v1206
      %v1755 = vunpack.c.l.b16 %v1207
      %v1756 = vunpack.c.h.b16 %v1207
      %v1757 = vunpack.c.l.b16 %v1208
      %v1758 = vunpack.c.h.b16 %v1208
      %v1759 = vunpack.c.l.b16 %v1209
      %v1760 = vunpack.c.h.b16 %v1209
      %v1761 = vunpack.c.l.b16 %v1210
      %v1762 = vunpack.c.h.b16 %v1210
      %v1763 = vpack.c.b16 %v1691, %v1667
      %v1764 = vpack.c.b16 %v1692, %v1668
      %v1765 = vpack.c.b16 %v1693, %v1669
      %v1766 = vpack.c.b16 %v1694, %v1670
      %v1767 = vpack.c.b16 %v1695, %v1671
      %v1768 = vpack.c.b16 %v1696, %v1672
      %v1769 = vpack.c.b16 %v1697, %v1673
      %v1770 = vpack.c.b16 %v1698, %v1674
      %v1771 = vpack.c.b16 %v1699, %v1675
      %v1772 = vpack.c.b16 %v1700, %v1676
      %v1773 = vpack.c.b16 %v1701, %v1677
      %v1774 = vpack.c.b16 %v1702, %v1678
      %v1775 = vpack.c.b16 %v1703, %v1679
      %v1776 = vpack.c.b16 %v1704, %v1680
      %v1777 = vpack.c.b16 %v1705, %v1681
      %v1778 = vpack.c.b16 %v1706, %v1682
      %v1779 = vpack.c.b16 %v1707, %v1683
      %v1780 = vpack.c.b16 %v1708, %v1684
      %v1781 = vpack.c.b16 %v1709, %v1685
      %v1782 = vpack.c.b16 %v1710, %v1686
      %v1783 = vpack.c.b16 %v1711, %v1687
      %v1784 = vpack.c.b16 %v1712, %v1688
      %v1785 = vpack.c.b16 %v1713, %v1689
      %v1786 = vpack.c.b16 %v1714, %v1690
      %v1787 = vpack.c.b16 %v1739, %v1715
      %v1788 = vpack.c.b16 %v1740, %v1716
      %v1789 = vpack.c.b16 %v1741, %v1717
      %v1790 = vpack.c.b16 %v1742, %v1718
      %v1791 = vpack.c.b16 %v1743, %v1719
      %v1792 = vpack.c.b16 %v1744, %v1720
      %v1793 = vpack.c.b16 %v1745, %v1721
      %v1794 = vpack.c.b16 %v1746, %v1722
      %v1795 = vpack.c.b16 %v1747, %v1723
      %v1796 = vpack.c.b16 %v1748, %v1724
      %v1797 = vpack.c.b16 %v1749, %v1725
      %v1798 = vpack.c.b16 %v1750, %v1726
      %v1799 = vpack.c.b16 %v1751, %v1727
      %v1800 = vpack.c.b16 %v1752, %v1728
      %v1801 = vpack.c.b16 %v1753, %v1729
      %v1802 = vpack.c.b16 %v1754, %v1730
      %v1803 = vpack.c.b16 %v1755, %v1731
      %v1804 = vpack.c.b16 %v1756, %v1732
      %v1805 = vpack.c.b16 %v1757, %v1733
      %v1806 = vpack.c.b16 %v1758, %v1734
      %v1807 = vpack.c.b16 %v1759, %v1735
      %v1808 = vpack.c.b16 %v1760, %v1736
      %v1809 = vpack.c.b16 %v1761, %v1737
      %v1810 = vpack.c.b16 %v1762, %v1738
      %v2243 = vunpack.c.l.b16 %v1211
      %v2244 = vunpack.c.l.b16 %v1212
      %v2245 = vunpack.c.l.b16 %v1213
      %v2246 = vunpack.c.l.b16 %v1214
      %v2247 = vunpack.c.l.b16 %v1215
      %v2248 = vunpack.c.l.b16 %v1216
      %v2249 = vunpack.c.l.b16 %v1217
      %v2250 = vunpack.c.l.b16 %v1218
      %v2251 = vunpack.c.l.b16 %v1219
      %v2252 = vunpack.c.l.b16 %v1220
      %v2253 = vunpack.c.l.b16 %v1221
      %v2254 = vunpack.c.l.b16 %v1222
      %v2255 = vunpack.c.l.b16 %v1223
      %v2256 = vunpack.c.l.b16 %v1224
      %v2257 = vunpack.c.l.b16 %v1225
      %v2258 = vunpack.c.l.b16 %v1226
      %v2259 = vunpack.c.l.b16 %v1227
      %v2260 = vunpack.c.l.b16 %v1228
      %v2261 = vunpack.c.l.b16 %v1229
      %v2262 = vunpack.c.l.b16 %v1230
      %v2263 = vunpack.c.l.b16 %v1231
      %v2264 = vunpack.c.l.b16 %v1232
      %v2265 = vunpack.c.l.b16 %v1233
      %v2266 = vunpack.c.l.b16 %v1234
      %v2267 = vunpack.c.l.b16 %v1235
      %v2268 = vunpack.c.l.b16 %v1236
      %v2269 = vunpack.c.l.b16 %v1237
      %v2270 = vunpack.c.l.b16 %v1238
      %v2271 = vunpack.c.l.b16 %v1239
      %v2272 = vunpack.c.l.b16 %v1240
      %v2273 = vunpack.c.l.b16 %v1241
      %v2274 = vunpack.c.l.b16 %v1242
      %v2275 = vunpack.c.l.b16 %v1243
      %v2276 = vunpack.c.l.b16 %v1244
      %v2277 = vunpack.c.l.b16 %v1245
      %v2278 = vunpack.c.l.b16 %v1246
      %v2279 = vunpack.c.l.b16 %v1247
      %v2280 = vunpack.c.l.b16 %v1248
      %v2281 = vunpack.c.l.b16 %v1249
      %v2282 = vunpack.c.l.b16 %v1250
      %v2283 = vunpack.c.l.b16 %v1251
      %v2284 = vunpack.c.l.b16 %v1252
      %v2285 = vunpack.c.l.b16 %v1253
      %v2286 = vunpack.c.l.b16 %v1254
      %v2287 = vunpack.c.l.b16 %v1255
      %v2288 = vunpack.c.l.b16 %v1256
      %v2289 = vunpack.c.l.b16 %v1257
      %v2290 = vunpack.c.l.b16 %v1258
      %v2291 = vunpack.c.l.b16 %v1259
      %v2292 = vunpack.c.l.b16 %v1260
      %v2293 = vunpack.c.l.b16 %v1261
      %v2294 = vunpack.c.l.b16 %v1262
      %v2295 = vunpack.c.l.b16 %v1263
      %v2296 = vunpack.c.l.b16 %v1264
      %v2297 = vunpack.c.l.b16 %v1265
      %v2298 = vunpack.c.l.b16 %v1266
      %v2299 = vunpack.c.l.b16 %v1267
      %v2300 = vunpack.c.l.b16 %v1268
      %v2301 = vunpack.c.l.b16 %v1269
      %v2302 = vunpack.c.l.b16 %v1270
      %v2303 = vunpack.c.l.b16 %v1271
      %v2304 = vunpack.c.l.b16 %v1272
      %v2305 = vunpack.c.l.b16 %v1273
      %v2306 = vunpack.c.l.b16 %v1274
      %v2307 = vunpack.c.l.b16 %v1275
      %v2308 = vunpack.c.l.b16 %v1276
      %v2309 = vunpack.c.l.b16 %v1277
      %v2310 = vunpack.c.l.b16 %v1278
      %v2311 = vunpack.c.l.b16 %v1279
      %v2312 = vunpack.c.l.b16 %v1280
      %v2313 = vunpack.c.l.b16 %v1281
      %v2314 = vunpack.c.l.b16 %v1282
      %v2315 = vunpack.c.l.b16 %v1283
      %v2316 = vunpack.c.l.b16 %v1284
      %v2317 = vunpack.c.l.b16 %v1285
      %v2318 = vunpack.c.l.b16 %v1286
      %v2319 = vunpack.c.l.b16 %v1287
      %v2320 = vunpack.c.l.b16 %v1288
      %v2321 = vunpack.c.l.b16 %v1289
      %v2322 = vunpack.c.l.b16 %v1290
      %v2323 = vunpack.c.l.b16 %v1291
      %v2324 = vunpack.c.l.b16 %v1292
      %v2325 = vunpack.c.l.b16 %v1293
      %v2326 = vunpack.c.l.b16 %v1294
      %v2327 = vunpack.c.l.b16 %v1295
      %v2328 = vunpack.c.l.b16 %v1296
      %v2329 = vunpack.c.l.b16 %v1297
      %v2330 = vunpack.c.l.b16 %v1298
      %v2331 = vunpack.c.l.b16 %v1299
      %v2332 = vunpack.c.l.b16 %v1300
      %v2333 = vunpack.c.l.b16 %v1301
      %v2334 = vunpack.c.l.b16 %v1302
      %v2335 = vunpack.c.l.b16 %v1303
      %v2336 = vunpack.c.l.b16 %v1304
      %v2337 = vunpack.c.l.b16 %v1305
      %v2338 = vunpack.c.l.b16 %v1306
      %v2339 = vunpack.c.l.b16 %v1307
      %v2340 = vunpack.c.l.b16 %v1308
      %v2341 = vunpack.c.l.b16 %v1309
      %v2342 = vunpack.c.l.b16 %v1310
      %v2343 = vunpack.c.l.b16 %v1311
      %v2344 = vunpack.c.l.b16 %v1312
      %v2345 = vunpack.c.l.b16 %v1313
      %v2346 = vunpack.c.l.b16 %v1314
      %v2347 = vunpack.c.l.b16 %v1315
      %v2348 = vunpack.c.l.b16 %v1316
      %v2349 = vunpack.c.l.b16 %v1317
      %v2350 = vunpack.c.l.b16 %v1318
      %v2351 = vunpack.c.l.b16 %v1319
      %v2352 = vunpack.c.l.b16 %v1320
      %v2353 = vunpack.c.l.b16 %v1321
      %v2354 = vunpack.c.l.b16 %v1322
      %v2355 = vunpack.c.l.b16 %v1323
      %v2356 = vunpack.c.l.b16 %v1324
      %v2357 = vunpack.c.l.b16 %v1325
      %v2358 = vunpack.c.l.b16 %v1326
      %v2359 = vunpack.c.l.b16 %v1327
      %v2360 = vunpack.c.l.b16 %v1328
      %v2361 = vunpack.c.l.b16 %v1329
      %v2362 = vunpack.c.l.b16 %v1330
      %v2363 = vunpack.c.l.b16 %v1331
      %v2364 = vunpack.c.l.b16 %v1332
      %v2365 = vunpack.c.l.b16 %v1333
      %v2366 = vunpack.c.l.b16 %v1334
      %v2367 = vunpack.c.l.b16 %v1335
      %v2368 = vunpack.c.l.b16 %v1336
      %v2369 = vunpack.c.l.b16 %v1337
      %v2370 = vunpack.c.l.b16 %v1338
      %v2371 = vunpack.c.l.b16 %v1339
      %v2372 = vunpack.c.l.b16 %v1340
      %v2373 = vunpack.c.l.b16 %v1341
      %v2374 = vunpack.c.l.b16 %v1342
      %v2375 = vunpack.c.l.b16 %v1343
      %v2376 = vunpack.c.l.b16 %v1344
      %v2377 = vunpack.c.l.b16 %v1345
      %v2378 = vunpack.c.l.b16 %v1346
      %v2379 = vunpack.c.l.b16 %v1347
      %v2380 = vunpack.c.l.b16 %v1348
      %v2381 = vunpack.c.l.b16 %v1349
      %v2382 = vunpack.c.l.b16 %v1350
      %v2383 = vunpack.c.l.b16 %v1351
      %v2384 = vunpack.c.l.b16 %v1352
      %v2385 = vunpack.c.l.b16 %v1353
      %v2386 = vunpack.c.l.b16 %v1354
      %v2387 = vunpack.c.l.b16 %v1355
      %v2388 = vunpack.c.l.b16 %v1356
      %v2389 = vunpack.c.l.b16 %v1357
      %v2390 = vunpack.c.l.b16 %v1358
      %v2391 = vunpack.c.l.b16 %v1359
      %v2392 = vunpack.c.l.b16 %v1360
      %v2393 = vunpack.c.l.b16 %v1361
      %v2394 = vunpack.c.l.b16 %v1362
      %v2395 = vunpack.c.l.b16 %v1363
      %v2396 = vunpack.c.l.b16 %v1364
      %v2397 = vunpack.c.l.b16 %v1365
      %v2398 = vunpack.c.l.b16 %v1366
      %v2399 = vunpack.c.l.b16 %v1367
      %v2400 = vunpack.c.l.b16 %v1368
      %v2401 = vunpack.c.l.b16 %v1369
      %v2402 = vunpack.c.l.b16 %v1370
      %v2403 = vunpack.c.l.b16 %v1371
      %v2404 = vunpack.c.l.b16 %v1372
      %v2405 = vunpack.c.l.b16 %v1373
      %v2406 = vunpack.c.l.b16 %v1374
      %v2407 = vunpack.c.l.b16 %v1375
      %v2408 = vunpack.c.l.b16 %v1376
      %v2409 = vunpack.c.l.b16 %v1377
      %v2410 = vunpack.c.l.b16 %v1378
      %v2411 = vunpack.c.l.b16 %v1379
      %v2412 = vunpack.c.l.b16 %v1380
      %v2413 = vunpack.c.l.b16 %v1381
      %v2414 = vunpack.c.l.b16 %v1382
      %v2415 = vunpack.c.l.b16 %v1383
      %v2416 = vunpack.c.l.b16 %v1384
      %v2417 = vunpack.c.l.b16 %v1385
      %v2418 = vunpack.c.l.b16 %v1386
      %v2419 = vunpack.c.l.b16 %v1387
      %v2420 = vunpack.c.l.b16 %v1388
      %v2421 = vunpack.c.l.b16 %v1389
      %v2422 = vunpack.c.l.b16 %v1390
      %v2423 = vunpack.c.l.b16 %v1391
      %v2424 = vunpack.c.l.b16 %v1392
      %v2425 = vunpack.c.l.b16 %v1393
      %v2426 = vunpack.c.l.b16 %v1394
      %v2427 = vunpack.c.l.b16 %v1395
      %v2428 = vunpack.c.l.b16 %v1396
      %v2429 = vunpack.c.l.b16 %v1397
      %v2430 = vunpack.c.l.b16 %v1398
      %v2431 = vunpack.c.l.b16 %v1399
      %v2432 = vunpack.c.l.b16 %v1400
      %v2433 = vunpack.c.l.b16 %v1401
      %v2434 = vunpack.c.l.b16 %v1402
      %v2435 = vunpack.c.l.b16 %v1403
      %v2436 = vunpack.c.l.b16 %v1404
      %v2437 = vunpack.c.l.b16 %v1405
      %v2438 = vunpack.c.l.b16 %v1406
      %v2439 = vunpack.c.l.b16 %v1407
      %v2440 = vunpack.c.l.b16 %v1408
      %v2441 = vunpack.c.l.b16 %v1409
      %v2442 = vunpack.c.l.b16 %v1410
      %v2443 = vunpack.c.l.b16 %v1411
      %v2444 = vunpack.c.l.b16 %v1412
      %v2445 = vunpack.c.l.b16 %v1413
      %v2446 = vunpack.c.l.b16 %v1414
      %v2447 = vunpack.c.l.b16 %v1415
      %v2448 = vunpack.c.l.b16 %v1416
      %v2449 = vunpack.c.l.b16 %v1417
      %v2450 = vunpack.c.l.b16 %v1418
      %v2451 = vunpack.c.l.b16 %v1419
      %v2452 = vunpack.c.l.b16 %v1420
      %v2453 = vunpack.c.l.b16 %v1421
      %v2454 = vunpack.c.l.b16 %v1422
      %v2455 = vunpack.c.l.b16 %v1423
      %v2456 = vunpack.c.l.b16 %v1424
      %v2457 = vunpack.c.l.b16 %v1425
      %v2458 = vunpack.c.l.b16 %v1426
      %v2459 = vunpack.c.l.b16 %v1427
      %v2460 = vunpack.c.l.b16 %v1428
      %v2461 = vunpack.c.l.b16 %v1429
      %v2462 = vunpack.c.l.b16 %v1430
      %v2463 = vunpack.c.l.b16 %v1431
      %v2464 = vunpack.c.l.b16 %v1432
      %v2465 = vunpack.c.l.b16 %v1433
      %v2466 = vunpack.c.l.b16 %v1434
      %v2467 = vunpack.c.l.b16 %v1435
      %v2468 = vunpack.c.l.b16 %v1436
      %v2469 = vunpack.c.l.b16 %v1437
      %v2470 = vunpack.c.l.b16 %v1438
      %v2471 = vunpack.c.l.b16 %v1439
      %v2472 = vunpack.c.l.b16 %v1440
      %v2473 = vunpack.c.l.b16 %v1441
      %v2474 = vunpack.c.l.b16 %v1442
      %v2475 = vunpack.c.l.b16 %v1443
      %v2476 = vunpack.c.l.b16 %v1444
      %v2477 = vunpack.c.l.b16 %v1445
      %v2478 = vunpack.c.l.b16 %v1446
      %v2479 = vunpack.c.l.b16 %v1447
      %v2480 = vunpack.c.l.b16 %v1448
      %v2481 = vunpack.c.l.b16 %v1449
      %v2482 = vunpack.c.l.b16 %v1450
      %v2483 = vunpack.c.l.b16 %v1451
      %v2484 = vunpack.c.l.b16 %v1452
      %v2485 = vunpack.c.l.b16 %v1453
      %v2486 = vunpack.c.l.b16 %v1454
      %v2487 = vunpack.c.l.b16 %v1455
      %v2488 = vunpack.c.l.b16 %v1456
      %v2489 = vunpack.c.l.b16 %v1457
      %v2490 = vunpack.c.l.b16 %v1458
      %v2491 = vunpack.c.l.b16 %v1459
      %v2492 = vunpack.c.l.b16 %v1460
      %v2493 = vunpack.c.l.b16 %v1461
      %v2494 = vunpack.c.l.b16 %v1462
      %v2495 = vunpack.c.l.b16 %v1463
      %v2496 = vunpack.c.l.b16 %v1464
      %v2497 = vunpack.c.l.b16 %v1465
      %v2498 = vunpack.c.l.b16 %v1466
      %v2499 = vunpack.c.l.b16 %v1467
      %v2500 = vunpack.c.l.b16 %v1468
      %v2501 = vunpack.c.l.b16 %v1469
      %v2502 = vunpack.c.l.b16 %v1470
      %v2503 = vunpack.c.l.b16 %v1471
      %v2504 = vunpack.c.l.b16 %v1472
      %v2505 = vunpack.c.l.b16 %v1473
      %v2506 = vunpack.c.l.b16 %v1474
      %v2507 = vunpack.c.l.b16 %v1475
      %v2508 = vunpack.c.l.b16 %v1476
      %v2509 = vunpack.c.l.b16 %v1477
      %v2510 = vunpack.c.l.b16 %v1478
      %v2511 = vunpack.c.l.b16 %v1479
      %v2512 = vunpack.c.l.b16 %v1480
      %v2513 = vunpack.c.l.b16 %v1481
      %v2514 = vunpack.c.l.b16 %v1482
      %v2515 = vunpack.c.l.b16 %v1483
      %v2516 = vunpack.c.l.b16 %v1484
      %v2517 = vunpack.c.l.b16 %v1485
      %v2518 = vunpack.c.l.b16 %v1486
      %v2519 = vunpack.c.l.b16 %v1487
      %v2520 = vunpack.c.l.b16 %v1488
      %v2521 = vunpack.c.l.b16 %v1489
      %v2522 = vunpack.c.l.b16 %v1490
      %v2523 = vunpack.c.l.b16 %v1491
      %v2524 = vunpack.c.l.b16 %v1492
      %v2525 = vunpack.c.l.b16 %v1493
      %v2526 = vunpack.c.l.b16 %v1494
      %v2527 = vunpack.c.l.b16 %v1495
      %v2528 = vunpack.c.l.b16 %v1496
      %v2529 = vunpack.c.l.b16 %v1497
      %v2530 = vunpack.c.l.b16 %v1498
      %v2531 = vunpack.c.l.b16 %v1499
      %v2532 = vunpack.c.l.b16 %v1500
      %v2533 = vunpack.c.l.b16 %v1501
      %v2534 = vunpack.c.l.b16 %v1502
      %v2535 = vunpack.c.l.b16 %v1503
      %v2536 = vunpack.c.l.b16 %v1504
      %v2537 = vunpack.c.l.b16 %v1505
      %v2538 = vunpack.c.l.b16 %v1506
      %v2539 = vunpack.c.l.b16 %v1507
      %v2540 = vunpack.c.l.b16 %v1508
      %v2541 = vunpack.c.l.b16 %v1509
      %v2542 = vunpack.c.l.b16 %v1510
      %v2543 = vunpack.c.l.b16 %v1511
      %v2544 = vunpack.c.l.b16 %v1512
      %v2545 = vunpack.c.l.b16 %v1513
      %v2546 = vunpack.c.l.b16 %v1514
      %v2547 = vunpack.c.l.b16 %v1515
      %v2548 = vunpack.c.l.b16 %v1516
      %v2549 = vunpack.c.l.b16 %v1517
      %v2550 = vunpack.c.l.b16 %v1518
      %v2551 = vunpack.c.l.b16 %v1519
      %v2552 = vunpack.c.l.b16 %v1520
      %v2553 = vunpack.c.l.b16 %v1521
      %v2554 = vunpack.c.l.b16 %v1522
      %v2555 = vunpack.c.l.b16 %v1523
      %v2556 = vunpack.c.l.b16 %v1524
      %v2557 = vunpack.c.l.b16 %v1525
      %v2558 = vunpack.c.l.b16 %v1526
      %v2559 = vunpack.c.l.b16 %v1527
      %v2560 = vunpack.c.l.b16 %v1528
      %v2561 = vunpack.c.l.b16 %v1529
      %v2562 = vunpack.c.l.b16 %v1530
      %v2563 = vunpack.c.l.b16 %v1531
      %v2564 = vunpack.c.l.b16 %v1532
      %v2565 = vunpack.c.l.b16 %v1533
      %v2566 = vunpack.c.l.b16 %v1534
      %v2567 = vunpack.c.l.b16 %v1535
      %v2568 = vunpack.c.l.b16 %v1536
      %v2569 = vunpack.c.l.b16 %v1537
      %v2570 = vunpack.c.l.b16 %v1538
      %v2571 = vunpack.c.l.b16 %v1539
      %v2572 = vunpack.c.l.b16 %v1540
      %v2573 = vunpack.c.l.b16 %v1541
      %v2574 = vunpack.c.l.b16 %v1542
      %v2575 = vunpack.c.l.b16 %v1543
      %v2576 = vunpack.c.l.b16 %v1544
      %v2577 = vunpack.c.l.b16 %v1545
      %v2578 = vunpack.c.l.b16 %v1546
      %v2579 = vunpack.c.l.b16 %v1547
      %v2580 = vunpack.c.l.b16 %v1548
      %v2581 = vunpack.c.l.b16 %v1549
      %v2582 = vunpack.c.l.b16 %v1550
      %v2583 = vunpack.c.l.b16 %v1551
      %v2584 = vunpack.c.l.b16 %v1552
      %v2585 = vunpack.c.l.b16 %v1553
      %v2586 = vunpack.c.l.b16 %v1554
      %v2587 = vunpack.c.l.b16 %v1555
      %v2588 = vunpack.c.l.b16 %v1556
      %v2589 = vunpack.c.l.b16 %v1557
      %v2590 = vunpack.c.l.b16 %v1558
      %v2591 = vunpack.c.l.b16 %v1559
      %v2592 = vunpack.c.l.b16 %v1560
      %v2593 = vunpack.c.l.b16 %v1561
      %v2594 = vunpack.c.l.b16 %v1562
      %v2595 = vunpack.c.l.b16 %v1563
      %v2596 = vunpack.c.l.b16 %v1564
      %v2597 = vunpack.c.l.b16 %v1565
      %v2598 = vunpack.c.l.b16 %v1566
      %v2599 = vunpack.c.l.b16 %v1567
      %v2600 = vunpack.c.l.b16 %v1568
      %v2601 = vunpack.c.l.b16 %v1569
      %v2602 = vunpack.c.l.b16 %v1570
      %v2603 = vunpack.c.l.b16 %v1571
      %v2604 = vunpack.c.l.b16 %v1572
      %v2605 = vunpack.c.l.b16 %v1573
      %v2606 = vunpack.c.l.b16 %v1574
      %v2607 = vunpack.c.l.b16 %v1575
      %v2608 = vunpack.c.l.b16 %v1576
      %v2609 = vunpack.c.l.b16 %v1577
      %v2610 = vunpack.c.l.b16 %v1578
      %v2611 = vunpack.c.l.b16 %v1579
      %v2612 = vunpack.c.l.b16 %v1580
      %v2613 = vunpack.c.l.b16 %v1581
      %v2614 = vunpack.c.l.b16 %v1582
      %v2615 = vunpack.c.l.b16 %v1583
      %v2616 = vunpack.c.l.b16 %v1584
      %v2617 = vunpack.c.l.b16 %v1585
      %v2618 = vunpack.c.l.b16 %v1586
      %v2619 = vunpack.c.l.b16 %v1587
      %v2620 = vunpack.c.l.b16 %v1588
      %v2621 = vunpack.c.l.b16 %v1589
      %v2622 = vunpack.c.l.b16 %v1590
      %v2623 = vunpack.c.l.b16 %v1591
      %v2624 = vunpack.c.l.b16 %v1592
      %v2625 = vunpack.c.l.b16 %v1593
      %v2626 = vunpack.c.l.b16 %v1594
      %v2627 = vpack.c.b16 %v2244, %v2243
      %v2628 = vpack.c.b16 %v2246, %v2245
      %v2629 = vpack.c.b16 %v2248, %v2247
      %v2630 = vpack.c.b16 %v2250, %v2249
      %v2631 = vpack.c.b16 %v2252, %v2251
      %v2632 = vpack.c.b16 %v2254, %v2253
      %v2633 = vpack.c.b16 %v2256, %v2255
      %v2634 = vpack.c.b16 %v2258, %v2257
      %v2635 = vpack.c.b16 %v2260, %v2259
      %v2636 = vpack.c.b16 %v2262, %v2261
      %v2637 = vpack.c.b16 %v2264, %v2263
      %v2638 = vpack.c.b16 %v2266, %v2265
      %v2639 = vpack.c.b16 %v2268, %v2267
      %v2640 = vpack.c.b16 %v2270, %v2269
      %v2641 = vpack.c.b16 %v2272, %v2271
      %v2642 = vpack.c.b16 %v2274, %v2273
      %v2643 = vpack.c.b16 %v2276, %v2275
      %v2644 = vpack.c.b16 %v2278, %v2277
      %v2645 = vpack.c.b16 %v2280, %v2279
      %v2646 = vpack.c.b16 %v2282, %v2281
      %v2647 = vpack.c.b16 %v2284, %v2283
      %v2648 = vpack.c.b16 %v2286, %v2285
      %v2649 = vpack.c.b16 %v2288, %v2287
      %v2650 = vpack.c.b16 %v2290, %v2289
      %v2651 = vpack.c.b16 %v2292, %v2291
      %v2652 = vpack.c.b16 %v2294, %v2293
      %v2653 = vpack.c.b16 %v2296, %v2295
      %v2654 = vpack.c.b16 %v2298, %v2297
      %v2655 = vpack.c.b16 %v2300, %v2299
      %v2656 = vpack.c.b16 %v2302, %v2301
      %v2657 = vpack.c.b16 %v2304, %v2303
      %v2658 = vpack.c.b16 %v2306, %v2305
      %v2659 = vpack.c.b16 %v2308, %v2307
      %v2660 = vpack.c.b16 %v2310, %v2309
      %v2661 = vpack.c.b16 %v2312, %v2311
      %v2662 = vpack.c.b16 %v2314, %v2313
      %v2663 = vpack.c.b16 %v2316, %v2315
      %v2664 = vpack.c.b16 %v2318, %v2317
      %v2665 = vpack.c.b16 %v2320, %v2319
      %v2666 = vpack.c.b16 %v2322, %v2321
      %v2667 = vpack.c.b16 %v2324, %v2323
      %v2668 = vpack.c.b16 %v2326, %v2325
      %v2669 = vpack.c.b16 %v2328, %v2327
      %v2670 = vpack.c.b16 %v2330, %v2329
      %v2671 = vpack.c.b16 %v2332, %v2331
      %v2672 = vpack.c.b16 %v2334, %v2333
      %v2673 = vpack.c.b16 %v2336, %v2335
      %v2674 = vpack.c.b16 %v2338, %v2337
      %v2675 = vpack.c.b16 %v2340, %v2339
      %v2676 = vpack.c.b16 %v2342, %v2341
      %v2677 = vpack.c.b16 %v2344, %v2343
      %v2678 = vpack.c.b16 %v2346, %v2345
      %v2679 = vpack.c.b16 %v2348, %v2347
      %v2680 = vpack.c.b16 %v2350, %v2349
      %v2681 = vpack.c.b16 %v2352, %v2351
      %v2682 = vpack.c.b16 %v2354, %v2353
      %v2683 = vpack.c.b16 %v2356, %v2355
      %v2684 = vpack.c.b16 %v2358, %v2357
      %v2685 = vpack.c.b16 %v2360, %v2359
      %v2686 = vpack.c.b16 %v2362, %v2361
      %v2687 = vpack.c.b16 %v2364, %v2363
      %v2688 = vpack.c.b16 %v2366, %v2365
      %v2689 = vpack.c.b16 %v2368, %v2367
      %v2690 = vpack.c.b16 %v2370, %v2369
      %v2691 = vpack.c.b16 %v2372, %v2371
      %v2692 = vpack.c.b16 %v2374, %v2373
      %v2693 = vpack.c.b16 %v2376, %v2375
      %v2694 = vpack.c.b16 %v2378, %v2377
      %v2695 = vpack.c.b16 %v2380, %v2379
      %v2696 = vpack.c.b16 %v2382, %v2381
      %v2697 = vpack.c.b16 %v2384, %v2383
      %v2698 = vpack.c.b16 %v2386, %v2385
      %v2699 = vpack.c.b16 %v2388, %v2387
      %v2700 = vpack.c.b16 %v2390, %v2389
      %v2701 = vpack.c.b16 %v2392, %v2391
      %v2702 = vpack.c.b16 %v2394, %v2393
      %v2703 = vpack.c.b16 %v2396, %v2395
      %v2704 = vpack.c.b16 %v2398, %v2397
      %v2705 = vpack.c.b16 %v2400, %v2399
      %v2706 = vpack.c.b16 %v2402, %v2401
      %v2707 = vpack.c.b16 %v2404, %v2403
      %v2708 = vpack.c.b16 %v2406, %v2405
      %v2709 = vpack.c.b16 %v2408, %v2407
      %v2710 = vpack.c.b16 %v2410, %v2409
      %v2711 = vpack.c.b16 %v2412, %v2411
      %v2712 = vpack.c.b16 %v2414, %v2413
      %v2713 = vpack.c.b16 %v2416, %v2415
      %v2714 = vpack.c.b16 %v2418, %v2417
      %v2715 = vpack.c.b16 %v2420, %v2419
      %v2716 = vpack.c.b16 %v2422, %v2421
      %v2717 = vpack.c.b16 %v2424, %v2423
      %v2718 = vpack.c.b16 %v2426, %v2425
      %v2719 = vpack.c.b16 %v2428, %v2427
      %v2720 = vpack.c.b16 %v2430, %v2429
      %v2721 = vpack.c.b16 %v2432, %v2431
      %v2722 = vpack.c.b16 %v2434, %v2433
      %v2723 = vpack.c.b16 %v2436, %v2435
      %v2724 = vpack.c.b16 %v2438, %v2437
      %v2725 = vpack.c.b16 %v2440, %v2439
      %v2726 = vpack.c.b16 %v2442, %v2441
      %v2727 = vpack.c.b16 %v2444, %v2443
      %v2728 = vpack.c.b16 %v2446, %v2445
      %v2729 = vpack.c.b16 %v2448, %v2447
      %v2730 = vpack.c.b16 %v2450, %v2449
      %v2731 = vpack.c.b16 %v2452, %v2451
      %v2732 = vpack.c.b16 %v2454, %v2453
      %v2733 = vpack.c.b16 %v2456, %v2455
      %v2734 = vpack.c.b16 %v2458, %v2457
      %v2735 = vpack.c.b16 %v2460, %v2459
      %v2736 = vpack.c.b16 %v2462, %v2461
      %v2737 = vpack.c.b16 %v2464, %v2463
      %v2738 = vpack.c.b16 %v2466, %v2465
      %v2739 = vpack.c.b16 %v2468, %v2467
      %v2740 = vpack.c.b16 %v2470, %v2469
      %v2741 = vpack.c.b16 %v2472, %v2471
      %v2742 = vpack.c.b16 %v2474, %v2473
      %v2743 = vpack.c.b16 %v2476, %v2475
      %v2744 = vpack.c.b16 %v2478, %v2477
      %v2745 = vpack.c.b16 %v2480, %v2479
      %v2746 = vpack.c.b16 %v2482, %v2481
      %v2747 = vpack.c.b16 %v2484, %v2483
      %v2748 = vpack.c.b16 %v2486, %v2485
      %v2749 = vpack.c.b16 %v2488, %v2487
      %v2750 = vpack.c.b16 %v2490, %v2489
      %v2751 = vpack.c.b16 %v2492, %v2491
      %v2752 = vpack.c.b16 %v2494, %v2493
      %v2753 = vpack.c.b16 %v2496, %v2495
      %v2754 = vpack.c.b16 %v2498, %v2497
      %v2755 = vpack.c.b16 %v2500, %v2499
      %v2756 = vpack.c.b16 %v2502, %v2501
      %v2757 = vpack.c.b16 %v2504, %v2503
      %v2758 = vpack.c.b16 %v2506, %v2505
      %v2759 = vpack.c.b16 %v2508, %v2507
      %v2760 = vpack.c.b16 %v2510, %v2509
      %v2761 = vpack.c.b16 %v2512, %v2511
      %v2762 = vpack.c.b16 %v2514, %v2513
      %v2763 = vpack.c.b16 %v2516, %v2515
      %v2764 = vpack.c.b16 %v2518, %v2517
      %v2765 = vpack.c.b16 %v2520, %v2519
      %v2766 = vpack.c.b16 %v2522, %v2521
      %v2767 = vpack.c.b16 %v2524, %v2523
      %v2768 = vpack.c.b16 %v2526, %v2525
      %v2769 = vpack.c.b16 %v2528, %v2527
      %v2770 = vpack.c.b16 %v2530, %v2529
      %v2771 = vpack.c.b16 %v2532, %v2531
      %v2772 = vpack.c.b16 %v2534, %v2533
      %v2773 = vpack.c.b16 %v2536, %v2535
      %v2774 = vpack.c.b16 %v2538, %v2537
      %v2775 = vpack.c.b16 %v2540, %v2539
      %v2776 = vpack.c.b16 %v2542, %v2541
      %v2777 = vpack.c.b16 %v2544, %v2543
      %v2778 = vpack.c.b16 %v2546, %v2545
      %v2779 = vpack.c.b16 %v2548, %v2547
      %v2780 = vpack.c.b16 %v2550, %v2549
      %v2781 = vpack.c.b16 %v2552, %v2551
      %v2782 = vpack.c.b16 %v2554, %v2553
      %v2783 = vpack.c.b16 %v2556, %v2555
      %v2784 = vpack.c.b16 %v2558, %v2557
      %v2785 = vpack.c.b16 %v2560, %v2559
      %v2786 = vpack.c.b16 %v2562, %v2561
      %v2787 = vpack.c.b16 %v2564, %v2563
      %v2788 = vpack.c.b16 %v2566, %v2565
      %v2789 = vpack.c.b16 %v2568, %v2567
      %v2790 = vpack.c.b16 %v2570, %v2569
      %v2791 = vpack.c.b16 %v2572, %v2571
      %v2792 = vpack.c.b16 %v2574, %v2573
      %v2793 = vpack.c.b16 %v2576, %v2575
      %v2794 = vpack.c.b16 %v2578, %v2577
      %v2795 = vpack.c.b16 %v2580, %v2579
      %v2796 = vpack.c.b16 %v2582, %v2581
      %v2797 = vpack.c.b16 %v2584, %v2583
      %v2798 = vpack.c.b16 %v2586, %v2585
      %v2799 = vpack.c.b16 %v2588, %v2587
      %v2800 = vpack.c.b16 %v2590, %v2589
      %v2801 = vpack.c.b16 %v2592, %v2591
      %v2802 = vpack.c.b16 %v2594, %v2593
      %v2803 = vpack.c.b16 %v2596, %v2595
      %v2804 = vpack.c.b16 %v2598, %v2597
      %v2805 = vpack.c.b16 %v2600, %v2599
      %v2806 = vpack.c.b16 %v2602, %v2601
      %v2807 = vpack.c.b16 %v2604, %v2603
      %v2808 = vpack.c.b16 %v2606, %v2605
      %v2809 = vpack.c.b16 %v2608, %v2607
      %v2810 = vpack.c.b16 %v2610, %v2609
      %v2811 = vpack.c.b16 %v2612, %v2611
      %v2812 = vpack.c.b16 %v2614, %v2613
      %v2813 = vpack.c.b16 %v2616, %v2615
      %v2814 = vpack.c.b16 %v2618, %v2617
      %v2815 = vpack.c.b16 %v2620, %v2619
      %v2816 = vpack.c.b16 %v2622, %v2621
      %v2817 = vpack.c.b16 %v2624, %v2623
      %v2818 = vpack.c.b16 %v2626, %v2625
      %3011 = vmatpush.bf16.msra.mxu0 %v2634
      %3012 = vmatpush.bf16.msra.mxu0 %v2633
      %3013 = vmatpush.bf16.msra.mxu0 %v2632
      %3014 = vmatpush.bf16.msra.mxu0 %v2631
      %3015 = vmatpush.bf16.msra.mxu0 %v2630
      %3016 = vmatpush.bf16.msra.mxu0 %v2629
      %3017 = vmatpush.bf16.msra.mxu0 %v2628
      %3018 = vmatpush.bf16.msra.mxu0 %v2627
      %3019 = vmatmul.bf16.gmra.mxu0 %v1763
      %v3020 = vpop.f32.mrf.mxu0
      %v3021 = vadd.f32 %v1602, %v3020
      %v3022 = vpop.f32.mrf.mxu0
      %v3023 = vadd.f32 %v1607, %v3022
      %3024 = vmatmul.bf16.gmra.mxu0 %v1787
      %v3025 = vpop.f32.mrf.mxu0
      %v3026 = vadd.f32 %v1612, %v3025
      %v3027 = vpop.f32.mrf.mxu0
      %v3028 = vadd.f32 %v1617, %v3027
      %3029 = vdwg.mxu0
      %3030 = vmatpush.bf16.msra.mxu0 %v2642
      %3031 = vmatpush.bf16.msra.mxu0 %v2641
      %3032 = vmatpush.bf16.msra.mxu0 %v2640
      %3033 = vmatpush.bf16.msra.mxu0 %v2639
      %3034 = vmatpush.bf16.msra.mxu0 %v2638
      %3035 = vmatpush.bf16.msra.mxu0 %v2637
      %3036 = vmatpush.bf16.msra.mxu0 %v2636
      %3037 = vmatpush.bf16.msra.mxu0 %v2635
      %3038 = vmatmul.bf16.gmra.mxu0 %v1764
      %v3039 = vpop.f32.mrf.mxu0
      %v3040 = vadd.f32 %v3021, %v3039
      %v3041 = vpop.f32.mrf.mxu0
      %v3042 = vadd.f32 %v3023, %v3041
      %3043 = vmatmul.bf16.gmra.mxu0 %v1788
      %v3044 = vpop.f32.mrf.mxu0
      %v3045 = vadd.f32 %v3026, %v3044
      %v3046 = vpop.f32.mrf.mxu0
      %v3047 = vadd.f32 %v3028, %v3046
      %3048 = vdwg.mxu0
      %3049 = vmatpush.bf16.msra.mxu0 %v2650
      %3050 = vmatpush.bf16.msra.mxu0 %v2649
      %3051 = vmatpush.bf16.msra.mxu0 %v2648
      %3052 = vmatpush.bf16.msra.mxu0 %v2647
      %3053 = vmatpush.bf16.msra.mxu0 %v2646
      %3054 = vmatpush.bf16.msra.mxu0 %v2645
      %3055 = vmatpush.bf16.msra.mxu0 %v2644
      %3056 = vmatpush.bf16.msra.mxu0 %v2643
      %3057 = vmatmul.bf16.gmra.mxu0 %v1765
      %v3058 = vpop.f32.mrf.mxu0
      %v3059 = vadd.f32 %v3040, %v3058
      %v3060 = vpop.f32.mrf.mxu0
      %v3061 = vadd.f32 %v3042, %v3060
      %3062 = vmatmul.bf16.gmra.mxu0 %v1789
      %v3063 = vpop.f32.mrf.mxu0
      %v3064 = vadd.f32 %v3045, %v3063
      %v3065 = vpop.f32.mrf.mxu0
      %v3066 = vadd.f32 %v3047, %v3065
      %3067 = vdwg.mxu0
      %3068 = vmatpush.bf16.msra.mxu0 %v2658
      %3069 = vmatpush.bf16.msra.mxu0 %v2657
      %3070 = vmatpush.bf16.msra.mxu0 %v2656
      %3071 = vmatpush.bf16.msra.mxu0 %v2655
      %3072 = vmatpush.bf16.msra.mxu0 %v2654
      %3073 = vmatpush.bf16.msra.mxu0 %v2653
      %3074 = vmatpush.bf16.msra.mxu0 %v2652
      %3075 = vmatpush.bf16.msra.mxu0 %v2651
      %3076 = vmatmul.bf16.gmra.mxu0 %v1766
      %v3077 = vpop.f32.mrf.mxu0
      %v3078 = vadd.f32 %v3059, %v3077
      %v3079 = vpop.f32.mrf.mxu0
      %v3080 = vadd.f32 %v3061, %v3079
      %3081 = vmatmul.bf16.gmra.mxu0 %v1790
      %v3082 = vpop.f32.mrf.mxu0
      %v3083 = vadd.f32 %v3064, %v3082
      %v3084 = vpop.f32.mrf.mxu0
      %v3085 = vadd.f32 %v3066, %v3084
      %3086 = vdwg.mxu0
      %3087 = vmatpush.bf16.msra.mxu0 %v2666
      %3088 = vmatpush.bf16.msra.mxu0 %v2665
      %3089 = vmatpush.bf16.msra.mxu0 %v2664
      %3090 = vmatpush.bf16.msra.mxu0 %v2663
      %3091 = vmatpush.bf16.msra.mxu0 %v2662
      %3092 = vmatpush.bf16.msra.mxu0 %v2661
      %3093 = vmatpush.bf16.msra.mxu0 %v2660
      %3094 = vmatpush.bf16.msra.mxu0 %v2659
      %3095 = vmatmul.bf16.gmra.mxu0 %v1767
      %v3096 = vpop.f32.mrf.mxu0
      %v3097 = vadd.f32 %v3078, %v3096
      %v3098 = vpop.f32.mrf.mxu0
      %v3099 = vadd.f32 %v3080, %v3098
      %3100 = vmatmul.bf16.gmra.mxu0 %v1791
      %v3101 = vpop.f32.mrf.mxu0
      %v3102 = vadd.f32 %v3083, %v3101
      %v3103 = vpop.f32.mrf.mxu0
      %v3104 = vadd.f32 %v3085, %v3103
      %3105 = vdwg.mxu0
      %3106 = vmatpush.bf16.msra.mxu0 %v2674
      %3107 = vmatpush.bf16.msra.mxu0 %v2673
      %3108 = vmatpush.bf16.msra.mxu0 %v2672
      %3109 = vmatpush.bf16.msra.mxu0 %v2671
      %3110 = vmatpush.bf16.msra.mxu0 %v2670
      %3111 = vmatpush.bf16.msra.mxu0 %v2669
      %3112 = vmatpush.bf16.msra.mxu0 %v2668
      %3113 = vmatpush.bf16.msra.mxu0 %v2667
      %3114 = vmatmul.bf16.gmra.mxu0 %v1768
      %v3115 = vpop.f32.mrf.mxu0
      %v3116 = vadd.f32 %v3097, %v3115
      %v3117 = vpop.f32.mrf.mxu0
      %v3118 = vadd.f32 %v3099, %v3117
      %3119 = vmatmul.bf16.gmra.mxu0 %v1792
      %v3120 = vpop.f32.mrf.mxu0
      %v3121 = vadd.f32 %v3102, %v3120
      %v3122 = vpop.f32.mrf.mxu0
      %v3123 = vadd.f32 %v3104, %v3122
      %3124 = vdwg.mxu0
      %3125 = vmatpush.bf16.msra.mxu0 %v2682
      %3126 = vmatpush.bf16.msra.mxu0 %v2681
      %3127 = vmatpush.bf16.msra.mxu0 %v2680
      %3128 = vmatpush.bf16.msra.mxu0 %v2679
      %3129 = vmatpush.bf16.msra.mxu0 %v2678
      %3130 = vmatpush.bf16.msra.mxu0 %v2677
      %3131 = vmatpush.bf16.msra.mxu0 %v2676
      %3132 = vmatpush.bf16.msra.mxu0 %v2675
      %3133 = vmatmul.bf16.gmra.mxu0 %v1769
      %v3134 = vpop.f32.mrf.mxu0
      %v3135 = vadd.f32 %v3116, %v3134
      %v3136 = vpop.f32.mrf.mxu0
      %v3137 = vadd.f32 %v3118, %v3136
      %3138 = vmatmul.bf16.gmra.mxu0 %v1793
      %v3139 = vpop.f32.mrf.mxu0
      %v3140 = vadd.f32 %v3121, %v3139
      %v3141 = vpop.f32.mrf.mxu0
      %v3142 = vadd.f32 %v3123, %v3141
      %3143 = vdwg.mxu0
      %3144 = vmatpush.bf16.msra.mxu0 %v2690
      %3145 = vmatpush.bf16.msra.mxu0 %v2689
      %3146 = vmatpush.bf16.msra.mxu0 %v2688
      %3147 = vmatpush.bf16.msra.mxu0 %v2687
      %3148 = vmatpush.bf16.msra.mxu0 %v2686
      %3149 = vmatpush.bf16.msra.mxu0 %v2685
      %3150 = vmatpush.bf16.msra.mxu0 %v2684
      %3151 = vmatpush.bf16.msra.mxu0 %v2683
      %3152 = vmatmul.bf16.gmra.mxu0 %v1770
      %v3153 = vpop.f32.mrf.mxu0
      %v3154 = vadd.f32 %v3135, %v3153
      %v3155 = vpop.f32.mrf.mxu0
      %v3156 = vadd.f32 %v3137, %v3155
      %3157 = vmatmul.bf16.gmra.mxu0 %v1794
      %v3158 = vpop.f32.mrf.mxu0
      %v3159 = vadd.f32 %v3140, %v3158
      %v3160 = vpop.f32.mrf.mxu0
      %v3161 = vadd.f32 %v3142, %v3160
      %3162 = vdwg.mxu0
      %3163 = vmatpush.bf16.msra.mxu0 %v2698
      %3164 = vmatpush.bf16.msra.mxu0 %v2697
      %3165 = vmatpush.bf16.msra.mxu0 %v2696
      %3166 = vmatpush.bf16.msra.mxu0 %v2695
      %3167 = vmatpush.bf16.msra.mxu0 %v2694
      %3168 = vmatpush.bf16.msra.mxu0 %v2693
      %3169 = vmatpush.bf16.msra.mxu0 %v2692
      %3170 = vmatpush.bf16.msra.mxu0 %v2691
      %3171 = vmatmul.bf16.gmra.mxu0 %v1771
      %v3172 = vpop.f32.mrf.mxu0
      %v3173 = vadd.f32 %v3154, %v3172
      %v3174 = vpop.f32.mrf.mxu0
      %v3175 = vadd.f32 %v3156, %v3174
      %3176 = vmatmul.bf16.gmra.mxu0 %v1795
      %v3177 = vpop.f32.mrf.mxu0
      %v3178 = vadd.f32 %v3159, %v3177
      %v3179 = vpop.f32.mrf.mxu0
      %v3180 = vadd.f32 %v3161, %v3179
      %3181 = vdwg.mxu0
      %3182 = vmatpush.bf16.msra.mxu0 %v2706
      %3183 = vmatpush.bf16.msra.mxu0 %v2705
      %3184 = vmatpush.bf16.msra.mxu0 %v2704
      %3185 = vmatpush.bf16.msra.mxu0 %v2703
      %3186 = vmatpush.bf16.msra.mxu0 %v2702
      %3187 = vmatpush.bf16.msra.mxu0 %v2701
      %3188 = vmatpush.bf16.msra.mxu0 %v2700
      %3189 = vmatpush.bf16.msra.mxu0 %v2699
      %3190 = vmatmul.bf16.gmra.mxu0 %v1772
      %v3191 = vpop.f32.mrf.mxu0
      %v3192 = vadd.f32 %v3173, %v3191
      %v3193 = vpop.f32.mrf.mxu0
      %v3194 = vadd.f32 %v3175, %v3193
      %3195 = vmatmul.bf16.gmra.mxu0 %v1796
      %v3196 = vpop.f32.mrf.mxu0
      %v3197 = vadd.f32 %v3178, %v3196
      %v3198 = vpop.f32.mrf.mxu0
      %v3199 = vadd.f32 %v3180, %v3198
      %3200 = vdwg.mxu0
      %3201 = vmatpush.bf16.msra.mxu0 %v2714
      %3202 = vmatpush.bf16.msra.mxu0 %v2713
      %3203 = vmatpush.bf16.msra.mxu0 %v2712
      %3204 = vmatpush.bf16.msra.mxu0 %v2711
      %3205 = vmatpush.bf16.msra.mxu0 %v2710
      %3206 = vmatpush.bf16.msra.mxu0 %v2709
      %3207 = vmatpush.bf16.msra.mxu0 %v2708
      %3208 = vmatpush.bf16.msra.mxu0 %v2707
      %3209 = vmatmul.bf16.gmra.mxu0 %v1773
      %v3210 = vpop.f32.mrf.mxu0
      %v3211 = vadd.f32 %v3192, %v3210
      %v3212 = vpop.f32.mrf.mxu0
      %v3213 = vadd.f32 %v3194, %v3212
      %3214 = vmatmul.bf16.gmra.mxu0 %v1797
      %v3215 = vpop.f32.mrf.mxu0
      %v3216 = vadd.f32 %v3197, %v3215
      %v3217 = vpop.f32.mrf.mxu0
      %v3218 = vadd.f32 %v3199, %v3217
      %3219 = vdwg.mxu0
      %3220 = vmatpush.bf16.msra.mxu0 %v2722
      %3221 = vmatpush.bf16.msra.mxu0 %v2721
      %3222 = vmatpush.bf16.msra.mxu0 %v2720
      %3223 = vmatpush.bf16.msra.mxu0 %v2719
      %3224 = vmatpush.bf16.msra.mxu0 %v2718
      %3225 = vmatpush.bf16.msra.mxu0 %v2717
      %3226 = vmatpush.bf16.msra.mxu0 %v2716
      %3227 = vmatpush.bf16.msra.mxu0 %v2715
      %3228 = vmatmul.bf16.gmra.mxu0 %v1774
      %v3229 = vpop.f32.mrf.mxu0
      %v3230 = vadd.f32 %v3211, %v3229
      %v3231 = vpop.f32.mrf.mxu0
      %v3232 = vadd.f32 %v3213, %v3231
      %3233 = vmatmul.bf16.gmra.mxu0 %v1798
      %v3234 = vpop.f32.mrf.mxu0
      %v3235 = vadd.f32 %v3216, %v3234
      %v3236 = vpop.f32.mrf.mxu0
      %v3237 = vadd.f32 %v3218, %v3236
      %3238 = vdwg.mxu0
      %3239 = vmatpush.bf16.msra.mxu0 %v2730
      %3240 = vmatpush.bf16.msra.mxu0 %v2729
      %3241 = vmatpush.bf16.msra.mxu0 %v2728
      %3242 = vmatpush.bf16.msra.mxu0 %v2727
      %3243 = vmatpush.bf16.msra.mxu0 %v2726
      %3244 = vmatpush.bf16.msra.mxu0 %v2725
      %3245 = vmatpush.bf16.msra.mxu0 %v2724
      %3246 = vmatpush.bf16.msra.mxu0 %v2723
      %3247 = vmatmul.bf16.gmra.mxu0 %v1775
      %v3248 = vpop.f32.mrf.mxu0
      %v3249 = vadd.f32 %v3230, %v3248
      %v3250 = vpop.f32.mrf.mxu0
      %v3251 = vadd.f32 %v3232, %v3250
      %3252 = vmatmul.bf16.gmra.mxu0 %v1799
      %v3253 = vpop.f32.mrf.mxu0
      %v3254 = vadd.f32 %v3235, %v3253
      %v3255 = vpop.f32.mrf.mxu0
      %v3256 = vadd.f32 %v3237, %v3255
      %3257 = vdwg.mxu0
      %3258 = vmatpush.bf16.msra.mxu0 %v2738
      %3259 = vmatpush.bf16.msra.mxu0 %v2737
      %3260 = vmatpush.bf16.msra.mxu0 %v2736
      %3261 = vmatpush.bf16.msra.mxu0 %v2735
      %3262 = vmatpush.bf16.msra.mxu0 %v2734
      %3263 = vmatpush.bf16.msra.mxu0 %v2733
      %3264 = vmatpush.bf16.msra.mxu0 %v2732
      %3265 = vmatpush.bf16.msra.mxu0 %v2731
      %3266 = vmatmul.bf16.gmra.mxu0 %v1776
      %v3267 = vpop.f32.mrf.mxu0
      %v3268 = vadd.f32 %v3249, %v3267
      %v3269 = vpop.f32.mrf.mxu0
      %v3270 = vadd.f32 %v3251, %v3269
      %3271 = vmatmul.bf16.gmra.mxu0 %v1800
      %v3272 = vpop.f32.mrf.mxu0
      %v3273 = vadd.f32 %v3254, %v3272
      %v3274 = vpop.f32.mrf.mxu0
      %v3275 = vadd.f32 %v3256, %v3274
      %3276 = vdwg.mxu0
      %3277 = vmatpush.bf16.msra.mxu0 %v2746
      %3278 = vmatpush.bf16.msra.mxu0 %v2745
      %3279 = vmatpush.bf16.msra.mxu0 %v2744
      %3280 = vmatpush.bf16.msra.mxu0 %v2743
      %3281 = vmatpush.bf16.msra.mxu0 %v2742
      %3282 = vmatpush.bf16.msra.mxu0 %v2741
      %3283 = vmatpush.bf16.msra.mxu0 %v2740
      %3284 = vmatpush.bf16.msra.mxu0 %v2739
      %3285 = vmatmul.bf16.gmra.mxu0 %v1777
      %v3286 = vpop.f32.mrf.mxu0
      %v3287 = vadd.f32 %v3268, %v3286
      %v3288 = vpop.f32.mrf.mxu0
      %v3289 = vadd.f32 %v3270, %v3288
      %3290 = vmatmul.bf16.gmra.mxu0 %v1801
      %v3291 = vpop.f32.mrf.mxu0
      %v3292 = vadd.f32 %v3273, %v3291
      %v3293 = vpop.f32.mrf.mxu0
      %v3294 = vadd.f32 %v3275, %v3293
      %3295 = vdwg.mxu0
      %3296 = vmatpush.bf16.msra.mxu0 %v2754
      %3297 = vmatpush.bf16.msra.mxu0 %v2753
      %3298 = vmatpush.bf16.msra.mxu0 %v2752
      %3299 = vmatpush.bf16.msra.mxu0 %v2751
      %3300 = vmatpush.bf16.msra.mxu0 %v2750
      %3301 = vmatpush.bf16.msra.mxu0 %v2749
      %3302 = vmatpush.bf16.msra.mxu0 %v2748
      %3303 = vmatpush.bf16.msra.mxu0 %v2747
      %3304 = vmatmul.bf16.gmra.mxu0 %v1778
      %v3305 = vpop.f32.mrf.mxu0
      %v3306 = vadd.f32 %v3287, %v3305
      %v3307 = vpop.f32.mrf.mxu0
      %v3308 = vadd.f32 %v3289, %v3307
      %3309 = vmatmul.bf16.gmra.mxu0 %v1802
      %v3310 = vpop.f32.mrf.mxu0
      %v3311 = vadd.f32 %v3292, %v3310
      %v3312 = vpop.f32.mrf.mxu0
      %v3313 = vadd.f32 %v3294, %v3312
      %3314 = vdwg.mxu0
      %3315 = vmatpush.bf16.msra.mxu0 %v2762
      %3316 = vmatpush.bf16.msra.mxu0 %v2761
      %3317 = vmatpush.bf16.msra.mxu0 %v2760
      %3318 = vmatpush.bf16.msra.mxu0 %v2759
      %3319 = vmatpush.bf16.msra.mxu0 %v2758
      %3320 = vmatpush.bf16.msra.mxu0 %v2757
      %3321 = vmatpush.bf16.msra.mxu0 %v2756
      %3322 = vmatpush.bf16.msra.mxu0 %v2755
      %3323 = vmatmul.bf16.gmra.mxu0 %v1779
      %v3324 = vpop.f32.mrf.mxu0
      %v3325 = vadd.f32 %v3306, %v3324
      %v3326 = vpop.f32.mrf.mxu0
      %v3327 = vadd.f32 %v3308, %v3326
      %3328 = vmatmul.bf16.gmra.mxu0 %v1803
      %v3329 = vpop.f32.mrf.mxu0
      %v3330 = vadd.f32 %v3311, %v3329
      %v3331 = vpop.f32.mrf.mxu0
      %v3332 = vadd.f32 %v3313, %v3331
      %3333 = vdwg.mxu0
      %3334 = vmatpush.bf16.msra.mxu0 %v2770
      %3335 = vmatpush.bf16.msra.mxu0 %v2769
      %3336 = vmatpush.bf16.msra.mxu0 %v2768
      %3337 = vmatpush.bf16.msra.mxu0 %v2767
      %3338 = vmatpush.bf16.msra.mxu0 %v2766
      %3339 = vmatpush.bf16.msra.mxu0 %v2765
      %3340 = vmatpush.bf16.msra.mxu0 %v2764
      %3341 = vmatpush.bf16.msra.mxu0 %v2763
      %3342 = vmatmul.bf16.gmra.mxu0 %v1780
      %v3343 = vpop.f32.mrf.mxu0
      %v3344 = vadd.f32 %v3325, %v3343
      %v3345 = vpop.f32.mrf.mxu0
      %v3346 = vadd.f32 %v3327, %v3345
      %3347 = vmatmul.bf16.gmra.mxu0 %v1804
      %v3348 = vpop.f32.mrf.mxu0
      %v3349 = vadd.f32 %v3330, %v3348
      %v3350 = vpop.f32.mrf.mxu0
      %v3351 = vadd.f32 %v3332, %v3350
      %3352 = vdwg.mxu0
      %3353 = vmatpush.bf16.msra.mxu0 %v2778
      %3354 = vmatpush.bf16.msra.mxu0 %v2777
      %3355 = vmatpush.bf16.msra.mxu0 %v2776
      %3356 = vmatpush.bf16.msra.mxu0 %v2775
      %3357 = vmatpush.bf16.msra.mxu0 %v2774
      %3358 = vmatpush.bf16.msra.mxu0 %v2773
      %3359 = vmatpush.bf16.msra.mxu0 %v2772
      %3360 = vmatpush.bf16.msra.mxu0 %v2771
      %3361 = vmatmul.bf16.gmra.mxu0 %v1781
      %v3362 = vpop.f32.mrf.mxu0
      %v3363 = vadd.f32 %v3344, %v3362
      %v3364 = vpop.f32.mrf.mxu0
      %v3365 = vadd.f32 %v3346, %v3364
      %3366 = vmatmul.bf16.gmra.mxu0 %v1805
      %v3367 = vpop.f32.mrf.mxu0
      %v3368 = vadd.f32 %v3349, %v3367
      %v3369 = vpop.f32.mrf.mxu0
      %v3370 = vadd.f32 %v3351, %v3369
      %3371 = vdwg.mxu0
      %3372 = vmatpush.bf16.msra.mxu0 %v2786
      %3373 = vmatpush.bf16.msra.mxu0 %v2785
      %3374 = vmatpush.bf16.msra.mxu0 %v2784
      %3375 = vmatpush.bf16.msra.mxu0 %v2783
      %3376 = vmatpush.bf16.msra.mxu0 %v2782
      %3377 = vmatpush.bf16.msra.mxu0 %v2781
      %3378 = vmatpush.bf16.msra.mxu0 %v2780
      %3379 = vmatpush.bf16.msra.mxu0 %v2779
      %3380 = vmatmul.bf16.gmra.mxu0 %v1782
      %v3381 = vpop.f32.mrf.mxu0
      %v3382 = vadd.f32 %v3363, %v3381
      %v3383 = vpop.f32.mrf.mxu0
      %v3384 = vadd.f32 %v3365, %v3383
      %3385 = vmatmul.bf16.gmra.mxu0 %v1806
      %v3386 = vpop.f32.mrf.mxu0
      %v3387 = vadd.f32 %v3368, %v3386
      %v3388 = vpop.f32.mrf.mxu0
      %v3389 = vadd.f32 %v3370, %v3388
      %3390 = vdwg.mxu0
      %3391 = vmatpush.bf16.msra.mxu0 %v2794
      %3392 = vmatpush.bf16.msra.mxu0 %v2793
      %3393 = vmatpush.bf16.msra.mxu0 %v2792
      %3394 = vmatpush.bf16.msra.mxu0 %v2791
      %3395 = vmatpush.bf16.msra.mxu0 %v2790
      %3396 = vmatpush.bf16.msra.mxu0 %v2789
      %3397 = vmatpush.bf16.msra.mxu0 %v2788
      %3398 = vmatpush.bf16.msra.mxu0 %v2787
      %3399 = vmatmul.bf16.gmra.mxu0 %v1783
      %v3400 = vpop.f32.mrf.mxu0
      %v3401 = vadd.f32 %v3382, %v3400
      %v3402 = vpop.f32.mrf.mxu0
      %v3403 = vadd.f32 %v3384, %v3402
      %3404 = vmatmul.bf16.gmra.mxu0 %v1807
      %v3405 = vpop.f32.mrf.mxu0
      %v3406 = vadd.f32 %v3387, %v3405
      %v3407 = vpop.f32.mrf.mxu0
      %v3408 = vadd.f32 %v3389, %v3407
      %3409 = vdwg.mxu0
      %3410 = vmatpush.bf16.msra.mxu0 %v2802
      %3411 = vmatpush.bf16.msra.mxu0 %v2801
      %3412 = vmatpush.bf16.msra.mxu0 %v2800
      %3413 = vmatpush.bf16.msra.mxu0 %v2799
      %3414 = vmatpush.bf16.msra.mxu0 %v2798
      %3415 = vmatpush.bf16.msra.mxu0 %v2797
      %3416 = vmatpush.bf16.msra.mxu0 %v2796
      %3417 = vmatpush.bf16.msra.mxu0 %v2795
      %3418 = vmatmul.bf16.gmra.mxu0 %v1784
      %v3419 = vpop.f32.mrf.mxu0
      %v3420 = vadd.f32 %v3401, %v3419
      %v3421 = vpop.f32.mrf.mxu0
      %v3422 = vadd.f32 %v3403, %v3421
      %3423 = vmatmul.bf16.gmra.mxu0 %v1808
      %v3424 = vpop.f32.mrf.mxu0
      %v3425 = vadd.f32 %v3406, %v3424
      %v3426 = vpop.f32.mrf.mxu0
      %v3427 = vadd.f32 %v3408, %v3426
      %3428 = vdwg.mxu0
      %3429 = vmatpush.bf16.msra.mxu0 %v2810
      %3430 = vmatpush.bf16.msra.mxu0 %v2809
      %3431 = vmatpush.bf16.msra.mxu0 %v2808
      %3432 = vmatpush.bf16.msra.mxu0 %v2807
      %3433 = vmatpush.bf16.msra.mxu0 %v2806
      %3434 = vmatpush.bf16.msra.mxu0 %v2805
      %3435 = vmatpush.bf16.msra.mxu0 %v2804
      %3436 = vmatpush.bf16.msra.mxu0 %v2803
      %3437 = vmatmul.bf16.gmra.mxu0 %v1785
      %v3438 = vpop.f32.mrf.mxu0
      %v3439 = vadd.f32 %v3420, %v3438
      %v3440 = vpop.f32.mrf.mxu0
      %v3441 = vadd.f32 %v3422, %v3440
      %3442 = vmatmul.bf16.gmra.mxu0 %v1809
      %v3443 = vpop.f32.mrf.mxu0
      %v3444 = vadd.f32 %v3425, %v3443
      %v3445 = vpop.f32.mrf.mxu0
      %v3446 = vadd.f32 %v3427, %v3445
      %3447 = vdwg.mxu0
      %3448 = vmatpush.bf16.msra.mxu0 %v2818
      %3449 = vmatpush.bf16.msra.mxu0 %v2817
      %3450 = vmatpush.bf16.msra.mxu0 %v2816
      %3451 = vmatpush.bf16.msra.mxu0 %v2815
      %3452 = vmatpush.bf16.msra.mxu0 %v2814
      %3453 = vmatpush.bf16.msra.mxu0 %v2813
      %3454 = vmatpush.bf16.msra.mxu0 %v2812
      %3455 = vmatpush.bf16.msra.mxu0 %v2811
      %3456 = vmatmul.bf16.gmra.mxu0 %v1786
      %v3457 = vpop.f32.mrf.mxu0
      %v3458 = vadd.f32 %v3439, %v3457
      %v3459 = vpop.f32.mrf.mxu0
      %v3460 = vadd.f32 %v3441, %v3459
      %3461 = vmatmul.bf16.gmra.mxu0 %v1810
      %v3462 = vpop.f32.mrf.mxu0
      %v3463 = vadd.f32 %v3444, %v3462
      %v3464 = vpop.f32.mrf.mxu0
      %v3465 = vadd.f32 %v3446, %v3464
      %3466 = vdwg.mxu0
      %v3467 = vmax.f32 %v3458, 0.0
      %v3468 = vmax.f32 %v3460, 0.0
      %v3469 = vmax.f32 %v3463, 0.0
      %v3470 = vmax.f32 %v3465, 0.0
      %v3471 = vpack.c.bf16 %v3467, %v3467
      %v3472 = vpack.c.bf16 %v3468, %v3468
      %v3473 = vpack.c.bf16 %v3469, %v3469
      %v3474 = vpack.c.bf16 %v3470, %v3470
      %v3475 = vlaneseq
      %v3476 = vand.u32 %v3475, 127
      %v3477 = vshra.s32 %v3476, 1
      %v3478 = vand.u32 %v3476, 1
      %v3483 = vunpack.c.l.b16 %v3471
      %v3484 = vunpack.c.l.b16 %v3472
      %v3485 = vunpack.c.l.b16 %v3473
      %v3486 = vunpack.c.l.b16 %v3474
      %v3487 = vpack.c.b16 %v3484, %v3483
      %v3488 = vpack.c.b16 %v3486, %v3485
      %3489 = vrot.lane.b32.xlu0 %v3487, 3
      %v3490 = vpop.permute.xlu0 %3489
      %3491 = vrot.lane.b32.xlu0 %v3488, 3
      %v3492 = vpop.permute.xlu0 %3491
      %vm3493 = vcmask 23552
      %v3496 = vsel %vm3493, 0, %v3490
      %v3499 = vsel %vm3493, 0, %v3492
      %vm3501 = vcmp.ge.s32.totalorder %v3477, 1
      %vm3502 = vcmp.ge.s32.totalorder %v3478, 1
      %vm3503 = vmand %vm3501, %vm3502
      %v3504 = vsel %vm3503, 1, 0
      %vm3505 = vcmp.eq.s32.totalorder %v3504, 1
      %vm3506 = vmpackc.low %vm3505, %vm3505
      %v3507 = vsel %vm3506, 65537, 0
      %v3508 = vperm.slane %v3507, 0
      %v3509 = vunpack.c.l.b16 %v3508
      %v3510 = vunpack.c.h.b16 %v3508
      %v3511 = vunpack.c.l.b16 0
      %v3512 = vunpack.c.h.b16 0
      %vm3513 = vcmp.ne.s32.totalorder %v3509, %v3511
      %vm3514 = vcmp.ne.s32.totalorder %v3510, %v3512
      %vm3515 = vmpackc.low %vm3514, %vm3513
      %v3516 = vsel %vm3515, %v3496, 0
      %v3517 = vsel %vm3515, %v3499, 0
      %3518 = vrot.lane.b32.xlu0 %v3487, 2
      %v3519 = vpop.permute.xlu0 %3518
      %3520 = vrot.lane.b32.xlu0 %v3488, 2
      %v3521 = vpop.permute.xlu0 %3520
      %vm3522 = vcmask 15360
      %v3524 = vsel %vm3522, 0, %v3519
      %v3527 = vsel %vm3522, 0, %v3521
      %v3529 = vsel %vm3501, 1, 0
      %vm3530 = vcmp.eq.s32.totalorder %v3529, 1
      %vm3531 = vmpackc.low %vm3530, %vm3530
      %v3532 = vsel %vm3531, 65537, 0
      %v3533 = vperm.slane %v3532, 0
      %v3534 = vunpack.c.l.b16 %v3533
      %v3535 = vunpack.c.h.b16 %v3533
      %v3536 = vunpack.c.l.b16 0
      %v3537 = vunpack.c.h.b16 0
      %vm3538 = vcmp.ne.s32.totalorder %v3534, %v3536
      %vm3539 = vcmp.ne.s32.totalorder %v3535, %v3537
      %vm3540 = vmpackc.low %vm3539, %vm3538
      %v3541 = vsel %vm3540, %v3524, 0
      %v3542 = vsel %vm3540, %v3527, 0
      %3543 = vrot.lane.b32.xlu0 %v3487, 1
      %v3544 = vpop.permute.xlu0 %3543
      %3545 = vrot.lane.b32.xlu0 %v3488, 1
      %v3546 = vpop.permute.xlu0 %3545
      %vm3547 = vcmask 7168
      %v3549 = vsel %vm3547, 0, %v3544
      %v3552 = vsel %vm3547, 0, %v3546
      %vm3554 = vcmp.lt.s32.totalorder %v3478, 1
      %vm3555 = vmand %vm3501, %vm3554
      %v3556 = vsel %vm3555, 1, 0
      %vm3557 = vcmp.eq.s32.totalorder %v3556, 1
      %vm3558 = vmpackc.low %vm3557, %vm3557
      %v3559 = vsel %vm3558, 65537, 0
      %v3560 = vperm.slane %v3559, 0
      %v3561 = vunpack.c.l.b16 %v3560
      %v3562 = vunpack.c.h.b16 %v3560
      %v3563 = vunpack.c.l.b16 0
      %v3564 = vunpack.c.h.b16 0
      %vm3565 = vcmp.ne.s32.totalorder %v3561, %v3563
      %vm3566 = vcmp.ne.s32.totalorder %v3562, %v3564
      %vm3567 = vmpackc.low %vm3566, %vm3565
      %v3568 = vsel %vm3567, %v3549, 0
      %v3569 = vsel %vm3567, %v3552, 0
      %v3570 = vsel %vm3502, 1, 0
      %vm3571 = vcmp.eq.s32.totalorder %v3570, 1
      %vm3572 = vmpackc.low %vm3571, %vm3571
      %v3573 = vsel %vm3572, 65537, 0
      %v3574 = vperm.slane %v3573, 0
      %v3575 = vunpack.c.l.b16 %v3574
      %v3576 = vunpack.c.h.b16 %v3574
      %v3577 = vunpack.c.l.b16 0
      %v3578 = vunpack.c.h.b16 0
      %vm3579 = vcmp.ne.s32.totalorder %v3575, %v3577
      %vm3580 = vcmp.ne.s32.totalorder %v3576, %v3578
      %vm3581 = vmpackc.low %vm3580, %vm3579
      %v3582 = vsel %vm3581, %v3549, 0
      %v3583 = vsel %vm3581, %v3552, 0
      %3584 = vrot.lane.b32.xlu0 %v3487, 127
      %v3585 = vpop.permute.xlu0 %3584
      %3586 = vrot.lane.b32.xlu0 %v3488, 127
      %v3587 = vpop.permute.xlu0 %3586
      %v3589 = vsel %vm3493, %v3585, 0
      %v3592 = vsel %vm3493, %v3587, 0
      %v3594 = vsel %vm3554, 1, 0
      %vm3595 = vcmp.eq.s32.totalorder %v3594, 1
      %vm3596 = vmpackc.low %vm3595, %vm3595
      %v3597 = vsel %vm3596, 65537, 0
      %v3598 = vperm.slane %v3597, 0
      %v3599 = vunpack.c.l.b16 %v3598
      %v3600 = vunpack.c.h.b16 %v3598
      %v3601 = vunpack.c.l.b16 0
      %v3602 = vunpack.c.h.b16 0
      %vm3603 = vcmp.ne.s32.totalorder %v3599, %v3601
      %vm3604 = vcmp.ne.s32.totalorder %v3600, %v3602
      %vm3605 = vmpackc.low %vm3604, %vm3603
      %v3606 = vsel %vm3605, %v3589, 0
      %v3607 = vsel %vm3605, %v3592, 0
      %vm3608 = vcmp.lt.s32.totalorder %v3477, 1
      %vm3609 = vmand %vm3608, %vm3502
      %v3610 = vsel %vm3609, 1, 0
      %vm3611 = vcmp.eq.s32.totalorder %v3610, 1
      %vm3612 = vmpackc.low %vm3611, %vm3611
      %v3613 = vsel %vm3612, 65537, 0
      %v3614 = vperm.slane %v3613, 0
      %v3615 = vunpack.c.l.b16 %v3614
      %v3616 = vunpack.c.h.b16 %v3614
      %v3617 = vunpack.c.l.b16 0
      %v3618 = vunpack.c.h.b16 0
      %vm3619 = vcmp.ne.s32.totalorder %v3615, %v3617
      %vm3620 = vcmp.ne.s32.totalorder %v3616, %v3618
      %vm3621 = vmpackc.low %vm3620, %vm3619
      %v3622 = vsel %vm3621, %v3589, 0
      %v3623 = vsel %vm3621, %v3592, 0
      %3624 = vrot.lane.b32.xlu0 %v3487, 126
      %v3625 = vpop.permute.xlu0 %3624
      %3626 = vrot.lane.b32.xlu0 %v3488, 126
      %v3627 = vpop.permute.xlu0 %3626
      %v3629 = vsel %vm3522, %v3625, 0
      %v3632 = vsel %vm3522, %v3627, 0
      %v3634 = vsel %vm3608, 1, 0
      %vm3635 = vcmp.eq.s32.totalorder %v3634, 1
      %vm3636 = vmpackc.low %vm3635, %vm3635
      %v3637 = vsel %vm3636, 65537, 0
      %v3638 = vperm.slane %v3637, 0
      %v3639 = vunpack.c.l.b16 %v3638
      %v3640 = vunpack.c.h.b16 %v3638
      %v3641 = vunpack.c.l.b16 0
      %v3642 = vunpack.c.h.b16 0
      %vm3643 = vcmp.ne.s32.totalorder %v3639, %v3641
      %vm3644 = vcmp.ne.s32.totalorder %v3640, %v3642
      %vm3645 = vmpackc.low %vm3644, %vm3643
      %v3646 = vsel %vm3645, %v3629, 0
      %v3647 = vsel %vm3645, %v3632, 0
      %3648 = vrot.lane.b32.xlu0 %v3487, 125
      %v3649 = vpop.permute.xlu0 %3648
      %3650 = vrot.lane.b32.xlu0 %v3488, 125
      %v3651 = vpop.permute.xlu0 %3650
      %v3653 = vsel %vm3547, %v3649, 0
      %v3656 = vsel %vm3547, %v3651, 0
      %vm3658 = vmand %vm3608, %vm3554
      %v3659 = vsel %vm3658, 1, 0
      %vm3660 = vcmp.eq.s32.totalorder %v3659, 1
      %vm3661 = vmpackc.low %vm3660, %vm3660
      %v3662 = vsel %vm3661, 65537, 0
      %v3663 = vperm.slane %v3662, 0
      %v3664 = vunpack.c.l.b16 %v3663
      %v3665 = vunpack.c.h.b16 %v3663
      %v3666 = vunpack.c.l.b16 0
      %v3667 = vunpack.c.h.b16 0
      %vm3668 = vcmp.ne.s32.totalorder %v3664, %v3666
      %vm3669 = vcmp.ne.s32.totalorder %v3665, %v3667
      %vm3670 = vmpackc.low %vm3669, %vm3668
      %v3671 = vsel %vm3670, %v3653, 0
      %v3672 = vsel %vm3670, %v3656, 0
      %v3675 = vld [vmem:[%s4 + $0x84] sm:$0xff]
      %v3676 = vld [vmem:[%s4 + $0x8c] sm:$0xf]
      %v3677 = vld [vmem:[%s4 + $0x158] sm:$0xff]
      %v3678 = vld [vmem:[%s4 + $0x160] sm:$0xf]
      %v3679 = vld [vmem:[%s4 + $0x22c] sm:$0xff]
      %v3680 = vld [vmem:[%s4 + $0x234] sm:$0xf]
      %v3681 = vld [vmem:[%s4 + $0x300] sm:$0xff]
      %v3682 = vld [vmem:[%s4 + $0x308] sm:$0xf]
      %3683 = vset.pattern.permute.xlu0 4
      %3684 = vperm.xlu0 %3683, %v1595
      %v3685 = vpop.permute.xlu0 %3684
      %3687 = vset.pattern.permute.xlu0 4
      %3688 = vperm.xlu0 %3687, %v1596
      %v3689 = vpop.permute.xlu0 %3688
      %3691 = vset.pattern.permute.xlu0 4
      %3692 = vperm.xlu0 %3691, %v1597
      %v3693 = vpop.permute.xlu0 %3692
      %3695 = vset.pattern.permute.xlu0 4
      %3696 = vperm.xlu0 %3695, %v1598
      %v3697 = vpop.permute.xlu0 %3696
      %v3707 = vunpack.c.l.b16 %v3675
      %v3708 = vunpack.c.h.b16 %v3675
      %v3709 = vunpack.c.l.b16 %v3676
      %v3710 = vunpack.c.l.b16 %v3677
      %v3711 = vunpack.c.h.b16 %v3677
      %v3712 = vunpack.c.l.b16 %v3678
      %v3713 = vunpack.c.l.b16 %v3679
      %v3714 = vunpack.c.h.b16 %v3679
      %v3715 = vunpack.c.l.b16 %v3680
      %v3716 = vunpack.c.l.b16 %v3681
      %v3717 = vunpack.c.h.b16 %v3681
      %v3718 = vunpack.c.l.b16 %v3682
      %v3719 = vpack.c.b16 %v3710, %v3707
      %v3720 = vpack.c.b16 %v3711, %v3708
      %v3721 = vpack.c.b16 %v3712, %v3709
      %v3722 = vpack.c.b16 %v3716, %v3713
      %v3723 = vpack.c.b16 %v3717, %v3714
      %v3724 = vpack.c.b16 %v3718, %v3715
      %vm3729 = vcmask 785408
      %v3731 = vsel %vm3729, %v3721, 0
      %v3734 = vsel %vm3729, %v3724, 0
      %3736 = vmatpush.bf16.msra.mxu0 %v3583
      %3737 = vmatpush.bf16.msra.mxu0 %v3582
      %3738 = vmatpush.bf16.msra.mxu0 %v3569
      %3739 = vmatpush.bf16.msra.mxu0 %v3568
      %3740 = vmatpush.bf16.msra.mxu0 %v3542
      %3741 = vmatpush.bf16.msra.mxu0 %v3541
      %3742 = vmatpush.bf16.msra.mxu0 %v3517
      %3743 = vmatpush.bf16.msra.mxu0 %v3516
      %3744 = vmatmul.bf16.gmra.mxu0 %v3719
      %v3745 = vpop.f32.mrf.mxu0
      %v3746 = vadd.f32 %v3685, %v3745
      %v3747 = vpop.f32.mrf.mxu0
      %v3748 = vadd.f32 %v3689, %v3747
      %3749 = vmatmul.bf16.gmra.mxu0 %v3722
      %v3750 = vpop.f32.mrf.mxu0
      %v3751 = vadd.f32 %v3693, %v3750
      %v3752 = vpop.f32.mrf.mxu0
      %v3753 = vadd.f32 %v3697, %v3752
      %3754 = vdwg.mxu0
      %3755 = vmatpush.bf16.msra.mxu0 %v3647
      %3756 = vmatpush.bf16.msra.mxu0 %v3646
      %3757 = vmatpush.bf16.msra.mxu0 %v3623
      %3758 = vmatpush.bf16.msra.mxu0 %v3622
      %3759 = vmatpush.bf16.msra.mxu0 %v3607
      %3760 = vmatpush.bf16.msra.mxu0 %v3606
      %3761 = vmatpush.bf16.msra.mxu0 %v3488
      %3762 = vmatpush.bf16.msra.mxu0 %v3487
      %3763 = vmatmul.bf16.gmra.mxu0 %v3720
      %v3764 = vpop.f32.mrf.mxu0
      %v3765 = vadd.f32 %v3746, %v3764
      %v3766 = vpop.f32.mrf.mxu0
      %v3767 = vadd.f32 %v3748, %v3766
      %3768 = vmatmul.bf16.gmra.mxu0 %v3723
      %v3769 = vpop.f32.mrf.mxu0
      %v3770 = vadd.f32 %v3751, %v3769
      %v3771 = vpop.f32.mrf.mxu0
      %v3772 = vadd.f32 %v3753, %v3771
      %3773 = vdwg.mxu0
      %3774 = vmatpush.bf16.msra.mxu0 0
      %3775 = vmatpush.bf16.msra.mxu0 0
      %3776 = vmatpush.bf16.msra.mxu0 %v3488
      %3777 = vmatpush.bf16.msra.mxu0 %v3487
      %3778 = vmatpush.bf16.msra.mxu0 %v3488
      %3779 = vmatpush.bf16.msra.mxu0 %v3487
      %3780 = vmatpush.bf16.msra.mxu0 %v3672
      %3781 = vmatpush.bf16.msra.mxu0 %v3671
      %3782 = vmatmul.bf16.gmra.mxu0 %v3731
      %v3783 = vpop.f32.mrf.mxu0
      %v3784 = vadd.f32 %v3765, %v3783
      %v3785 = vpop.f32.mrf.mxu0
      %v3786 = vadd.f32 %v3767, %v3785
      %3787 = vmatmul.bf16.gmra.mxu0 %v3734
      %v3788 = vpop.f32.mrf.mxu0
      %v3789 = vadd.f32 %v3770, %v3788
      %v3790 = vpop.f32.mrf.mxu0
      %v3791 = vadd.f32 %v3772, %v3790
      %3792 = vdwg.mxu0
      %v3793 = vld [vmem:[%s4 + $0x90] sm:$0xf]
      %v3794 = vld [vmem:[%s4 + $0x164] sm:$0xf]
      %v3795 = vpack.c.bf16 %v3786, %v3784
      %v3796 = vpack.c.bf16 %v3791, %v3789
      %3797 = vset.pattern.permute.xlu0 5
      %3798 = vperm.xlu0 %3797, %v522
      %v3799 = vpop.permute.xlu0 %3798
      %3801 = vset.pattern.permute.xlu0 5
      %3802 = vperm.xlu0 %3801, %v523
      %v3803 = vpop.permute.xlu0 %3802
      %v3807 = vunpack.c.l.b16 %v3793
      %v3808 = vunpack.c.l.b16 %v3794
      %v3809 = vpack.c.b16 %v3808, %v3807
      %vm3810 = vcmask 261120
      %v3812 = vsel %vm3810, %v3809, 0
      %3814 = vmatpush.bf16.msra.mxu0 0
      %3815 = vmatpush.bf16.msra.mxu0 0
      %3816 = vmatpush.bf16.msra.mxu0 0
      %3817 = vmatpush.bf16.msra.mxu0 0
      %3818 = vmatpush.bf16.msra.mxu0 0
      %3819 = vmatpush.bf16.msra.mxu0 0
      %3820 = vmatpush.bf16.msra.mxu0 %v3796
      %3821 = vmatpush.bf16.msra.mxu0 %v3795
      %3822 = vmatmul.bf16.gmra.mxu0 %v3812
      %v3823 = vpop.f32.mrf.mxu0
      %v3824 = vadd.f32 %v3799, %v3823
      %v3825 = vpop.f32.mrf.mxu0
      %v3826 = vadd.f32 %v3803, %v3825
      %3827 = vdwg.mxu0
      %v3828 = vmax.f32 %v3824, 0.0
      %v3829 = vmax.f32 %v3826, 0.0
      %v3830 = vld [vmem:[%s4 + $0x94] sm:$0xf]
      %v3831 = vld [vmem:[%s4 + $0x168] sm:$0xf]
      %v3832 = vld [vmem:[%s4 + $0x23c] sm:$0xf]
      %v3833 = vld [vmem:[%s4 + $0x310] sm:$0xf]
      %v3834 = vpack.c.bf16 %v3829, %v3828
      %3835 = vset.pattern.permute.xlu0 6
      %3836 = vperm.xlu0 %3835, %v1595
      %v3837 = vpop.permute.xlu0 %3836
      %3839 = vset.pattern.permute.xlu0 6
      %3840 = vperm.xlu0 %3839, %v1596
      %v3841 = vpop.permute.xlu0 %3840
      %3843 = vset.pattern.permute.xlu0 6
      %3844 = vperm.xlu0 %3843, %v1597
      %v3845 = vpop.permute.xlu0 %3844
      %3847 = vset.pattern.permute.xlu0 6
      %3848 = vperm.xlu0 %3847, %v1598
      %v3849 = vpop.permute.xlu0 %3848
      %v3855 = vunpack.c.l.b16 %v3830
      %v3856 = vunpack.c.l.b16 %v3831
      %v3857 = vunpack.c.l.b16 %v3832
      %v3858 = vunpack.c.l.b16 %v3833
      %v3859 = vpack.c.b16 %v3856, %v3855
      %v3860 = vpack.c.b16 %v3858, %v3857
      %vm3861 = vcmask 130048
      %v3863 = vsel %vm3861, %v3859, 0
      %v3866 = vsel %vm3861, %v3860, 0
      %3868 = vmatpush.bf16.msra.mxu0 0
      %3869 = vmatpush.bf16.msra.mxu0 0
      %3870 = vmatpush.bf16.msra.mxu0 0
      %3871 = vmatpush.bf16.msra.mxu0 0
      %3872 = vmatpush.bf16.msra.mxu0 0
      %3873 = vmatpush.bf16.msra.mxu0 0
      %3874 = vmatpush.bf16.msra.mxu0 0
      %3875 = vmatpush.bf16.msra.mxu0 %v3834
      %3876 = vmatmul.bf16.gmra.mxu0 %v3863
      %v3877 = vpop.f32.mrf.mxu0
      %v3878 = vadd.f32 %v3837, %v3877
      %v3879 = vpop.f32.mrf.mxu0
      %v3880 = vadd.f32 %v3841, %v3879
      %3881 = vmatmul.bf16.gmra.mxu0 %v3866
      %v3882 = vpop.f32.mrf.mxu0
      %v3883 = vadd.f32 %v3845, %v3882
      %v3884 = vpop.f32.mrf.mxu0
      %v3885 = vadd.f32 %v3849, %v3884
      %3886 = vdwg.mxu0
      %v3887 = vadd.f32 %v3467, %v3878
      %v3888 = vadd.f32 %v3468, %v3880
      %v3889 = vadd.f32 %v3469, %v3883
      %v3890 = vadd.f32 %v3470, %v3885
      %v3891 = vpack.c.bf16 %v3888, %v3887
      %v3892 = vpack.c.bf16 %v3890, %v3889
      %v3893 = vld [vmem:[%s4 + $0x98] sm:$0xf]
      %3894 = vset.pattern.permute.xlu0 7
      %3895 = vperm.xlu0 %3894, %v428
      %v3896 = vpop.permute.xlu0 %3895
      %v3899 = vsel %vm3810, %v3893, 0
      %3901 = vmatpush.bf16.msra.mxu0 0
      %3902 = vmatpush.bf16.msra.mxu0 0
      %3903 = vmatpush.bf16.msra.mxu0 0
      %3904 = vmatpush.bf16.msra.mxu0 0
      %3905 = vmatpush.bf16.msra.mxu0 0
      %3906 = vmatpush.bf16.msra.mxu0 0
      %3907 = vmatpush.bf16.msra.mxu0 %v3892
      %3908 = vmatpush.bf16.msra.mxu0 %v3891
      %3909 = vmatmul.bf16.gmra.mxu0 %v3899
      %v3910 = vpop.f32.mrf.mxu0
      %v3911 = vadd.f32 %v3896, %v3910
      %v3912 = vpop.f32.mrf.mxu0
      %3913 = vdwg.mxu0
      %v3914 = vmax.f32 %v3911, 0.0
      %v3915 = vld [vmem:[%s4 + $0x9c] sm:$0xf]
      %v3916 = vld [vmem:[%s4 + $0x170] sm:$0xf]
      %v3917 = vld [vmem:[%s4 + $0x244] sm:$0xf]
      %v3918 = vld [vmem:[%s4 + $0x318] sm:$0xf]
      %v3919 = vpack.c.bf16 %v3914, %v3914
      %3920 = vset.pattern.permute.xlu0 8
      %3921 = vperm.xlu0 %3920, %v1595
      %v3922 = vpop.permute.xlu0 %3921
      %3924 = vset.pattern.permute.xlu0 8
      %3925 = vperm.xlu0 %3924, %v1596
      %v3926 = vpop.permute.xlu0 %3925
      %3928 = vset.pattern.permute.xlu0 8
      %3929 = vperm.xlu0 %3928, %v1597
      %v3930 = vpop.permute.xlu0 %3929
      %3932 = vset.pattern.permute.xlu0 8
      %3933 = vperm.xlu0 %3932, %v1598
      %v3934 = vpop.permute.xlu0 %3933
      %v3940 = vunpack.c.l.b16 %v3915
      %v3941 = vunpack.c.l.b16 %v3916
      %v3942 = vunpack.c.l.b16 %v3917
      %v3943 = vunpack.c.l.b16 %v3918
      %v3944 = vpack.c.b16 %v3941, %v3940
      %v3945 = vpack.c.b16 %v3943, %v3942
      %vm3946 = vcmask 64512
      %v3948 = vsel %vm3946, %v3944, 0
      %v3951 = vsel %vm3946, %v3945, 0
      %vm3953 = vcmask 1043456
      %v3955 = vsel %vm3953, %v3919, 0
      %3957 = vmatpush.bf16.msra.mxu0 0
      %3958 = vmatpush.bf16.msra.mxu0 0
      %3959 = vmatpush.bf16.msra.mxu0 0
      %3960 = vmatpush.bf16.msra.mxu0 0
      %3961 = vmatpush.bf16.msra.mxu0 0
      %3962 = vmatpush.bf16.msra.mxu0 0
      %3963 = vmatpush.bf16.msra.mxu0 0
      %3964 = vmatpush.bf16.msra.mxu0 %v3955
      %3965 = vmatmul.bf16.gmra.mxu0 %v3948
      %v3966 = vpop.f32.mrf.mxu0
      %v3967 = vadd.f32 %v3922, %v3966
      %v3968 = vpop.f32.mrf.mxu0
      %v3969 = vadd.f32 %v3926, %v3968
      %3970 = vmatmul.bf16.gmra.mxu0 %v3951
      %v3971 = vpop.f32.mrf.mxu0
      %v3972 = vadd.f32 %v3930, %v3971
      %v3973 = vpop.f32.mrf.mxu0
      %v3974 = vadd.f32 %v3934, %v3973
      %3975 = vdwg.mxu0
      %v3976 = vxor.u32 %v3967, 2147483648
      %v3977 = vxor.u32 %v3969, 2147483648
      %v3978 = vxor.u32 %v3972, 2147483648
      %v3979 = vxor.u32 %v3974, 2147483648
      %v3980 = vmul.f32 %v3976, 1.442695
      %v3981 = vpow.pop %v3980
      %v3982 = vmul.f32 %v3977, 1.442695
      %v3983 = vpow.pop %v3982
      %v3984 = vmul.f32 %v3978, 1.442695
      %v3985 = vpow.pop %v3984
      %v3986 = vmul.f32 %v3979, 1.442695
      %v3987 = vpow.pop %v3986
      %v3988 = vadd.f32 %v3981, 1.0
      %v3989 = vadd.f32 %v3983, 1.0
      %v3990 = vadd.f32 %v3985, 1.0
      %v3991 = vadd.f32 %v3987, 1.0
      %v3992 = vrcp.pop %v3988
      %v3993 = vmul.f32 %v3988, %v3992
      %v3994 = vsub.f32 1.0, %v3993
      %v3995 = vmul.f32 %v3992, %v3994
      %v3996 = vadd.f32 %v3992, %v3995
      %vm3997 = vweird.f32 %v3988
      %vm3998 = vweird.f32 %v3992
      %vm3999 = vmor %vm3997, %vm3998
      %v4000 = vsel %vm3999, %v3992, %v3996
      %v4001 = vand.u32 2147483647, %v3988
      %vm4002 = vcmp.eq.f32.partialorder %v4001, 8.507059e+37
      %v4003 = vand.u32 %v3988, 2147483648
      %v4004 = vor.u32 1.1754944e-38, %v4003
      %v4005 = vsel %vm4002, %v4004, %v4000
      %v4006 = vmul.f32 1.0, %v4005
      %v4007 = vrcp.pop %v3989
      %v4008 = vmul.f32 %v3989, %v4007
      %v4009 = vsub.f32 1.0, %v4008
      %v4010 = vmul.f32 %v4007, %v4009
      %v4011 = vadd.f32 %v4007, %v4010
      %vm4012 = vweird.f32 %v3989
      %vm4013 = vweird.f32 %v4007
      %vm4014 = vmor %vm4012, %vm4013
      %v4015 = vsel %vm4014, %v4007, %v4011
      %v4016 = vand.u32 2147483647, %v3989
      %vm4017 = vcmp.eq.f32.partialorder %v4016, 8.507059e+37
      %v4018 = vand.u32 %v3989, 2147483648
      %v4019 = vor.u32 1.1754944e-38, %v4018
      %v4020 = vsel %vm4017, %v4019, %v4015
      %v4021 = vmul.f32 1.0, %v4020
      %v4022 = vrcp.pop %v3990
      %v4023 = vmul.f32 %v3990, %v4022
      %v4024 = vsub.f32 1.0, %v4023
      %v4025 = vmul.f32 %v4022, %v4024
      %v4026 = vadd.f32 %v4022, %v4025
      %vm4027 = vweird.f32 %v3990
      %vm4028 = vweird.f32 %v4022
      %vm4029 = vmor %vm4027, %vm4028
      %v4030 = vsel %vm4029, %v4022, %v4026
      %v4031 = vand.u32 2147483647, %v3990
      %vm4032 = vcmp.eq.f32.partialorder %v4031, 8.507059e+37
      %v4033 = vand.u32 %v3990, 2147483648
      %v4034 = vor.u32 1.1754944e-38, %v4033
      %v4035 = vsel %vm4032, %v4034, %v4030
      %v4036 = vmul.f32 1.0, %v4035
      %v4037 = vrcp.pop %v3991
      %v4038 = vmul.f32 %v3991, %v4037
      %v4039 = vsub.f32 1.0, %v4038
      %v4040 = vmul.f32 %v4037, %v4039
      %v4041 = vadd.f32 %v4037, %v4040
      %vm4042 = vweird.f32 %v3991
      %vm4043 = vweird.f32 %v4037
      %vm4044 = vmor %vm4042, %vm4043
      %v4045 = vsel %vm4044, %v4037, %v4041
      %v4046 = vand.u32 2147483647, %v3991
      %vm4047 = vcmp.eq.f32.partialorder %v4046, 8.507059e+37
      %v4048 = vand.u32 %v3991, 2147483648
      %v4049 = vor.u32 1.1754944e-38, %v4048
      %v4050 = vsel %vm4047, %v4049, %v4045
      %v4051 = vmul.f32 1.0, %v4050
      %v4052 = vmul.f32 %v3887, %v4006
      %v4053 = vmul.f32 %v3888, %v4021
      %v4054 = vmul.f32 %v3889, %v4036
      %v4055 = vmul.f32 %v3890, %v4051
      %v4056 = vld [vmem:[%s4 + $0xa0] sm:$0xf]
      %v4057 = vld [vmem:[%s4 + $0x174] sm:$0xf]
      %v4058 = vld [vmem:[%s4 + $0x248] sm:$0xf]
      %v4059 = vld [vmem:[%s4 + $0x31c] sm:$0xf]
      %v4060 = vld [vmem:[%s4 + $0x3f0] sm:$0xf]
      %v4061 = vld [vmem:[%s4 + $0x4c4] sm:$0xf]
      %v4062 = vld [vmem:[%s4 + $0x598] sm:$0xf]
      %v4063 = vld [vmem:[%s4 + $0x66c] sm:$0xf]
      %v4064 = vpack.c.bf16 %v4053, %v4052
      %v4065 = vpack.c.bf16 %v4055, %v4054
      %v4074 = vunpack.c.l.b16 %v4056
      %v4075 = vunpack.c.l.b16 %v4057
      %v4076 = vunpack.c.l.b16 %v4058
      %v4077 = vunpack.c.l.b16 %v4059
      %v4078 = vunpack.c.l.b16 %v4060
      %v4079 = vunpack.c.l.b16 %v4061
      %v4080 = vunpack.c.l.b16 %v4062
      %v4081 = vunpack.c.l.b16 %v4063
      %v4082 = vpack.c.b16 %v4075, %v4074
      %v4083 = vpack.c.b16 %v4077, %v4076
      %v4084 = vpack.c.b16 %v4079, %v4078
      %v4085 = vpack.c.b16 %v4081, %v4080
      %v4087 = vsel %vm3810, %v4082, 0
      %v4090 = vsel %vm3810, %v4083, 0
      %v4093 = vsel %vm3810, %v4084, 0
      %v4096 = vsel %vm3810, %v4085, 0
      %4098 = vmatpush.bf16.msra.mxu0 0
      %4099 = vmatpush.bf16.msra.mxu0 0
      %4100 = vmatpush.bf16.msra.mxu0 0
      %4101 = vmatpush.bf16.msra.mxu0 0
      %4102 = vmatpush.bf16.msra.mxu0 0
      %4103 = vmatpush.bf16.msra.mxu0 0
      %4104 = vmatpush.bf16.msra.mxu0 %v4065
      %4105 = vmatpush.bf16.msra.mxu0 %v4064
      %4106 = vmatmul.bf16.gmra.mxu0 %v4087
      %v4107 = vpop.f32.mrf.mxu0
      %v4108 = vadd.f32 0.0, %v4107
      %v4109 = vpop.f32.mrf.mxu0
      %v4110 = vadd.f32 0.0, %v4109
      %4111 = vmatmul.bf16.gmra.mxu0 %v4090
      %v4112 = vpop.f32.mrf.mxu0
      %v4113 = vadd.f32 0.0, %v4112
      %v4114 = vpop.f32.mrf.mxu0
      %v4115 = vadd.f32 0.0, %v4114
      %4116 = vmatmul.bf16.gmra.mxu0 %v4093
      %v4117 = vpop.f32.mrf.mxu0
      %v4118 = vadd.f32 0.0, %v4117
      %v4119 = vpop.f32.mrf.mxu0
      %v4120 = vadd.f32 0.0, %v4119
      %4121 = vmatmul.bf16.gmra.mxu0 %v4096
      %v4122 = vpop.f32.mrf.mxu0
      %v4123 = vadd.f32 0.0, %v4122
      %v4124 = vpop.f32.mrf.mxu0
      %v4125 = vadd.f32 0.0, %v4124
      %4126 = vdwg.mxu0
      %4129 = vrot.lane.b32.xlu0 %v4113, 4
      %v4130 = vpop.permute.xlu0 %4129
      %4131 = vrot.lane.b32.xlu0 %v4115, 4
      %v4132 = vpop.permute.xlu0 %4131
      %4137 = vrot.lane.b32.xlu0 %v4118, 8
      %v4138 = vpop.permute.xlu0 %4137
      %4139 = vrot.lane.b32.xlu0 %v4120, 8
      %v4140 = vpop.permute.xlu0 %4139
      %4145 = vrot.lane.b32.xlu0 %v4123, 12
      %v4146 = vpop.permute.xlu0 %4145
      %4147 = vrot.lane.b32.xlu0 %v4125, 12
      %v4148 = vpop.permute.xlu0 %4147
      %vm4151 = vcmask 31744
      %v4152 = vsel %vm4151, %v4108, %v4130
      %v4153 = vsel %vm4151, %v4110, %v4132
      %v4154 = vsel %vm3946, %v4152, %v4138
      %v4155 = vsel %vm3946, %v4153, %v4140
      %vm4156 = vcmask 97280
      %v4157 = vsel %vm4156, %v4154, %v4146
      %v4158 = vsel %vm4156, %v4155, %v4148
      %v4159 = vpack.c.bf16 %v4158, %v4157
      %v4160 = vld [vmem:[%s6] sm:$0xf]
      %v4161 = vld [vmem:[%s6 + $0x4] sm:$0xf]
      %4162 = vset.pattern.permute.xlu0 9
      %4163 = vperm.xlu0 %4162, %v522
      %v4164 = vpop.permute.xlu0 %4163
      %4166 = vset.pattern.permute.xlu0 9
      %4167 = vperm.xlu0 %4166, %v523
      %v4168 = vpop.permute.xlu0 %4167
      %v4172 = vunpack.c.l.b16 %v4160
      %v4173 = vunpack.c.l.b16 %v4161
      %v4174 = vpack.c.b16 %v4173, %v4172
      %v4177 = vsel %vm3861, %v4159, 0
      %4179 = vmatpush.bf16.msra.mxu0 0
      %4180 = vmatpush.bf16.msra.mxu0 0
      %4181 = vmatpush.bf16.msra.mxu0 0
      %4182 = vmatpush.bf16.msra.mxu0 0
      %4183 = vmatpush.bf16.msra.mxu0 0
      %4184 = vmatpush.bf16.msra.mxu0 0
      %4185 = vmatpush.bf16.msra.mxu0 0
      %4186 = vmatpush.bf16.msra.mxu0 %v4174
      %4187 = vmatmul.bf16.gmra.mxu0 %v4177
      %v4188 = vpop.f32.mrf.mxu0
      %v4189 = vadd.f32 %v4164, %v4188
      %v4190 = vpop.f32.mrf.mxu0
      %v4191 = vadd.f32 %v4168, %v4190
      %4192 = vdwg.mxu0
      %v4193 = vadd.f32 %v4189, %v1161
      %v4194 = vadd.f32 %v4191, %v1162
      %v4195 = vpack.c.bf16 %v4193, %v4193
      %v4196 = vpack.c.bf16 %v4194, %v4194
      %v4197 = vshra.s32 %v3476, 2
      %v4198 = vand.u32 %v3476, 3
      %v4201 = vunpack.c.l.b16 %v4195
      %v4202 = vunpack.c.l.b16 %v4196
      %v4203 = vpack.c.b16 %v4202, %v4201
      %4204 = vrot.lane.b32.xlu0 %v4203, 5
      %v4205 = vpop.permute.xlu0 %4204
      %vm4206 = vcmask 39936
      %v4208 = vsel %vm4206, 0, %v4205
      %vm4210 = vcmp.ge.s32.totalorder %v4197, 1
      %vm4211 = vcmp.ge.s32.totalorder %v4198, 1
      %vm4212 = vmand %vm4210, %vm4211
      %v4213 = vsel %vm4212, 1, 0
      %vm4214 = vcmp.eq.s32.totalorder %v4213, 1
      %vm4215 = vmpackc.low %vm4214, %vm4214
      %v4216 = vsel %vm4215, 65537, 0
      %v4217 = vperm.slane %v4216, 0
      %v4218 = vunpack.c.l.b16 %v4217
      %v4219 = vunpack.c.h.b16 %v4217
      %v4220 = vunpack.c.l.b16 0
      %v4221 = vunpack.c.h.b16 0
      %vm4222 = vcmp.ne.s32.totalorder %v4218, %v4220
      %vm4223 = vcmp.ne.s32.totalorder %v4219, %v4221
      %vm4224 = vmpackc.low %vm4223, %vm4222
      %v4225 = vsel %vm4224, %v4208, 0
      %4226 = vrot.lane.b32.xlu0 %v4203, 4
      %v4227 = vpop.permute.xlu0 %4226
      %v4229 = vsel %vm4151, 0, %v4227
      %v4231 = vsel %vm4210, 1, 0
      %vm4232 = vcmp.eq.s32.totalorder %v4231, 1
      %vm4233 = vmpackc.low %vm4232, %vm4232
      %v4234 = vsel %vm4233, 65537, 0
      %v4235 = vperm.slane %v4234, 0
      %v4236 = vunpack.c.l.b16 %v4235
      %v4237 = vunpack.c.h.b16 %v4235
      %v4238 = vunpack.c.l.b16 0
      %v4239 = vunpack.c.h.b16 0
      %vm4240 = vcmp.ne.s32.totalorder %v4236, %v4238
      %vm4241 = vcmp.ne.s32.totalorder %v4237, %v4239
      %vm4242 = vmpackc.low %vm4241, %vm4240
      %v4243 = vsel %vm4242, %v4229, 0
      %4244 = vrot.lane.b32.xlu0 %v4203, 3
      %v4245 = vpop.permute.xlu0 %4244
      %v4247 = vsel %vm3493, 0, %v4245
      %vm4249 = vcmp.lt.s32.totalorder %v4198, 3
      %vm4250 = vmand %vm4210, %vm4249
      %v4251 = vsel %vm4250, 1, 0
      %vm4252 = vcmp.eq.s32.totalorder %v4251, 1
      %vm4253 = vmpackc.low %vm4252, %vm4252
      %v4254 = vsel %vm4253, 65537, 0
      %v4255 = vperm.slane %v4254, 0
      %v4256 = vunpack.c.l.b16 %v4255
      %v4257 = vunpack.c.h.b16 %v4255
      %v4258 = vunpack.c.l.b16 0
      %v4259 = vunpack.c.h.b16 0
      %vm4260 = vcmp.ne.s32.totalorder %v4256, %v4258
      %vm4261 = vcmp.ne.s32.totalorder %v4257, %v4259
      %vm4262 = vmpackc.low %vm4261, %vm4260
      %v4263 = vsel %vm4262, %v4247, 0
      %4264 = vrot.lane.b32.xlu0 %v4203, 1
      %v4265 = vpop.permute.xlu0 %4264
      %v4267 = vsel %vm3547, 0, %v4265
      %v4269 = vsel %vm4211, 1, 0
      %vm4270 = vcmp.eq.s32.totalorder %v4269, 1
      %vm4271 = vmpackc.low %vm4270, %vm4270
      %v4272 = vsel %vm4271, 65537, 0
      %v4273 = vperm.slane %v4272, 0
      %v4274 = vunpack.c.l.b16 %v4273
      %v4275 = vunpack.c.h.b16 %v4273
      %v4276 = vunpack.c.l.b16 0
      %v4277 = vunpack.c.h.b16 0
      %vm4278 = vcmp.ne.s32.totalorder %v4274, %v4276
      %vm4279 = vcmp.ne.s32.totalorder %v4275, %v4277
      %vm4280 = vmpackc.low %vm4279, %vm4278
      %v4281 = vsel %vm4280, %v4267, 0
      %4282 = vrot.lane.b32.xlu0 %v4203, 127
      %v4283 = vpop.permute.xlu0 %4282
      %vm4284 = vcmask 121856
      %v4286 = vsel %vm4284, %v4283, 0
      %v4288 = vsel %vm4249, 1, 0
      %vm4289 = vcmp.eq.s32.totalorder %v4288, 1
      %vm4290 = vmpackc.low %vm4289, %vm4289
      %v4291 = vsel %vm4290, 65537, 0
      %v4292 = vperm.slane %v4291, 0
      %v4293 = vunpack.c.l.b16 %v4292
      %v4294 = vunpack.c.h.b16 %v4292
      %v4295 = vunpack.c.l.b16 0
      %v4296 = vunpack.c.h.b16 0
      %vm4297 = vcmp.ne.s32.totalorder %v4293, %v4295
      %vm4298 = vcmp.ne.s32.totalorder %v4294, %v4296
      %vm4299 = vmpackc.low %vm4298, %vm4297
      %v4300 = vsel %vm4299, %v4286, 0
      %4301 = vrot.lane.b32.xlu0 %v4203, 125
      %v4302 = vpop.permute.xlu0 %4301
      %vm4303 = vcmask 105472
      %v4305 = vsel %vm4303, %v4302, 0
      %vm4307 = vcmp.lt.s32.totalorder %v4197, 3
      %vm4308 = vmand %vm4307, %vm4211
      %v4309 = vsel %vm4308, 1, 0
      %vm4310 = vcmp.eq.s32.totalorder %v4309, 1
      %vm4311 = vmpackc.low %vm4310, %vm4310
      %v4312 = vsel %vm4311, 65537, 0
      %v4313 = vperm.slane %v4312, 0
      %v4314 = vunpack.c.l.b16 %v4313
      %v4315 = vunpack.c.h.b16 %v4313
      %v4316 = vunpack.c.l.b16 0
      %v4317 = vunpack.c.h.b16 0
      %vm4318 = vcmp.ne.s32.totalorder %v4314, %v4316
      %vm4319 = vcmp.ne.s32.totalorder %v4315, %v4317
      %vm4320 = vmpackc.low %vm4319, %vm4318
      %v4321 = vsel %vm4320, %v4305, 0
      %4322 = vrot.lane.b32.xlu0 %v4203, 124
      %v4323 = vpop.permute.xlu0 %4322
      %v4325 = vsel %vm4156, %v4323, 0
      %v4327 = vsel %vm4307, 1, 0
      %vm4328 = vcmp.eq.s32.totalorder %v4327, 1
      %vm4329 = vmpackc.low %vm4328, %vm4328
      %v4330 = vsel %vm4329, 65537, 0
      %v4331 = vperm.slane %v4330, 0
      %v4332 = vunpack.c.l.b16 %v4331
      %v4333 = vunpack.c.h.b16 %v4331
      %v4334 = vunpack.c.l.b16 0
      %v4335 = vunpack.c.h.b16 0
      %vm4336 = vcmp.ne.s32.totalorder %v4332, %v4334
      %vm4337 = vcmp.ne.s32.totalorder %v4333, %v4335
      %vm4338 = vmpackc.low %vm4337, %vm4336
      %v4339 = vsel %vm4338, %v4325, 0
      %4340 = vrot.lane.b32.xlu0 %v4203, 123
      %v4341 = vpop.permute.xlu0 %4340
      %vm4342 = vcmask 89088
      %v4344 = vsel %vm4342, %v4341, 0
      %vm4346 = vmand %vm4307, %vm4249
      %v4347 = vsel %vm4346, 1, 0
      %vm4348 = vcmp.eq.s32.totalorder %v4347, 1
      %vm4349 = vmpackc.low %vm4348, %vm4348
      %v4350 = vsel %vm4349, 65537, 0
      %v4351 = vperm.slane %v4350, 0
      %v4352 = vunpack.c.l.b16 %v4351
      %v4353 = vunpack.c.h.b16 %v4351
      %v4354 = vunpack.c.l.b16 0
      %v4355 = vunpack.c.h.b16 0
      %vm4356 = vcmp.ne.s32.totalorder %v4352, %v4354
      %vm4357 = vcmp.ne.s32.totalorder %v4353, %v4355
      %vm4358 = vmpackc.low %vm4357, %vm4356
      %v4359 = vsel %vm4358, %v4344, 0
      %v4361 = vld [vmem:[%s4 + $0xa4] sm:$0xff]
      %v4362 = vld [vmem:[%s4 + $0x178] sm:$0xff]
      %4363 = vset.pattern.permute.xlu0 10
      %4364 = vperm.xlu0 %4363, %v522
      %v4365 = vpop.permute.xlu0 %4364
      %4367 = vset.pattern.permute.xlu0 10
      %4368 = vperm.xlu0 %4367, %v523
      %v4369 = vpop.permute.xlu0 %4368
      %v4373 = vunpack.c.l.b16 %v4361
      %v4374 = vunpack.c.h.b16 %v4361
      %v4375 = vunpack.c.l.b16 %v4362
      %v4376 = vunpack.c.h.b16 %v4362
      %v4377 = vpack.c.b16 %v4375, %v4373
      %v4378 = vpack.c.b16 %v4376, %v4374
      %v4381 = vsel %vm3861, %v4378, 0
      %4383 = vmatpush.bf16.msra.mxu0 %v4339
      %4384 = vmatpush.bf16.msra.mxu0 %v4321
      %4385 = vmatpush.bf16.msra.mxu0 %v4300
      %4386 = vmatpush.bf16.msra.mxu0 %v4203
      %4387 = vmatpush.bf16.msra.mxu0 %v4281
      %4388 = vmatpush.bf16.msra.mxu0 %v4263
      %4389 = vmatpush.bf16.msra.mxu0 %v4243
      %4390 = vmatpush.bf16.msra.mxu0 %v4225
      %4391 = vmatmul.bf16.gmra.mxu0 %v4377
      %v4392 = vpop.f32.mrf.mxu0
      %v4393 = vadd.f32 %v4365, %v4392
      %v4394 = vpop.f32.mrf.mxu0
      %v4395 = vadd.f32 %v4369, %v4394
      %4396 = vdwg.mxu0
      %4397 = vmatpush.bf16.msra.mxu0 0
      %4398 = vmatpush.bf16.msra.mxu0 0
      %4399 = vmatpush.bf16.msra.mxu0 0
      %4400 = vmatpush.bf16.msra.mxu0 0
      %4401 = vmatpush.bf16.msra.mxu0 0
      %4402 = vmatpush.bf16.msra.mxu0 0
      %4403 = vmatpush.bf16.msra.mxu0 0
      %4404 = vmatpush.bf16.msra.mxu0 %v4359
      %4405 = vmatmul.bf16.gmra.mxu0 %v4381
      %v4406 = vpop.f32.mrf.mxu0
      %v4407 = vadd.f32 %v4393, %v4406
      %v4408 = vpop.f32.mrf.mxu0
      %v4409 = vadd.f32 %v4395, %v4408
      %4410 = vdwg.mxu0
      %v4411 = vpack.c.bf16 %v4409, %v4407
      %v4412 = vld [vmem:[%s4 + $0xac] sm:$0x3]
      %v4413 = vld [vmem:[%s5] sm:$0xf]
      %4415 = vset.pattern.permute.xlu0 11
      %4416 = vperm.xlu0 %4415, %v4413
      %v4417 = vpop.permute.xlu0 %4416
      %v4420 = vsel %vm3861, %v4412, 0
      %4422 = vmatpush.bf16.msra.mxu0 0
      %4423 = vmatpush.bf16.msra.mxu0 0
      %4424 = vmatpush.bf16.msra.mxu0 0
      %4425 = vmatpush.bf16.msra.mxu0 0
      %4426 = vmatpush.bf16.msra.mxu0 0
      %4427 = vmatpush.bf16.msra.mxu0 0
      %4428 = vmatpush.bf16.msra.mxu0 0
      %4429 = vmatpush.bf16.msra.mxu0 %v4411
      %4430 = vmatmul.bf16.gmra.mxu0 %v4420
      %v4431 = vpop.f32.mrf.mxu0
      %v4432 = vadd.f32 %v4417, %v4431
      %v4433 = vpop.f32.mrf.mxu0
      %4434 = vdwg.mxu0
      %v4435 = vmax.f32 %v4432, 0.0
      %v4436 = vld [vmem:[%s4 + $0xb0] sm:$0xf]
      %v4437 = vld [vmem:[%s4 + $0x184] sm:$0xf]
      %v4438 = vpack.c.bf16 %v4435, %v4435
      %4439 = vset.pattern.permute.xlu0 12
      %4440 = vperm.xlu0 %4439, %v522
      %v4441 = vpop.permute.xlu0 %4440
      %4443 = vset.pattern.permute.xlu0 12
      %4444 = vperm.xlu0 %4443, %v523
      %v4445 = vpop.permute.xlu0 %4444
      %v4449 = vunpack.c.l.b16 %v4436
      %v4450 = vunpack.c.l.b16 %v4437
      %v4451 = vpack.c.b16 %v4450, %v4449
      %v4453 = vsel %vm4151, %v4451, 0
      %vm4455 = vcmask 1041408
      %v4457 = vsel %vm4455, %v4438, 0
      %4459 = vmatpush.bf16.msra.mxu0 0
      %4460 = vmatpush.bf16.msra.mxu0 0
      %4461 = vmatpush.bf16.msra.mxu0 0
      %4462 = vmatpush.bf16.msra.mxu0 0
      %4463 = vmatpush.bf16.msra.mxu0 0
      %4464 = vmatpush.bf16.msra.mxu0 0
      %4465 = vmatpush.bf16.msra.mxu0 0
      %4466 = vmatpush.bf16.msra.mxu0 %v4457
      %4467 = vmatmul.bf16.gmra.mxu0 %v4453
      %v4468 = vpop.f32.mrf.mxu0
      %v4469 = vadd.f32 %v4441, %v4468
      %v4470 = vpop.f32.mrf.mxu0
      %v4471 = vadd.f32 %v4445, %v4470
      %4472 = vdwg.mxu0
      %v4473 = vxor.u32 %v4469, 2147483648
      %v4474 = vxor.u32 %v4471, 2147483648
      %v4475 = vmul.f32 %v4473, 1.442695
      %v4476 = vpow.pop %v4475
      %v4477 = vmul.f32 %v4474, 1.442695
      %v4478 = vpow.pop %v4477
      %v4479 = vadd.f32 %v4476, 1.0
      %v4480 = vadd.f32 %v4478, 1.0
      %v4481 = vrcp.pop %v4479
      %v4482 = vmul.f32 %v4479, %v4481
      %v4483 = vsub.f32 1.0, %v4482
      %v4484 = vmul.f32 %v4481, %v4483
      %v4485 = vadd.f32 %v4481, %v4484
      %vm4486 = vweird.f32 %v4479
      %vm4487 = vweird.f32 %v4481
      %vm4488 = vmor %vm4486, %vm4487
      %v4489 = vsel %vm4488, %v4481, %v4485
      %v4490 = vand.u32 2147483647, %v4479
      %vm4491 = vcmp.eq.f32.partialorder %v4490, 8.507059e+37
      %v4492 = vand.u32 %v4479, 2147483648
      %v4493 = vor.u32 1.1754944e-38, %v4492
      %v4494 = vsel %vm4491, %v4493, %v4489
      %v4495 = vmul.f32 1.0, %v4494
      %v4496 = vrcp.pop %v4480
      %v4497 = vmul.f32 %v4480, %v4496
      %v4498 = vsub.f32 1.0, %v4497
      %v4499 = vmul.f32 %v4496, %v4498
      %v4500 = vadd.f32 %v4496, %v4499
      %vm4501 = vweird.f32 %v4480
      %vm4502 = vweird.f32 %v4496
      %vm4503 = vmor %vm4501, %vm4502
      %v4504 = vsel %vm4503, %v4496, %v4500
      %v4505 = vand.u32 2147483647, %v4480
      %vm4506 = vcmp.eq.f32.partialorder %v4505, 8.507059e+37
      %v4507 = vand.u32 %v4480, 2147483648
      %v4508 = vor.u32 1.1754944e-38, %v4507
      %v4509 = vsel %vm4506, %v4508, %v4504
      %v4510 = vmul.f32 1.0, %v4509
      %v4511 = vmul.f32 %v4407, %v4495
      %v4512 = vmul.f32 %v4409, %v4510
      %v4513 = vld [vmem:[%s4 + $0xb4] sm:$0xf]
      %v4514 = vld [vmem:[%s4 + $0x188] sm:$0xf]
      %v4515 = vld [vmem:[%s4 + $0x25c] sm:$0xf]
      %v4516 = vld [vmem:[%s4 + $0x330] sm:$0xf]
      %v4517 = vld [vmem:[%s4 + $0x404] sm:$0xf]
      %v4518 = vld [vmem:[%s4 + $0x4d8] sm:$0xf]
      %v4519 = vld [vmem:[%s4 + $0x5ac] sm:$0xf]
      %v4520 = vld [vmem:[%s4 + $0x680] sm:$0xf]
      %v4521 = vpack.c.bf16 %v4512, %v4511
      %v4530 = vunpack.c.l.b16 %v4513
      %v4531 = vunpack.c.l.b16 %v4514
      %v4532 = vunpack.c.l.b16 %v4515
      %v4533 = vunpack.c.l.b16 %v4516
      %v4534 = vunpack.c.l.b16 %v4517
      %v4535 = vunpack.c.l.b16 %v4518
      %v4536 = vunpack.c.l.b16 %v4519
      %v4537 = vunpack.c.l.b16 %v4520
      %v4538 = vpack.c.b16 %v4531, %v4530
      %v4539 = vpack.c.b16 %v4533, %v4532
      %v4540 = vpack.c.b16 %v4535, %v4534
      %v4541 = vpack.c.b16 %v4537, %v4536
      %v4543 = vsel %vm3861, %v4538, 0
      %v4546 = vsel %vm3861, %v4539, 0
      %v4549 = vsel %vm3861, %v4540, 0
      %v4552 = vsel %vm3861, %v4541, 0
      %4554 = vmatpush.bf16.msra.mxu0 0
      %4555 = vmatpush.bf16.msra.mxu0 0
      %4556 = vmatpush.bf16.msra.mxu0 0
      %4557 = vmatpush.bf16.msra.mxu0 0
      %4558 = vmatpush.bf16.msra.mxu0 0
      %4559 = vmatpush.bf16.msra.mxu0 0
      %4560 = vmatpush.bf16.msra.mxu0 0
      %4561 = vmatpush.bf16.msra.mxu0 %v4521
      %4562 = vmatmul.bf16.gmra.mxu0 %v4543
      %v4563 = vpop.f32.mrf.mxu0
      %v4564 = vadd.f32 0.0, %v4563
      %v4565 = vpop.f32.mrf.mxu0
      %v4566 = vadd.f32 0.0, %v4565
      %4567 = vmatmul.bf16.gmra.mxu0 %v4546
      %v4568 = vpop.f32.mrf.mxu0
      %v4569 = vadd.f32 0.0, %v4568
      %v4570 = vpop.f32.mrf.mxu0
      %v4571 = vadd.f32 0.0, %v4570
      %4572 = vmatmul.bf16.gmra.mxu0 %v4549
      %v4573 = vpop.f32.mrf.mxu0
      %v4574 = vadd.f32 0.0, %v4573
      %v4575 = vpop.f32.mrf.mxu0
      %v4576 = vadd.f32 0.0, %v4575
      %4577 = vmatmul.bf16.gmra.mxu0 %v4552
      %v4578 = vpop.f32.mrf.mxu0
      %v4579 = vadd.f32 0.0, %v4578
      %v4580 = vpop.f32.mrf.mxu0
      %v4581 = vadd.f32 0.0, %v4580
      %4582 = vdwg.mxu0
      %4585 = vrot.lane.b32.xlu0 %v4569, 16
      %v4586 = vpop.permute.xlu0 %4585
      %4587 = vrot.lane.b32.xlu0 %v4571, 16
      %v4588 = vpop.permute.xlu0 %4587
      %4593 = vrot.lane.b32.xlu0 %v4574, 32
      %v4594 = vpop.permute.xlu0 %4593
      %4595 = vrot.lane.b32.xlu0 %v4576, 32
      %v4596 = vpop.permute.xlu0 %4595
      %4601 = vrot.lane.b32.xlu0 %v4579, 48
      %v4602 = vpop.permute.xlu0 %4601
      %4603 = vrot.lane.b32.xlu0 %v4581, 48
      %v4604 = vpop.permute.xlu0 %4603
      %v4607 = vsel %vm3861, %v4564, %v4586
      %v4608 = vsel %vm3861, %v4566, %v4588
      %v4609 = vsel %vm3810, %v4607, %v4594
      %v4610 = vsel %vm3810, %v4608, %v4596
      %v4611 = vsel %vm464, %v4609, %v4602
      %v4612 = vsel %vm464, %v4610, %v4604
      %v4613 = vpack.c.bf16 %v4612, %v4611
      %v4614 = vld [vmem:[%s7] sm:$0xf]
      %v4615 = vld [vmem:[%s7 + $0x4] sm:$0xf]
      %v4616 = vld [vmem:[%s7 + $0x8] sm:$0xf]
      %v4617 = vld [vmem:[%s7 + $0xc] sm:$0xf]
      %v4618 = vld [vmem:[%s7 + $0x10] sm:$0xf]
      %v4619 = vld [vmem:[%s7 + $0x14] sm:$0xf]
      %v4620 = vld [vmem:[%s7 + $0x18] sm:$0xf]
      %v4621 = vld [vmem:[%s7 + $0x1c] sm:$0xf]
      %4622 = vset.pattern.permute.xlu0 13
      %4623 = vperm.xlu0 %4622, %v522
      %v4624 = vpop.permute.xlu0 %4623
      %4626 = vset.pattern.permute.xlu0 13
      %4627 = vperm.xlu0 %4626, %v523
      %v4628 = vpop.permute.xlu0 %4627
      %v4638 = vunpack.c.l.b16 %v4614
      %v4639 = vunpack.c.l.b16 %v4615
      %v4640 = vunpack.c.l.b16 %v4616
      %v4641 = vunpack.c.l.b16 %v4617
      %v4642 = vunpack.c.l.b16 %v4618
      %v4643 = vunpack.c.l.b16 %v4619
      %v4644 = vunpack.c.l.b16 %v4620
      %v4645 = vunpack.c.l.b16 %v4621
      %v4646 = vpack.c.b16 %v4639, %v4638
      %v4647 = vpack.c.b16 %v4641, %v4640
      %v4648 = vpack.c.b16 %v4643, %v4642
      %v4649 = vpack.c.b16 %v4645, %v4644
      %v4655 = vsel %vm615, %v4613, 0
      %4657 = vmatpush.bf16.msra.mxu0 0
      %4658 = vmatpush.bf16.msra.mxu0 0
      %4659 = vmatpush.bf16.msra.mxu0 0
      %4660 = vmatpush.bf16.msra.mxu0 0
      %4661 = vmatpush.bf16.msra.mxu0 %v4649
      %4662 = vmatpush.bf16.msra.mxu0 %v4648
      %4663 = vmatpush.bf16.msra.mxu0 %v4647
      %4664 = vmatpush.bf16.msra.mxu0 %v4646
      %4665 = vmatmul.bf16.gmra.mxu0 %v4655
      %v4666 = vpop.f32.mrf.mxu0
      %v4667 = vadd.f32 %v4624, %v4666
      %v4668 = vpop.f32.mrf.mxu0
      %v4669 = vadd.f32 %v4628, %v4668
      %4670 = vdwg.mxu0
      %v4671 = vadd.f32 %v4667, %v647
      %v4672 = vadd.f32 %v4669, %v648
      %v4673 = vpack.c.bf16 %v4671, %v4671
      %v4674 = vpack.c.bf16 %v4672, %v4672
      %v4675 = vshra.s32 %v3476, 3
      %v4676 = vand.u32 %v3476, 7
      %v4679 = vunpack.c.l.b16 %v4673
      %v4680 = vunpack.c.l.b16 %v4674
      %v4681 = vpack.c.b16 %v4680, %v4679
      %4682 = vrot.lane.b32.xlu0 %v4681, 9
      %v4683 = vpop.permute.xlu0 %4682
      %vm4684 = vcmask 72704
      %v4686 = vsel %vm4684, 0, %v4683
      %vm4688 = vcmp.ge.s32.totalorder %v4675, 1
      %vm4689 = vcmp.ge.s32.totalorder %v4676, 1
      %vm4690 = vmand %vm4688, %vm4689
      %v4691 = vsel %vm4690, 1, 0
      %vm4692 = vcmp.eq.s32.totalorder %v4691, 1
      %vm4693 = vmpackc.low %vm4692, %vm4692
      %v4694 = vsel %vm4693, 65537, 0
      %v4695 = vperm.slane %v4694, 0
      %v4696 = vunpack.c.l.b16 %v4695
      %v4697 = vunpack.c.h.b16 %v4695
      %v4698 = vunpack.c.l.b16 0
      %v4699 = vunpack.c.h.b16 0
      %vm4700 = vcmp.ne.s32.totalorder %v4696, %v4698
      %vm4701 = vcmp.ne.s32.totalorder %v4697, %v4699
      %vm4702 = vmpackc.low %vm4701, %vm4700
      %v4703 = vsel %vm4702, %v4686, 0
      %4704 = vrot.lane.b32.xlu0 %v4681, 8
      %v4705 = vpop.permute.xlu0 %4704
      %v4707 = vsel %vm3946, 0, %v4705
      %v4709 = vsel %vm4688, 1, 0
      %vm4710 = vcmp.eq.s32.totalorder %v4709, 1
      %vm4711 = vmpackc.low %vm4710, %vm4710
      %v4712 = vsel %vm4711, 65537, 0
      %v4713 = vperm.slane %v4712, 0
      %v4714 = vunpack.c.l.b16 %v4713
      %v4715 = vunpack.c.h.b16 %v4713
      %v4716 = vunpack.c.l.b16 0
      %v4717 = vunpack.c.h.b16 0
      %vm4718 = vcmp.ne.s32.totalorder %v4714, %v4716
      %vm4719 = vcmp.ne.s32.totalorder %v4715, %v4717
      %vm4720 = vmpackc.low %vm4719, %vm4718
      %v4721 = vsel %vm4720, %v4707, 0
      %4722 = vrot.lane.b32.xlu0 %v4681, 7
      %v4723 = vpop.permute.xlu0 %4722
      %vm4724 = vcmask 56320
      %v4726 = vsel %vm4724, 0, %v4723
      %vm4728 = vcmp.lt.s32.totalorder %v4676, 7
      %vm4729 = vmand %vm4688, %vm4728
      %v4730 = vsel %vm4729, 1, 0
      %vm4731 = vcmp.eq.s32.totalorder %v4730, 1
      %vm4732 = vmpackc.low %vm4731, %vm4731
      %v4733 = vsel %vm4732, 65537, 0
      %v4734 = vperm.slane %v4733, 0
      %v4735 = vunpack.c.l.b16 %v4734
      %v4736 = vunpack.c.h.b16 %v4734
      %v4737 = vunpack.c.l.b16 0
      %v4738 = vunpack.c.h.b16 0
      %vm4739 = vcmp.ne.s32.totalorder %v4735, %v4737
      %vm4740 = vcmp.ne.s32.totalorder %v4736, %v4738
      %vm4741 = vmpackc.low %vm4740, %vm4739
      %v4742 = vsel %vm4741, %v4726, 0
      %4743 = vrot.lane.b32.xlu0 %v4681, 1
      %v4744 = vpop.permute.xlu0 %4743
      %v4746 = vsel %vm3547, 0, %v4744
      %v4748 = vsel %vm4689, 1, 0
      %vm4749 = vcmp.eq.s32.totalorder %v4748, 1
      %vm4750 = vmpackc.low %vm4749, %vm4749
      %v4751 = vsel %vm4750, 65537, 0
      %v4752 = vperm.slane %v4751, 0
      %v4753 = vunpack.c.l.b16 %v4752
      %v4754 = vunpack.c.h.b16 %v4752
      %v4755 = vunpack.c.l.b16 0
      %v4756 = vunpack.c.h.b16 0
      %vm4757 = vcmp.ne.s32.totalorder %v4753, %v4755
      %vm4758 = vcmp.ne.s32.totalorder %v4754, %v4756
      %vm4759 = vmpackc.low %vm4758, %vm4757
      %v4760 = vsel %vm4759, %v4746, 0
      %4761 = vrot.lane.b32.xlu0 %v4681, 127
      %v4762 = vpop.permute.xlu0 %4761
      %vm4763 = vcmask 515072
      %v4765 = vsel %vm4763, %v4762, 0
      %v4767 = vsel %vm4728, 1, 0
      %vm4768 = vcmp.eq.s32.totalorder %v4767, 1
      %vm4769 = vmpackc.low %vm4768, %vm4768
      %v4770 = vsel %vm4769, 65537, 0
      %v4771 = vperm.slane %v4770, 0
      %v4772 = vunpack.c.l.b16 %v4771
      %v4773 = vunpack.c.h.b16 %v4771
      %v4774 = vunpack.c.l.b16 0
      %v4775 = vunpack.c.h.b16 0
      %vm4776 = vcmp.ne.s32.totalorder %v4772, %v4774
      %vm4777 = vcmp.ne.s32.totalorder %v4773, %v4775
      %vm4778 = vmpackc.low %vm4777, %vm4776
      %v4779 = vsel %vm4778, %v4765, 0
      %4780 = vrot.lane.b32.xlu0 %v4681, 121
      %v4781 = vpop.permute.xlu0 %4780
      %vm4782 = vcmask 465920
      %v4784 = vsel %vm4782, %v4781, 0
      %vm4786 = vcmp.lt.s32.totalorder %v4675, 7
      %vm4787 = vmand %vm4786, %vm4689
      %v4788 = vsel %vm4787, 1, 0
      %vm4789 = vcmp.eq.s32.totalorder %v4788, 1
      %vm4790 = vmpackc.low %vm4789, %vm4789
      %v4791 = vsel %vm4790, 65537, 0
      %v4792 = vperm.slane %v4791, 0
      %v4793 = vunpack.c.l.b16 %v4792
      %v4794 = vunpack.c.h.b16 %v4792
      %v4795 = vunpack.c.l.b16 0
      %v4796 = vunpack.c.h.b16 0
      %vm4797 = vcmp.ne.s32.totalorder %v4793, %v4795
      %vm4798 = vcmp.ne.s32.totalorder %v4794, %v4796
      %vm4799 = vmpackc.low %vm4798, %vm4797
      %v4800 = vsel %vm4799, %v4784, 0
      %4801 = vrot.lane.b32.xlu0 %v4681, 120
      %v4802 = vpop.permute.xlu0 %4801
      %vm4803 = vcmask 457728
      %v4805 = vsel %vm4803, %v4802, 0
      %v4807 = vsel %vm4786, 1, 0
      %vm4808 = vcmp.eq.s32.totalorder %v4807, 1
      %vm4809 = vmpackc.low %vm4808, %vm4808
      %v4810 = vsel %vm4809, 65537, 0
      %v4811 = vperm.slane %v4810, 0
      %v4812 = vunpack.c.l.b16 %v4811
      %v4813 = vunpack.c.h.b16 %v4811
      %v4814 = vunpack.c.l.b16 0
      %v4815 = vunpack.c.h.b16 0
      %vm4816 = vcmp.ne.s32.totalorder %v4812, %v4814
      %vm4817 = vcmp.ne.s32.totalorder %v4813, %v4815
      %vm4818 = vmpackc.low %vm4817, %vm4816
      %v4819 = vsel %vm4818, %v4805, 0
      %4820 = vrot.lane.b32.xlu0 %v4681, 119
      %v4821 = vpop.permute.xlu0 %4820
      %vm4822 = vcmask 449536
      %v4824 = vsel %vm4822, %v4821, 0
      %vm4826 = vmand %vm4786, %vm4728
      %v4827 = vsel %vm4826, 1, 0
      %vm4828 = vcmp.eq.s32.totalorder %v4827, 1
      %vm4829 = vmpackc.low %vm4828, %vm4828
      %v4830 = vsel %vm4829, 65537, 0
      %v4831 = vperm.slane %v4830, 0
      %v4832 = vunpack.c.l.b16 %v4831
      %v4833 = vunpack.c.h.b16 %v4831
      %v4834 = vunpack.c.l.b16 0
      %v4835 = vunpack.c.h.b16 0
      %vm4836 = vcmp.ne.s32.totalorder %v4832, %v4834
      %vm4837 = vcmp.ne.s32.totalorder %v4833, %v4835
      %vm4838 = vmpackc.low %vm4837, %vm4836
      %v4839 = vsel %vm4838, %v4824, 0
      %v4841 = vld [vmem:[%s4 + $0xb8] sm:$0xff]
      %v4842 = vld [vmem:[%s4 + $0x18c] sm:$0xff]
      %4843 = vset.pattern.permute.xlu0 14
      %4844 = vperm.xlu0 %4843, %v522
      %v4845 = vpop.permute.xlu0 %4844
      %4847 = vset.pattern.permute.xlu0 14
      %4848 = vperm.xlu0 %4847, %v523
      %v4849 = vpop.permute.xlu0 %4848
      %v4853 = vunpack.c.l.b16 %v4841
      %v4854 = vunpack.c.h.b16 %v4841
      %v4855 = vunpack.c.l.b16 %v4842
      %v4856 = vunpack.c.h.b16 %v4842
      %v4857 = vpack.c.b16 %v4855, %v4853
      %v4858 = vpack.c.b16 %v4856, %v4854
      %v4861 = vsel %vm3861, %v4858, 0
      %4863 = vmatpush.bf16.msra.mxu0 %v4819
      %4864 = vmatpush.bf16.msra.mxu0 %v4800
      %4865 = vmatpush.bf16.msra.mxu0 %v4779
      %4866 = vmatpush.bf16.msra.mxu0 %v4681
      %4867 = vmatpush.bf16.msra.mxu0 %v4760
      %4868 = vmatpush.bf16.msra.mxu0 %v4742
      %4869 = vmatpush.bf16.msra.mxu0 %v4721
      %4870 = vmatpush.bf16.msra.mxu0 %v4703
      %4871 = vmatmul.bf16.gmra.mxu0 %v4857
      %v4872 = vpop.f32.mrf.mxu0
      %v4873 = vadd.f32 %v4845, %v4872
      %v4874 = vpop.f32.mrf.mxu0
      %v4875 = vadd.f32 %v4849, %v4874
      %4876 = vdwg.mxu0
      %4877 = vmatpush.bf16.msra.mxu0 0
      %4878 = vmatpush.bf16.msra.mxu0 0
      %4879 = vmatpush.bf16.msra.mxu0 0
      %4880 = vmatpush.bf16.msra.mxu0 0
      %4881 = vmatpush.bf16.msra.mxu0 0
      %4882 = vmatpush.bf16.msra.mxu0 0
      %4883 = vmatpush.bf16.msra.mxu0 0
      %4884 = vmatpush.bf16.msra.mxu0 %v4839
      %4885 = vmatmul.bf16.gmra.mxu0 %v4861
      %v4886 = vpop.f32.mrf.mxu0
      %v4887 = vadd.f32 %v4873, %v4886
      %v4888 = vpop.f32.mrf.mxu0
      %v4889 = vadd.f32 %v4875, %v4888
      %4890 = vdwg.mxu0
      %v4891 = vpack.c.bf16 %v4889, %v4887
      %v4892 = vld [vmem:[%s4 + $0xc0] sm:$0x3]
      %4893 = vset.pattern.permute.xlu0 15
      %4894 = vperm.xlu0 %4893, %v4413
      %v4895 = vpop.permute.xlu0 %4894
      %v4898 = vsel %vm3861, %v4892, 0
      %4900 = vmatpush.bf16.msra.mxu0 0
      %4901 = vmatpush.bf16.msra.mxu0 0
      %4902 = vmatpush.bf16.msra.mxu0 0
      %4903 = vmatpush.bf16.msra.mxu0 0
      %4904 = vmatpush.bf16.msra.mxu0 0
      %4905 = vmatpush.bf16.msra.mxu0 0
      %4906 = vmatpush.bf16.msra.mxu0 0
      %4907 = vmatpush.bf16.msra.mxu0 %v4891
      %4908 = vmatmul.bf16.gmra.mxu0 %v4898
      %v4909 = vpop.f32.mrf.mxu0
      %v4910 = vadd.f32 %v4895, %v4909
      %v4911 = vpop.f32.mrf.mxu0
      %4912 = vdwg.mxu0
      %v4913 = vmax.f32 %v4910, 0.0
      %v4914 = vld [vmem:[%s4 + $0xc4] sm:$0xf]
      %v4915 = vld [vmem:[%s4 + $0x198] sm:$0xf]
      %v4916 = vpack.c.bf16 %v4913, %v4913
      %4917 = vset.pattern.permute.xlu0 16
      %4918 = vperm.xlu0 %4917, %v522
      %v4919 = vpop.permute.xlu0 %4918
      %4921 = vset.pattern.permute.xlu0 16
      %4922 = vperm.xlu0 %4921, %v523
      %v4923 = vpop.permute.xlu0 %4922
      %v4927 = vunpack.c.l.b16 %v4914
      %v4928 = vunpack.c.l.b16 %v4915
      %v4929 = vpack.c.b16 %v4928, %v4927
      %v4931 = vsel %vm4151, %v4929, 0
      %v4934 = vsel %vm4455, %v4916, 0
      %4936 = vmatpush.bf16.msra.mxu0 0
      %4937 = vmatpush.bf16.msra.mxu0 0
      %4938 = vmatpush.bf16.msra.mxu0 0
      %4939 = vmatpush.bf16.msra.mxu0 0
      %4940 = vmatpush.bf16.msra.mxu0 0
      %4941 = vmatpush.bf16.msra.mxu0 0
      %4942 = vmatpush.bf16.msra.mxu0 0
      %4943 = vmatpush.bf16.msra.mxu0 %v4934
      %4944 = vmatmul.bf16.gmra.mxu0 %v4931
      %v4945 = vpop.f32.mrf.mxu0
      %v4946 = vadd.f32 %v4919, %v4945
      %v4947 = vpop.f32.mrf.mxu0
      %v4948 = vadd.f32 %v4923, %v4947
      %4949 = vdwg.mxu0
      %v4950 = vxor.u32 %v4946, 2147483648
      %v4951 = vxor.u32 %v4948, 2147483648
      %v4952 = vmul.f32 %v4950, 1.442695
      %v4953 = vpow.pop %v4952
      %v4954 = vmul.f32 %v4951, 1.442695
      %v4955 = vpow.pop %v4954
      %v4956 = vadd.f32 %v4953, 1.0
      %v4957 = vadd.f32 %v4955, 1.0
      %v4958 = vrcp.pop %v4956
      %v4959 = vmul.f32 %v4956, %v4958
      %v4960 = vsub.f32 1.0, %v4959
      %v4961 = vmul.f32 %v4958, %v4960
      %v4962 = vadd.f32 %v4958, %v4961
      %vm4963 = vweird.f32 %v4956
      %vm4964 = vweird.f32 %v4958
      %vm4965 = vmor %vm4963, %vm4964
      %v4966 = vsel %vm4965, %v4958, %v4962
      %v4967 = vand.u32 2147483647, %v4956
      %vm4968 = vcmp.eq.f32.partialorder %v4967, 8.507059e+37
      %v4969 = vand.u32 %v4956, 2147483648
      %v4970 = vor.u32 1.1754944e-38, %v4969
      %v4971 = vsel %vm4968, %v4970, %v4966
      %v4972 = vmul.f32 1.0, %v4971
      %v4973 = vrcp.pop %v4957
      %v4974 = vmul.f32 %v4957, %v4973
      %v4975 = vsub.f32 1.0, %v4974
      %v4976 = vmul.f32 %v4973, %v4975
      %v4977 = vadd.f32 %v4973, %v4976
      %vm4978 = vweird.f32 %v4957
      %vm4979 = vweird.f32 %v4973
      %vm4980 = vmor %vm4978, %vm4979
      %v4981 = vsel %vm4980, %v4973, %v4977
      %v4982 = vand.u32 2147483647, %v4957
      %vm4983 = vcmp.eq.f32.partialorder %v4982, 8.507059e+37
      %v4984 = vand.u32 %v4957, 2147483648
      %v4985 = vor.u32 1.1754944e-38, %v4984
      %v4986 = vsel %vm4983, %v4985, %v4981
      %v4987 = vmul.f32 1.0, %v4986
      %v4988 = vmul.f32 %v4887, %v4972
      %v4989 = vmul.f32 %v4889, %v4987
      %v4990 = vld [vmem:[%s4 + $0xc8] sm:$0xf]
      %v4991 = vld [vmem:[%s4 + $0x19c] sm:$0xf]
      %v4992 = vld [vmem:[%s4 + $0x270] sm:$0xf]
      %v4993 = vld [vmem:[%s4 + $0x344] sm:$0xf]
      %v4994 = vpack.c.bf16 %v4989, %v4988
      %v4999 = vunpack.c.l.b16 %v4990
      %v5000 = vunpack.c.l.b16 %v4991
      %v5001 = vunpack.c.l.b16 %v4992
      %v5002 = vunpack.c.l.b16 %v4993
      %v5003 = vpack.c.b16 %v5000, %v4999
      %v5004 = vpack.c.b16 %v5002, %v5001
      %v5006 = vsel %vm3861, %v5003, 0
      %v5009 = vsel %vm3861, %v5004, 0
      %5011 = vmatpush.bf16.msra.mxu0 0
      %5012 = vmatpush.bf16.msra.mxu0 0
      %5013 = vmatpush.bf16.msra.mxu0 0
      %5014 = vmatpush.bf16.msra.mxu0 0
      %5015 = vmatpush.bf16.msra.mxu0 0
      %5016 = vmatpush.bf16.msra.mxu0 0
      %5017 = vmatpush.bf16.msra.mxu0 0
      %5018 = vmatpush.bf16.msra.mxu0 %v4994
      %5019 = vmatmul.bf16.gmra.mxu0 %v5006
      %v5020 = vpop.f32.mrf.mxu0
      %v5021 = vadd.f32 0.0, %v5020
      %v5022 = vpop.f32.mrf.mxu0
      %v5023 = vadd.f32 0.0, %v5022
      %5024 = vmatmul.bf16.gmra.mxu0 %v5009
      %v5025 = vpop.f32.mrf.mxu0
      %v5026 = vadd.f32 0.0, %v5025
      %v5027 = vpop.f32.mrf.mxu0
      %v5028 = vadd.f32 0.0, %v5027
      %5029 = vdwg.mxu0
      %5031 = vrot.lane.b32.xlu0 %v5023, 64
      %v5032 = vpop.permute.xlu0 %5031
      %5035 = vrot.lane.b32.xlu0 %v5028, 64
      %v5036 = vpop.permute.xlu0 %5035
      %v5038 = vsel %vm615, %v5021, %v5032
      %v5039 = vsel %vm615, %v5026, %v5036
      %v5040 = vpack.c.bf16 %v5038, %v5038
      %v5041 = vpack.c.bf16 %v5039, %v5039
      %v5042 = vld [vmem:[%s8] sm:$0xff]
      %v5043 = vld [vmem:[%s8 + $0x8] sm:$0xff]
      %v5044 = vld [vmem:[%s8 + $0x10] sm:$0xff]
      %v5045 = vld [vmem:[%s8 + $0x18] sm:$0xff]
      %v5046 = vld [vmem:[%s8 + $0x20] sm:$0xff]
      %v5047 = vld [vmem:[%s8 + $0x28] sm:$0xff]
      %v5048 = vld [vmem:[%s8 + $0x30] sm:$0xff]
      %v5049 = vld [vmem:[%s8 + $0x38] sm:$0xff]
      %v5050 = vld [vmem:[%s8 + $0x40] sm:$0xff]
      %v5051 = vld [vmem:[%s8 + $0x48] sm:$0xff]
      %v5052 = vld [vmem:[%s8 + $0x50] sm:$0xff]
      %v5053 = vld [vmem:[%s8 + $0x58] sm:$0xff]
      %v5054 = vld [vmem:[%s8 + $0x60] sm:$0xff]
      %v5055 = vld [vmem:[%s8 + $0x68] sm:$0xff]
      %v5056 = vld [vmem:[%s8 + $0x70] sm:$0xff]
      %v5057 = vld [vmem:[%s8 + $0x78] sm:$0xff]
      %v5058 = vld [vmem:[%s8 + $0x80] sm:$0xff]
      %v5059 = vld [vmem:[%s8 + $0x88] sm:$0xff]
      %v5060 = vld [vmem:[%s8 + $0x90] sm:$0xff]
      %v5061 = vld [vmem:[%s8 + $0x98] sm:$0xff]
      %v5062 = vld [vmem:[%s8 + $0xa0] sm:$0xff]
      %v5063 = vld [vmem:[%s8 + $0xa8] sm:$0xff]
      %v5064 = vld [vmem:[%s8 + $0xb0] sm:$0xff]
      %v5065 = vld [vmem:[%s8 + $0xb8] sm:$0xff]
      %v5066 = vld [vmem:[%s8 + $0xc0] sm:$0xff]
      %v5067 = vld [vmem:[%s8 + $0xc8] sm:$0xff]
      %v5068 = vld [vmem:[%s8 + $0xd0] sm:$0xff]
      %v5069 = vld [vmem:[%s8 + $0xd8] sm:$0xff]
      %v5070 = vld [vmem:[%s8 + $0xe0] sm:$0xff]
      %v5071 = vld [vmem:[%s8 + $0xe8] sm:$0xff]
      %v5072 = vld [vmem:[%s8 + $0xf0] sm:$0xff]
      %v5073 = vld [vmem:[%s8 + $0xf8] sm:$0xff]
      %5074 = vset.pattern.permute.xlu0 17
      %5075 = vperm.xlu0 %5074, %v428
      %v5076 = vpop.permute.xlu0 %5075
      %v5110 = vunpack.c.l.b16 %v5042
      %v5111 = vunpack.c.h.b16 %v5042
      %v5112 = vunpack.c.l.b16 %v5043
      %v5113 = vunpack.c.h.b16 %v5043
      %v5114 = vunpack.c.l.b16 %v5044
      %v5115 = vunpack.c.h.b16 %v5044
      %v5116 = vunpack.c.l.b16 %v5045
      %v5117 = vunpack.c.h.b16 %v5045
      %v5118 = vunpack.c.l.b16 %v5046
      %v5119 = vunpack.c.h.b16 %v5046
      %v5120 = vunpack.c.l.b16 %v5047
      %v5121 = vunpack.c.h.b16 %v5047
      %v5122 = vunpack.c.l.b16 %v5048
      %v5123 = vunpack.c.h.b16 %v5048
      %v5124 = vunpack.c.l.b16 %v5049
      %v5125 = vunpack.c.h.b16 %v5049
      %v5126 = vunpack.c.l.b16 %v5050
      %v5127 = vunpack.c.h.b16 %v5050
      %v5128 = vunpack.c.l.b16 %v5051
      %v5129 = vunpack.c.h.b16 %v5051
      %v5130 = vunpack.c.l.b16 %v5052
      %v5131 = vunpack.c.h.b16 %v5052
      %v5132 = vunpack.c.l.b16 %v5053
      %v5133 = vunpack.c.h.b16 %v5053
      %v5134 = vunpack.c.l.b16 %v5054
      %v5135 = vunpack.c.h.b16 %v5054
      %v5136 = vunpack.c.l.b16 %v5055
      %v5137 = vunpack.c.h.b16 %v5055
      %v5138 = vunpack.c.l.b16 %v5056
      %v5139 = vunpack.c.h.b16 %v5056
      %v5140 = vunpack.c.l.b16 %v5057
      %v5141 = vunpack.c.h.b16 %v5057
      %v5142 = vunpack.c.l.b16 %v5058
      %v5143 = vunpack.c.h.b16 %v5058
      %v5144 = vunpack.c.l.b16 %v5059
      %v5145 = vunpack.c.h.b16 %v5059
      %v5146 = vunpack.c.l.b16 %v5060
      %v5147 = vunpack.c.h.b16 %v5060
      %v5148 = vunpack.c.l.b16 %v5061
      %v5149 = vunpack.c.h.b16 %v5061
      %v5150 = vunpack.c.l.b16 %v5062
      %v5151 = vunpack.c.h.b16 %v5062
      %v5152 = vunpack.c.l.b16 %v5063
      %v5153 = vunpack.c.h.b16 %v5063
      %v5154 = vunpack.c.l.b16 %v5064
      %v5155 = vunpack.c.h.b16 %v5064
      %v5156 = vunpack.c.l.b16 %v5065
      %v5157 = vunpack.c.h.b16 %v5065
      %v5158 = vunpack.c.l.b16 %v5066
      %v5159 = vunpack.c.h.b16 %v5066
      %v5160 = vunpack.c.l.b16 %v5067
      %v5161 = vunpack.c.h.b16 %v5067
      %v5162 = vunpack.c.l.b16 %v5068
      %v5163 = vunpack.c.h.b16 %v5068
      %v5164 = vunpack.c.l.b16 %v5069
      %v5165 = vunpack.c.h.b16 %v5069
      %v5166 = vunpack.c.l.b16 %v5070
      %v5167 = vunpack.c.h.b16 %v5070
      %v5168 = vunpack.c.l.b16 %v5071
      %v5169 = vunpack.c.h.b16 %v5071
      %v5170 = vunpack.c.l.b16 %v5072
      %v5171 = vunpack.c.h.b16 %v5072
      %v5172 = vunpack.c.l.b16 %v5073
      %v5173 = vunpack.c.h.b16 %v5073
      %v5174 = vpack.c.b16 %v5112, %v5110
      %v5175 = vpack.c.b16 %v5113, %v5111
      %v5176 = vpack.c.b16 %v5116, %v5114
      %v5177 = vpack.c.b16 %v5117, %v5115
      %v5178 = vpack.c.b16 %v5120, %v5118
      %v5179 = vpack.c.b16 %v5121, %v5119
      %v5180 = vpack.c.b16 %v5124, %v5122
      %v5181 = vpack.c.b16 %v5125, %v5123
      %v5182 = vpack.c.b16 %v5128, %v5126
      %v5183 = vpack.c.b16 %v5129, %v5127
      %v5184 = vpack.c.b16 %v5132, %v5130
      %v5185 = vpack.c.b16 %v5133, %v5131
      %v5186 = vpack.c.b16 %v5136, %v5134
      %v5187 = vpack.c.b16 %v5137, %v5135
      %v5188 = vpack.c.b16 %v5140, %v5138
      %v5189 = vpack.c.b16 %v5141, %v5139
      %v5190 = vpack.c.b16 %v5144, %v5142
      %v5191 = vpack.c.b16 %v5145, %v5143
      %v5192 = vpack.c.b16 %v5148, %v5146
      %v5193 = vpack.c.b16 %v5149, %v5147
      %v5194 = vpack.c.b16 %v5152, %v5150
      %v5195 = vpack.c.b16 %v5153, %v5151
      %v5196 = vpack.c.b16 %v5156, %v5154
      %v5197 = vpack.c.b16 %v5157, %v5155
      %v5198 = vpack.c.b16 %v5160, %v5158
      %v5199 = vpack.c.b16 %v5161, %v5159
      %v5200 = vpack.c.b16 %v5164, %v5162
      %v5201 = vpack.c.b16 %v5165, %v5163
      %v5202 = vpack.c.b16 %v5168, %v5166
      %v5203 = vpack.c.b16 %v5169, %v5167
      %v5204 = vpack.c.b16 %v5172, %v5170
      %v5205 = vpack.c.b16 %v5173, %v5171
      %5238 = vmatpush.bf16.msra.mxu0 %v5188
      %5239 = vmatpush.bf16.msra.mxu0 %v5186
      %5240 = vmatpush.bf16.msra.mxu0 %v5184
      %5241 = vmatpush.bf16.msra.mxu0 %v5182
      %5242 = vmatpush.bf16.msra.mxu0 %v5180
      %5243 = vmatpush.bf16.msra.mxu0 %v5178
      %5244 = vmatpush.bf16.msra.mxu0 %v5176
      %5245 = vmatpush.bf16.msra.mxu0 %v5174
      %5246 = vmatmul.bf16.gmra.mxu0 %v5040
      %v5247 = vpop.f32.mrf.mxu0
      %v5248 = vadd.f32 %v5076, %v5247
      %v5249 = vpop.f32.mrf.mxu0
      %5250 = vdwg.mxu0
      %5251 = vmatpush.bf16.msra.mxu0 %v5204
      %5252 = vmatpush.bf16.msra.mxu0 %v5202
      %5253 = vmatpush.bf16.msra.mxu0 %v5200
      %5254 = vmatpush.bf16.msra.mxu0 %v5198
      %5255 = vmatpush.bf16.msra.mxu0 %v5196
      %5256 = vmatpush.bf16.msra.mxu0 %v5194
      %5257 = vmatpush.bf16.msra.mxu0 %v5192
      %5258 = vmatpush.bf16.msra.mxu0 %v5190
      %5259 = vmatmul.bf16.gmra.mxu0 %v5041
      %v5260 = vpop.f32.mrf.mxu0
      %v5261 = vadd.f32 %v5248, %v5260
      %v5262 = vpop.f32.mrf.mxu0
      %5263 = vdwg.mxu0
      %5264 = vmatpush.bf16.msra.mxu0 %v5189
      %5265 = vmatpush.bf16.msra.mxu0 %v5187
      %5266 = vmatpush.bf16.msra.mxu0 %v5185
      %5267 = vmatpush.bf16.msra.mxu0 %v5183
      %5268 = vmatpush.bf16.msra.mxu0 %v5181
      %5269 = vmatpush.bf16.msra.mxu0 %v5179
      %5270 = vmatpush.bf16.msra.mxu0 %v5177
      %5271 = vmatpush.bf16.msra.mxu0 %v5175
      %5272 = vmatmul.bf16.gmra.mxu0 %v5040
      %v5273 = vpop.f32.mrf.mxu0
      %v5274 = vadd.f32 %v5076, %v5273
      %v5275 = vpop.f32.mrf.mxu0
      %5276 = vdwg.mxu0
      %5277 = vmatpush.bf16.msra.mxu0 %v5205
      %5278 = vmatpush.bf16.msra.mxu0 %v5203
      %5279 = vmatpush.bf16.msra.mxu0 %v5201
      %5280 = vmatpush.bf16.msra.mxu0 %v5199
      %5281 = vmatpush.bf16.msra.mxu0 %v5197
      %5282 = vmatpush.bf16.msra.mxu0 %v5195
      %5283 = vmatpush.bf16.msra.mxu0 %v5193
      %5284 = vmatpush.bf16.msra.mxu0 %v5191
      %5285 = vmatmul.bf16.gmra.mxu0 %v5041
      %v5286 = vpop.f32.mrf.mxu0
      %v5287 = vadd.f32 %v5274, %v5286
      %v5288 = vpop.f32.mrf.mxu0
      %5289 = vdwg.mxu0
      %v5290 = vadd.f32 %v5261, %v494
      %v5291 = vadd.f32 %v5287, %v495
      %v5292 = vpack.c.bf16 %v5291, %v5290
      %v5293 = vadd.s32 %v3476, 128
      %v5294 = vshra.s32 %v3476, 4
      %v5295 = vshra.s32 %v5293, 4
      %v5296 = vand.u32 %v3476, 15
      %v5297 = vand.u32 %v5293, 15
      %v5299 = vunpack.c.l.b16 %v5292
      %v5300 = vunpack.c.h.b16 %v5292
      %v5301 = vpack.c.b16 %v5299, %v5299
      %v5302 = vpack.c.b16 %v5300, %v5300
      %5303 = vrot.lane.b32.xlu0 %v5301, 17
      %v5304 = vpop.permute.xlu0 %5303
      %5305 = vrot.lane.b32.xlu0 %v5302, 17
      %v5306 = vpop.permute.xlu0 %5305
      %vm5307 = vcmask 138240
      %v5308 = vsel %vm5307, %v5304, %v5306
      %vm5310 = vcmask 138240
      %v5312 = vsel %vm5310, 0, %v5304
      %vm5314 = vcmp.ge.s32.totalorder %v5294, 1
      %vm5315 = vcmp.ge.s32.totalorder %v5295, 1
      %vm5316 = vcmp.ge.s32.totalorder %v5296, 1
      %vm5317 = vcmp.ge.s32.totalorder %v5297, 1
      %vm5318 = vmand %vm5314, %vm5316
      %vm5319 = vmand %vm5315, %vm5317
      %v5320 = vsel %vm5318, 1, 0
      %v5321 = vsel %vm5319, 1, 0
      %vm5322 = vcmp.eq.s32.totalorder %v5320, 1
      %vm5323 = vcmp.eq.s32.totalorder %v5321, 1
      %vm5324 = vmpackc.low %vm5323, %vm5322
      %v5325 = vsel %vm5324, 65537, 0
      %v5326 = vperm.slane %v5325, 0
      %v5327 = vperm.slane %v5325, 4
      %v5328 = vunpack.c.l.b16 %v5326
      %v5329 = vunpack.c.h.b16 %v5326
      %v5330 = vunpack.c.l.b16 0
      %v5331 = vunpack.c.h.b16 0
      %vm5332 = vcmp.ne.s32.totalorder %v5328, %v5330
      %vm5333 = vcmp.ne.s32.totalorder %v5329, %v5331
      %vm5334 = vmpackc.low %vm5333, %vm5332
      %v5335 = vunpack.c.l.b16 %v5327
      %v5336 = vunpack.c.h.b16 %v5327
      %v5337 = vunpack.c.l.b16 0
      %v5338 = vunpack.c.h.b16 0
      %vm5339 = vcmp.ne.s32.totalorder %v5335, %v5337
      %vm5340 = vcmp.ne.s32.totalorder %v5336, %v5338
      %vm5341 = vmpackc.low %vm5340, %vm5339
      %v5342 = vsel %vm5334, %v5312, 0
      %v5343 = vsel %vm5341, %v5308, 0
      %5344 = vrot.lane.b32.xlu0 %v5301, 16
      %v5345 = vpop.permute.xlu0 %5344
      %5346 = vrot.lane.b32.xlu0 %v5302, 16
      %v5347 = vpop.permute.xlu0 %5346
      %vm5348 = vcmask 130048
      %v5349 = vsel %vm5348, %v5345, %v5347
      %v5352 = vsel %vm3861, 0, %v5345
      %v5354 = vsel %vm5314, 1, 0
      %v5355 = vsel %vm5315, 1, 0
      %vm5356 = vcmp.eq.s32.totalorder %v5354, 1
      %vm5357 = vcmp.eq.s32.totalorder %v5355, 1
      %vm5358 = vmpackc.low %vm5357, %vm5356
      %v5359 = vsel %vm5358, 65537, 0
      %v5360 = vperm.slane %v5359, 0
      %v5361 = vperm.slane %v5359, 4
      %v5362 = vunpack.c.l.b16 %v5360
      %v5363 = vunpack.c.h.b16 %v5360
      %v5364 = vunpack.c.l.b16 0
      %v5365 = vunpack.c.h.b16 0
      %vm5366 = vcmp.ne.s32.totalorder %v5362, %v5364
      %vm5367 = vcmp.ne.s32.totalorder %v5363, %v5365
      %vm5368 = vmpackc.low %vm5367, %vm5366
      %v5369 = vunpack.c.l.b16 %v5361
      %v5370 = vunpack.c.h.b16 %v5361
      %v5371 = vunpack.c.l.b16 0
      %v5372 = vunpack.c.h.b16 0
      %vm5373 = vcmp.ne.s32.totalorder %v5369, %v5371
      %vm5374 = vcmp.ne.s32.totalorder %v5370, %v5372
      %vm5375 = vmpackc.low %vm5374, %vm5373
      %v5376 = vsel %vm5368, %v5352, 0
      %v5377 = vsel %vm5375, %v5349, 0
      %5378 = vrot.lane.b32.xlu0 %v5301, 15
      %v5379 = vpop.permute.xlu0 %5378
      %5380 = vrot.lane.b32.xlu0 %v5302, 15
      %v5381 = vpop.permute.xlu0 %5380
      %vm5382 = vcmask 121856
      %v5383 = vsel %vm5382, %v5379, %v5381
      %v5386 = vsel %vm4284, 0, %v5379
      %vm5388 = vcmp.lt.s32.totalorder %v5296, 15
      %vm5389 = vcmp.lt.s32.totalorder %v5297, 15
      %vm5390 = vmand %vm5314, %vm5388
      %vm5391 = vmand %vm5315, %vm5389
      %v5392 = vsel %vm5390, 1, 0
      %v5393 = vsel %vm5391, 1, 0
      %vm5394 = vcmp.eq.s32.totalorder %v5392, 1
      %vm5395 = vcmp.eq.s32.totalorder %v5393, 1
      %vm5396 = vmpackc.low %vm5395, %vm5394
      %v5397 = vsel %vm5396, 65537, 0
      %v5398 = vperm.slane %v5397, 0
      %v5399 = vperm.slane %v5397, 4
      %v5400 = vunpack.c.l.b16 %v5398
      %v5401 = vunpack.c.h.b16 %v5398
      %v5402 = vunpack.c.l.b16 0
      %v5403 = vunpack.c.h.b16 0
      %vm5404 = vcmp.ne.s32.totalorder %v5400, %v5402
      %vm5405 = vcmp.ne.s32.totalorder %v5401, %v5403
      %vm5406 = vmpackc.low %vm5405, %vm5404
      %v5407 = vunpack.c.l.b16 %v5399
      %v5408 = vunpack.c.h.b16 %v5399
      %v5409 = vunpack.c.l.b16 0
      %v5410 = vunpack.c.h.b16 0
      %vm5411 = vcmp.ne.s32.totalorder %v5407, %v5409
      %vm5412 = vcmp.ne.s32.totalorder %v5408, %v5410
      %vm5413 = vmpackc.low %vm5412, %vm5411
      %v5414 = vsel %vm5406, %v5386, 0
      %v5415 = vsel %vm5413, %v5383, 0
      %5416 = vrot.lane.b32.xlu0 %v5301, 1
      %v5417 = vpop.permute.xlu0 %5416
      %5418 = vrot.lane.b32.xlu0 %v5302, 1
      %v5419 = vpop.permute.xlu0 %5418
      %vm5420 = vcmask 7168
      %v5421 = vsel %vm5420, %v5417, %v5419
      %v5424 = vsel %vm3547, 0, %v5417
      %v5426 = vsel %vm5316, 1, 0
      %v5427 = vsel %vm5317, 1, 0
      %vm5428 = vcmp.eq.s32.totalorder %v5426, 1
      %vm5429 = vcmp.eq.s32.totalorder %v5427, 1
      %vm5430 = vmpackc.low %vm5429, %vm5428
      %v5431 = vsel %vm5430, 65537, 0
      %v5432 = vperm.slane %v5431, 0
      %v5433 = vperm.slane %v5431, 4
      %v5434 = vunpack.c.l.b16 %v5432
      %v5435 = vunpack.c.h.b16 %v5432
      %v5436 = vunpack.c.l.b16 0
      %v5437 = vunpack.c.h.b16 0
      %vm5438 = vcmp.ne.s32.totalorder %v5434, %v5436
      %vm5439 = vcmp.ne.s32.totalorder %v5435, %v5437
      %vm5440 = vmpackc.low %vm5439, %vm5438
      %v5441 = vunpack.c.l.b16 %v5433
      %v5442 = vunpack.c.h.b16 %v5433
      %v5443 = vunpack.c.l.b16 0
      %v5444 = vunpack.c.h.b16 0
      %vm5445 = vcmp.ne.s32.totalorder %v5441, %v5443
      %vm5446 = vcmp.ne.s32.totalorder %v5442, %v5444
      %vm5447 = vmpackc.low %vm5446, %vm5445
      %v5448 = vsel %vm5440, %v5424, 0
      %v5449 = vsel %vm5447, %v5421, 0
      %5450 = vrot.lane.b32.xlu0 %v5301, 127
      %v5451 = vpop.permute.xlu0 %5450
      %5452 = vrot.lane.b32.xlu0 %v5302, 127
      %v5453 = vpop.permute.xlu0 %5452
      %vm5454 = vcmask 1039360
      %v5455 = vsel %vm5454, %v5451, %v5453
      %vm5457 = vcmask 1039360
      %v5459 = vsel %vm5457, %v5453, 0
      %v5461 = vsel %vm5388, 1, 0
      %v5462 = vsel %vm5389, 1, 0
      %vm5463 = vcmp.eq.s32.totalorder %v5461, 1
      %vm5464 = vcmp.eq.s32.totalorder %v5462, 1
      %vm5465 = vmpackc.low %vm5464, %vm5463
      %v5466 = vsel %vm5465, 65537, 0
      %v5467 = vperm.slane %v5466, 0
      %v5468 = vperm.slane %v5466, 4
      %v5469 = vunpack.c.l.b16 %v5467
      %v5470 = vunpack.c.h.b16 %v5467
      %v5471 = vunpack.c.l.b16 0
      %v5472 = vunpack.c.h.b16 0
      %vm5473 = vcmp.ne.s32.totalorder %v5469, %v5471
      %vm5474 = vcmp.ne.s32.totalorder %v5470, %v5472
      %vm5475 = vmpackc.low %vm5474, %vm5473
      %v5476 = vunpack.c.l.b16 %v5468
      %v5477 = vunpack.c.h.b16 %v5468
      %v5478 = vunpack.c.l.b16 0
      %v5479 = vunpack.c.h.b16 0
      %vm5480 = vcmp.ne.s32.totalorder %v5476, %v5478
      %vm5481 = vcmp.ne.s32.totalorder %v5477, %v5479
      %vm5482 = vmpackc.low %vm5481, %vm5480
      %v5483 = vsel %vm5475, %v5455, 0
      %v5484 = vsel %vm5482, %v5459, 0
      %5485 = vrot.lane.b32.xlu0 %v5301, 113
      %v5486 = vpop.permute.xlu0 %5485
      %5487 = vrot.lane.b32.xlu0 %v5302, 113
      %v5488 = vpop.permute.xlu0 %5487
      %vm5489 = vcmask 924672
      %v5490 = vsel %vm5489, %v5486, %v5488
      %vm5492 = vcmask 924672
      %v5494 = vsel %vm5492, %v5488, 0
      %vm5496 = vcmp.lt.s32.totalorder %v5294, 15
      %vm5497 = vcmp.lt.s32.totalorder %v5295, 15
      %vm5498 = vmand %vm5496, %vm5316
      %vm5499 = vmand %vm5497, %vm5317
      %v5500 = vsel %vm5498, 1, 0
      %v5501 = vsel %vm5499, 1, 0
      %vm5502 = vcmp.eq.s32.totalorder %v5500, 1
      %vm5503 = vcmp.eq.s32.totalorder %v5501, 1
      %vm5504 = vmpackc.low %vm5503, %vm5502
      %v5505 = vsel %vm5504, 65537, 0
      %v5506 = vperm.slane %v5505, 0
      %v5507 = vperm.slane %v5505, 4
      %v5508 = vunpack.c.l.b16 %v5506
      %v5509 = vunpack.c.h.b16 %v5506
      %v5510 = vunpack.c.l.b16 0
      %v5511 = vunpack.c.h.b16 0
      %vm5512 = vcmp.ne.s32.totalorder %v5508, %v5510
      %vm5513 = vcmp.ne.s32.totalorder %v5509, %v5511
      %vm5514 = vmpackc.low %vm5513, %vm5512
      %v5515 = vunpack.c.l.b16 %v5507
      %v5516 = vunpack.c.h.b16 %v5507
      %v5517 = vunpack.c.l.b16 0
      %v5518 = vunpack.c.h.b16 0
      %vm5519 = vcmp.ne.s32.totalorder %v5515, %v5517
      %vm5520 = vcmp.ne.s32.totalorder %v5516, %v5518
      %vm5521 = vmpackc.low %vm5520, %vm5519
      %v5522 = vsel %vm5514, %v5490, 0
      %v5523 = vsel %vm5521, %v5494, 0
      %5524 = vrot.lane.b32.xlu0 %v5301, 112
      %v5525 = vpop.permute.xlu0 %5524
      %5526 = vrot.lane.b32.xlu0 %v5302, 112
      %v5527 = vpop.permute.xlu0 %5526
      %vm5528 = vcmask 916480
      %v5529 = vsel %vm5528, %v5525, %v5527
      %vm5531 = vcmask 916480
      %v5533 = vsel %vm5531, %v5527, 0
      %v5535 = vsel %vm5496, 1, 0
      %v5536 = vsel %vm5497, 1, 0
      %vm5537 = vcmp.eq.s32.totalorder %v5535, 1
      %vm5538 = vcmp.eq.s32.totalorder %v5536, 1
      %vm5539 = vmpackc.low %vm5538, %vm5537
      %v5540 = vsel %vm5539, 65537, 0
      %v5541 = vperm.slane %v5540, 0
      %v5542 = vperm.slane %v5540, 4
      %v5543 = vunpack.c.l.b16 %v5541
      %v5544 = vunpack.c.h.b16 %v5541
      %v5545 = vunpack.c.l.b16 0
      %v5546 = vunpack.c.h.b16 0
      %vm5547 = vcmp.ne.s32.totalorder %v5543, %v5545
      %vm5548 = vcmp.ne.s32.totalorder %v5544, %v5546
      %vm5549 = vmpackc.low %vm5548, %vm5547
      %v5550 = vunpack.c.l.b16 %v5542
      %v5551 = vunpack.c.h.b16 %v5542
      %v5552 = vunpack.c.l.b16 0
      %v5553 = vunpack.c.h.b16 0
      %vm5554 = vcmp.ne.s32.totalorder %v5550, %v5552
      %vm5555 = vcmp.ne.s32.totalorder %v5551, %v5553
      %vm5556 = vmpackc.low %vm5555, %vm5554
      %v5557 = vsel %vm5549, %v5529, 0
      %v5558 = vsel %vm5556, %v5533, 0
      %5559 = vrot.lane.b32.xlu0 %v5301, 111
      %v5560 = vpop.permute.xlu0 %5559
      %5561 = vrot.lane.b32.xlu0 %v5302, 111
      %v5562 = vpop.permute.xlu0 %5561
      %vm5563 = vcmask 908288
      %v5564 = vsel %vm5563, %v5560, %v5562
      %vm5566 = vcmask 908288
      %v5568 = vsel %vm5566, %v5562, 0
      %vm5570 = vmand %vm5496, %vm5388
      %vm5571 = vmand %vm5497, %vm5389
      %v5572 = vsel %vm5570, 1, 0
      %v5573 = vsel %vm5571, 1, 0
      %vm5574 = vcmp.eq.s32.totalorder %v5572, 1
      %vm5575 = vcmp.eq.s32.totalorder %v5573, 1
      %vm5576 = vmpackc.low %vm5575, %vm5574
      %v5577 = vsel %vm5576, 65537, 0
      %v5578 = vperm.slane %v5577, 0
      %v5579 = vperm.slane %v5577, 4
      %v5580 = vunpack.c.l.b16 %v5578
      %v5581 = vunpack.c.h.b16 %v5578
      %v5582 = vunpack.c.l.b16 0
      %v5583 = vunpack.c.h.b16 0
      %vm5584 = vcmp.ne.s32.totalorder %v5580, %v5582
      %vm5585 = vcmp.ne.s32.totalorder %v5581, %v5583
      %vm5586 = vmpackc.low %vm5585, %vm5584
      %v5587 = vunpack.c.l.b16 %v5579
      %v5588 = vunpack.c.h.b16 %v5579
      %v5589 = vunpack.c.l.b16 0
      %v5590 = vunpack.c.h.b16 0
      %vm5591 = vcmp.ne.s32.totalorder %v5587, %v5589
      %vm5592 = vcmp.ne.s32.totalorder %v5588, %v5590
      %vm5593 = vmpackc.low %vm5592, %vm5591
      %v5594 = vsel %vm5586, %v5564, 0
      %v5595 = vsel %vm5593, %v5568, 0
      %v5598 = vrot.slane %v5376, 4
      %v5599 = vrot.slane %v5377, 4
      %v5602 = vrot.slane %v5448, 4
      %v5603 = vrot.slane %v5449, 4
      %v5606 = vrot.slane %v5483, 4
      %v5607 = vrot.slane %v5484, 4
      %v5610 = vrot.slane %v5557, 4
      %v5611 = vrot.slane %v5558, 4
      %v5614 = vsel %vm3953, %v5342, %v5598
      %v5618 = vsel %vm3953, %v5343, %v5599
      %v5622 = vsel %vm3953, %v5414, %v5602
      %v5626 = vsel %vm3953, %v5415, %v5603
      %v5630 = vsel %vm3953, %v5301, %v5606
      %v5634 = vsel %vm3953, %v5302, %v5607
      %v5638 = vsel %vm3953, %v5522, %v5610
      %v5642 = vsel %vm3953, %v5523, %v5611
      %v5644 = vld [vmem:[%s4 + $0xcc] sm:$0xf]
      %5645 = vset.pattern.permute.xlu0 18
      %5646 = vperm.xlu0 %5645, %v428
      %v5647 = vpop.permute.xlu0 %5646
      %vm5649 = vcmask 588800
      %v5651 = vsel %vm5649, %v5644, 0
      %v5654 = vsel %vm3953, %v5594, 0
      %v5657 = vsel %vm3953, %v5595, 0
      %5659 = vmatpush.bf16.msra.mxu0 0
      %5660 = vmatpush.bf16.msra.mxu0 0
      %5661 = vmatpush.bf16.msra.mxu0 0
      %5662 = vmatpush.bf16.msra.mxu0 %v5654
      %5663 = vmatpush.bf16.msra.mxu0 %v5638
      %5664 = vmatpush.bf16.msra.mxu0 %v5630
      %5665 = vmatpush.bf16.msra.mxu0 %v5622
      %5666 = vmatpush.bf16.msra.mxu0 %v5614
      %5667 = vmatmul.bf16.gmra.mxu0 %v5651
      %v5668 = vpop.f32.mrf.mxu0
      %v5669 = vadd.f32 %v5647, %v5668
      %v5670 = vpop.f32.mrf.mxu0
      %5671 = vdwg.mxu0
      %5672 = vmatpush.bf16.msra.mxu0 0
      %5673 = vmatpush.bf16.msra.mxu0 0
      %5674 = vmatpush.bf16.msra.mxu0 0
      %5675 = vmatpush.bf16.msra.mxu0 %v5657
      %5676 = vmatpush.bf16.msra.mxu0 %v5642
      %5677 = vmatpush.bf16.msra.mxu0 %v5634
      %5678 = vmatpush.bf16.msra.mxu0 %v5626
      %5679 = vmatpush.bf16.msra.mxu0 %v5618
      %5680 = vmatmul.bf16.gmra.mxu0 %v5651
      %v5681 = vpop.f32.mrf.mxu0
      %v5682 = vadd.f32 %v5647, %v5681
      %v5683 = vpop.f32.mrf.mxu0
      %5684 = vdwg.mxu0
      %v5685 = vld [vmem:[%s4 + $0xd0] sm:$0x1]
      %v5686 = vpack.c.bf16 %v5669, %v5669
      %v5687 = vpack.c.bf16 %v5682, %v5682
      %v5688 = vld [vmem:[%s5] sm:$0x1]
      %5690 = vset.pattern.permute.xlu0 19
      %5691 = vperm.xlu0 %5690, %v5688
      %v5692 = vpop.permute.xlu0 %5691
      %v5695 = vsel %vm3946, %v5685, 0
      %v5698 = vsel %vm3953, %v5686, 0
      %v5701 = vsel %vm3953, %v5687, 0
      %5703 = vmatpush.bf16.msra.mxu0 0
      %5704 = vmatpush.bf16.msra.mxu0 0
      %5705 = vmatpush.bf16.msra.mxu0 0
      %5706 = vmatpush.bf16.msra.mxu0 0
      %5707 = vmatpush.bf16.msra.mxu0 0
      %5708 = vmatpush.bf16.msra.mxu0 0
      %5709 = vmatpush.bf16.msra.mxu0 0
      %5710 = vmatpush.bf16.msra.mxu0 %v5698
      %5711 = vmatmul.bf16.gmra.mxu0 %v5695
      %v5712 = vpop.f32.mrf.mxu0
      %v5713 = vadd.f32 %v5692, %v5712
      %v5714 = vpop.f32.mrf.mxu0
      %5715 = vdwg.mxu0
      %5716 = vmatpush.bf16.msra.mxu0 0
      %5717 = vmatpush.bf16.msra.mxu0 0
      %5718 = vmatpush.bf16.msra.mxu0 0
      %5719 = vmatpush.bf16.msra.mxu0 0
      %5720 = vmatpush.bf16.msra.mxu0 0
      %5721 = vmatpush.bf16.msra.mxu0 0
      %5722 = vmatpush.bf16.msra.mxu0 0
      %5723 = vmatpush.bf16.msra.mxu0 %v5701
      %5724 = vmatmul.bf16.gmra.mxu0 %v5695
      %v5725 = vpop.f32.mrf.mxu0
      %v5726 = vadd.f32 %v5692, %v5725
      %v5727 = vpop.f32.mrf.mxu0
      %5728 = vdwg.mxu0
      %v5729 = vpack.c.bf16 %v5713, %v5713
      %v5730 = vpack.c.bf16 %v5726, %v5726
      %v5731 = vld [vmem:[%s9] sm:$0xff]
      %v5732 = vld [vmem:[%s9 + $0x8] sm:$0xff]
      %v5733 = vld [vmem:[%s9 + $0x10] sm:$0xff]
      %v5734 = vld [vmem:[%s9 + $0x18] sm:$0xff]
      %v5735 = vld [vmem:[%s9 + $0x20] sm:$0xff]
      %v5736 = vld [vmem:[%s9 + $0x28] sm:$0xff]
      %v5737 = vld [vmem:[%s9 + $0x30] sm:$0xff]
      %v5738 = vld [vmem:[%s9 + $0x38] sm:$0xff]
      %v5739 = vld [vmem:[%s9 + $0x40] sm:$0xff]
      %v5740 = vld [vmem:[%s9 + $0x48] sm:$0xff]
      %v5741 = vld [vmem:[%s9 + $0x50] sm:$0xff]
      %v5742 = vld [vmem:[%s9 + $0x58] sm:$0xff]
      %v5743 = vld [vmem:[%s9 + $0x60] sm:$0xff]
      %v5744 = vld [vmem:[%s9 + $0x68] sm:$0xff]
      %v5745 = vld [vmem:[%s9 + $0x70] sm:$0xff]
      %v5746 = vld [vmem:[%s9 + $0x78] sm:$0xff]
      %v5747 = vld [vmem:[%s9 + $0x80] sm:$0xff]
      %v5748 = vld [vmem:[%s9 + $0x88] sm:$0xff]
      %v5749 = vld [vmem:[%s9 + $0x90] sm:$0xff]
      %v5750 = vld [vmem:[%s9 + $0x98] sm:$0xff]
      %v5751 = vld [vmem:[%s9 + $0xa0] sm:$0xff]
      %v5752 = vld [vmem:[%s9 + $0xa8] sm:$0xff]
      %v5753 = vld [vmem:[%s9 + $0xb0] sm:$0xff]
      %v5754 = vld [vmem:[%s9 + $0xb8] sm:$0xff]
      %v5755 = vld [vmem:[%s9 + $0xc0] sm:$0xff]
      %v5756 = vld [vmem:[%s9 + $0xc8] sm:$0xff]
      %v5757 = vld [vmem:[%s9 + $0xd0] sm:$0xff]
      %v5758 = vld [vmem:[%s9 + $0xd8] sm:$0xff]
      %v5759 = vld [vmem:[%s9 + $0xe0] sm:$0xff]
      %v5760 = vld [vmem:[%s9 + $0xe8] sm:$0xff]
      %v5761 = vld [vmem:[%s9 + $0xf0] sm:$0xff]
      %v5762 = vld [vmem:[%s9 + $0xf8] sm:$0xff]
      %v5763 = vld [vmem:[%s9 + $0x100] sm:$0xff]
      %v5764 = vld [vmem:[%s9 + $0x108] sm:$0xff]
      %v5765 = vld [vmem:[%s9 + $0x110] sm:$0xff]
      %v5766 = vld [vmem:[%s9 + $0x118] sm:$0xff]
      %v5767 = vld [vmem:[%s9 + $0x120] sm:$0xff]
      %v5768 = vld [vmem:[%s9 + $0x128] sm:$0xff]
      %v5769 = vld [vmem:[%s9 + $0x130] sm:$0xff]
      %v5770 = vld [vmem:[%s9 + $0x138] sm:$0xff]
      %v5771 = vld [vmem:[%s9 + $0x140] sm:$0xff]
      %v5772 = vld [vmem:[%s9 + $0x148] sm:$0xff]
      %v5773 = vld [vmem:[%s9 + $0x150] sm:$0xff]
      %v5774 = vld [vmem:[%s9 + $0x158] sm:$0xff]
      %v5775 = vld [vmem:[%s9 + $0x160] sm:$0xff]
      %v5776 = vld [vmem:[%s9 + $0x168] sm:$0xff]
      %v5777 = vld [vmem:[%s9 + $0x170] sm:$0xff]
      %v5778 = vld [vmem:[%s9 + $0x178] sm:$0xff]
      %v5779 = vld [vmem:[%s9 + $0x180] sm:$0xff]
      %v5780 = vld [vmem:[%s9 + $0x188] sm:$0xff]
      %v5781 = vld [vmem:[%s9 + $0x190] sm:$0xff]
      %v5782 = vld [vmem:[%s9 + $0x198] sm:$0xff]
      %v5783 = vld [vmem:[%s9 + $0x1a0] sm:$0xff]
      %v5784 = vld [vmem:[%s9 + $0x1a8] sm:$0xff]
      %v5785 = vld [vmem:[%s9 + $0x1b0] sm:$0xff]
      %v5786 = vld [vmem:[%s9 + $0x1b8] sm:$0xff]
      %v5787 = vld [vmem:[%s9 + $0x1c0] sm:$0xff]
      %v5788 = vld [vmem:[%s9 + $0x1c8] sm:$0xff]
      %v5789 = vld [vmem:[%s9 + $0x1d0] sm:$0xff]
      %v5790 = vld [vmem:[%s9 + $0x1d8] sm:$0xff]
      %v5791 = vld [vmem:[%s9 + $0x1e0] sm:$0xff]
      %v5792 = vld [vmem:[%s9 + $0x1e8] sm:$0xff]
      %v5793 = vld [vmem:[%s9 + $0x1f0] sm:$0xff]
      %v5794 = vld [vmem:[%s9 + $0x1f8] sm:$0xff]
      %v5795 = vld [vmem:[%s9 + $0x200] sm:$0xff]
      %v5796 = vld [vmem:[%s9 + $0x208] sm:$0xff]
      %v5797 = vld [vmem:[%s9 + $0x210] sm:$0xff]
      %v5798 = vld [vmem:[%s9 + $0x218] sm:$0xff]
      %v5799 = vld [vmem:[%s9 + $0x220] sm:$0xff]
      %v5800 = vld [vmem:[%s9 + $0x228] sm:$0xff]
      %v5801 = vld [vmem:[%s9 + $0x230] sm:$0xff]
      %v5802 = vld [vmem:[%s9 + $0x238] sm:$0xff]
      %v5803 = vld [vmem:[%s9 + $0x240] sm:$0xff]
      %v5804 = vld [vmem:[%s9 + $0x248] sm:$0xff]
      %v5805 = vld [vmem:[%s9 + $0x250] sm:$0xff]
      %v5806 = vld [vmem:[%s9 + $0x258] sm:$0xff]
      %v5807 = vld [vmem:[%s9 + $0x260] sm:$0xff]
      %v5808 = vld [vmem:[%s9 + $0x268] sm:$0xff]
      %v5809 = vld [vmem:[%s9 + $0x270] sm:$0xff]
      %v5810 = vld [vmem:[%s9 + $0x278] sm:$0xff]
      %v5811 = vld [vmem:[%s9 + $0x280] sm:$0xff]
      %v5812 = vld [vmem:[%s9 + $0x288] sm:$0xff]
      %v5813 = vld [vmem:[%s9 + $0x290] sm:$0xff]
      %v5814 = vld [vmem:[%s9 + $0x298] sm:$0xff]
      %v5815 = vld [vmem:[%s9 + $0x2a0] sm:$0xff]
      %v5816 = vld [vmem:[%s9 + $0x2a8] sm:$0xff]
      %v5817 = vld [vmem:[%s9 + $0x2b0] sm:$0xff]
      %v5818 = vld [vmem:[%s9 + $0x2b8] sm:$0xff]
      %v5819 = vld [vmem:[%s9 + $0x2c0] sm:$0xff]
      %v5820 = vld [vmem:[%s9 + $0x2c8] sm:$0xff]
      %v5821 = vld [vmem:[%s9 + $0x2d0] sm:$0xff]
      %v5822 = vld [vmem:[%s9 + $0x2d8] sm:$0xff]
      %v5823 = vld [vmem:[%s9 + $0x2e0] sm:$0xff]
      %v5824 = vld [vmem:[%s9 + $0x2e8] sm:$0xff]
      %v5825 = vld [vmem:[%s9 + $0x2f0] sm:$0xff]
      %v5826 = vld [vmem:[%s9 + $0x2f8] sm:$0xff]
      %v5827 = vld [vmem:[%s9 + $0x300] sm:$0xff]
      %v5828 = vld [vmem:[%s9 + $0x308] sm:$0xff]
      %v5829 = vld [vmem:[%s9 + $0x310] sm:$0xff]
      %v5830 = vld [vmem:[%s9 + $0x318] sm:$0xff]
      %v5831 = vld [vmem:[%s9 + $0x320] sm:$0xff]
      %v5832 = vld [vmem:[%s9 + $0x328] sm:$0xff]
      %v5833 = vld [vmem:[%s9 + $0x330] sm:$0xff]
      %v5834 = vld [vmem:[%s9 + $0x338] sm:$0xff]
      %v5835 = vld [vmem:[%s9 + $0x340] sm:$0xff]
      %v5836 = vld [vmem:[%s9 + $0x348] sm:$0xff]
      %v5837 = vld [vmem:[%s9 + $0x350] sm:$0xff]
      %v5838 = vld [vmem:[%s9 + $0x358] sm:$0xff]
      %v5839 = vld [vmem:[%s9 + $0x360] sm:$0xff]
      %v5840 = vld [vmem:[%s9 + $0x368] sm:$0xff]
      %v5841 = vld [vmem:[%s9 + $0x370] sm:$0xff]
      %v5842 = vld [vmem:[%s9 + $0x378] sm:$0xff]
      %v5843 = vld [vmem:[%s9 + $0x380] sm:$0xff]
      %v5844 = vld [vmem:[%s9 + $0x388] sm:$0xff]
      %v5845 = vld [vmem:[%s9 + $0x390] sm:$0xff]
      %v5846 = vld [vmem:[%s9 + $0x398] sm:$0xff]
      %v5847 = vld [vmem:[%s9 + $0x3a0] sm:$0xff]
      %v5848 = vld [vmem:[%s9 + $0x3a8] sm:$0xff]
      %v5849 = vld [vmem:[%s9 + $0x3b0] sm:$0xff]
      %v5850 = vld [vmem:[%s9 + $0x3b8] sm:$0xff]
      %v5851 = vld [vmem:[%s9 + $0x3c0] sm:$0xff]
      %v5852 = vld [vmem:[%s9 + $0x3c8] sm:$0xff]
      %v5853 = vld [vmem:[%s9 + $0x3d0] sm:$0xff]
      %v5854 = vld [vmem:[%s9 + $0x3d8] sm:$0xff]
      %v5855 = vld [vmem:[%s9 + $0x3e0] sm:$0xff]
      %v5856 = vld [vmem:[%s9 + $0x3e8] sm:$0xff]
      %v5857 = vld [vmem:[%s9 + $0x3f0] sm:$0xff]
      %v5858 = vld [vmem:[%s9 + $0x3f8] sm:$0xff]
      %v5859 = vld [vmem:[%s9 + $0x400] sm:$0xff]
      %v5860 = vld [vmem:[%s9 + $0x408] sm:$0xff]
      %v5861 = vld [vmem:[%s9 + $0x410] sm:$0xff]
      %v5862 = vld [vmem:[%s9 + $0x418] sm:$0xff]
      %v5863 = vld [vmem:[%s9 + $0x420] sm:$0xff]
      %v5864 = vld [vmem:[%s9 + $0x428] sm:$0xff]
      %v5865 = vld [vmem:[%s9 + $0x430] sm:$0xff]
      %v5866 = vld [vmem:[%s9 + $0x438] sm:$0xff]
      %v5867 = vld [vmem:[%s9 + $0x440] sm:$0xff]
      %v5868 = vld [vmem:[%s9 + $0x448] sm:$0xff]
      %v5869 = vld [vmem:[%s9 + $0x450] sm:$0xff]
      %v5870 = vld [vmem:[%s9 + $0x458] sm:$0xff]
      %v5871 = vld [vmem:[%s9 + $0x460] sm:$0xff]
      %v5872 = vld [vmem:[%s9 + $0x468] sm:$0xff]
      %v5873 = vld [vmem:[%s9 + $0x470] sm:$0xff]
      %v5874 = vld [vmem:[%s9 + $0x478] sm:$0xff]
      %v5875 = vld [vmem:[%s9 + $0x480] sm:$0xff]
      %v5876 = vld [vmem:[%s9 + $0x488] sm:$0xff]
      %v5877 = vld [vmem:[%s9 + $0x490] sm:$0xff]
      %v5878 = vld [vmem:[%s9 + $0x498] sm:$0xff]
      %v5879 = vld [vmem:[%s9 + $0x4a0] sm:$0xff]
      %v5880 = vld [vmem:[%s9 + $0x4a8] sm:$0xff]
      %v5881 = vld [vmem:[%s9 + $0x4b0] sm:$0xff]
      %v5882 = vld [vmem:[%s9 + $0x4b8] sm:$0xff]
      %v5883 = vld [vmem:[%s9 + $0x4c0] sm:$0xff]
      %v5884 = vld [vmem:[%s9 + $0x4c8] sm:$0xff]
      %v5885 = vld [vmem:[%s9 + $0x4d0] sm:$0xff]
      %v5886 = vld [vmem:[%s9 + $0x4d8] sm:$0xff]
      %v5887 = vld [vmem:[%s9 + $0x4e0] sm:$0xff]
      %v5888 = vld [vmem:[%s9 + $0x4e8] sm:$0xff]
      %v5889 = vld [vmem:[%s9 + $0x4f0] sm:$0xff]
      %v5890 = vld [vmem:[%s9 + $0x4f8] sm:$0xff]
      %v5891 = vld [vmem:[%s9 + $0x500] sm:$0xff]
      %v5892 = vld [vmem:[%s9 + $0x508] sm:$0xff]
      %v5893 = vld [vmem:[%s9 + $0x510] sm:$0xff]
      %v5894 = vld [vmem:[%s9 + $0x518] sm:$0xff]
      %v5895 = vld [vmem:[%s9 + $0x520] sm:$0xff]
      %v5896 = vld [vmem:[%s9 + $0x528] sm:$0xff]
      %v5897 = vld [vmem:[%s9 + $0x530] sm:$0xff]
      %v5898 = vld [vmem:[%s9 + $0x538] sm:$0xff]
      %v5899 = vld [vmem:[%s9 + $0x540] sm:$0xff]
      %v5900 = vld [vmem:[%s9 + $0x548] sm:$0xff]
      %v5901 = vld [vmem:[%s9 + $0x550] sm:$0xff]
      %v5902 = vld [vmem:[%s9 + $0x558] sm:$0xff]
      %v5903 = vld [vmem:[%s9 + $0x560] sm:$0xff]
      %v5904 = vld [vmem:[%s9 + $0x568] sm:$0xff]
      %v5905 = vld [vmem:[%s9 + $0x570] sm:$0xff]
      %v5906 = vld [vmem:[%s9 + $0x578] sm:$0xff]
      %v5907 = vld [vmem:[%s9 + $0x580] sm:$0xff]
      %v5908 = vld [vmem:[%s9 + $0x588] sm:$0xff]
      %v5909 = vld [vmem:[%s9 + $0x590] sm:$0xff]
      %v5910 = vld [vmem:[%s9 + $0x598] sm:$0xff]
      %v5911 = vld [vmem:[%s9 + $0x5a0] sm:$0xff]
      %v5912 = vld [vmem:[%s9 + $0x5a8] sm:$0xff]
      %v5913 = vld [vmem:[%s9 + $0x5b0] sm:$0xff]
      %v5914 = vld [vmem:[%s9 + $0x5b8] sm:$0xff]
      %v5915 = vld [vmem:[%s9 + $0x5c0] sm:$0xff]
      %v5916 = vld [vmem:[%s9 + $0x5c8] sm:$0xff]
      %v5917 = vld [vmem:[%s9 + $0x5d0] sm:$0xff]
      %v5918 = vld [vmem:[%s9 + $0x5d8] sm:$0xff]
      %v5919 = vld [vmem:[%s9 + $0x5e0] sm:$0xff]
      %v5920 = vld [vmem:[%s9 + $0x5e8] sm:$0xff]
      %v5921 = vld [vmem:[%s9 + $0x5f0] sm:$0xff]
      %v5922 = vld [vmem:[%s9 + $0x5f8] sm:$0xff]
      %v5923 = vld [vmem:[%s9 + $0x600] sm:$0xff]
      %v5924 = vld [vmem:[%s9 + $0x608] sm:$0xff]
      %v5925 = vld [vmem:[%s9 + $0x610] sm:$0xff]
      %v5926 = vld [vmem:[%s9 + $0x618] sm:$0xff]
      %v5927 = vld [vmem:[%s9 + $0x620] sm:$0xff]
      %v5928 = vld [vmem:[%s9 + $0x628] sm:$0xff]
      %v5929 = vld [vmem:[%s9 + $0x630] sm:$0xff]
      %v5930 = vld [vmem:[%s9 + $0x638] sm:$0xff]
      %v5931 = vld [vmem:[%s9 + $0x640] sm:$0xff]
      %v5932 = vld [vmem:[%s9 + $0x648] sm:$0xff]
      %v5933 = vld [vmem:[%s9 + $0x650] sm:$0xff]
      %v5934 = vld [vmem:[%s9 + $0x658] sm:$0xff]
      %v5935 = vld [vmem:[%s9 + $0x660] sm:$0xff]
      %v5936 = vld [vmem:[%s9 + $0x668] sm:$0xff]
      %v5937 = vld [vmem:[%s9 + $0x670] sm:$0xff]
      %v5938 = vld [vmem:[%s9 + $0x678] sm:$0xff]
      %v5939 = vld [vmem:[%s9 + $0x680] sm:$0xff]
      %v5940 = vld [vmem:[%s9 + $0x688] sm:$0xff]
      %v5941 = vld [vmem:[%s9 + $0x690] sm:$0xff]
      %v5942 = vld [vmem:[%s9 + $0x698] sm:$0xff]
      %v5943 = vld [vmem:[%s9 + $0x6a0] sm:$0xff]
      %v5944 = vld [vmem:[%s9 + $0x6a8] sm:$0xff]
      %v5945 = vld [vmem:[%s9 + $0x6b0] sm:$0xff]
      %v5946 = vld [vmem:[%s9 + $0x6b8] sm:$0xff]
      %v5947 = vld [vmem:[%s9 + $0x6c0] sm:$0xff]
      %v5948 = vld [vmem:[%s9 + $0x6c8] sm:$0xff]
      %v5949 = vld [vmem:[%s9 + $0x6d0] sm:$0xff]
      %v5950 = vld [vmem:[%s9 + $0x6d8] sm:$0xff]
      %v5951 = vld [vmem:[%s9 + $0x6e0] sm:$0xff]
      %v5952 = vld [vmem:[%s9 + $0x6e8] sm:$0xff]
      %v5953 = vld [vmem:[%s9 + $0x6f0] sm:$0xff]
      %v5954 = vld [vmem:[%s9 + $0x6f8] sm:$0xff]
      %v5955 = vld [vmem:[%s9 + $0x700] sm:$0xff]
      %v5956 = vld [vmem:[%s9 + $0x708] sm:$0xff]
      %v5957 = vld [vmem:[%s9 + $0x710] sm:$0xff]
      %v5958 = vld [vmem:[%s9 + $0x718] sm:$0xff]
      %v5959 = vld [vmem:[%s9 + $0x720] sm:$0xff]
      %v5960 = vld [vmem:[%s9 + $0x728] sm:$0xff]
      %v5961 = vld [vmem:[%s9 + $0x730] sm:$0xff]
      %v5962 = vld [vmem:[%s9 + $0x738] sm:$0xff]
      %v5963 = vld [vmem:[%s9 + $0x740] sm:$0xff]
      %v5964 = vld [vmem:[%s9 + $0x748] sm:$0xff]
      %v5965 = vld [vmem:[%s9 + $0x750] sm:$0xff]
      %v5966 = vld [vmem:[%s9 + $0x758] sm:$0xff]
      %v5967 = vld [vmem:[%s9 + $0x760] sm:$0xff]
      %v5968 = vld [vmem:[%s9 + $0x768] sm:$0xff]
      %v5969 = vld [vmem:[%s9 + $0x770] sm:$0xff]
      %v5970 = vld [vmem:[%s9 + $0x778] sm:$0xff]
      %v5971 = vld [vmem:[%s9 + $0x780] sm:$0xff]
      %v5972 = vld [vmem:[%s9 + $0x788] sm:$0xff]
      %v5973 = vld [vmem:[%s9 + $0x790] sm:$0xff]
      %v5974 = vld [vmem:[%s9 + $0x798] sm:$0xff]
      %v5975 = vld [vmem:[%s9 + $0x7a0] sm:$0xff]
      %v5976 = vld [vmem:[%s9 + $0x7a8] sm:$0xff]
      %v5977 = vld [vmem:[%s9 + $0x7b0] sm:$0xff]
      %v5978 = vld [vmem:[%s9 + $0x7b8] sm:$0xff]
      %v5979 = vld [vmem:[%s9 + $0x7c0] sm:$0xff]
      %v5980 = vld [vmem:[%s9 + $0x7c8] sm:$0xff]
      %v5981 = vld [vmem:[%s9 + $0x7d0] sm:$0xff]
      %v5982 = vld [vmem:[%s9 + $0x7d8] sm:$0xff]
      %v5983 = vld [vmem:[%s9 + $0x7e0] sm:$0xff]
      %v5984 = vld [vmem:[%s9 + $0x7e8] sm:$0xff]
      %v5985 = vld [vmem:[%s9 + $0x7f0] sm:$0xff]
      %v5986 = vld [vmem:[%s9 + $0x7f8] sm:$0xff]
      %v5987 = vld [vmem:[%s9 + $0x800] sm:$0xff]
      %v5988 = vld [vmem:[%s9 + $0x808] sm:$0xff]
      %v5989 = vld [vmem:[%s9 + $0x810] sm:$0xff]
      %v5990 = vld [vmem:[%s9 + $0x818] sm:$0xff]
      %v5991 = vld [vmem:[%s9 + $0x820] sm:$0xff]
      %v5992 = vld [vmem:[%s9 + $0x828] sm:$0xff]
      %v5993 = vld [vmem:[%s9 + $0x830] sm:$0xff]
      %v5994 = vld [vmem:[%s9 + $0x838] sm:$0xff]
      %v5995 = vld [vmem:[%s9 + $0x840] sm:$0xff]
      %v5996 = vld [vmem:[%s9 + $0x848] sm:$0xff]
      %v5997 = vld [vmem:[%s9 + $0x850] sm:$0xff]
      %v5998 = vld [vmem:[%s9 + $0x858] sm:$0xff]
      %v5999 = vld [vmem:[%s9 + $0x860] sm:$0xff]
      %v6000 = vld [vmem:[%s9 + $0x868] sm:$0xff]
      %v6001 = vld [vmem:[%s9 + $0x870] sm:$0xff]
      %v6002 = vld [vmem:[%s9 + $0x878] sm:$0xff]
      %v6003 = vld [vmem:[%s9 + $0x880] sm:$0xff]
      %v6004 = vld [vmem:[%s9 + $0x888] sm:$0xff]
      %v6005 = vld [vmem:[%s9 + $0x890] sm:$0xff]
      %v6006 = vld [vmem:[%s9 + $0x898] sm:$0xff]
      %v6007 = vld [vmem:[%s9 + $0x8a0] sm:$0xff]
      %v6008 = vld [vmem:[%s9 + $0x8a8] sm:$0xff]
      %v6009 = vld [vmem:[%s9 + $0x8b0] sm:$0xff]
      %v6010 = vld [vmem:[%s9 + $0x8b8] sm:$0xff]
      %v6011 = vld [vmem:[%s9 + $0x8c0] sm:$0xff]
      %v6012 = vld [vmem:[%s9 + $0x8c8] sm:$0xff]
      %v6013 = vld [vmem:[%s9 + $0x8d0] sm:$0xff]
      %v6014 = vld [vmem:[%s9 + $0x8d8] sm:$0xff]
      %v6015 = vld [vmem:[%s9 + $0x8e0] sm:$0xff]
      %v6016 = vld [vmem:[%s9 + $0x8e8] sm:$0xff]
      %v6017 = vld [vmem:[%s9 + $0x8f0] sm:$0xff]
      %v6018 = vld [vmem:[%s9 + $0x8f8] sm:$0xff]
      %v6019 = vld [vmem:[%s9 + $0x900] sm:$0xff]
      %v6020 = vld [vmem:[%s9 + $0x908] sm:$0xff]
      %v6021 = vld [vmem:[%s9 + $0x910] sm:$0xff]
      %v6022 = vld [vmem:[%s9 + $0x918] sm:$0xff]
      %v6023 = vld [vmem:[%s9 + $0x920] sm:$0xff]
      %v6024 = vld [vmem:[%s9 + $0x928] sm:$0xff]
      %v6025 = vld [vmem:[%s9 + $0x930] sm:$0xff]
      %v6026 = vld [vmem:[%s9 + $0x938] sm:$0xff]
      %v6027 = vld [vmem:[%s9 + $0x940] sm:$0xff]
      %v6028 = vld [vmem:[%s9 + $0x948] sm:$0xff]
      %v6029 = vld [vmem:[%s9 + $0x950] sm:$0xff]
      %v6030 = vld [vmem:[%s9 + $0x958] sm:$0xff]
      %v6031 = vld [vmem:[%s9 + $0x960] sm:$0xff]
      %v6032 = vld [vmem:[%s9 + $0x968] sm:$0xff]
      %v6033 = vld [vmem:[%s9 + $0x970] sm:$0xff]
      %v6034 = vld [vmem:[%s9 + $0x978] sm:$0xff]
      %v6035 = vld [vmem:[%s9 + $0x980] sm:$0xff]
      %v6036 = vld [vmem:[%s9 + $0x988] sm:$0xff]
      %v6037 = vld [vmem:[%s9 + $0x990] sm:$0xff]
      %v6038 = vld [vmem:[%s9 + $0x998] sm:$0xff]
      %v6039 = vld [vmem:[%s9 + $0x9a0] sm:$0xff]
      %v6040 = vld [vmem:[%s9 + $0x9a8] sm:$0xff]
      %v6041 = vld [vmem:[%s9 + $0x9b0] sm:$0xff]
      %v6042 = vld [vmem:[%s9 + $0x9b8] sm:$0xff]
      %v6043 = vld [vmem:[%s9 + $0x9c0] sm:$0xff]
      %v6044 = vld [vmem:[%s9 + $0x9c8] sm:$0xff]
      %v6045 = vld [vmem:[%s9 + $0x9d0] sm:$0xff]
      %v6046 = vld [vmem:[%s9 + $0x9d8] sm:$0xff]
      %v6047 = vld [vmem:[%s9 + $0x9e0] sm:$0xff]
      %v6048 = vld [vmem:[%s9 + $0x9e8] sm:$0xff]
      %v6049 = vld [vmem:[%s9 + $0x9f0] sm:$0xff]
      %v6050 = vld [vmem:[%s9 + $0x9f8] sm:$0xff]
      %v6051 = vld [vmem:[%s9 + $0xa00] sm:$0xff]
      %v6052 = vld [vmem:[%s9 + $0xa08] sm:$0xff]
      %v6053 = vld [vmem:[%s9 + $0xa10] sm:$0xff]
      %v6054 = vld [vmem:[%s9 + $0xa18] sm:$0xff]
      %v6055 = vld [vmem:[%s9 + $0xa20] sm:$0xff]
      %v6056 = vld [vmem:[%s9 + $0xa28] sm:$0xff]
      %v6057 = vld [vmem:[%s9 + $0xa30] sm:$0xff]
      %v6058 = vld [vmem:[%s9 + $0xa38] sm:$0xff]
      %v6059 = vld [vmem:[%s9 + $0xa40] sm:$0xff]
      %v6060 = vld [vmem:[%s9 + $0xa48] sm:$0xff]
      %v6061 = vld [vmem:[%s9 + $0xa50] sm:$0xff]
      %v6062 = vld [vmem:[%s9 + $0xa58] sm:$0xff]
      %v6063 = vld [vmem:[%s9 + $0xa60] sm:$0xff]
      %v6064 = vld [vmem:[%s9 + $0xa68] sm:$0xff]
      %v6065 = vld [vmem:[%s9 + $0xa70] sm:$0xff]
      %v6066 = vld [vmem:[%s9 + $0xa78] sm:$0xff]
      %v6067 = vld [vmem:[%s9 + $0xa80] sm:$0xff]
      %v6068 = vld [vmem:[%s9 + $0xa88] sm:$0xff]
      %v6069 = vld [vmem:[%s9 + $0xa90] sm:$0xff]
      %v6070 = vld [vmem:[%s9 + $0xa98] sm:$0xff]
      %v6071 = vld [vmem:[%s9 + $0xaa0] sm:$0xff]
      %v6072 = vld [vmem:[%s9 + $0xaa8] sm:$0xff]
      %v6073 = vld [vmem:[%s9 + $0xab0] sm:$0xff]
      %v6074 = vld [vmem:[%s9 + $0xab8] sm:$0xff]
      %v6075 = vld [vmem:[%s9 + $0xac0] sm:$0xff]
      %v6076 = vld [vmem:[%s9 + $0xac8] sm:$0xff]
      %v6077 = vld [vmem:[%s9 + $0xad0] sm:$0xff]
      %v6078 = vld [vmem:[%s9 + $0xad8] sm:$0xff]
      %v6079 = vld [vmem:[%s9 + $0xae0] sm:$0xff]
      %v6080 = vld [vmem:[%s9 + $0xae8] sm:$0xff]
      %v6081 = vld [vmem:[%s9 + $0xaf0] sm:$0xff]
      %v6082 = vld [vmem:[%s9 + $0xaf8] sm:$0xff]
      %v6083 = vld [vmem:[%s9 + $0xb00] sm:$0xff]
      %v6084 = vld [vmem:[%s9 + $0xb08] sm:$0xff]
      %v6085 = vld [vmem:[%s9 + $0xb10] sm:$0xff]
      %v6086 = vld [vmem:[%s9 + $0xb18] sm:$0xff]
      %v6087 = vld [vmem:[%s9 + $0xb20] sm:$0xff]
      %v6088 = vld [vmem:[%s9 + $0xb28] sm:$0xff]
      %v6089 = vld [vmem:[%s9 + $0xb30] sm:$0xff]
      %v6090 = vld [vmem:[%s9 + $0xb38] sm:$0xff]
      %v6091 = vld [vmem:[%s9 + $0xb40] sm:$0xff]
      %v6092 = vld [vmem:[%s9 + $0xb48] sm:$0xff]
      %v6093 = vld [vmem:[%s9 + $0xb50] sm:$0xff]
      %v6094 = vld [vmem:[%s9 + $0xb58] sm:$0xff]
      %v6095 = vld [vmem:[%s9 + $0xb60] sm:$0xff]
      %v6096 = vld [vmem:[%s9 + $0xb68] sm:$0xff]
      %v6097 = vld [vmem:[%s9 + $0xb70] sm:$0xff]
      %v6098 = vld [vmem:[%s9 + $0xb78] sm:$0xff]
      %v6099 = vld [vmem:[%s9 + $0xb80] sm:$0xff]
      %v6100 = vld [vmem:[%s9 + $0xb88] sm:$0xff]
      %v6101 = vld [vmem:[%s9 + $0xb90] sm:$0xff]
      %v6102 = vld [vmem:[%s9 + $0xb98] sm:$0xff]
      %v6103 = vld [vmem:[%s9 + $0xba0] sm:$0xff]
      %v6104 = vld [vmem:[%s9 + $0xba8] sm:$0xff]
      %v6105 = vld [vmem:[%s9 + $0xbb0] sm:$0xff]
      %v6106 = vld [vmem:[%s9 + $0xbb8] sm:$0xff]
      %v6107 = vld [vmem:[%s9 + $0xbc0] sm:$0xff]
      %v6108 = vld [vmem:[%s9 + $0xbc8] sm:$0xff]
      %v6109 = vld [vmem:[%s9 + $0xbd0] sm:$0xff]
      %v6110 = vld [vmem:[%s9 + $0xbd8] sm:$0xff]
      %v6111 = vld [vmem:[%s9 + $0xbe0] sm:$0xff]
      %v6112 = vld [vmem:[%s9 + $0xbe8] sm:$0xff]
      %v6113 = vld [vmem:[%s9 + $0xbf0] sm:$0xff]
      %v6114 = vld [vmem:[%s9 + $0xbf8] sm:$0xff]
      %v6115 = vld [vmem:[%s9 + $0xc00] sm:$0xff]
      %v6116 = vld [vmem:[%s9 + $0xc08] sm:$0xff]
      %v6117 = vld [vmem:[%s9 + $0xc10] sm:$0xff]
      %v6118 = vld [vmem:[%s9 + $0xc18] sm:$0xff]
      %v6119 = vld [vmem:[%s9 + $0xc20] sm:$0xff]
      %v6120 = vld [vmem:[%s9 + $0xc28] sm:$0xff]
      %v6121 = vld [vmem:[%s9 + $0xc30] sm:$0xff]
      %v6122 = vld [vmem:[%s9 + $0xc38] sm:$0xff]
      %v6123 = vld [vmem:[%s9 + $0xc40] sm:$0xff]
      %v6124 = vld [vmem:[%s9 + $0xc48] sm:$0xff]
      %v6125 = vld [vmem:[%s9 + $0xc50] sm:$0xff]
      %v6126 = vld [vmem:[%s9 + $0xc58] sm:$0xff]
      %v6127 = vld [vmem:[%s9 + $0xc60] sm:$0xff]
      %v6128 = vld [vmem:[%s9 + $0xc68] sm:$0xff]
      %v6129 = vld [vmem:[%s9 + $0xc70] sm:$0xff]
      %v6130 = vld [vmem:[%s9 + $0xc78] sm:$0xff]
      %v6131 = vld [vmem:[%s9 + $0xc80] sm:$0xff]
      %v6132 = vld [vmem:[%s9 + $0xc88] sm:$0xff]
      %v6133 = vld [vmem:[%s9 + $0xc90] sm:$0xff]
      %v6134 = vld [vmem:[%s9 + $0xc98] sm:$0xff]
      %v6135 = vld [vmem:[%s9 + $0xca0] sm:$0xff]
      %v6136 = vld [vmem:[%s9 + $0xca8] sm:$0xff]
      %v6137 = vld [vmem:[%s9 + $0xcb0] sm:$0xff]
      %v6138 = vld [vmem:[%s9 + $0xcb8] sm:$0xff]
      %v6139 = vld [vmem:[%s9 + $0xcc0] sm:$0xff]
      %v6140 = vld [vmem:[%s9 + $0xcc8] sm:$0xff]
      %v6141 = vld [vmem:[%s9 + $0xcd0] sm:$0xff]
      %v6142 = vld [vmem:[%s9 + $0xcd8] sm:$0xff]
      %v6143 = vld [vmem:[%s9 + $0xce0] sm:$0xff]
      %v6144 = vld [vmem:[%s9 + $0xce8] sm:$0xff]
      %v6145 = vld [vmem:[%s9 + $0xcf0] sm:$0xff]
      %v6146 = vld [vmem:[%s9 + $0xcf8] sm:$0xff]
      %v6147 = vld [vmem:[%s9 + $0xd00] sm:$0xff]
      %v6148 = vld [vmem:[%s9 + $0xd08] sm:$0xff]
      %v6149 = vld [vmem:[%s9 + $0xd10] sm:$0xff]
      %v6150 = vld [vmem:[%s9 + $0xd18] sm:$0xff]
      %v6151 = vld [vmem:[%s9 + $0xd20] sm:$0xff]
      %v6152 = vld [vmem:[%s9 + $0xd28] sm:$0xff]
      %v6153 = vld [vmem:[%s9 + $0xd30] sm:$0xff]
      %v6154 = vld [vmem:[%s9 + $0xd38] sm:$0xff]
      %v6155 = vld [vmem:[%s9 + $0xd40] sm:$0xff]
      %v6156 = vld [vmem:[%s9 + $0xd48] sm:$0xff]
      %v6157 = vld [vmem:[%s9 + $0xd50] sm:$0xff]
      %v6158 = vld [vmem:[%s9 + $0xd58] sm:$0xff]
      %v6159 = vld [vmem:[%s9 + $0xd60] sm:$0xff]
      %v6160 = vld [vmem:[%s9 + $0xd68] sm:$0xff]
      %v6161 = vld [vmem:[%s9 + $0xd70] sm:$0xff]
      %v6162 = vld [vmem:[%s9 + $0xd78] sm:$0xff]
      %v6163 = vld [vmem:[%s9 + $0xd80] sm:$0xff]
      %v6164 = vld [vmem:[%s9 + $0xd88] sm:$0xff]
      %v6165 = vld [vmem:[%s9 + $0xd90] sm:$0xff]
      %v6166 = vld [vmem:[%s9 + $0xd98] sm:$0xff]
      %v6167 = vld [vmem:[%s9 + $0xda0] sm:$0xff]
      %v6168 = vld [vmem:[%s9 + $0xda8] sm:$0xff]
      %v6169 = vld [vmem:[%s9 + $0xdb0] sm:$0xff]
      %v6170 = vld [vmem:[%s9 + $0xdb8] sm:$0xff]
      %v6171 = vld [vmem:[%s9 + $0xdc0] sm:$0xff]
      %v6172 = vld [vmem:[%s9 + $0xdc8] sm:$0xff]
      %v6173 = vld [vmem:[%s9 + $0xdd0] sm:$0xff]
      %v6174 = vld [vmem:[%s9 + $0xdd8] sm:$0xff]
      %v6175 = vld [vmem:[%s9 + $0xde0] sm:$0xff]
      %v6176 = vld [vmem:[%s9 + $0xde8] sm:$0xff]
      %v6177 = vld [vmem:[%s9 + $0xdf0] sm:$0xff]
      %v6178 = vld [vmem:[%s9 + $0xdf8] sm:$0xff]
      %v6179 = vld [vmem:[%s9 + $0xe00] sm:$0xff]
      %v6180 = vld [vmem:[%s9 + $0xe08] sm:$0xff]
      %v6181 = vld [vmem:[%s9 + $0xe10] sm:$0xff]
      %v6182 = vld [vmem:[%s9 + $0xe18] sm:$0xff]
      %v6183 = vld [vmem:[%s9 + $0xe20] sm:$0xff]
      %v6184 = vld [vmem:[%s9 + $0xe28] sm:$0xff]
      %v6185 = vld [vmem:[%s9 + $0xe30] sm:$0xff]
      %v6186 = vld [vmem:[%s9 + $0xe38] sm:$0xff]
      %v6187 = vld [vmem:[%s9 + $0xe40] sm:$0xff]
      %v6188 = vld [vmem:[%s9 + $0xe48] sm:$0xff]
      %v6189 = vld [vmem:[%s9 + $0xe50] sm:$0xff]
      %v6190 = vld [vmem:[%s9 + $0xe58] sm:$0xff]
      %v6191 = vld [vmem:[%s9 + $0xe60] sm:$0xff]
      %v6192 = vld [vmem:[%s9 + $0xe68] sm:$0xff]
      %v6193 = vld [vmem:[%s9 + $0xe70] sm:$0xff]
      %v6194 = vld [vmem:[%s9 + $0xe78] sm:$0xff]
      %v6195 = vld [vmem:[%s9 + $0xe80] sm:$0xff]
      %v6196 = vld [vmem:[%s9 + $0xe88] sm:$0xff]
      %v6197 = vld [vmem:[%s9 + $0xe90] sm:$0xff]
      %v6198 = vld [vmem:[%s9 + $0xe98] sm:$0xff]
      %v6199 = vld [vmem:[%s9 + $0xea0] sm:$0xff]
      %v6200 = vld [vmem:[%s9 + $0xea8] sm:$0xff]
      %v6201 = vld [vmem:[%s9 + $0xeb0] sm:$0xff]
      %v6202 = vld [vmem:[%s9 + $0xeb8] sm:$0xff]
      %v6203 = vld [vmem:[%s9 + $0xec0] sm:$0xff]
      %v6204 = vld [vmem:[%s9 + $0xec8] sm:$0xff]
      %v6205 = vld [vmem:[%s9 + $0xed0] sm:$0xff]
      %v6206 = vld [vmem:[%s9 + $0xed8] sm:$0xff]
      %v6207 = vld [vmem:[%s9 + $0xee0] sm:$0xff]
      %v6208 = vld [vmem:[%s9 + $0xee8] sm:$0xff]
      %v6209 = vld [vmem:[%s9 + $0xef0] sm:$0xff]
      %v6210 = vld [vmem:[%s9 + $0xef8] sm:$0xff]
      %v6211 = vld [vmem:[%s9 + $0xf00] sm:$0xff]
      %v6212 = vld [vmem:[%s9 + $0xf08] sm:$0xff]
      %v6213 = vld [vmem:[%s9 + $0xf10] sm:$0xff]
      %v6214 = vld [vmem:[%s9 + $0xf18] sm:$0xff]
      %v6215 = vld [vmem:[%s9 + $0xf20] sm:$0xff]
      %v6216 = vld [vmem:[%s9 + $0xf28] sm:$0xff]
      %v6217 = vld [vmem:[%s9 + $0xf30] sm:$0xff]
      %v6218 = vld [vmem:[%s9 + $0xf38] sm:$0xff]
      %v6219 = vld [vmem:[%s9 + $0xf40] sm:$0xff]
      %v6220 = vld [vmem:[%s9 + $0xf48] sm:$0xff]
      %v6221 = vld [vmem:[%s9 + $0xf50] sm:$0xff]
      %v6222 = vld [vmem:[%s9 + $0xf58] sm:$0xff]
      %v6223 = vld [vmem:[%s9 + $0xf60] sm:$0xff]
      %v6224 = vld [vmem:[%s9 + $0xf68] sm:$0xff]
      %v6225 = vld [vmem:[%s9 + $0xf70] sm:$0xff]
      %v6226 = vld [vmem:[%s9 + $0xf78] sm:$0xff]
      %v6227 = vld [vmem:[%s9 + $0xf80] sm:$0xff]
      %v6228 = vld [vmem:[%s9 + $0xf88] sm:$0xff]
      %v6229 = vld [vmem:[%s9 + $0xf90] sm:$0xff]
      %v6230 = vld [vmem:[%s9 + $0xf98] sm:$0xff]
      %v6231 = vld [vmem:[%s9 + $0xfa0] sm:$0xff]
      %v6232 = vld [vmem:[%s9 + $0xfa8] sm:$0xff]
      %v6233 = vld [vmem:[%s9 + $0xfb0] sm:$0xff]
      %v6234 = vld [vmem:[%s9 + $0xfb8] sm:$0xff]
      %v6235 = vld [vmem:[%s9 + $0xfc0] sm:$0xff]
      %v6236 = vld [vmem:[%s9 + $0xfc8] sm:$0xff]
      %v6237 = vld [vmem:[%s9 + $0xfd0] sm:$0xff]
      %v6238 = vld [vmem:[%s9 + $0xfd8] sm:$0xff]
      %v6239 = vld [vmem:[%s9 + $0xfe0] sm:$0xff]
      %v6240 = vld [vmem:[%s9 + $0xfe8] sm:$0xff]
      %v6241 = vld [vmem:[%s9 + $0xff0] sm:$0xff]
      %v6242 = vld [vmem:[%s9 + $0xff8] sm:$0xff]
      %v6755 = vunpack.c.l.b16 %v5731
      %v6756 = vunpack.c.h.b16 %v5731
      %v6757 = vunpack.c.l.b16 %v5732
      %v6758 = vunpack.c.h.b16 %v5732
      %v6759 = vunpack.c.l.b16 %v5733
      %v6760 = vunpack.c.h.b16 %v5733
      %v6761 = vunpack.c.l.b16 %v5734
      %v6762 = vunpack.c.h.b16 %v5734
      %v6763 = vunpack.c.l.b16 %v5735
      %v6764 = vunpack.c.h.b16 %v5735
      %v6765 = vunpack.c.l.b16 %v5736
      %v6766 = vunpack.c.h.b16 %v5736
      %v6767 = vunpack.c.l.b16 %v5737
      %v6768 = vunpack.c.h.b16 %v5737
      %v6769 = vunpack.c.l.b16 %v5738
      %v6770 = vunpack.c.h.b16 %v5738
      %v6771 = vunpack.c.l.b16 %v5739
      %v6772 = vunpack.c.h.b16 %v5739
      %v6773 = vunpack.c.l.b16 %v5740
      %v6774 = vunpack.c.h.b16 %v5740
      %v6775 = vunpack.c.l.b16 %v5741
      %v6776 = vunpack.c.h.b16 %v5741
      %v6777 = vunpack.c.l.b16 %v5742
      %v6778 = vunpack.c.h.b16 %v5742
      %v6779 = vunpack.c.l.b16 %v5743
      %v6780 = vunpack.c.h.b16 %v5743
      %v6781 = vunpack.c.l.b16 %v5744
      %v6782 = vunpack.c.h.b16 %v5744
      %v6783 = vunpack.c.l.b16 %v5745
      %v6784 = vunpack.c.h.b16 %v5745
      %v6785 = vunpack.c.l.b16 %v5746
      %v6786 = vunpack.c.h.b16 %v5746
      %v6787 = vunpack.c.l.b16 %v5747
      %v6788 = vunpack.c.h.b16 %v5747
      %v6789 = vunpack.c.l.b16 %v5748
      %v6790 = vunpack.c.h.b16 %v5748
      %v6791 = vunpack.c.l.b16 %v5749
      %v6792 = vunpack.c.h.b16 %v5749
      %v6793 = vunpack.c.l.b16 %v5750
      %v6794 = vunpack.c.h.b16 %v5750
      %v6795 = vunpack.c.l.b16 %v5751
      %v6796 = vunpack.c.h.b16 %v5751
      %v6797 = vunpack.c.l.b16 %v5752
      %v6798 = vunpack.c.h.b16 %v5752
      %v6799 = vunpack.c.l.b16 %v5753
      %v6800 = vunpack.c.h.b16 %v5753
      %v6801 = vunpack.c.l.b16 %v5754
      %v6802 = vunpack.c.h.b16 %v5754
      %v6803 = vunpack.c.l.b16 %v5755
      %v6804 = vunpack.c.h.b16 %v5755
      %v6805 = vunpack.c.l.b16 %v5756
      %v6806 = vunpack.c.h.b16 %v5756
      %v6807 = vunpack.c.l.b16 %v5757
      %v6808 = vunpack.c.h.b16 %v5757
      %v6809 = vunpack.c.l.b16 %v5758
      %v6810 = vunpack.c.h.b16 %v5758
      %v6811 = vunpack.c.l.b16 %v5759
      %v6812 = vunpack.c.h.b16 %v5759
      %v6813 = vunpack.c.l.b16 %v5760
      %v6814 = vunpack.c.h.b16 %v5760
      %v6815 = vunpack.c.l.b16 %v5761
      %v6816 = vunpack.c.h.b16 %v5761
      %v6817 = vunpack.c.l.b16 %v5762
      %v6818 = vunpack.c.h.b16 %v5762
      %v6819 = vunpack.c.l.b16 %v5763
      %v6820 = vunpack.c.h.b16 %v5763
      %v6821 = vunpack.c.l.b16 %v5764
      %v6822 = vunpack.c.h.b16 %v5764
      %v6823 = vunpack.c.l.b16 %v5765
      %v6824 = vunpack.c.h.b16 %v5765
      %v6825 = vunpack.c.l.b16 %v5766
      %v6826 = vunpack.c.h.b16 %v5766
      %v6827 = vunpack.c.l.b16 %v5767
      %v6828 = vunpack.c.h.b16 %v5767
      %v6829 = vunpack.c.l.b16 %v5768
      %v6830 = vunpack.c.h.b16 %v5768
      %v6831 = vunpack.c.l.b16 %v5769
      %v6832 = vunpack.c.h.b16 %v5769
      %v6833 = vunpack.c.l.b16 %v5770
      %v6834 = vunpack.c.h.b16 %v5770
      %v6835 = vunpack.c.l.b16 %v5771
      %v6836 = vunpack.c.h.b16 %v5771
      %v6837 = vunpack.c.l.b16 %v5772
      %v6838 = vunpack.c.h.b16 %v5772
      %v6839 = vunpack.c.l.b16 %v5773
      %v6840 = vunpack.c.h.b16 %v5773
      %v6841 = vunpack.c.l.b16 %v5774
      %v6842 = vunpack.c.h.b16 %v5774
      %v6843 = vunpack.c.l.b16 %v5775
      %v6844 = vunpack.c.h.b16 %v5775
      %v6845 = vunpack.c.l.b16 %v5776
      %v6846 = vunpack.c.h.b16 %v5776
      %v6847 = vunpack.c.l.b16 %v5777
      %v6848 = vunpack.c.h.b16 %v5777
      %v6849 = vunpack.c.l.b16 %v5778
      %v6850 = vunpack.c.h.b16 %v5778
      %v6851 = vunpack.c.l.b16 %v5779
      %v6852 = vunpack.c.h.b16 %v5779
      %v6853 = vunpack.c.l.b16 %v5780
      %v6854 = vunpack.c.h.b16 %v5780
      %v6855 = vunpack.c.l.b16 %v5781
      %v6856 = vunpack.c.h.b16 %v5781
      %v6857 = vunpack.c.l.b16 %v5782
      %v6858 = vunpack.c.h.b16 %v5782
      %v6859 = vunpack.c.l.b16 %v5783
      %v6860 = vunpack.c.h.b16 %v5783
      %v6861 = vunpack.c.l.b16 %v5784
      %v6862 = vunpack.c.h.b16 %v5784
      %v6863 = vunpack.c.l.b16 %v5785
      %v6864 = vunpack.c.h.b16 %v5785
      %v6865 = vunpack.c.l.b16 %v5786
      %v6866 = vunpack.c.h.b16 %v5786
      %v6867 = vunpack.c.l.b16 %v5787
      %v6868 = vunpack.c.h.b16 %v5787
      %v6869 = vunpack.c.l.b16 %v5788
      %v6870 = vunpack.c.h.b16 %v5788
      %v6871 = vunpack.c.l.b16 %v5789
      %v6872 = vunpack.c.h.b16 %v5789
      %v6873 = vunpack.c.l.b16 %v5790
      %v6874 = vunpack.c.h.b16 %v5790
      %v6875 = vunpack.c.l.b16 %v5791
      %v6876 = vunpack.c.h.b16 %v5791
      %v6877 = vunpack.c.l.b16 %v5792
      %v6878 = vunpack.c.h.b16 %v5792
      %v6879 = vunpack.c.l.b16 %v5793
      %v6880 = vunpack.c.h.b16 %v5793
      %v6881 = vunpack.c.l.b16 %v5794
      %v6882 = vunpack.c.h.b16 %v5794
      %v6883 = vunpack.c.l.b16 %v5795
      %v6884 = vunpack.c.h.b16 %v5795
      %v6885 = vunpack.c.l.b16 %v5796
      %v6886 = vunpack.c.h.b16 %v5796
      %v6887 = vunpack.c.l.b16 %v5797
      %v6888 = vunpack.c.h.b16 %v5797
      %v6889 = vunpack.c.l.b16 %v5798
      %v6890 = vunpack.c.h.b16 %v5798
      %v6891 = vunpack.c.l.b16 %v5799
      %v6892 = vunpack.c.h.b16 %v5799
      %v6893 = vunpack.c.l.b16 %v5800
      %v6894 = vunpack.c.h.b16 %v5800
      %v6895 = vunpack.c.l.b16 %v5801
      %v6896 = vunpack.c.h.b16 %v5801
      %v6897 = vunpack.c.l.b16 %v5802
      %v6898 = vunpack.c.h.b16 %v5802
      %v6899 = vunpack.c.l.b16 %v5803
      %v6900 = vunpack.c.h.b16 %v5803
      %v6901 = vunpack.c.l.b16 %v5804
      %v6902 = vunpack.c.h.b16 %v5804
      %v6903 = vunpack.c.l.b16 %v5805
      %v6904 = vunpack.c.h.b16 %v5805
      %v6905 = vunpack.c.l.b16 %v5806
      %v6906 = vunpack.c.h.b16 %v5806
      %v6907 = vunpack.c.l.b16 %v5807
      %v6908 = vunpack.c.h.b16 %v5807
      %v6909 = vunpack.c.l.b16 %v5808
      %v6910 = vunpack.c.h.b16 %v5808
      %v6911 = vunpack.c.l.b16 %v5809
      %v6912 = vunpack.c.h.b16 %v5809
      %v6913 = vunpack.c.l.b16 %v5810
      %v6914 = vunpack.c.h.b16 %v5810
      %v6915 = vunpack.c.l.b16 %v5811
      %v6916 = vunpack.c.h.b16 %v5811
      %v6917 = vunpack.c.l.b16 %v5812
      %v6918 = vunpack.c.h.b16 %v5812
      %v6919 = vunpack.c.l.b16 %v5813
      %v6920 = vunpack.c.h.b16 %v5813
      %v6921 = vunpack.c.l.b16 %v5814
      %v6922 = vunpack.c.h.b16 %v5814
      %v6923 = vunpack.c.l.b16 %v5815
      %v6924 = vunpack.c.h.b16 %v5815
      %v6925 = vunpack.c.l.b16 %v5816
      %v6926 = vunpack.c.h.b16 %v5816
      %v6927 = vunpack.c.l.b16 %v5817
      %v6928 = vunpack.c.h.b16 %v5817
      %v6929 = vunpack.c.l.b16 %v5818
      %v6930 = vunpack.c.h.b16 %v5818
      %v6931 = vunpack.c.l.b16 %v5819
      %v6932 = vunpack.c.h.b16 %v5819
      %v6933 = vunpack.c.l.b16 %v5820
      %v6934 = vunpack.c.h.b16 %v5820
      %v6935 = vunpack.c.l.b16 %v5821
      %v6936 = vunpack.c.h.b16 %v5821
      %v6937 = vunpack.c.l.b16 %v5822
      %v6938 = vunpack.c.h.b16 %v5822
      %v6939 = vunpack.c.l.b16 %v5823
      %v6940 = vunpack.c.h.b16 %v5823
      %v6941 = vunpack.c.l.b16 %v5824
      %v6942 = vunpack.c.h.b16 %v5824
      %v6943 = vunpack.c.l.b16 %v5825
      %v6944 = vunpack.c.h.b16 %v5825
      %v6945 = vunpack.c.l.b16 %v5826
      %v6946 = vunpack.c.h.b16 %v5826
      %v6947 = vunpack.c.l.b16 %v5827
      %v6948 = vunpack.c.h.b16 %v5827
      %v6949 = vunpack.c.l.b16 %v5828
      %v6950 = vunpack.c.h.b16 %v5828
      %v6951 = vunpack.c.l.b16 %v5829
      %v6952 = vunpack.c.h.b16 %v5829
      %v6953 = vunpack.c.l.b16 %v5830
      %v6954 = vunpack.c.h.b16 %v5830
      %v6955 = vunpack.c.l.b16 %v5831
      %v6956 = vunpack.c.h.b16 %v5831
      %v6957 = vunpack.c.l.b16 %v5832
      %v6958 = vunpack.c.h.b16 %v5832
      %v6959 = vunpack.c.l.b16 %v5833
      %v6960 = vunpack.c.h.b16 %v5833
      %v6961 = vunpack.c.l.b16 %v5834
      %v6962 = vunpack.c.h.b16 %v5834
      %v6963 = vunpack.c.l.b16 %v5835
      %v6964 = vunpack.c.h.b16 %v5835
      %v6965 = vunpack.c.l.b16 %v5836
      %v6966 = vunpack.c.h.b16 %v5836
      %v6967 = vunpack.c.l.b16 %v5837
      %v6968 = vunpack.c.h.b16 %v5837
      %v6969 = vunpack.c.l.b16 %v5838
      %v6970 = vunpack.c.h.b16 %v5838
      %v6971 = vunpack.c.l.b16 %v5839
      %v6972 = vunpack.c.h.b16 %v5839
      %v6973 = vunpack.c.l.b16 %v5840
      %v6974 = vunpack.c.h.b16 %v5840
      %v6975 = vunpack.c.l.b16 %v5841
      %v6976 = vunpack.c.h.b16 %v5841
      %v6977 = vunpack.c.l.b16 %v5842
      %v6978 = vunpack.c.h.b16 %v5842
      %v6979 = vunpack.c.l.b16 %v5843
      %v6980 = vunpack.c.h.b16 %v5843
      %v6981 = vunpack.c.l.b16 %v5844
      %v6982 = vunpack.c.h.b16 %v5844
      %v6983 = vunpack.c.l.b16 %v5845
      %v6984 = vunpack.c.h.b16 %v5845
      %v6985 = vunpack.c.l.b16 %v5846
      %v6986 = vunpack.c.h.b16 %v5846
      %v6987 = vunpack.c.l.b16 %v5847
      %v6988 = vunpack.c.h.b16 %v5847
      %v6989 = vunpack.c.l.b16 %v5848
      %v6990 = vunpack.c.h.b16 %v5848
      %v6991 = vunpack.c.l.b16 %v5849
      %v6992 = vunpack.c.h.b16 %v5849
      %v6993 = vunpack.c.l.b16 %v5850
      %v6994 = vunpack.c.h.b16 %v5850
      %v6995 = vunpack.c.l.b16 %v5851
      %v6996 = vunpack.c.h.b16 %v5851
      %v6997 = vunpack.c.l.b16 %v5852
      %v6998 = vunpack.c.h.b16 %v5852
      %v6999 = vunpack.c.l.b16 %v5853
      %v7000 = vunpack.c.h.b16 %v5853
      %v7001 = vunpack.c.l.b16 %v5854
      %v7002 = vunpack.c.h.b16 %v5854
      %v7003 = vunpack.c.l.b16 %v5855
      %v7004 = vunpack.c.h.b16 %v5855
      %v7005 = vunpack.c.l.b16 %v5856
      %v7006 = vunpack.c.h.b16 %v5856
      %v7007 = vunpack.c.l.b16 %v5857
      %v7008 = vunpack.c.h.b16 %v5857
      %v7009 = vunpack.c.l.b16 %v5858
      %v7010 = vunpack.c.h.b16 %v5858
      %v7011 = vunpack.c.l.b16 %v5859
      %v7012 = vunpack.c.h.b16 %v5859
      %v7013 = vunpack.c.l.b16 %v5860
      %v7014 = vunpack.c.h.b16 %v5860
      %v7015 = vunpack.c.l.b16 %v5861
      %v7016 = vunpack.c.h.b16 %v5861
      %v7017 = vunpack.c.l.b16 %v5862
      %v7018 = vunpack.c.h.b16 %v5862
      %v7019 = vunpack.c.l.b16 %v5863
      %v7020 = vunpack.c.h.b16 %v5863
      %v7021 = vunpack.c.l.b16 %v5864
      %v7022 = vunpack.c.h.b16 %v5864
      %v7023 = vunpack.c.l.b16 %v5865
      %v7024 = vunpack.c.h.b16 %v5865
      %v7025 = vunpack.c.l.b16 %v5866
      %v7026 = vunpack.c.h.b16 %v5866
      %v7027 = vunpack.c.l.b16 %v5867
      %v7028 = vunpack.c.h.b16 %v5867
      %v7029 = vunpack.c.l.b16 %v5868
      %v7030 = vunpack.c.h.b16 %v5868
      %v7031 = vunpack.c.l.b16 %v5869
      %v7032 = vunpack.c.h.b16 %v5869
      %v7033 = vunpack.c.l.b16 %v5870
      %v7034 = vunpack.c.h.b16 %v5870
      %v7035 = vunpack.c.l.b16 %v5871
      %v7036 = vunpack.c.h.b16 %v5871
      %v7037 = vunpack.c.l.b16 %v5872
      %v7038 = vunpack.c.h.b16 %v5872
      %v7039 = vunpack.c.l.b16 %v5873
      %v7040 = vunpack.c.h.b16 %v5873
      %v7041 = vunpack.c.l.b16 %v5874
      %v7042 = vunpack.c.h.b16 %v5874
      %v7043 = vunpack.c.l.b16 %v5875
      %v7044 = vunpack.c.h.b16 %v5875
      %v7045 = vunpack.c.l.b16 %v5876
      %v7046 = vunpack.c.h.b16 %v5876
      %v7047 = vunpack.c.l.b16 %v5877
      %v7048 = vunpack.c.h.b16 %v5877
      %v7049 = vunpack.c.l.b16 %v5878
      %v7050 = vunpack.c.h.b16 %v5878
      %v7051 = vunpack.c.l.b16 %v5879
      %v7052 = vunpack.c.h.b16 %v5879
      %v7053 = vunpack.c.l.b16 %v5880
      %v7054 = vunpack.c.h.b16 %v5880
      %v7055 = vunpack.c.l.b16 %v5881
      %v7056 = vunpack.c.h.b16 %v5881
      %v7057 = vunpack.c.l.b16 %v5882
      %v7058 = vunpack.c.h.b16 %v5882
      %v7059 = vunpack.c.l.b16 %v5883
      %v7060 = vunpack.c.h.b16 %v5883
      %v7061 = vunpack.c.l.b16 %v5884
      %v7062 = vunpack.c.h.b16 %v5884
      %v7063 = vunpack.c.l.b16 %v5885
      %v7064 = vunpack.c.h.b16 %v5885
      %v7065 = vunpack.c.l.b16 %v5886
      %v7066 = vunpack.c.h.b16 %v5886
      %v7067 = vunpack.c.l.b16 %v5887
      %v7068 = vunpack.c.h.b16 %v5887
      %v7069 = vunpack.c.l.b16 %v5888
      %v7070 = vunpack.c.h.b16 %v5888
      %v7071 = vunpack.c.l.b16 %v5889
      %v7072 = vunpack.c.h.b16 %v5889
      %v7073 = vunpack.c.l.b16 %v5890
      %v7074 = vunpack.c.h.b16 %v5890
      %v7075 = vunpack.c.l.b16 %v5891
      %v7076 = vunpack.c.h.b16 %v5891
      %v7077 = vunpack.c.l.b16 %v5892
      %v7078 = vunpack.c.h.b16 %v5892
      %v7079 = vunpack.c.l.b16 %v5893
      %v7080 = vunpack.c.h.b16 %v5893
      %v7081 = vunpack.c.l.b16 %v5894
      %v7082 = vunpack.c.h.b16 %v5894
      %v7083 = vunpack.c.l.b16 %v5895
      %v7084 = vunpack.c.h.b16 %v5895
      %v7085 = vunpack.c.l.b16 %v5896
      %v7086 = vunpack.c.h.b16 %v5896
      %v7087 = vunpack.c.l.b16 %v5897
      %v7088 = vunpack.c.h.b16 %v5897
      %v7089 = vunpack.c.l.b16 %v5898
      %v7090 = vunpack.c.h.b16 %v5898
      %v7091 = vunpack.c.l.b16 %v5899
      %v7092 = vunpack.c.h.b16 %v5899
      %v7093 = vunpack.c.l.b16 %v5900
      %v7094 = vunpack.c.h.b16 %v5900
      %v7095 = vunpack.c.l.b16 %v5901
      %v7096 = vunpack.c.h.b16 %v5901
      %v7097 = vunpack.c.l.b16 %v5902
      %v7098 = vunpack.c.h.b16 %v5902
      %v7099 = vunpack.c.l.b16 %v5903
      %v7100 = vunpack.c.h.b16 %v5903
      %v7101 = vunpack.c.l.b16 %v5904
      %v7102 = vunpack.c.h.b16 %v5904
      %v7103 = vunpack.c.l.b16 %v5905
      %v7104 = vunpack.c.h.b16 %v5905
      %v7105 = vunpack.c.l.b16 %v5906
      %v7106 = vunpack.c.h.b16 %v5906
      %v7107 = vunpack.c.l.b16 %v5907
      %v7108 = vunpack.c.h.b16 %v5907
      %v7109 = vunpack.c.l.b16 %v5908
      %v7110 = vunpack.c.h.b16 %v5908
      %v7111 = vunpack.c.l.b16 %v5909
      %v7112 = vunpack.c.h.b16 %v5909
      %v7113 = vunpack.c.l.b16 %v5910
      %v7114 = vunpack.c.h.b16 %v5910
      %v7115 = vunpack.c.l.b16 %v5911
      %v7116 = vunpack.c.h.b16 %v5911
      %v7117 = vunpack.c.l.b16 %v5912
      %v7118 = vunpack.c.h.b16 %v5912
      %v7119 = vunpack.c.l.b16 %v5913
      %v7120 = vunpack.c.h.b16 %v5913
      %v7121 = vunpack.c.l.b16 %v5914
      %v7122 = vunpack.c.h.b16 %v5914
      %v7123 = vunpack.c.l.b16 %v5915
      %v7124 = vunpack.c.h.b16 %v5915
      %v7125 = vunpack.c.l.b16 %v5916
      %v7126 = vunpack.c.h.b16 %v5916
      %v7127 = vunpack.c.l.b16 %v5917
      %v7128 = vunpack.c.h.b16 %v5917
      %v7129 = vunpack.c.l.b16 %v5918
      %v7130 = vunpack.c.h.b16 %v5918
      %v7131 = vunpack.c.l.b16 %v5919
      %v7132 = vunpack.c.h.b16 %v5919
      %v7133 = vunpack.c.l.b16 %v5920
      %v7134 = vunpack.c.h.b16 %v5920
      %v7135 = vunpack.c.l.b16 %v5921
      %v7136 = vunpack.c.h.b16 %v5921
      %v7137 = vunpack.c.l.b16 %v5922
      %v7138 = vunpack.c.h.b16 %v5922
      %v7139 = vunpack.c.l.b16 %v5923
      %v7140 = vunpack.c.h.b16 %v5923
      %v7141 = vunpack.c.l.b16 %v5924
      %v7142 = vunpack.c.h.b16 %v5924
      %v7143 = vunpack.c.l.b16 %v5925
      %v7144 = vunpack.c.h.b16 %v5925
      %v7145 = vunpack.c.l.b16 %v5926
      %v7146 = vunpack.c.h.b16 %v5926
      %v7147 = vunpack.c.l.b16 %v5927
      %v7148 = vunpack.c.h.b16 %v5927
      %v7149 = vunpack.c.l.b16 %v5928
      %v7150 = vunpack.c.h.b16 %v5928
      %v7151 = vunpack.c.l.b16 %v5929
      %v7152 = vunpack.c.h.b16 %v5929
      %v7153 = vunpack.c.l.b16 %v5930
      %v7154 = vunpack.c.h.b16 %v5930
      %v7155 = vunpack.c.l.b16 %v5931
      %v7156 = vunpack.c.h.b16 %v5931
      %v7157 = vunpack.c.l.b16 %v5932
      %v7158 = vunpack.c.h.b16 %v5932
      %v7159 = vunpack.c.l.b16 %v5933
      %v7160 = vunpack.c.h.b16 %v5933
      %v7161 = vunpack.c.l.b16 %v5934
      %v7162 = vunpack.c.h.b16 %v5934
      %v7163 = vunpack.c.l.b16 %v5935
      %v7164 = vunpack.c.h.b16 %v5935
      %v7165 = vunpack.c.l.b16 %v5936
      %v7166 = vunpack.c.h.b16 %v5936
      %v7167 = vunpack.c.l.b16 %v5937
      %v7168 = vunpack.c.h.b16 %v5937
      %v7169 = vunpack.c.l.b16 %v5938
      %v7170 = vunpack.c.h.b16 %v5938
      %v7171 = vunpack.c.l.b16 %v5939
      %v7172 = vunpack.c.h.b16 %v5939
      %v7173 = vunpack.c.l.b16 %v5940
      %v7174 = vunpack.c.h.b16 %v5940
      %v7175 = vunpack.c.l.b16 %v5941
      %v7176 = vunpack.c.h.b16 %v5941
      %v7177 = vunpack.c.l.b16 %v5942
      %v7178 = vunpack.c.h.b16 %v5942
      %v7179 = vunpack.c.l.b16 %v5943
      %v7180 = vunpack.c.h.b16 %v5943
      %v7181 = vunpack.c.l.b16 %v5944
      %v7182 = vunpack.c.h.b16 %v5944
      %v7183 = vunpack.c.l.b16 %v5945
      %v7184 = vunpack.c.h.b16 %v5945
      %v7185 = vunpack.c.l.b16 %v5946
      %v7186 = vunpack.c.h.b16 %v5946
      %v7187 = vunpack.c.l.b16 %v5947
      %v7188 = vunpack.c.h.b16 %v5947
      %v7189 = vunpack.c.l.b16 %v5948
      %v7190 = vunpack.c.h.b16 %v5948
      %v7191 = vunpack.c.l.b16 %v5949
      %v7192 = vunpack.c.h.b16 %v5949
      %v7193 = vunpack.c.l.b16 %v5950
      %v7194 = vunpack.c.h.b16 %v5950
      %v7195 = vunpack.c.l.b16 %v5951
      %v7196 = vunpack.c.h.b16 %v5951
      %v7197 = vunpack.c.l.b16 %v5952
      %v7198 = vunpack.c.h.b16 %v5952
      %v7199 = vunpack.c.l.b16 %v5953
      %v7200 = vunpack.c.h.b16 %v5953
      %v7201 = vunpack.c.l.b16 %v5954
      %v7202 = vunpack.c.h.b16 %v5954
      %v7203 = vunpack.c.l.b16 %v5955
      %v7204 = vunpack.c.h.b16 %v5955
      %v7205 = vunpack.c.l.b16 %v5956
      %v7206 = vunpack.c.h.b16 %v5956
      %v7207 = vunpack.c.l.b16 %v5957
      %v7208 = vunpack.c.h.b16 %v5957
      %v7209 = vunpack.c.l.b16 %v5958
      %v7210 = vunpack.c.h.b16 %v5958
      %v7211 = vunpack.c.l.b16 %v5959
      %v7212 = vunpack.c.h.b16 %v5959
      %v7213 = vunpack.c.l.b16 %v5960
      %v7214 = vunpack.c.h.b16 %v5960
      %v7215 = vunpack.c.l.b16 %v5961
      %v7216 = vunpack.c.h.b16 %v5961
      %v7217 = vunpack.c.l.b16 %v5962
      %v7218 = vunpack.c.h.b16 %v5962
      %v7219 = vunpack.c.l.b16 %v5963
      %v7220 = vunpack.c.h.b16 %v5963
      %v7221 = vunpack.c.l.b16 %v5964
      %v7222 = vunpack.c.h.b16 %v5964
      %v7223 = vunpack.c.l.b16 %v5965
      %v7224 = vunpack.c.h.b16 %v5965
      %v7225 = vunpack.c.l.b16 %v5966
      %v7226 = vunpack.c.h.b16 %v5966
      %v7227 = vunpack.c.l.b16 %v5967
      %v7228 = vunpack.c.h.b16 %v5967
      %v7229 = vunpack.c.l.b16 %v5968
      %v7230 = vunpack.c.h.b16 %v5968
      %v7231 = vunpack.c.l.b16 %v5969
      %v7232 = vunpack.c.h.b16 %v5969
      %v7233 = vunpack.c.l.b16 %v5970
      %v7234 = vunpack.c.h.b16 %v5970
      %v7235 = vunpack.c.l.b16 %v5971
      %v7236 = vunpack.c.h.b16 %v5971
      %v7237 = vunpack.c.l.b16 %v5972
      %v7238 = vunpack.c.h.b16 %v5972
      %v7239 = vunpack.c.l.b16 %v5973
      %v7240 = vunpack.c.h.b16 %v5973
      %v7241 = vunpack.c.l.b16 %v5974
      %v7242 = vunpack.c.h.b16 %v5974
      %v7243 = vunpack.c.l.b16 %v5975
      %v7244 = vunpack.c.h.b16 %v5975
      %v7245 = vunpack.c.l.b16 %v5976
      %v7246 = vunpack.c.h.b16 %v5976
      %v7247 = vunpack.c.l.b16 %v5977
      %v7248 = vunpack.c.h.b16 %v5977
      %v7249 = vunpack.c.l.b16 %v5978
      %v7250 = vunpack.c.h.b16 %v5978
      %v7251 = vunpack.c.l.b16 %v5979
      %v7252 = vunpack.c.h.b16 %v5979
      %v7253 = vunpack.c.l.b16 %v5980
      %v7254 = vunpack.c.h.b16 %v5980
      %v7255 = vunpack.c.l.b16 %v5981
      %v7256 = vunpack.c.h.b16 %v5981
      %v7257 = vunpack.c.l.b16 %v5982
      %v7258 = vunpack.c.h.b16 %v5982
      %v7259 = vunpack.c.l.b16 %v5983
      %v7260 = vunpack.c.h.b16 %v5983
      %v7261 = vunpack.c.l.b16 %v5984
      %v7262 = vunpack.c.h.b16 %v5984
      %v7263 = vunpack.c.l.b16 %v5985
      %v7264 = vunpack.c.h.b16 %v5985
      %v7265 = vunpack.c.l.b16 %v5986
      %v7266 = vunpack.c.h.b16 %v5986
      %v7267 = vunpack.c.l.b16 %v5987
      %v7268 = vunpack.c.h.b16 %v5987
      %v7269 = vunpack.c.l.b16 %v5988
      %v7270 = vunpack.c.h.b16 %v5988
      %v7271 = vunpack.c.l.b16 %v5989
      %v7272 = vunpack.c.h.b16 %v5989
      %v7273 = vunpack.c.l.b16 %v5990
      %v7274 = vunpack.c.h.b16 %v5990
      %v7275 = vunpack.c.l.b16 %v5991
      %v7276 = vunpack.c.h.b16 %v5991
      %v7277 = vunpack.c.l.b16 %v5992
      %v7278 = vunpack.c.h.b16 %v5992
      %v7279 = vunpack.c.l.b16 %v5993
      %v7280 = vunpack.c.h.b16 %v5993
      %v7281 = vunpack.c.l.b16 %v5994
      %v7282 = vunpack.c.h.b16 %v5994
      %v7283 = vunpack.c.l.b16 %v5995
      %v7284 = vunpack.c.h.b16 %v5995
      %v7285 = vunpack.c.l.b16 %v5996
      %v7286 = vunpack.c.h.b16 %v5996
      %v7287 = vunpack.c.l.b16 %v5997
      %v7288 = vunpack.c.h.b16 %v5997
      %v7289 = vunpack.c.l.b16 %v5998
      %v7290 = vunpack.c.h.b16 %v5998
      %v7291 = vunpack.c.l.b16 %v5999
      %v7292 = vunpack.c.h.b16 %v5999
      %v7293 = vunpack.c.l.b16 %v6000
      %v7294 = vunpack.c.h.b16 %v6000
      %v7295 = vunpack.c.l.b16 %v6001
      %v7296 = vunpack.c.h.b16 %v6001
      %v7297 = vunpack.c.l.b16 %v6002
      %v7298 = vunpack.c.h.b16 %v6002
      %v7299 = vunpack.c.l.b16 %v6003
      %v7300 = vunpack.c.h.b16 %v6003
      %v7301 = vunpack.c.l.b16 %v6004
      %v7302 = vunpack.c.h.b16 %v6004
      %v7303 = vunpack.c.l.b16 %v6005
      %v7304 = vunpack.c.h.b16 %v6005
      %v7305 = vunpack.c.l.b16 %v6006
      %v7306 = vunpack.c.h.b16 %v6006
      %v7307 = vunpack.c.l.b16 %v6007
      %v7308 = vunpack.c.h.b16 %v6007
      %v7309 = vunpack.c.l.b16 %v6008
      %v7310 = vunpack.c.h.b16 %v6008
      %v7311 = vunpack.c.l.b16 %v6009
      %v7312 = vunpack.c.h.b16 %v6009
      %v7313 = vunpack.c.l.b16 %v6010
      %v7314 = vunpack.c.h.b16 %v6010
      %v7315 = vunpack.c.l.b16 %v6011
      %v7316 = vunpack.c.h.b16 %v6011
      %v7317 = vunpack.c.l.b16 %v6012
      %v7318 = vunpack.c.h.b16 %v6012
      %v7319 = vunpack.c.l.b16 %v6013
      %v7320 = vunpack.c.h.b16 %v6013
      %v7321 = vunpack.c.l.b16 %v6014
      %v7322 = vunpack.c.h.b16 %v6014
      %v7323 = vunpack.c.l.b16 %v6015
      %v7324 = vunpack.c.h.b16 %v6015
      %v7325 = vunpack.c.l.b16 %v6016
      %v7326 = vunpack.c.h.b16 %v6016
      %v7327 = vunpack.c.l.b16 %v6017
      %v7328 = vunpack.c.h.b16 %v6017
      %v7329 = vunpack.c.l.b16 %v6018
      %v7330 = vunpack.c.h.b16 %v6018
      %v7331 = vunpack.c.l.b16 %v6019
      %v7332 = vunpack.c.h.b16 %v6019
      %v7333 = vunpack.c.l.b16 %v6020
      %v7334 = vunpack.c.h.b16 %v6020
      %v7335 = vunpack.c.l.b16 %v6021
      %v7336 = vunpack.c.h.b16 %v6021
      %v7337 = vunpack.c.l.b16 %v6022
      %v7338 = vunpack.c.h.b16 %v6022
      %v7339 = vunpack.c.l.b16 %v6023
      %v7340 = vunpack.c.h.b16 %v6023
      %v7341 = vunpack.c.l.b16 %v6024
      %v7342 = vunpack.c.h.b16 %v6024
      %v7343 = vunpack.c.l.b16 %v6025
      %v7344 = vunpack.c.h.b16 %v6025
      %v7345 = vunpack.c.l.b16 %v6026
      %v7346 = vunpack.c.h.b16 %v6026
      %v7347 = vunpack.c.l.b16 %v6027
      %v7348 = vunpack.c.h.b16 %v6027
      %v7349 = vunpack.c.l.b16 %v6028
      %v7350 = vunpack.c.h.b16 %v6028
      %v7351 = vunpack.c.l.b16 %v6029
      %v7352 = vunpack.c.h.b16 %v6029
      %v7353 = vunpack.c.l.b16 %v6030
      %v7354 = vunpack.c.h.b16 %v6030
      %v7355 = vunpack.c.l.b16 %v6031
      %v7356 = vunpack.c.h.b16 %v6031
      %v7357 = vunpack.c.l.b16 %v6032
      %v7358 = vunpack.c.h.b16 %v6032
      %v7359 = vunpack.c.l.b16 %v6033
      %v7360 = vunpack.c.h.b16 %v6033
      %v7361 = vunpack.c.l.b16 %v6034
      %v7362 = vunpack.c.h.b16 %v6034
      %v7363 = vunpack.c.l.b16 %v6035
      %v7364 = vunpack.c.h.b16 %v6035
      %v7365 = vunpack.c.l.b16 %v6036
      %v7366 = vunpack.c.h.b16 %v6036
      %v7367 = vunpack.c.l.b16 %v6037
      %v7368 = vunpack.c.h.b16 %v6037
      %v7369 = vunpack.c.l.b16 %v6038
      %v7370 = vunpack.c.h.b16 %v6038
      %v7371 = vunpack.c.l.b16 %v6039
      %v7372 = vunpack.c.h.b16 %v6039
      %v7373 = vunpack.c.l.b16 %v6040
      %v7374 = vunpack.c.h.b16 %v6040
      %v7375 = vunpack.c.l.b16 %v6041
      %v7376 = vunpack.c.h.b16 %v6041
      %v7377 = vunpack.c.l.b16 %v6042
      %v7378 = vunpack.c.h.b16 %v6042
      %v7379 = vunpack.c.l.b16 %v6043
      %v7380 = vunpack.c.h.b16 %v6043
      %v7381 = vunpack.c.l.b16 %v6044
      %v7382 = vunpack.c.h.b16 %v6044
      %v7383 = vunpack.c.l.b16 %v6045
      %v7384 = vunpack.c.h.b16 %v6045
      %v7385 = vunpack.c.l.b16 %v6046
      %v7386 = vunpack.c.h.b16 %v6046
      %v7387 = vunpack.c.l.b16 %v6047
      %v7388 = vunpack.c.h.b16 %v6047
      %v7389 = vunpack.c.l.b16 %v6048
      %v7390 = vunpack.c.h.b16 %v6048
      %v7391 = vunpack.c.l.b16 %v6049
      %v7392 = vunpack.c.h.b16 %v6049
      %v7393 = vunpack.c.l.b16 %v6050
      %v7394 = vunpack.c.h.b16 %v6050
      %v7395 = vunpack.c.l.b16 %v6051
      %v7396 = vunpack.c.h.b16 %v6051
      %v7397 = vunpack.c.l.b16 %v6052
      %v7398 = vunpack.c.h.b16 %v6052
      %v7399 = vunpack.c.l.b16 %v6053
      %v7400 = vunpack.c.h.b16 %v6053
      %v7401 = vunpack.c.l.b16 %v6054
      %v7402 = vunpack.c.h.b16 %v6054
      %v7403 = vunpack.c.l.b16 %v6055
      %v7404 = vunpack.c.h.b16 %v6055
      %v7405 = vunpack.c.l.b16 %v6056
      %v7406 = vunpack.c.h.b16 %v6056
      %v7407 = vunpack.c.l.b16 %v6057
      %v7408 = vunpack.c.h.b16 %v6057
      %v7409 = vunpack.c.l.b16 %v6058
      %v7410 = vunpack.c.h.b16 %v6058
      %v7411 = vunpack.c.l.b16 %v6059
      %v7412 = vunpack.c.h.b16 %v6059
      %v7413 = vunpack.c.l.b16 %v6060
      %v7414 = vunpack.c.h.b16 %v6060
      %v7415 = vunpack.c.l.b16 %v6061
      %v7416 = vunpack.c.h.b16 %v6061
      %v7417 = vunpack.c.l.b16 %v6062
      %v7418 = vunpack.c.h.b16 %v6062
      %v7419 = vunpack.c.l.b16 %v6063
      %v7420 = vunpack.c.h.b16 %v6063
      %v7421 = vunpack.c.l.b16 %v6064
      %v7422 = vunpack.c.h.b16 %v6064
      %v7423 = vunpack.c.l.b16 %v6065
      %v7424 = vunpack.c.h.b16 %v6065
      %v7425 = vunpack.c.l.b16 %v6066
      %v7426 = vunpack.c.h.b16 %v6066
      %v7427 = vunpack.c.l.b16 %v6067
      %v7428 = vunpack.c.h.b16 %v6067
      %v7429 = vunpack.c.l.b16 %v6068
      %v7430 = vunpack.c.h.b16 %v6068
      %v7431 = vunpack.c.l.b16 %v6069
      %v7432 = vunpack.c.h.b16 %v6069
      %v7433 = vunpack.c.l.b16 %v6070
      %v7434 = vunpack.c.h.b16 %v6070
      %v7435 = vunpack.c.l.b16 %v6071
      %v7436 = vunpack.c.h.b16 %v6071
      %v7437 = vunpack.c.l.b16 %v6072
      %v7438 = vunpack.c.h.b16 %v6072
      %v7439 = vunpack.c.l.b16 %v6073
      %v7440 = vunpack.c.h.b16 %v6073
      %v7441 = vunpack.c.l.b16 %v6074
      %v7442 = vunpack.c.h.b16 %v6074
      %v7443 = vunpack.c.l.b16 %v6075
      %v7444 = vunpack.c.h.b16 %v6075
      %v7445 = vunpack.c.l.b16 %v6076
      %v7446 = vunpack.c.h.b16 %v6076
      %v7447 = vunpack.c.l.b16 %v6077
      %v7448 = vunpack.c.h.b16 %v6077
      %v7449 = vunpack.c.l.b16 %v6078
      %v7450 = vunpack.c.h.b16 %v6078
      %v7451 = vunpack.c.l.b16 %v6079
      %v7452 = vunpack.c.h.b16 %v6079
      %v7453 = vunpack.c.l.b16 %v6080
      %v7454 = vunpack.c.h.b16 %v6080
      %v7455 = vunpack.c.l.b16 %v6081
      %v7456 = vunpack.c.h.b16 %v6081
      %v7457 = vunpack.c.l.b16 %v6082
      %v7458 = vunpack.c.h.b16 %v6082
      %v7459 = vunpack.c.l.b16 %v6083
      %v7460 = vunpack.c.h.b16 %v6083
      %v7461 = vunpack.c.l.b16 %v6084
      %v7462 = vunpack.c.h.b16 %v6084
      %v7463 = vunpack.c.l.b16 %v6085
      %v7464 = vunpack.c.h.b16 %v6085
      %v7465 = vunpack.c.l.b16 %v6086
      %v7466 = vunpack.c.h.b16 %v6086
      %v7467 = vunpack.c.l.b16 %v6087
      %v7468 = vunpack.c.h.b16 %v6087
      %v7469 = vunpack.c.l.b16 %v6088
      %v7470 = vunpack.c.h.b16 %v6088
      %v7471 = vunpack.c.l.b16 %v6089
      %v7472 = vunpack.c.h.b16 %v6089
      %v7473 = vunpack.c.l.b16 %v6090
      %v7474 = vunpack.c.h.b16 %v6090
      %v7475 = vunpack.c.l.b16 %v6091
      %v7476 = vunpack.c.h.b16 %v6091
      %v7477 = vunpack.c.l.b16 %v6092
      %v7478 = vunpack.c.h.b16 %v6092
      %v7479 = vunpack.c.l.b16 %v6093
      %v7480 = vunpack.c.h.b16 %v6093
      %v7481 = vunpack.c.l.b16 %v6094
      %v7482 = vunpack.c.h.b16 %v6094
      %v7483 = vunpack.c.l.b16 %v6095
      %v7484 = vunpack.c.h.b16 %v6095
      %v7485 = vunpack.c.l.b16 %v6096
      %v7486 = vunpack.c.h.b16 %v6096
      %v7487 = vunpack.c.l.b16 %v6097
      %v7488 = vunpack.c.h.b16 %v6097
      %v7489 = vunpack.c.l.b16 %v6098
      %v7490 = vunpack.c.h.b16 %v6098
      %v7491 = vunpack.c.l.b16 %v6099
      %v7492 = vunpack.c.h.b16 %v6099
      %v7493 = vunpack.c.l.b16 %v6100
      %v7494 = vunpack.c.h.b16 %v6100
      %v7495 = vunpack.c.l.b16 %v6101
      %v7496 = vunpack.c.h.b16 %v6101
      %v7497 = vunpack.c.l.b16 %v6102
      %v7498 = vunpack.c.h.b16 %v6102
      %v7499 = vunpack.c.l.b16 %v6103
      %v7500 = vunpack.c.h.b16 %v6103
      %v7501 = vunpack.c.l.b16 %v6104
      %v7502 = vunpack.c.h.b16 %v6104
      %v7503 = vunpack.c.l.b16 %v6105
      %v7504 = vunpack.c.h.b16 %v6105
      %v7505 = vunpack.c.l.b16 %v6106
      %v7506 = vunpack.c.h.b16 %v6106
      %v7507 = vunpack.c.l.b16 %v6107
      %v7508 = vunpack.c.h.b16 %v6107
      %v7509 = vunpack.c.l.b16 %v6108
      %v7510 = vunpack.c.h.b16 %v6108
      %v7511 = vunpack.c.l.b16 %v6109
      %v7512 = vunpack.c.h.b16 %v6109
      %v7513 = vunpack.c.l.b16 %v6110
      %v7514 = vunpack.c.h.b16 %v6110
      %v7515 = vunpack.c.l.b16 %v6111
      %v7516 = vunpack.c.h.b16 %v6111
      %v7517 = vunpack.c.l.b16 %v6112
      %v7518 = vunpack.c.h.b16 %v6112
      %v7519 = vunpack.c.l.b16 %v6113
      %v7520 = vunpack.c.h.b16 %v6113
      %v7521 = vunpack.c.l.b16 %v6114
      %v7522 = vunpack.c.h.b16 %v6114
      %v7523 = vunpack.c.l.b16 %v6115
      %v7524 = vunpack.c.h.b16 %v6115
      %v7525 = vunpack.c.l.b16 %v6116
      %v7526 = vunpack.c.h.b16 %v6116
      %v7527 = vunpack.c.l.b16 %v6117
      %v7528 = vunpack.c.h.b16 %v6117
      %v7529 = vunpack.c.l.b16 %v6118
      %v7530 = vunpack.c.h.b16 %v6118
      %v7531 = vunpack.c.l.b16 %v6119
      %v7532 = vunpack.c.h.b16 %v6119
      %v7533 = vunpack.c.l.b16 %v6120
      %v7534 = vunpack.c.h.b16 %v6120
      %v7535 = vunpack.c.l.b16 %v6121
      %v7536 = vunpack.c.h.b16 %v6121
      %v7537 = vunpack.c.l.b16 %v6122
      %v7538 = vunpack.c.h.b16 %v6122
      %v7539 = vunpack.c.l.b16 %v6123
      %v7540 = vunpack.c.h.b16 %v6123
      %v7541 = vunpack.c.l.b16 %v6124
      %v7542 = vunpack.c.h.b16 %v6124
      %v7543 = vunpack.c.l.b16 %v6125
      %v7544 = vunpack.c.h.b16 %v6125
      %v7545 = vunpack.c.l.b16 %v6126
      %v7546 = vunpack.c.h.b16 %v6126
      %v7547 = vunpack.c.l.b16 %v6127
      %v7548 = vunpack.c.h.b16 %v6127
      %v7549 = vunpack.c.l.b16 %v6128
      %v7550 = vunpack.c.h.b16 %v6128
      %v7551 = vunpack.c.l.b16 %v6129
      %v7552 = vunpack.c.h.b16 %v6129
      %v7553 = vunpack.c.l.b16 %v6130
      %v7554 = vunpack.c.h.b16 %v6130
      %v7555 = vunpack.c.l.b16 %v6131
      %v7556 = vunpack.c.h.b16 %v6131
      %v7557 = vunpack.c.l.b16 %v6132
      %v7558 = vunpack.c.h.b16 %v6132
      %v7559 = vunpack.c.l.b16 %v6133
      %v7560 = vunpack.c.h.b16 %v6133
      %v7561 = vunpack.c.l.b16 %v6134
      %v7562 = vunpack.c.h.b16 %v6134
      %v7563 = vunpack.c.l.b16 %v6135
      %v7564 = vunpack.c.h.b16 %v6135
      %v7565 = vunpack.c.l.b16 %v6136
      %v7566 = vunpack.c.h.b16 %v6136
      %v7567 = vunpack.c.l.b16 %v6137
      %v7568 = vunpack.c.h.b16 %v6137
      %v7569 = vunpack.c.l.b16 %v6138
      %v7570 = vunpack.c.h.b16 %v6138
      %v7571 = vunpack.c.l.b16 %v6139
      %v7572 = vunpack.c.h.b16 %v6139
      %v7573 = vunpack.c.l.b16 %v6140
      %v7574 = vunpack.c.h.b16 %v6140
      %v7575 = vunpack.c.l.b16 %v6141
      %v7576 = vunpack.c.h.b16 %v6141
      %v7577 = vunpack.c.l.b16 %v6142
      %v7578 = vunpack.c.h.b16 %v6142
      %v7579 = vunpack.c.l.b16 %v6143
      %v7580 = vunpack.c.h.b16 %v6143
      %v7581 = vunpack.c.l.b16 %v6144
      %v7582 = vunpack.c.h.b16 %v6144
      %v7583 = vunpack.c.l.b16 %v6145
      %v7584 = vunpack.c.h.b16 %v6145
      %v7585 = vunpack.c.l.b16 %v6146
      %v7586 = vunpack.c.h.b16 %v6146
      %v7587 = vunpack.c.l.b16 %v6147
      %v7588 = vunpack.c.h.b16 %v6147
      %v7589 = vunpack.c.l.b16 %v6148
      %v7590 = vunpack.c.h.b16 %v6148
      %v7591 = vunpack.c.l.b16 %v6149
      %v7592 = vunpack.c.h.b16 %v6149
      %v7593 = vunpack.c.l.b16 %v6150
      %v7594 = vunpack.c.h.b16 %v6150
      %v7595 = vunpack.c.l.b16 %v6151
      %v7596 = vunpack.c.h.b16 %v6151
      %v7597 = vunpack.c.l.b16 %v6152
      %v7598 = vunpack.c.h.b16 %v6152
      %v7599 = vunpack.c.l.b16 %v6153
      %v7600 = vunpack.c.h.b16 %v6153
      %v7601 = vunpack.c.l.b16 %v6154
      %v7602 = vunpack.c.h.b16 %v6154
      %v7603 = vunpack.c.l.b16 %v6155
      %v7604 = vunpack.c.h.b16 %v6155
      %v7605 = vunpack.c.l.b16 %v6156
      %v7606 = vunpack.c.h.b16 %v6156
      %v7607 = vunpack.c.l.b16 %v6157
      %v7608 = vunpack.c.h.b16 %v6157
      %v7609 = vunpack.c.l.b16 %v6158
      %v7610 = vunpack.c.h.b16 %v6158
      %v7611 = vunpack.c.l.b16 %v6159
      %v7612 = vunpack.c.h.b16 %v6159
      %v7613 = vunpack.c.l.b16 %v6160
      %v7614 = vunpack.c.h.b16 %v6160
      %v7615 = vunpack.c.l.b16 %v6161
      %v7616 = vunpack.c.h.b16 %v6161
      %v7617 = vunpack.c.l.b16 %v6162
      %v7618 = vunpack.c.h.b16 %v6162
      %v7619 = vunpack.c.l.b16 %v6163
      %v7620 = vunpack.c.h.b16 %v6163
      %v7621 = vunpack.c.l.b16 %v6164
      %v7622 = vunpack.c.h.b16 %v6164
      %v7623 = vunpack.c.l.b16 %v6165
      %v7624 = vunpack.c.h.b16 %v6165
      %v7625 = vunpack.c.l.b16 %v6166
      %v7626 = vunpack.c.h.b16 %v6166
      %v7627 = vunpack.c.l.b16 %v6167
      %v7628 = vunpack.c.h.b16 %v6167
      %v7629 = vunpack.c.l.b16 %v6168
      %v7630 = vunpack.c.h.b16 %v6168
      %v7631 = vunpack.c.l.b16 %v6169
      %v7632 = vunpack.c.h.b16 %v6169
      %v7633 = vunpack.c.l.b16 %v6170
      %v7634 = vunpack.c.h.b16 %v6170
      %v7635 = vunpack.c.l.b16 %v6171
      %v7636 = vunpack.c.h.b16 %v6171
      %v7637 = vunpack.c.l.b16 %v6172
      %v7638 = vunpack.c.h.b16 %v6172
      %v7639 = vunpack.c.l.b16 %v6173
      %v7640 = vunpack.c.h.b16 %v6173
      %v7641 = vunpack.c.l.b16 %v6174
      %v7642 = vunpack.c.h.b16 %v6174
      %v7643 = vunpack.c.l.b16 %v6175
      %v7644 = vunpack.c.h.b16 %v6175
      %v7645 = vunpack.c.l.b16 %v6176
      %v7646 = vunpack.c.h.b16 %v6176
      %v7647 = vunpack.c.l.b16 %v6177
      %v7648 = vunpack.c.h.b16 %v6177
      %v7649 = vunpack.c.l.b16 %v6178
      %v7650 = vunpack.c.h.b16 %v6178
      %v7651 = vunpack.c.l.b16 %v6179
      %v7652 = vunpack.c.h.b16 %v6179
      %v7653 = vunpack.c.l.b16 %v6180
      %v7654 = vunpack.c.h.b16 %v6180
      %v7655 = vunpack.c.l.b16 %v6181
      %v7656 = vunpack.c.h.b16 %v6181
      %v7657 = vunpack.c.l.b16 %v6182
      %v7658 = vunpack.c.h.b16 %v6182
      %v7659 = vunpack.c.l.b16 %v6183
      %v7660 = vunpack.c.h.b16 %v6183
      %v7661 = vunpack.c.l.b16 %v6184
      %v7662 = vunpack.c.h.b16 %v6184
      %v7663 = vunpack.c.l.b16 %v6185
      %v7664 = vunpack.c.h.b16 %v6185
      %v7665 = vunpack.c.l.b16 %v6186
      %v7666 = vunpack.c.h.b16 %v6186
      %v7667 = vunpack.c.l.b16 %v6187
      %v7668 = vunpack.c.h.b16 %v6187
      %v7669 = vunpack.c.l.b16 %v6188
      %v7670 = vunpack.c.h.b16 %v6188
      %v7671 = vunpack.c.l.b16 %v6189
      %v7672 = vunpack.c.h.b16 %v6189
      %v7673 = vunpack.c.l.b16 %v6190
      %v7674 = vunpack.c.h.b16 %v6190
      %v7675 = vunpack.c.l.b16 %v6191
      %v7676 = vunpack.c.h.b16 %v6191
      %v7677 = vunpack.c.l.b16 %v6192
      %v7678 = vunpack.c.h.b16 %v6192
      %v7679 = vunpack.c.l.b16 %v6193
      %v7680 = vunpack.c.h.b16 %v6193
      %v7681 = vunpack.c.l.b16 %v6194
      %v7682 = vunpack.c.h.b16 %v6194
      %v7683 = vunpack.c.l.b16 %v6195
      %v7684 = vunpack.c.h.b16 %v6195
      %v7685 = vunpack.c.l.b16 %v6196
      %v7686 = vunpack.c.h.b16 %v6196
      %v7687 = vunpack.c.l.b16 %v6197
      %v7688 = vunpack.c.h.b16 %v6197
      %v7689 = vunpack.c.l.b16 %v6198
      %v7690 = vunpack.c.h.b16 %v6198
      %v7691 = vunpack.c.l.b16 %v6199
      %v7692 = vunpack.c.h.b16 %v6199
      %v7693 = vunpack.c.l.b16 %v6200
      %v7694 = vunpack.c.h.b16 %v6200
      %v7695 = vunpack.c.l.b16 %v6201
      %v7696 = vunpack.c.h.b16 %v6201
      %v7697 = vunpack.c.l.b16 %v6202
      %v7698 = vunpack.c.h.b16 %v6202
      %v7699 = vunpack.c.l.b16 %v6203
      %v7700 = vunpack.c.h.b16 %v6203
      %v7701 = vunpack.c.l.b16 %v6204
      %v7702 = vunpack.c.h.b16 %v6204
      %v7703 = vunpack.c.l.b16 %v6205
      %v7704 = vunpack.c.h.b16 %v6205
      %v7705 = vunpack.c.l.b16 %v6206
      %v7706 = vunpack.c.h.b16 %v6206
      %v7707 = vunpack.c.l.b16 %v6207
      %v7708 = vunpack.c.h.b16 %v6207
      %v7709 = vunpack.c.l.b16 %v6208
      %v7710 = vunpack.c.h.b16 %v6208
      %v7711 = vunpack.c.l.b16 %v6209
      %v7712 = vunpack.c.h.b16 %v6209
      %v7713 = vunpack.c.l.b16 %v6210
      %v7714 = vunpack.c.h.b16 %v6210
      %v7715 = vunpack.c.l.b16 %v6211
      %v7716 = vunpack.c.h.b16 %v6211
      %v7717 = vunpack.c.l.b16 %v6212
      %v7718 = vunpack.c.h.b16 %v6212
      %v7719 = vunpack.c.l.b16 %v6213
      %v7720 = vunpack.c.h.b16 %v6213
      %v7721 = vunpack.c.l.b16 %v6214
      %v7722 = vunpack.c.h.b16 %v6214
      %v7723 = vunpack.c.l.b16 %v6215
      %v7724 = vunpack.c.h.b16 %v6215
      %v7725 = vunpack.c.l.b16 %v6216
      %v7726 = vunpack.c.h.b16 %v6216
      %v7727 = vunpack.c.l.b16 %v6217
      %v7728 = vunpack.c.h.b16 %v6217
      %v7729 = vunpack.c.l.b16 %v6218
      %v7730 = vunpack.c.h.b16 %v6218
      %v7731 = vunpack.c.l.b16 %v6219
      %v7732 = vunpack.c.h.b16 %v6219
      %v7733 = vunpack.c.l.b16 %v6220
      %v7734 = vunpack.c.h.b16 %v6220
      %v7735 = vunpack.c.l.b16 %v6221
      %v7736 = vunpack.c.h.b16 %v6221
      %v7737 = vunpack.c.l.b16 %v6222
      %v7738 = vunpack.c.h.b16 %v6222
      %v7739 = vunpack.c.l.b16 %v6223
      %v7740 = vunpack.c.h.b16 %v6223
      %v7741 = vunpack.c.l.b16 %v6224
      %v7742 = vunpack.c.h.b16 %v6224
      %v7743 = vunpack.c.l.b16 %v6225
      %v7744 = vunpack.c.h.b16 %v6225
      %v7745 = vunpack.c.l.b16 %v6226
      %v7746 = vunpack.c.h.b16 %v6226
      %v7747 = vunpack.c.l.b16 %v6227
      %v7748 = vunpack.c.h.b16 %v6227
      %v7749 = vunpack.c.l.b16 %v6228
      %v7750 = vunpack.c.h.b16 %v6228
      %v7751 = vunpack.c.l.b16 %v6229
      %v7752 = vunpack.c.h.b16 %v6229
      %v7753 = vunpack.c.l.b16 %v6230
      %v7754 = vunpack.c.h.b16 %v6230
      %v7755 = vunpack.c.l.b16 %v6231
      %v7756 = vunpack.c.h.b16 %v6231
      %v7757 = vunpack.c.l.b16 %v6232
      %v7758 = vunpack.c.h.b16 %v6232
      %v7759 = vunpack.c.l.b16 %v6233
      %v7760 = vunpack.c.h.b16 %v6233
      %v7761 = vunpack.c.l.b16 %v6234
      %v7762 = vunpack.c.h.b16 %v6234
      %v7763 = vunpack.c.l.b16 %v6235
      %v7764 = vunpack.c.h.b16 %v6235
      %v7765 = vunpack.c.l.b16 %v6236
      %v7766 = vunpack.c.h.b16 %v6236
      %v7767 = vunpack.c.l.b16 %v6237
      %v7768 = vunpack.c.h.b16 %v6237
      %v7769 = vunpack.c.l.b16 %v6238
      %v7770 = vunpack.c.h.b16 %v6238
      %v7771 = vunpack.c.l.b16 %v6239
      %v7772 = vunpack.c.h.b16 %v6239
      %v7773 = vunpack.c.l.b16 %v6240
      %v7774 = vunpack.c.h.b16 %v6240
      %v7775 = vunpack.c.l.b16 %v6241
      %v7776 = vunpack.c.h.b16 %v6241
      %v7777 = vunpack.c.l.b16 %v6242
      %v7778 = vunpack.c.h.b16 %v6242
      %v7779 = vpack.c.b16 %v6787, %v6755
      %v7780 = vpack.c.b16 %v6788, %v6756
      %v7781 = vpack.c.b16 %v6789, %v6757
      %v7782 = vpack.c.b16 %v6790, %v6758
      %v7783 = vpack.c.b16 %v6791, %v6759
      %v7784 = vpack.c.b16 %v6792, %v6760
      %v7785 = vpack.c.b16 %v6793, %v6761
      %v7786 = vpack.c.b16 %v6794, %v6762
      %v7787 = vpack.c.b16 %v6795, %v6763
      %v7788 = vpack.c.b16 %v6796, %v6764
      %v7789 = vpack.c.b16 %v6797, %v6765
      %v7790 = vpack.c.b16 %v6798, %v6766
      %v7791 = vpack.c.b16 %v6799, %v6767
      %v7792 = vpack.c.b16 %v6800, %v6768
      %v7793 = vpack.c.b16 %v6801, %v6769
      %v7794 = vpack.c.b16 %v6802, %v6770
      %v7795 = vpack.c.b16 %v6803, %v6771
      %v7796 = vpack.c.b16 %v6804, %v6772
      %v7797 = vpack.c.b16 %v6805, %v6773
      %v7798 = vpack.c.b16 %v6806, %v6774
      %v7799 = vpack.c.b16 %v6807, %v6775
      %v7800 = vpack.c.b16 %v6808, %v6776
      %v7801 = vpack.c.b16 %v6809, %v6777
      %v7802 = vpack.c.b16 %v6810, %v6778
      %v7803 = vpack.c.b16 %v6811, %v6779
      %v7804 = vpack.c.b16 %v6812, %v6780
      %v7805 = vpack.c.b16 %v6813, %v6781
      %v7806 = vpack.c.b16 %v6814, %v6782
      %v7807 = vpack.c.b16 %v6815, %v6783
      %v7808 = vpack.c.b16 %v6816, %v6784
      %v7809 = vpack.c.b16 %v6817, %v6785
      %v7810 = vpack.c.b16 %v6818, %v6786
      %v7811 = vpack.c.b16 %v6851, %v6819
      %v7812 = vpack.c.b16 %v6852, %v6820
      %v7813 = vpack.c.b16 %v6853, %v6821
      %v7814 = vpack.c.b16 %v6854, %v6822
      %v7815 = vpack.c.b16 %v6855, %v6823
      %v7816 = vpack.c.b16 %v6856, %v6824
      %v7817 = vpack.c.b16 %v6857, %v6825
      %v7818 = vpack.c.b16 %v6858, %v6826
      %v7819 = vpack.c.b16 %v6859, %v6827
      %v7820 = vpack.c.b16 %v6860, %v6828
      %v7821 = vpack.c.b16 %v6861, %v6829
      %v7822 = vpack.c.b16 %v6862, %v6830
      %v7823 = vpack.c.b16 %v6863, %v6831
      %v7824 = vpack.c.b16 %v6864, %v6832
      %v7825 = vpack.c.b16 %v6865, %v6833
      %v7826 = vpack.c.b16 %v6866, %v6834
      %v7827 = vpack.c.b16 %v6867, %v6835
      %v7828 = vpack.c.b16 %v6868, %v6836
      %v7829 = vpack.c.b16 %v6869, %v6837
      %v7830 = vpack.c.b16 %v6870, %v6838
      %v7831 = vpack.c.b16 %v6871, %v6839
      %v7832 = vpack.c.b16 %v6872, %v6840
      %v7833 = vpack.c.b16 %v6873, %v6841
      %v7834 = vpack.c.b16 %v6874, %v6842
      %v7835 = vpack.c.b16 %v6875, %v6843
      %v7836 = vpack.c.b16 %v6876, %v6844
      %v7837 = vpack.c.b16 %v6877, %v6845
      %v7838 = vpack.c.b16 %v6878, %v6846
      %v7839 = vpack.c.b16 %v6879, %v6847
      %v7840 = vpack.c.b16 %v6880, %v6848
      %v7841 = vpack.c.b16 %v6881, %v6849
      %v7842 = vpack.c.b16 %v6882, %v6850
      %v7843 = vpack.c.b16 %v6915, %v6883
      %v7844 = vpack.c.b16 %v6916, %v6884
      %v7845 = vpack.c.b16 %v6917, %v6885
      %v7846 = vpack.c.b16 %v6918, %v6886
      %v7847 = vpack.c.b16 %v6919, %v6887
      %v7848 = vpack.c.b16 %v6920, %v6888
      %v7849 = vpack.c.b16 %v6921, %v6889
      %v7850 = vpack.c.b16 %v6922, %v6890
      %v7851 = vpack.c.b16 %v6923, %v6891
      %v7852 = vpack.c.b16 %v6924, %v6892
      %v7853 = vpack.c.b16 %v6925, %v6893
      %v7854 = vpack.c.b16 %v6926, %v6894
      %v7855 = vpack.c.b16 %v6927, %v6895
      %v7856 = vpack.c.b16 %v6928, %v6896
      %v7857 = vpack.c.b16 %v6929, %v6897
      %v7858 = vpack.c.b16 %v6930, %v6898
      %v7859 = vpack.c.b16 %v6931, %v6899
      %v7860 = vpack.c.b16 %v6932, %v6900
      %v7861 = vpack.c.b16 %v6933, %v6901
      %v7862 = vpack.c.b16 %v6934, %v6902
      %v7863 = vpack.c.b16 %v6935, %v6903
      %v7864 = vpack.c.b16 %v6936, %v6904
      %v7865 = vpack.c.b16 %v6937, %v6905
      %v7866 = vpack.c.b16 %v6938, %v6906
      %v7867 = vpack.c.b16 %v6939, %v6907
      %v7868 = vpack.c.b16 %v6940, %v6908
      %v7869 = vpack.c.b16 %v6941, %v6909
      %v7870 = vpack.c.b16 %v6942, %v6910
      %v7871 = vpack.c.b16 %v6943, %v6911
      %v7872 = vpack.c.b16 %v6944, %v6912
      %v7873 = vpack.c.b16 %v6945, %v6913
      %v7874 = vpack.c.b16 %v6946, %v6914
      %v7875 = vpack.c.b16 %v6979, %v6947
      %v7876 = vpack.c.b16 %v6980, %v6948
      %v7877 = vpack.c.b16 %v6981, %v6949
      %v7878 = vpack.c.b16 %v6982, %v6950
      %v7879 = vpack.c.b16 %v6983, %v6951
      %v7880 = vpack.c.b16 %v6984, %v6952
      %v7881 = vpack.c.b16 %v6985, %v6953
      %v7882 = vpack.c.b16 %v6986, %v6954
      %v7883 = vpack.c.b16 %v6987, %v6955
      %v7884 = vpack.c.b16 %v6988, %v6956
      %v7885 = vpack.c.b16 %v6989, %v6957
      %v7886 = vpack.c.b16 %v6990, %v6958
      %v7887 = vpack.c.b16 %v6991, %v6959
      %v7888 = vpack.c.b16 %v6992, %v6960
      %v7889 = vpack.c.b16 %v6993, %v6961
      %v7890 = vpack.c.b16 %v6994, %v6962
      %v7891 = vpack.c.b16 %v6995, %v6963
      %v7892 = vpack.c.b16 %v6996, %v6964
      %v7893 = vpack.c.b16 %v6997, %v6965
      %v7894 = vpack.c.b16 %v6998, %v6966
      %v7895 = vpack.c.b16 %v6999, %v6967
      %v7896 = vpack.c.b16 %v7000, %v6968
      %v7897 = vpack.c.b16 %v7001, %v6969
      %v7898 = vpack.c.b16 %v7002, %v6970
      %v7899 = vpack.c.b16 %v7003, %v6971
      %v7900 = vpack.c.b16 %v7004, %v6972
      %v7901 = vpack.c.b16 %v7005, %v6973
      %v7902 = vpack.c.b16 %v7006, %v6974
      %v7903 = vpack.c.b16 %v7007, %v6975
      %v7904 = vpack.c.b16 %v7008, %v6976
      %v7905 = vpack.c.b16 %v7009, %v6977
      %v7906 = vpack.c.b16 %v7010, %v6978
      %v7907 = vpack.c.b16 %v7043, %v7011
      %v7908 = vpack.c.b16 %v7044, %v7012
      %v7909 = vpack.c.b16 %v7045, %v7013
      %v7910 = vpack.c.b16 %v7046, %v7014
      %v7911 = vpack.c.b16 %v7047, %v7015
      %v7912 = vpack.c.b16 %v7048, %v7016
      %v7913 = vpack.c.b16 %v7049, %v7017
      %v7914 = vpack.c.b16 %v7050, %v7018
      %v7915 = vpack.c.b16 %v7051, %v7019
      %v7916 = vpack.c.b16 %v7052, %v7020
      %v7917 = vpack.c.b16 %v7053, %v7021
      %v7918 = vpack.c.b16 %v7054, %v7022
      %v7919 = vpack.c.b16 %v7055, %v7023
      %v7920 = vpack.c.b16 %v7056, %v7024
      %v7921 = vpack.c.b16 %v7057, %v7025
      %v7922 = vpack.c.b16 %v7058, %v7026
      %v7923 = vpack.c.b16 %v7059, %v7027
      %v7924 = vpack.c.b16 %v7060, %v7028
      %v7925 = vpack.c.b16 %v7061, %v7029
      %v7926 = vpack.c.b16 %v7062, %v7030
      %v7927 = vpack.c.b16 %v7063, %v7031
      %v7928 = vpack.c.b16 %v7064, %v7032
      %v7929 = vpack.c.b16 %v7065, %v7033
      %v7930 = vpack.c.b16 %v7066, %v7034
      %v7931 = vpack.c.b16 %v7067, %v7035
      %v7932 = vpack.c.b16 %v7068, %v7036
      %v7933 = vpack.c.b16 %v7069, %v7037
      %v7934 = vpack.c.b16 %v7070, %v7038
      %v7935 = vpack.c.b16 %v7071, %v7039
      %v7936 = vpack.c.b16 %v7072, %v7040
      %v7937 = vpack.c.b16 %v7073, %v7041
      %v7938 = vpack.c.b16 %v7074, %v7042
      %v7939 = vpack.c.b16 %v7107, %v7075
      %v7940 = vpack.c.b16 %v7108, %v7076
      %v7941 = vpack.c.b16 %v7109, %v7077
      %v7942 = vpack.c.b16 %v7110, %v7078
      %v7943 = vpack.c.b16 %v7111, %v7079
      %v7944 = vpack.c.b16 %v7112, %v7080
      %v7945 = vpack.c.b16 %v7113, %v7081
      %v7946 = vpack.c.b16 %v7114, %v7082
      %v7947 = vpack.c.b16 %v7115, %v7083
      %v7948 = vpack.c.b16 %v7116, %v7084
      %v7949 = vpack.c.b16 %v7117, %v7085
      %v7950 = vpack.c.b16 %v7118, %v7086
      %v7951 = vpack.c.b16 %v7119, %v7087
      %v7952 = vpack.c.b16 %v7120, %v7088
      %v7953 = vpack.c.b16 %v7121, %v7089
      %v7954 = vpack.c.b16 %v7122, %v7090
      %v7955 = vpack.c.b16 %v7123, %v7091
      %v7956 = vpack.c.b16 %v7124, %v7092
      %v7957 = vpack.c.b16 %v7125, %v7093
      %v7958 = vpack.c.b16 %v7126, %v7094
      %v7959 = vpack.c.b16 %v7127, %v7095
      %v7960 = vpack.c.b16 %v7128, %v7096
      %v7961 = vpack.c.b16 %v7129, %v7097
      %v7962 = vpack.c.b16 %v7130, %v7098
      %v7963 = vpack.c.b16 %v7131, %v7099
      %v7964 = vpack.c.b16 %v7132, %v7100
      %v7965 = vpack.c.b16 %v7133, %v7101
      %v7966 = vpack.c.b16 %v7134, %v7102
      %v7967 = vpack.c.b16 %v7135, %v7103
      %v7968 = vpack.c.b16 %v7136, %v7104
      %v7969 = vpack.c.b16 %v7137, %v7105
      %v7970 = vpack.c.b16 %v7138, %v7106
      %v7971 = vpack.c.b16 %v7171, %v7139
      %v7972 = vpack.c.b16 %v7172, %v7140
      %v7973 = vpack.c.b16 %v7173, %v7141
      %v7974 = vpack.c.b16 %v7174, %v7142
      %v7975 = vpack.c.b16 %v7175, %v7143
      %v7976 = vpack.c.b16 %v7176, %v7144
      %v7977 = vpack.c.b16 %v7177, %v7145
      %v7978 = vpack.c.b16 %v7178, %v7146
      %v7979 = vpack.c.b16 %v7179, %v7147
      %v7980 = vpack.c.b16 %v7180, %v7148
      %v7981 = vpack.c.b16 %v7181, %v7149
      %v7982 = vpack.c.b16 %v7182, %v7150
      %v7983 = vpack.c.b16 %v7183, %v7151
      %v7984 = vpack.c.b16 %v7184, %v7152
      %v7985 = vpack.c.b16 %v7185, %v7153
      %v7986 = vpack.c.b16 %v7186, %v7154
      %v7987 = vpack.c.b16 %v7187, %v7155
      %v7988 = vpack.c.b16 %v7188, %v7156
      %v7989 = vpack.c.b16 %v7189, %v7157
      %v7990 = vpack.c.b16 %v7190, %v7158
      %v7991 = vpack.c.b16 %v7191, %v7159
      %v7992 = vpack.c.b16 %v7192, %v7160
      %v7993 = vpack.c.b16 %v7193, %v7161
      %v7994 = vpack.c.b16 %v7194, %v7162
      %v7995 = vpack.c.b16 %v7195, %v7163
      %v7996 = vpack.c.b16 %v7196, %v7164
      %v7997 = vpack.c.b16 %v7197, %v7165
      %v7998 = vpack.c.b16 %v7198, %v7166
      %v7999 = vpack.c.b16 %v7199, %v7167
      %v8000 = vpack.c.b16 %v7200, %v7168
      %v8001 = vpack.c.b16 %v7201, %v7169
      %v8002 = vpack.c.b16 %v7202, %v7170
      %v8003 = vpack.c.b16 %v7235, %v7203
      %v8004 = vpack.c.b16 %v7236, %v7204
      %v8005 = vpack.c.b16 %v7237, %v7205
      %v8006 = vpack.c.b16 %v7238, %v7206
      %v8007 = vpack.c.b16 %v7239, %v7207
      %v8008 = vpack.c.b16 %v7240, %v7208
      %v8009 = vpack.c.b16 %v7241, %v7209
      %v8010 = vpack.c.b16 %v7242, %v7210
      %v8011 = vpack.c.b16 %v7243, %v7211
      %v8012 = vpack.c.b16 %v7244, %v7212
      %v8013 = vpack.c.b16 %v7245, %v7213
      %v8014 = vpack.c.b16 %v7246, %v7214
      %v8015 = vpack.c.b16 %v7247, %v7215
      %v8016 = vpack.c.b16 %v7248, %v7216
      %v8017 = vpack.c.b16 %v7249, %v7217
      %v8018 = vpack.c.b16 %v7250, %v7218
      %v8019 = vpack.c.b16 %v7251, %v7219
      %v8020 = vpack.c.b16 %v7252, %v7220
      %v8021 = vpack.c.b16 %v7253, %v7221
      %v8022 = vpack.c.b16 %v7254, %v7222
      %v8023 = vpack.c.b16 %v7255, %v7223
      %v8024 = vpack.c.b16 %v7256, %v7224
      %v8025 = vpack.c.b16 %v7257, %v7225
      %v8026 = vpack.c.b16 %v7258, %v7226
      %v8027 = vpack.c.b16 %v7259, %v7227
      %v8028 = vpack.c.b16 %v7260, %v7228
      %v8029 = vpack.c.b16 %v7261, %v7229
      %v8030 = vpack.c.b16 %v7262, %v7230
      %v8031 = vpack.c.b16 %v7263, %v7231
      %v8032 = vpack.c.b16 %v7264, %v7232
      %v8033 = vpack.c.b16 %v7265, %v7233
      %v8034 = vpack.c.b16 %v7266, %v7234
      %v8035 = vpack.c.b16 %v7299, %v7267
      %v8036 = vpack.c.b16 %v7300, %v7268
      %v8037 = vpack.c.b16 %v7301, %v7269
      %v8038 = vpack.c.b16 %v7302, %v7270
      %v8039 = vpack.c.b16 %v7303, %v7271
      %v8040 = vpack.c.b16 %v7304, %v7272
      %v8041 = vpack.c.b16 %v7305, %v7273
      %v8042 = vpack.c.b16 %v7306, %v7274
      %v8043 = vpack.c.b16 %v7307, %v7275
      %v8044 = vpack.c.b16 %v7308, %v7276
      %v8045 = vpack.c.b16 %v7309, %v7277
      %v8046 = vpack.c.b16 %v7310, %v7278
      %v8047 = vpack.c.b16 %v7311, %v7279
      %v8048 = vpack.c.b16 %v7312, %v7280
      %v8049 = vpack.c.b16 %v7313, %v7281
      %v8050 = vpack.c.b16 %v7314, %v7282
      %v8051 = vpack.c.b16 %v7315, %v7283
      %v8052 = vpack.c.b16 %v7316, %v7284
      %v8053 = vpack.c.b16 %v7317, %v7285
      %v8054 = vpack.c.b16 %v7318, %v7286
      %v8055 = vpack.c.b16 %v7319, %v7287
      %v8056 = vpack.c.b16 %v7320, %v7288
      %v8057 = vpack.c.b16 %v7321, %v7289
      %v8058 = vpack.c.b16 %v7322, %v7290
      %v8059 = vpack.c.b16 %v7323, %v7291
      %v8060 = vpack.c.b16 %v7324, %v7292
      %v8061 = vpack.c.b16 %v7325, %v7293
      %v8062 = vpack.c.b16 %v7326, %v7294
      %v8063 = vpack.c.b16 %v7327, %v7295
      %v8064 = vpack.c.b16 %v7328, %v7296
      %v8065 = vpack.c.b16 %v7329, %v7297
      %v8066 = vpack.c.b16 %v7330, %v7298
      %v8067 = vpack.c.b16 %v7363, %v7331
      %v8068 = vpack.c.b16 %v7364, %v7332
      %v8069 = vpack.c.b16 %v7365, %v7333
      %v8070 = vpack.c.b16 %v7366, %v7334
      %v8071 = vpack.c.b16 %v7367, %v7335
      %v8072 = vpack.c.b16 %v7368, %v7336
      %v8073 = vpack.c.b16 %v7369, %v7337
      %v8074 = vpack.c.b16 %v7370, %v7338
      %v8075 = vpack.c.b16 %v7371, %v7339
      %v8076 = vpack.c.b16 %v7372, %v7340
      %v8077 = vpack.c.b16 %v7373, %v7341
      %v8078 = vpack.c.b16 %v7374, %v7342
      %v8079 = vpack.c.b16 %v7375, %v7343
      %v8080 = vpack.c.b16 %v7376, %v7344
      %v8081 = vpack.c.b16 %v7377, %v7345
      %v8082 = vpack.c.b16 %v7378, %v7346
      %v8083 = vpack.c.b16 %v7379, %v7347
      %v8084 = vpack.c.b16 %v7380, %v7348
      %v8085 = vpack.c.b16 %v7381, %v7349
      %v8086 = vpack.c.b16 %v7382, %v7350
      %v8087 = vpack.c.b16 %v7383, %v7351
      %v8088 = vpack.c.b16 %v7384, %v7352
      %v8089 = vpack.c.b16 %v7385, %v7353
      %v8090 = vpack.c.b16 %v7386, %v7354
      %v8091 = vpack.c.b16 %v7387, %v7355
      %v8092 = vpack.c.b16 %v7388, %v7356
      %v8093 = vpack.c.b16 %v7389, %v7357
      %v8094 = vpack.c.b16 %v7390, %v7358
      %v8095 = vpack.c.b16 %v7391, %v7359
      %v8096 = vpack.c.b16 %v7392, %v7360
      %v8097 = vpack.c.b16 %v7393, %v7361
      %v8098 = vpack.c.b16 %v7394, %v7362
      %v8099 = vpack.c.b16 %v7427, %v7395
      %v8100 = vpack.c.b16 %v7428, %v7396
      %v8101 = vpack.c.b16 %v7429, %v7397
      %v8102 = vpack.c.b16 %v7430, %v7398
      %v8103 = vpack.c.b16 %v7431, %v7399
      %v8104 = vpack.c.b16 %v7432, %v7400
      %v8105 = vpack.c.b16 %v7433, %v7401
      %v8106 = vpack.c.b16 %v7434, %v7402
      %v8107 = vpack.c.b16 %v7435, %v7403
      %v8108 = vpack.c.b16 %v7436, %v7404
      %v8109 = vpack.c.b16 %v7437, %v7405
      %v8110 = vpack.c.b16 %v7438, %v7406
      %v8111 = vpack.c.b16 %v7439, %v7407
      %v8112 = vpack.c.b16 %v7440, %v7408
      %v8113 = vpack.c.b16 %v7441, %v7409
      %v8114 = vpack.c.b16 %v7442, %v7410
      %v8115 = vpack.c.b16 %v7443, %v7411
      %v8116 = vpack.c.b16 %v7444, %v7412
      %v8117 = vpack.c.b16 %v7445, %v7413
      %v8118 = vpack.c.b16 %v7446, %v7414
      %v8119 = vpack.c.b16 %v7447, %v7415
      %v8120 = vpack.c.b16 %v7448, %v7416
      %v8121 = vpack.c.b16 %v7449, %v7417
      %v8122 = vpack.c.b16 %v7450, %v7418
      %v8123 = vpack.c.b16 %v7451, %v7419
      %v8124 = vpack.c.b16 %v7452, %v7420
      %v8125 = vpack.c.b16 %v7453, %v7421
      %v8126 = vpack.c.b16 %v7454, %v7422
      %v8127 = vpack.c.b16 %v7455, %v7423
      %v8128 = vpack.c.b16 %v7456, %v7424
      %v8129 = vpack.c.b16 %v7457, %v7425
      %v8130 = vpack.c.b16 %v7458, %v7426
      %v8131 = vpack.c.b16 %v7491, %v7459
      %v8132 = vpack.c.b16 %v7492, %v7460
      %v8133 = vpack.c.b16 %v7493, %v7461
      %v8134 = vpack.c.b16 %v7494, %v7462
      %v8135 = vpack.c.b16 %v7495, %v7463
      %v8136 = vpack.c.b16 %v7496, %v7464
      %v8137 = vpack.c.b16 %v7497, %v7465
      %v8138 = vpack.c.b16 %v7498, %v7466
      %v8139 = vpack.c.b16 %v7499, %v7467
      %v8140 = vpack.c.b16 %v7500, %v7468
      %v8141 = vpack.c.b16 %v7501, %v7469
      %v8142 = vpack.c.b16 %v7502, %v7470
      %v8143 = vpack.c.b16 %v7503, %v7471
      %v8144 = vpack.c.b16 %v7504, %v7472
      %v8145 = vpack.c.b16 %v7505, %v7473
      %v8146 = vpack.c.b16 %v7506, %v7474
      %v8147 = vpack.c.b16 %v7507, %v7475
      %v8148 = vpack.c.b16 %v7508, %v7476
      %v8149 = vpack.c.b16 %v7509, %v7477
      %v8150 = vpack.c.b16 %v7510, %v7478
      %v8151 = vpack.c.b16 %v7511, %v7479
      %v8152 = vpack.c.b16 %v7512, %v7480
      %v8153 = vpack.c.b16 %v7513, %v7481
      %v8154 = vpack.c.b16 %v7514, %v7482
      %v8155 = vpack.c.b16 %v7515, %v7483
      %v8156 = vpack.c.b16 %v7516, %v7484
      %v8157 = vpack.c.b16 %v7517, %v7485
      %v8158 = vpack.c.b16 %v7518, %v7486
      %v8159 = vpack.c.b16 %v7519, %v7487
      %v8160 = vpack.c.b16 %v7520, %v7488
      %v8161 = vpack.c.b16 %v7521, %v7489
      %v8162 = vpack.c.b16 %v7522, %v7490
      %v8163 = vpack.c.b16 %v7555, %v7523
      %v8164 = vpack.c.b16 %v7556, %v7524
      %v8165 = vpack.c.b16 %v7557, %v7525
      %v8166 = vpack.c.b16 %v7558, %v7526
      %v8167 = vpack.c.b16 %v7559, %v7527
      %v8168 = vpack.c.b16 %v7560, %v7528
      %v8169 = vpack.c.b16 %v7561, %v7529
      %v8170 = vpack.c.b16 %v7562, %v7530
      %v8171 = vpack.c.b16 %v7563, %v7531
      %v8172 = vpack.c.b16 %v7564, %v7532
      %v8173 = vpack.c.b16 %v7565, %v7533
      %v8174 = vpack.c.b16 %v7566, %v7534
      %v8175 = vpack.c.b16 %v7567, %v7535
      %v8176 = vpack.c.b16 %v7568, %v7536
      %v8177 = vpack.c.b16 %v7569, %v7537
      %v8178 = vpack.c.b16 %v7570, %v7538
      %v8179 = vpack.c.b16 %v7571, %v7539
      %v8180 = vpack.c.b16 %v7572, %v7540
      %v8181 = vpack.c.b16 %v7573, %v7541
      %v8182 = vpack.c.b16 %v7574, %v7542
      %v8183 = vpack.c.b16 %v7575, %v7543
      %v8184 = vpack.c.b16 %v7576, %v7544
      %v8185 = vpack.c.b16 %v7577, %v7545
      %v8186 = vpack.c.b16 %v7578, %v7546
      %v8187 = vpack.c.b16 %v7579, %v7547
      %v8188 = vpack.c.b16 %v7580, %v7548
      %v8189 = vpack.c.b16 %v7581, %v7549
      %v8190 = vpack.c.b16 %v7582, %v7550
      %v8191 = vpack.c.b16 %v7583, %v7551
      %v8192 = vpack.c.b16 %v7584, %v7552
      %v8193 = vpack.c.b16 %v7585, %v7553
      %v8194 = vpack.c.b16 %v7586, %v7554
      %v8195 = vpack.c.b16 %v7619, %v7587
      %v8196 = vpack.c.b16 %v7620, %v7588
      %v8197 = vpack.c.b16 %v7621, %v7589
      %v8198 = vpack.c.b16 %v7622, %v7590
      %v8199 = vpack.c.b16 %v7623, %v7591
      %v8200 = vpack.c.b16 %v7624, %v7592
      %v8201 = vpack.c.b16 %v7625, %v7593
      %v8202 = vpack.c.b16 %v7626, %v7594
      %v8203 = vpack.c.b16 %v7627, %v7595
      %v8204 = vpack.c.b16 %v7628, %v7596
      %v8205 = vpack.c.b16 %v7629, %v7597
      %v8206 = vpack.c.b16 %v7630, %v7598
      %v8207 = vpack.c.b16 %v7631, %v7599
      %v8208 = vpack.c.b16 %v7632, %v7600
      %v8209 = vpack.c.b16 %v7633, %v7601
      %v8210 = vpack.c.b16 %v7634, %v7602
      %v8211 = vpack.c.b16 %v7635, %v7603
      %v8212 = vpack.c.b16 %v7636, %v7604
      %v8213 = vpack.c.b16 %v7637, %v7605
      %v8214 = vpack.c.b16 %v7638, %v7606
      %v8215 = vpack.c.b16 %v7639, %v7607
      %v8216 = vpack.c.b16 %v7640, %v7608
      %v8217 = vpack.c.b16 %v7641, %v7609
      %v8218 = vpack.c.b16 %v7642, %v7610
      %v8219 = vpack.c.b16 %v7643, %v7611
      %v8220 = vpack.c.b16 %v7644, %v7612
      %v8221 = vpack.c.b16 %v7645, %v7613
      %v8222 = vpack.c.b16 %v7646, %v7614
      %v8223 = vpack.c.b16 %v7647, %v7615
      %v8224 = vpack.c.b16 %v7648, %v7616
      %v8225 = vpack.c.b16 %v7649, %v7617
      %v8226 = vpack.c.b16 %v7650, %v7618
      %v8227 = vpack.c.b16 %v7683, %v7651
      %v8228 = vpack.c.b16 %v7684, %v7652
      %v8229 = vpack.c.b16 %v7685, %v7653
      %v8230 = vpack.c.b16 %v7686, %v7654
      %v8231 = vpack.c.b16 %v7687, %v7655
      %v8232 = vpack.c.b16 %v7688, %v7656
      %v8233 = vpack.c.b16 %v7689, %v7657
      %v8234 = vpack.c.b16 %v7690, %v7658
      %v8235 = vpack.c.b16 %v7691, %v7659
      %v8236 = vpack.c.b16 %v7692, %v7660
      %v8237 = vpack.c.b16 %v7693, %v7661
      %v8238 = vpack.c.b16 %v7694, %v7662
      %v8239 = vpack.c.b16 %v7695, %v7663
      %v8240 = vpack.c.b16 %v7696, %v7664
      %v8241 = vpack.c.b16 %v7697, %v7665
      %v8242 = vpack.c.b16 %v7698, %v7666
      %v8243 = vpack.c.b16 %v7699, %v7667
      %v8244 = vpack.c.b16 %v7700, %v7668
      %v8245 = vpack.c.b16 %v7701, %v7669
      %v8246 = vpack.c.b16 %v7702, %v7670
      %v8247 = vpack.c.b16 %v7703, %v7671
      %v8248 = vpack.c.b16 %v7704, %v7672
      %v8249 = vpack.c.b16 %v7705, %v7673
      %v8250 = vpack.c.b16 %v7706, %v7674
      %v8251 = vpack.c.b16 %v7707, %v7675
      %v8252 = vpack.c.b16 %v7708, %v7676
      %v8253 = vpack.c.b16 %v7709, %v7677
      %v8254 = vpack.c.b16 %v7710, %v7678
      %v8255 = vpack.c.b16 %v7711, %v7679
      %v8256 = vpack.c.b16 %v7712, %v7680
      %v8257 = vpack.c.b16 %v7713, %v7681
      %v8258 = vpack.c.b16 %v7714, %v7682
      %v8259 = vpack.c.b16 %v7747, %v7715
      %v8260 = vpack.c.b16 %v7748, %v7716
      %v8261 = vpack.c.b16 %v7749, %v7717
      %v8262 = vpack.c.b16 %v7750, %v7718
      %v8263 = vpack.c.b16 %v7751, %v7719
      %v8264 = vpack.c.b16 %v7752, %v7720
      %v8265 = vpack.c.b16 %v7753, %v7721
      %v8266 = vpack.c.b16 %v7754, %v7722
      %v8267 = vpack.c.b16 %v7755, %v7723
      %v8268 = vpack.c.b16 %v7756, %v7724
      %v8269 = vpack.c.b16 %v7757, %v7725
      %v8270 = vpack.c.b16 %v7758, %v7726
      %v8271 = vpack.c.b16 %v7759, %v7727
      %v8272 = vpack.c.b16 %v7760, %v7728
      %v8273 = vpack.c.b16 %v7761, %v7729
      %v8274 = vpack.c.b16 %v7762, %v7730
      %v8275 = vpack.c.b16 %v7763, %v7731
      %v8276 = vpack.c.b16 %v7764, %v7732
      %v8277 = vpack.c.b16 %v7765, %v7733
      %v8278 = vpack.c.b16 %v7766, %v7734
      %v8279 = vpack.c.b16 %v7767, %v7735
      %v8280 = vpack.c.b16 %v7768, %v7736
      %v8281 = vpack.c.b16 %v7769, %v7737
      %v8282 = vpack.c.b16 %v7770, %v7738
      %v8283 = vpack.c.b16 %v7771, %v7739
      %v8284 = vpack.c.b16 %v7772, %v7740
      %v8285 = vpack.c.b16 %v7773, %v7741
      %v8286 = vpack.c.b16 %v7774, %v7742
      %v8287 = vpack.c.b16 %v7775, %v7743
      %v8288 = vpack.c.b16 %v7776, %v7744
      %v8289 = vpack.c.b16 %v7777, %v7745
      %v8290 = vpack.c.b16 %v7778, %v7746
      %8803 = vmatpush.bf16.msra.mxu0 %v8003
      %8804 = vmatpush.bf16.msra.mxu0 %v7971
      %8805 = vmatpush.bf16.msra.mxu0 %v7939
      %8806 = vmatpush.bf16.msra.mxu0 %v7907
      %8807 = vmatpush.bf16.msra.mxu0 %v7875
      %8808 = vmatpush.bf16.msra.mxu0 %v7843
      %8809 = vmatpush.bf16.msra.mxu0 %v7811
      %8810 = vmatpush.bf16.msra.mxu0 %v7779
      %8811 = vmatmul.bf16.gmra.mxu0 %v5729
      %v8812 = vpop.f32.mrf.mxu0
      %v8813 = vadd.f32 0.0, %v8812
      %v8814 = vpop.f32.mrf.mxu0
      %8815 = vdwg.mxu0
      %8816 = vmatpush.bf16.msra.mxu0 %v8259
      %8817 = vmatpush.bf16.msra.mxu0 %v8227
      %8818 = vmatpush.bf16.msra.mxu0 %v8195
      %8819 = vmatpush.bf16.msra.mxu0 %v8163
      %8820 = vmatpush.bf16.msra.mxu0 %v8131
      %8821 = vmatpush.bf16.msra.mxu0 %v8099
      %8822 = vmatpush.bf16.msra.mxu0 %v8067
      %8823 = vmatpush.bf16.msra.mxu0 %v8035
      %8824 = vmatmul.bf16.gmra.mxu0 %v5730
      %v8825 = vpop.f32.mrf.mxu0
      %v8826 = vadd.f32 %v8813, %v8825
      %v8827 = vpop.f32.mrf.mxu0
      %8828 = vdwg.mxu0
      %8829 = vmatpush.bf16.msra.mxu0 %v8004
      %8830 = vmatpush.bf16.msra.mxu0 %v7972
      %8831 = vmatpush.bf16.msra.mxu0 %v7940
      %8832 = vmatpush.bf16.msra.mxu0 %v7908
      %8833 = vmatpush.bf16.msra.mxu0 %v7876
      %8834 = vmatpush.bf16.msra.mxu0 %v7844
      %8835 = vmatpush.bf16.msra.mxu0 %v7812
      %8836 = vmatpush.bf16.msra.mxu0 %v7780
      %8837 = vmatmul.bf16.gmra.mxu0 %v5729
      %v8838 = vpop.f32.mrf.mxu0
      %v8839 = vadd.f32 0.0, %v8838
      %v8840 = vpop.f32.mrf.mxu0
      %8841 = vdwg.mxu0
      %8842 = vmatpush.bf16.msra.mxu0 %v8260
      %8843 = vmatpush.bf16.msra.mxu0 %v8228
      %8844 = vmatpush.bf16.msra.mxu0 %v8196
      %8845 = vmatpush.bf16.msra.mxu0 %v8164
      %8846 = vmatpush.bf16.msra.mxu0 %v8132
      %8847 = vmatpush.bf16.msra.mxu0 %v8100
      %8848 = vmatpush.bf16.msra.mxu0 %v8068
      %8849 = vmatpush.bf16.msra.mxu0 %v8036
      %8850 = vmatmul.bf16.gmra.mxu0 %v5730
      %v8851 = vpop.f32.mrf.mxu0
      %v8852 = vadd.f32 %v8839, %v8851
      %v8853 = vpop.f32.mrf.mxu0
      %8854 = vdwg.mxu0
      %8855 = vmatpush.bf16.msra.mxu0 %v8005
      %8856 = vmatpush.bf16.msra.mxu0 %v7973
      %8857 = vmatpush.bf16.msra.mxu0 %v7941
      %8858 = vmatpush.bf16.msra.mxu0 %v7909
      %8859 = vmatpush.bf16.msra.mxu0 %v7877
      %8860 = vmatpush.bf16.msra.mxu0 %v7845
      %8861 = vmatpush.bf16.msra.mxu0 %v7813
      %8862 = vmatpush.bf16.msra.mxu0 %v7781
      %8863 = vmatmul.bf16.gmra.mxu0 %v5729
      %v8864 = vpop.f32.mrf.mxu0
      %v8865 = vadd.f32 0.0, %v8864
      %v8866 = vpop.f32.mrf.mxu0
      %8867 = vdwg.mxu0
      %8868 = vmatpush.bf16.msra.mxu0 %v8261
      %8869 = vmatpush.bf16.msra.mxu0 %v8229
      %8870 = vmatpush.bf16.msra.mxu0 %v8197
      %8871 = vmatpush.bf16.msra.mxu0 %v8165
      %8872 = vmatpush.bf16.msra.mxu0 %v8133
      %8873 = vmatpush.bf16.msra.mxu0 %v8101
      %8874 = vmatpush.bf16.msra.mxu0 %v8069
      %8875 = vmatpush.bf16.msra.mxu0 %v8037
      %8876 = vmatmul.bf16.gmra.mxu0 %v5730
      %v8877 = vpop.f32.mrf.mxu0
      %v8878 = vadd.f32 %v8865, %v8877
      %v8879 = vpop.f32.mrf.mxu0
      %8880 = vdwg.mxu0
      %8881 = vmatpush.bf16.msra.mxu0 %v8006
      %8882 = vmatpush.bf16.msra.mxu0 %v7974
      %8883 = vmatpush.bf16.msra.mxu0 %v7942
      %8884 = vmatpush.bf16.msra.mxu0 %v7910
      %8885 = vmatpush.bf16.msra.mxu0 %v7878
      %8886 = vmatpush.bf16.msra.mxu0 %v7846
      %8887 = vmatpush.bf16.msra.mxu0 %v7814
      %8888 = vmatpush.bf16.msra.mxu0 %v7782
      %8889 = vmatmul.bf16.gmra.mxu0 %v5729
      %v8890 = vpop.f32.mrf.mxu0
      %v8891 = vadd.f32 0.0, %v8890
      %v8892 = vpop.f32.mrf.mxu0
      %8893 = vdwg.mxu0
      %8894 = vmatpush.bf16.msra.mxu0 %v8262
      %8895 = vmatpush.bf16.msra.mxu0 %v8230
      %8896 = vmatpush.bf16.msra.mxu0 %v8198
      %8897 = vmatpush.bf16.msra.mxu0 %v8166
      %8898 = vmatpush.bf16.msra.mxu0 %v8134
      %8899 = vmatpush.bf16.msra.mxu0 %v8102
      %8900 = vmatpush.bf16.msra.mxu0 %v8070
      %8901 = vmatpush.bf16.msra.mxu0 %v8038
      %8902 = vmatmul.bf16.gmra.mxu0 %v5730
      %v8903 = vpop.f32.mrf.mxu0
      %v8904 = vadd.f32 %v8891, %v8903
      %v8905 = vpop.f32.mrf.mxu0
      %8906 = vdwg.mxu0
      %8907 = vmatpush.bf16.msra.mxu0 %v8007
      %8908 = vmatpush.bf16.msra.mxu0 %v7975
      %8909 = vmatpush.bf16.msra.mxu0 %v7943
      %8910 = vmatpush.bf16.msra.mxu0 %v7911
      %8911 = vmatpush.bf16.msra.mxu0 %v7879
      %8912 = vmatpush.bf16.msra.mxu0 %v7847
      %8913 = vmatpush.bf16.msra.mxu0 %v7815
      %8914 = vmatpush.bf16.msra.mxu0 %v7783
      %8915 = vmatmul.bf16.gmra.mxu0 %v5729
      %v8916 = vpop.f32.mrf.mxu0
      %v8917 = vadd.f32 0.0, %v8916
      %v8918 = vpop.f32.mrf.mxu0
      %8919 = vdwg.mxu0
      %8920 = vmatpush.bf16.msra.mxu0 %v8263
      %8921 = vmatpush.bf16.msra.mxu0 %v8231
      %8922 = vmatpush.bf16.msra.mxu0 %v8199
      %8923 = vmatpush.bf16.msra.mxu0 %v8167
      %8924 = vmatpush.bf16.msra.mxu0 %v8135
      %8925 = vmatpush.bf16.msra.mxu0 %v8103
      %8926 = vmatpush.bf16.msra.mxu0 %v8071
      %8927 = vmatpush.bf16.msra.mxu0 %v8039
      %8928 = vmatmul.bf16.gmra.mxu0 %v5730
      %v8929 = vpop.f32.mrf.mxu0
      %v8930 = vadd.f32 %v8917, %v8929
      %v8931 = vpop.f32.mrf.mxu0
      %8932 = vdwg.mxu0
      %8933 = vmatpush.bf16.msra.mxu0 %v8008
      %8934 = vmatpush.bf16.msra.mxu0 %v7976
      %8935 = vmatpush.bf16.msra.mxu0 %v7944
      %8936 = vmatpush.bf16.msra.mxu0 %v7912
      %8937 = vmatpush.bf16.msra.mxu0 %v7880
      %8938 = vmatpush.bf16.msra.mxu0 %v7848
      %8939 = vmatpush.bf16.msra.mxu0 %v7816
      %8940 = vmatpush.bf16.msra.mxu0 %v7784
      %8941 = vmatmul.bf16.gmra.mxu0 %v5729
      %v8942 = vpop.f32.mrf.mxu0
      %v8943 = vadd.f32 0.0, %v8942
      %v8944 = vpop.f32.mrf.mxu0
      %8945 = vdwg.mxu0
      %8946 = vmatpush.bf16.msra.mxu0 %v8264
      %8947 = vmatpush.bf16.msra.mxu0 %v8232
      %8948 = vmatpush.bf16.msra.mxu0 %v8200
      %8949 = vmatpush.bf16.msra.mxu0 %v8168
      %8950 = vmatpush.bf16.msra.mxu0 %v8136
      %8951 = vmatpush.bf16.msra.mxu0 %v8104
      %8952 = vmatpush.bf16.msra.mxu0 %v8072
      %8953 = vmatpush.bf16.msra.mxu0 %v8040
      %8954 = vmatmul.bf16.gmra.mxu0 %v5730
      %v8955 = vpop.f32.mrf.mxu0
      %v8956 = vadd.f32 %v8943, %v8955
      %v8957 = vpop.f32.mrf.mxu0
      %8958 = vdwg.mxu0
      %8959 = vmatpush.bf16.msra.mxu0 %v8009
      %8960 = vmatpush.bf16.msra.mxu0 %v7977
      %8961 = vmatpush.bf16.msra.mxu0 %v7945
      %8962 = vmatpush.bf16.msra.mxu0 %v7913
      %8963 = vmatpush.bf16.msra.mxu0 %v7881
      %8964 = vmatpush.bf16.msra.mxu0 %v7849
      %8965 = vmatpush.bf16.msra.mxu0 %v7817
      %8966 = vmatpush.bf16.msra.mxu0 %v7785
      %8967 = vmatmul.bf16.gmra.mxu0 %v5729
      %v8968 = vpop.f32.mrf.mxu0
      %v8969 = vadd.f32 0.0, %v8968
      %v8970 = vpop.f32.mrf.mxu0
      %8971 = vdwg.mxu0
      %8972 = vmatpush.bf16.msra.mxu0 %v8265
      %8973 = vmatpush.bf16.msra.mxu0 %v8233
      %8974 = vmatpush.bf16.msra.mxu0 %v8201
      %8975 = vmatpush.bf16.msra.mxu0 %v8169
      %8976 = vmatpush.bf16.msra.mxu0 %v8137
      %8977 = vmatpush.bf16.msra.mxu0 %v8105
      %8978 = vmatpush.bf16.msra.mxu0 %v8073
      %8979 = vmatpush.bf16.msra.mxu0 %v8041
      %8980 = vmatmul.bf16.gmra.mxu0 %v5730
      %v8981 = vpop.f32.mrf.mxu0
      %v8982 = vadd.f32 %v8969, %v8981
      %v8983 = vpop.f32.mrf.mxu0
      %8984 = vdwg.mxu0
      %8985 = vmatpush.bf16.msra.mxu0 %v8010
      %8986 = vmatpush.bf16.msra.mxu0 %v7978
      %8987 = vmatpush.bf16.msra.mxu0 %v7946
      %8988 = vmatpush.bf16.msra.mxu0 %v7914
      %8989 = vmatpush.bf16.msra.mxu0 %v7882
      %8990 = vmatpush.bf16.msra.mxu0 %v7850
      %8991 = vmatpush.bf16.msra.mxu0 %v7818
      %8992 = vmatpush.bf16.msra.mxu0 %v7786
      %8993 = vmatmul.bf16.gmra.mxu0 %v5729
      %v8994 = vpop.f32.mrf.mxu0
      %v8995 = vadd.f32 0.0, %v8994
      %v8996 = vpop.f32.mrf.mxu0
      %8997 = vdwg.mxu0
      %8998 = vmatpush.bf16.msra.mxu0 %v8266
      %8999 = vmatpush.bf16.msra.mxu0 %v8234
      %9000 = vmatpush.bf16.msra.mxu0 %v8202
      %9001 = vmatpush.bf16.msra.mxu0 %v8170
      %9002 = vmatpush.bf16.msra.mxu0 %v8138
      %9003 = vmatpush.bf16.msra.mxu0 %v8106
      %9004 = vmatpush.bf16.msra.mxu0 %v8074
      %9005 = vmatpush.bf16.msra.mxu0 %v8042
      %9006 = vmatmul.bf16.gmra.mxu0 %v5730
      %v9007 = vpop.f32.mrf.mxu0
      %v9008 = vadd.f32 %v8995, %v9007
      %v9009 = vpop.f32.mrf.mxu0
      %9010 = vdwg.mxu0
      %9011 = vmatpush.bf16.msra.mxu0 %v8011
      %9012 = vmatpush.bf16.msra.mxu0 %v7979
      %9013 = vmatpush.bf16.msra.mxu0 %v7947
      %9014 = vmatpush.bf16.msra.mxu0 %v7915
      %9015 = vmatpush.bf16.msra.mxu0 %v7883
      %9016 = vmatpush.bf16.msra.mxu0 %v7851
      %9017 = vmatpush.bf16.msra.mxu0 %v7819
      %9018 = vmatpush.bf16.msra.mxu0 %v7787
      %9019 = vmatmul.bf16.gmra.mxu0 %v5729
      %v9020 = vpop.f32.mrf.mxu0
      %v9021 = vadd.f32 0.0, %v9020
      %v9022 = vpop.f32.mrf.mxu0
      %9023 = vdwg.mxu0
      %9024 = vmatpush.bf16.msra.mxu0 %v8267
      %9025 = vmatpush.bf16.msra.mxu0 %v8235
      %9026 = vmatpush.bf16.msra.mxu0 %v8203
      %9027 = vmatpush.bf16.msra.mxu0 %v8171
      %9028 = vmatpush.bf16.msra.mxu0 %v8139
      %9029 = vmatpush.bf16.msra.mxu0 %v8107
      %9030 = vmatpush.bf16.msra.mxu0 %v8075
      %9031 = vmatpush.bf16.msra.mxu0 %v8043
      %9032 = vmatmul.bf16.gmra.mxu0 %v5730
      %v9033 = vpop.f32.mrf.mxu0
      %v9034 = vadd.f32 %v9021, %v9033
      %v9035 = vpop.f32.mrf.mxu0
      %9036 = vdwg.mxu0
      %9037 = vmatpush.bf16.msra.mxu0 %v8012
      %9038 = vmatpush.bf16.msra.mxu0 %v7980
      %9039 = vmatpush.bf16.msra.mxu0 %v7948
      %9040 = vmatpush.bf16.msra.mxu0 %v7916
      %9041 = vmatpush.bf16.msra.mxu0 %v7884
      %9042 = vmatpush.bf16.msra.mxu0 %v7852
      %9043 = vmatpush.bf16.msra.mxu0 %v7820
      %9044 = vmatpush.bf16.msra.mxu0 %v7788
      %9045 = vmatmul.bf16.gmra.mxu0 %v5729
      %v9046 = vpop.f32.mrf.mxu0
      %v9047 = vadd.f32 0.0, %v9046
      %v9048 = vpop.f32.mrf.mxu0
      %9049 = vdwg.mxu0
      %9050 = vmatpush.bf16.msra.mxu0 %v8268
      %9051 = vmatpush.bf16.msra.mxu0 %v8236
      %9052 = vmatpush.bf16.msra.mxu0 %v8204
      %9053 = vmatpush.bf16.msra.mxu0 %v8172
      %9054 = vmatpush.bf16.msra.mxu0 %v8140
      %9055 = vmatpush.bf16.msra.mxu0 %v8108
      %9056 = vmatpush.bf16.msra.mxu0 %v8076
      %9057 = vmatpush.bf16.msra.mxu0 %v8044
      %9058 = vmatmul.bf16.gmra.mxu0 %v5730
      %v9059 = vpop.f32.mrf.mxu0
      %v9060 = vadd.f32 %v9047, %v9059
      %v9061 = vpop.f32.mrf.mxu0
      %9062 = vdwg.mxu0
      %9063 = vmatpush.bf16.msra.mxu0 %v8013
      %9064 = vmatpush.bf16.msra.mxu0 %v7981
      %9065 = vmatpush.bf16.msra.mxu0 %v7949
      %9066 = vmatpush.bf16.msra.mxu0 %v7917
      %9067 = vmatpush.bf16.msra.mxu0 %v7885
      %9068 = vmatpush.bf16.msra.mxu0 %v7853
      %9069 = vmatpush.bf16.msra.mxu0 %v7821
      %9070 = vmatpush.bf16.msra.mxu0 %v7789
      %9071 = vmatmul.bf16.gmra.mxu0 %v5729
      %v9072 = vpop.f32.mrf.mxu0
      %v9073 = vadd.f32 0.0, %v9072
      %v9074 = vpop.f32.mrf.mxu0
      %9075 = vdwg.mxu0
      %9076 = vmatpush.bf16.msra.mxu0 %v8269
      %9077 = vmatpush.bf16.msra.mxu0 %v8237
      %9078 = vmatpush.bf16.msra.mxu0 %v8205
      %9079 = vmatpush.bf16.msra.mxu0 %v8173
      %9080 = vmatpush.bf16.msra.mxu0 %v8141
      %9081 = vmatpush.bf16.msra.mxu0 %v8109
      %9082 = vmatpush.bf16.msra.mxu0 %v8077
      %9083 = vmatpush.bf16.msra.mxu0 %v8045
      %9084 = vmatmul.bf16.gmra.mxu0 %v5730
      %v9085 = vpop.f32.mrf.mxu0
      %v9086 = vadd.f32 %v9073, %v9085
      %v9087 = vpop.f32.mrf.mxu0
      %9088 = vdwg.mxu0
      %9089 = vmatpush.bf16.msra.mxu0 %v8014
      %9090 = vmatpush.bf16.msra.mxu0 %v7982
      %9091 = vmatpush.bf16.msra.mxu0 %v7950
      %9092 = vmatpush.bf16.msra.mxu0 %v7918
      %9093 = vmatpush.bf16.msra.mxu0 %v7886
      %9094 = vmatpush.bf16.msra.mxu0 %v7854
      %9095 = vmatpush.bf16.msra.mxu0 %v7822
      %9096 = vmatpush.bf16.msra.mxu0 %v7790
      %9097 = vmatmul.bf16.gmra.mxu0 %v5729
      %v9098 = vpop.f32.mrf.mxu0
      %v9099 = vadd.f32 0.0, %v9098
      %v9100 = vpop.f32.mrf.mxu0
      %9101 = vdwg.mxu0
      %9102 = vmatpush.bf16.msra.mxu0 %v8270
      %9103 = vmatpush.bf16.msra.mxu0 %v8238
      %9104 = vmatpush.bf16.msra.mxu0 %v8206
      %9105 = vmatpush.bf16.msra.mxu0 %v8174
      %9106 = vmatpush.bf16.msra.mxu0 %v8142
      %9107 = vmatpush.bf16.msra.mxu0 %v8110
      %9108 = vmatpush.bf16.msra.mxu0 %v8078
      %9109 = vmatpush.bf16.msra.mxu0 %v8046
      %9110 = vmatmul.bf16.gmra.mxu0 %v5730
      %v9111 = vpop.f32.mrf.mxu0
      %v9112 = vadd.f32 %v9099, %v9111
      %v9113 = vpop.f32.mrf.mxu0
      %9114 = vdwg.mxu0
      %9115 = vmatpush.bf16.msra.mxu0 %v8015
      %9116 = vmatpush.bf16.msra.mxu0 %v7983
      %9117 = vmatpush.bf16.msra.mxu0 %v7951
      %9118 = vmatpush.bf16.msra.mxu0 %v7919
      %9119 = vmatpush.bf16.msra.mxu0 %v7887
      %9120 = vmatpush.bf16.msra.mxu0 %v7855
      %9121 = vmatpush.bf16.msra.mxu0 %v7823
      %9122 = vmatpush.bf16.msra.mxu0 %v7791
      %9123 = vmatmul.bf16.gmra.mxu0 %v5729
      %v9124 = vpop.f32.mrf.mxu0
      %v9125 = vadd.f32 0.0, %v9124
      %v9126 = vpop.f32.mrf.mxu0
      %9127 = vdwg.mxu0
      %9128 = vmatpush.bf16.msra.mxu0 %v8271
      %9129 = vmatpush.bf16.msra.mxu0 %v8239
      %9130 = vmatpush.bf16.msra.mxu0 %v8207
      %9131 = vmatpush.bf16.msra.mxu0 %v8175
      %9132 = vmatpush.bf16.msra.mxu0 %v8143
      %9133 = vmatpush.bf16.msra.mxu0 %v8111
      %9134 = vmatpush.bf16.msra.mxu0 %v8079
      %9135 = vmatpush.bf16.msra.mxu0 %v8047
      %9136 = vmatmul.bf16.gmra.mxu0 %v5730
      %v9137 = vpop.f32.mrf.mxu0
      %v9138 = vadd.f32 %v9125, %v9137
      %v9139 = vpop.f32.mrf.mxu0
      %9140 = vdwg.mxu0
      %9141 = vmatpush.bf16.msra.mxu0 %v8016
      %9142 = vmatpush.bf16.msra.mxu0 %v7984
      %9143 = vmatpush.bf16.msra.mxu0 %v7952
      %9144 = vmatpush.bf16.msra.mxu0 %v7920
      %9145 = vmatpush.bf16.msra.mxu0 %v7888
      %9146 = vmatpush.bf16.msra.mxu0 %v7856
      %9147 = vmatpush.bf16.msra.mxu0 %v7824
      %9148 = vmatpush.bf16.msra.mxu0 %v7792
      %9149 = vmatmul.bf16.gmra.mxu0 %v5729
      %v9150 = vpop.f32.mrf.mxu0
      %v9151 = vadd.f32 0.0, %v9150
      %v9152 = vpop.f32.mrf.mxu0
      %9153 = vdwg.mxu0
      %9154 = vmatpush.bf16.msra.mxu0 %v8272
      %9155 = vmatpush.bf16.msra.mxu0 %v8240
      %9156 = vmatpush.bf16.msra.mxu0 %v8208
      %9157 = vmatpush.bf16.msra.mxu0 %v8176
      %9158 = vmatpush.bf16.msra.mxu0 %v8144
      %9159 = vmatpush.bf16.msra.mxu0 %v8112
      %9160 = vmatpush.bf16.msra.mxu0 %v8080
      %9161 = vmatpush.bf16.msra.mxu0 %v8048
      %9162 = vmatmul.bf16.gmra.mxu0 %v5730
      %v9163 = vpop.f32.mrf.mxu0
      %v9164 = vadd.f32 %v9151, %v9163
      %v9165 = vpop.f32.mrf.mxu0
      %9166 = vdwg.mxu0
      %9167 = vmatpush.bf16.msra.mxu0 %v8017
      %9168 = vmatpush.bf16.msra.mxu0 %v7985
      %9169 = vmatpush.bf16.msra.mxu0 %v7953
      %9170 = vmatpush.bf16.msra.mxu0 %v7921
      %9171 = vmatpush.bf16.msra.mxu0 %v7889
      %9172 = vmatpush.bf16.msra.mxu0 %v7857
      %9173 = vmatpush.bf16.msra.mxu0 %v7825
      %9174 = vmatpush.bf16.msra.mxu0 %v7793
      %9175 = vmatmul.bf16.gmra.mxu0 %v5729
      %v9176 = vpop.f32.mrf.mxu0
      %v9177 = vadd.f32 0.0, %v9176
      %v9178 = vpop.f32.mrf.mxu0
      %9179 = vdwg.mxu0
      %9180 = vmatpush.bf16.msra.mxu0 %v8273
      %9181 = vmatpush.bf16.msra.mxu0 %v8241
      %9182 = vmatpush.bf16.msra.mxu0 %v8209
      %9183 = vmatpush.bf16.msra.mxu0 %v8177
      %9184 = vmatpush.bf16.msra.mxu0 %v8145
      %9185 = vmatpush.bf16.msra.mxu0 %v8113
      %9186 = vmatpush.bf16.msra.mxu0 %v8081
      %9187 = vmatpush.bf16.msra.mxu0 %v8049
      %9188 = vmatmul.bf16.gmra.mxu0 %v5730
      %v9189 = vpop.f32.mrf.mxu0
      %v9190 = vadd.f32 %v9177, %v9189
      %v9191 = vpop.f32.mrf.mxu0
      %9192 = vdwg.mxu0
      %9193 = vmatpush.bf16.msra.mxu0 %v8018
      %9194 = vmatpush.bf16.msra.mxu0 %v7986
      %9195 = vmatpush.bf16.msra.mxu0 %v7954
      %9196 = vmatpush.bf16.msra.mxu0 %v7922
      %9197 = vmatpush.bf16.msra.mxu0 %v7890
      %9198 = vmatpush.bf16.msra.mxu0 %v7858
      %9199 = vmatpush.bf16.msra.mxu0 %v7826
      %9200 = vmatpush.bf16.msra.mxu0 %v7794
      %9201 = vmatmul.bf16.gmra.mxu0 %v5729
      %v9202 = vpop.f32.mrf.mxu0
      %v9203 = vadd.f32 0.0, %v9202
      %v9204 = vpop.f32.mrf.mxu0
      %9205 = vdwg.mxu0
      %9206 = vmatpush.bf16.msra.mxu0 %v8274
      %9207 = vmatpush.bf16.msra.mxu0 %v8242
      %9208 = vmatpush.bf16.msra.mxu0 %v8210
      %9209 = vmatpush.bf16.msra.mxu0 %v8178
      %9210 = vmatpush.bf16.msra.mxu0 %v8146
      %9211 = vmatpush.bf16.msra.mxu0 %v8114
      %9212 = vmatpush.bf16.msra.mxu0 %v8082
      %9213 = vmatpush.bf16.msra.mxu0 %v8050
      %9214 = vmatmul.bf16.gmra.mxu0 %v5730
      %v9215 = vpop.f32.mrf.mxu0
      %v9216 = vadd.f32 %v9203, %v9215
      %v9217 = vpop.f32.mrf.mxu0
      %9218 = vdwg.mxu0
      %9219 = vmatpush.bf16.msra.mxu0 %v8019
      %9220 = vmatpush.bf16.msra.mxu0 %v7987
      %9221 = vmatpush.bf16.msra.mxu0 %v7955
      %9222 = vmatpush.bf16.msra.mxu0 %v7923
      %9223 = vmatpush.bf16.msra.mxu0 %v7891
      %9224 = vmatpush.bf16.msra.mxu0 %v7859
      %9225 = vmatpush.bf16.msra.mxu0 %v7827
      %9226 = vmatpush.bf16.msra.mxu0 %v7795
      %9227 = vmatmul.bf16.gmra.mxu0 %v5729
      %v9228 = vpop.f32.mrf.mxu0
      %v9229 = vadd.f32 0.0, %v9228
      %v9230 = vpop.f32.mrf.mxu0
      %9231 = vdwg.mxu0
      %9232 = vmatpush.bf16.msra.mxu0 %v8275
      %9233 = vmatpush.bf16.msra.mxu0 %v8243
      %9234 = vmatpush.bf16.msra.mxu0 %v8211
      %9235 = vmatpush.bf16.msra.mxu0 %v8179
      %9236 = vmatpush.bf16.msra.mxu0 %v8147
      %9237 = vmatpush.bf16.msra.mxu0 %v8115
      %9238 = vmatpush.bf16.msra.mxu0 %v8083
      %9239 = vmatpush.bf16.msra.mxu0 %v8051
      %9240 = vmatmul.bf16.gmra.mxu0 %v5730
      %v9241 = vpop.f32.mrf.mxu0
      %v9242 = vadd.f32 %v9229, %v9241
      %v9243 = vpop.f32.mrf.mxu0
      %9244 = vdwg.mxu0
      %9245 = vmatpush.bf16.msra.mxu0 %v8020
      %9246 = vmatpush.bf16.msra.mxu0 %v7988
      %9247 = vmatpush.bf16.msra.mxu0 %v7956
      %9248 = vmatpush.bf16.msra.mxu0 %v7924
      %9249 = vmatpush.bf16.msra.mxu0 %v7892
      %9250 = vmatpush.bf16.msra.mxu0 %v7860
      %9251 = vmatpush.bf16.msra.mxu0 %v7828
      %9252 = vmatpush.bf16.msra.mxu0 %v7796
      %9253 = vmatmul.bf16.gmra.mxu0 %v5729
      %v9254 = vpop.f32.mrf.mxu0
      %v9255 = vadd.f32 0.0, %v9254
      %v9256 = vpop.f32.mrf.mxu0
      %9257 = vdwg.mxu0
      %9258 = vmatpush.bf16.msra.mxu0 %v8276
      %9259 = vmatpush.bf16.msra.mxu0 %v8244
      %9260 = vmatpush.bf16.msra.mxu0 %v8212
      %9261 = vmatpush.bf16.msra.mxu0 %v8180
      %9262 = vmatpush.bf16.msra.mxu0 %v8148
      %9263 = vmatpush.bf16.msra.mxu0 %v8116
      %9264 = vmatpush.bf16.msra.mxu0 %v8084
      %9265 = vmatpush.bf16.msra.mxu0 %v8052
      %9266 = vmatmul.bf16.gmra.mxu0 %v5730
      %v9267 = vpop.f32.mrf.mxu0
      %v9268 = vadd.f32 %v9255, %v9267
      %v9269 = vpop.f32.mrf.mxu0
      %9270 = vdwg.mxu0
      %9271 = vmatpush.bf16.msra.mxu0 %v8021
      %9272 = vmatpush.bf16.msra.mxu0 %v7989
      %9273 = vmatpush.bf16.msra.mxu0 %v7957
      %9274 = vmatpush.bf16.msra.mxu0 %v7925
      %9275 = vmatpush.bf16.msra.mxu0 %v7893
      %9276 = vmatpush.bf16.msra.mxu0 %v7861
      %9277 = vmatpush.bf16.msra.mxu0 %v7829
      %9278 = vmatpush.bf16.msra.mxu0 %v7797
      %9279 = vmatmul.bf16.gmra.mxu0 %v5729
      %v9280 = vpop.f32.mrf.mxu0
      %v9281 = vadd.f32 0.0, %v9280
      %v9282 = vpop.f32.mrf.mxu0
      %9283 = vdwg.mxu0
      %9284 = vmatpush.bf16.msra.mxu0 %v8277
      %9285 = vmatpush.bf16.msra.mxu0 %v8245
      %9286 = vmatpush.bf16.msra.mxu0 %v8213
      %9287 = vmatpush.bf16.msra.mxu0 %v8181
      %9288 = vmatpush.bf16.msra.mxu0 %v8149
      %9289 = vmatpush.bf16.msra.mxu0 %v8117
      %9290 = vmatpush.bf16.msra.mxu0 %v8085
      %9291 = vmatpush.bf16.msra.mxu0 %v8053
      %9292 = vmatmul.bf16.gmra.mxu0 %v5730
      %v9293 = vpop.f32.mrf.mxu0
      %v9294 = vadd.f32 %v9281, %v9293
      %v9295 = vpop.f32.mrf.mxu0
      %9296 = vdwg.mxu0
      %9297 = vmatpush.bf16.msra.mxu0 %v8022
      %9298 = vmatpush.bf16.msra.mxu0 %v7990
      %9299 = vmatpush.bf16.msra.mxu0 %v7958
      %9300 = vmatpush.bf16.msra.mxu0 %v7926
      %9301 = vmatpush.bf16.msra.mxu0 %v7894
      %9302 = vmatpush.bf16.msra.mxu0 %v7862
      %9303 = vmatpush.bf16.msra.mxu0 %v7830
      %9304 = vmatpush.bf16.msra.mxu0 %v7798
      %9305 = vmatmul.bf16.gmra.mxu0 %v5729
      %v9306 = vpop.f32.mrf.mxu0
      %v9307 = vadd.f32 0.0, %v9306
      %v9308 = vpop.f32.mrf.mxu0
      %9309 = vdwg.mxu0
      %9310 = vmatpush.bf16.msra.mxu0 %v8278
      %9311 = vmatpush.bf16.msra.mxu0 %v8246
      %9312 = vmatpush.bf16.msra.mxu0 %v8214
      %9313 = vmatpush.bf16.msra.mxu0 %v8182
      %9314 = vmatpush.bf16.msra.mxu0 %v8150
      %9315 = vmatpush.bf16.msra.mxu0 %v8118
      %9316 = vmatpush.bf16.msra.mxu0 %v8086
      %9317 = vmatpush.bf16.msra.mxu0 %v8054
      %9318 = vmatmul.bf16.gmra.mxu0 %v5730
      %v9319 = vpop.f32.mrf.mxu0
      %v9320 = vadd.f32 %v9307, %v9319
      %v9321 = vpop.f32.mrf.mxu0
      %9322 = vdwg.mxu0
      %9323 = vmatpush.bf16.msra.mxu0 %v8023
      %9324 = vmatpush.bf16.msra.mxu0 %v7991
      %9325 = vmatpush.bf16.msra.mxu0 %v7959
      %9326 = vmatpush.bf16.msra.mxu0 %v7927
      %9327 = vmatpush.bf16.msra.mxu0 %v7895
      %9328 = vmatpush.bf16.msra.mxu0 %v7863
      %9329 = vmatpush.bf16.msra.mxu0 %v7831
      %9330 = vmatpush.bf16.msra.mxu0 %v7799
      %9331 = vmatmul.bf16.gmra.mxu0 %v5729
      %v9332 = vpop.f32.mrf.mxu0
      %v9333 = vadd.f32 0.0, %v9332
      %v9334 = vpop.f32.mrf.mxu0
      %9335 = vdwg.mxu0
      %9336 = vmatpush.bf16.msra.mxu0 %v8279
      %9337 = vmatpush.bf16.msra.mxu0 %v8247
      %9338 = vmatpush.bf16.msra.mxu0 %v8215
      %9339 = vmatpush.bf16.msra.mxu0 %v8183
      %9340 = vmatpush.bf16.msra.mxu0 %v8151
      %9341 = vmatpush.bf16.msra.mxu0 %v8119
      %9342 = vmatpush.bf16.msra.mxu0 %v8087
      %9343 = vmatpush.bf16.msra.mxu0 %v8055
      %9344 = vmatmul.bf16.gmra.mxu0 %v5730
      %v9345 = vpop.f32.mrf.mxu0
      %v9346 = vadd.f32 %v9333, %v9345
      %v9347 = vpop.f32.mrf.mxu0
      %9348 = vdwg.mxu0
      %9349 = vmatpush.bf16.msra.mxu0 %v8024
      %9350 = vmatpush.bf16.msra.mxu0 %v7992
      %9351 = vmatpush.bf16.msra.mxu0 %v7960
      %9352 = vmatpush.bf16.msra.mxu0 %v7928
      %9353 = vmatpush.bf16.msra.mxu0 %v7896
      %9354 = vmatpush.bf16.msra.mxu0 %v7864
      %9355 = vmatpush.bf16.msra.mxu0 %v7832
      %9356 = vmatpush.bf16.msra.mxu0 %v7800
      %9357 = vmatmul.bf16.gmra.mxu0 %v5729
      %v9358 = vpop.f32.mrf.mxu0
      %v9359 = vadd.f32 0.0, %v9358
      %v9360 = vpop.f32.mrf.mxu0
      %9361 = vdwg.mxu0
      %9362 = vmatpush.bf16.msra.mxu0 %v8280
      %9363 = vmatpush.bf16.msra.mxu0 %v8248
      %9364 = vmatpush.bf16.msra.mxu0 %v8216
      %9365 = vmatpush.bf16.msra.mxu0 %v8184
      %9366 = vmatpush.bf16.msra.mxu0 %v8152
      %9367 = vmatpush.bf16.msra.mxu0 %v8120
      %9368 = vmatpush.bf16.msra.mxu0 %v8088
      %9369 = vmatpush.bf16.msra.mxu0 %v8056
      %9370 = vmatmul.bf16.gmra.mxu0 %v5730
      %v9371 = vpop.f32.mrf.mxu0
      %v9372 = vadd.f32 %v9359, %v9371
      %v9373 = vpop.f32.mrf.mxu0
      %9374 = vdwg.mxu0
      %9375 = vmatpush.bf16.msra.mxu0 %v8025
      %9376 = vmatpush.bf16.msra.mxu0 %v7993
      %9377 = vmatpush.bf16.msra.mxu0 %v7961
      %9378 = vmatpush.bf16.msra.mxu0 %v7929
      %9379 = vmatpush.bf16.msra.mxu0 %v7897
      %9380 = vmatpush.bf16.msra.mxu0 %v7865
      %9381 = vmatpush.bf16.msra.mxu0 %v7833
      %9382 = vmatpush.bf16.msra.mxu0 %v7801
      %9383 = vmatmul.bf16.gmra.mxu0 %v5729
      %v9384 = vpop.f32.mrf.mxu0
      %v9385 = vadd.f32 0.0, %v9384
      %v9386 = vpop.f32.mrf.mxu0
      %9387 = vdwg.mxu0
      %9388 = vmatpush.bf16.msra.mxu0 %v8281
      %9389 = vmatpush.bf16.msra.mxu0 %v8249
      %9390 = vmatpush.bf16.msra.mxu0 %v8217
      %9391 = vmatpush.bf16.msra.mxu0 %v8185
      %9392 = vmatpush.bf16.msra.mxu0 %v8153
      %9393 = vmatpush.bf16.msra.mxu0 %v8121
      %9394 = vmatpush.bf16.msra.mxu0 %v8089
      %9395 = vmatpush.bf16.msra.mxu0 %v8057
      %9396 = vmatmul.bf16.gmra.mxu0 %v5730
      %v9397 = vpop.f32.mrf.mxu0
      %v9398 = vadd.f32 %v9385, %v9397
      %v9399 = vpop.f32.mrf.mxu0
      %9400 = vdwg.mxu0
      %9401 = vmatpush.bf16.msra.mxu0 %v8026
      %9402 = vmatpush.bf16.msra.mxu0 %v7994
      %9403 = vmatpush.bf16.msra.mxu0 %v7962
      %9404 = vmatpush.bf16.msra.mxu0 %v7930
      %9405 = vmatpush.bf16.msra.mxu0 %v7898
      %9406 = vmatpush.bf16.msra.mxu0 %v7866
      %9407 = vmatpush.bf16.msra.mxu0 %v7834
      %9408 = vmatpush.bf16.msra.mxu0 %v7802
      %9409 = vmatmul.bf16.gmra.mxu0 %v5729
      %v9410 = vpop.f32.mrf.mxu0
      %v9411 = vadd.f32 0.0, %v9410
      %v9412 = vpop.f32.mrf.mxu0
      %9413 = vdwg.mxu0
      %9414 = vmatpush.bf16.msra.mxu0 %v8282
      %9415 = vmatpush.bf16.msra.mxu0 %v8250
      %9416 = vmatpush.bf16.msra.mxu0 %v8218
      %9417 = vmatpush.bf16.msra.mxu0 %v8186
      %9418 = vmatpush.bf16.msra.mxu0 %v8154
      %9419 = vmatpush.bf16.msra.mxu0 %v8122
      %9420 = vmatpush.bf16.msra.mxu0 %v8090
      %9421 = vmatpush.bf16.msra.mxu0 %v8058
      %9422 = vmatmul.bf16.gmra.mxu0 %v5730
      %v9423 = vpop.f32.mrf.mxu0
      %v9424 = vadd.f32 %v9411, %v9423
      %v9425 = vpop.f32.mrf.mxu0
      %9426 = vdwg.mxu0
      %9427 = vmatpush.bf16.msra.mxu0 %v8027
      %9428 = vmatpush.bf16.msra.mxu0 %v7995
      %9429 = vmatpush.bf16.msra.mxu0 %v7963
      %9430 = vmatpush.bf16.msra.mxu0 %v7931
      %9431 = vmatpush.bf16.msra.mxu0 %v7899
      %9432 = vmatpush.bf16.msra.mxu0 %v7867
      %9433 = vmatpush.bf16.msra.mxu0 %v7835
      %9434 = vmatpush.bf16.msra.mxu0 %v7803
      %9435 = vmatmul.bf16.gmra.mxu0 %v5729
      %v9436 = vpop.f32.mrf.mxu0
      %v9437 = vadd.f32 0.0, %v9436
      %v9438 = vpop.f32.mrf.mxu0
      %9439 = vdwg.mxu0
      %9440 = vmatpush.bf16.msra.mxu0 %v8283
      %9441 = vmatpush.bf16.msra.mxu0 %v8251
      %9442 = vmatpush.bf16.msra.mxu0 %v8219
      %9443 = vmatpush.bf16.msra.mxu0 %v8187
      %9444 = vmatpush.bf16.msra.mxu0 %v8155
      %9445 = vmatpush.bf16.msra.mxu0 %v8123
      %9446 = vmatpush.bf16.msra.mxu0 %v8091
      %9447 = vmatpush.bf16.msra.mxu0 %v8059
      %9448 = vmatmul.bf16.gmra.mxu0 %v5730
      %v9449 = vpop.f32.mrf.mxu0
      %v9450 = vadd.f32 %v9437, %v9449
      %v9451 = vpop.f32.mrf.mxu0
      %9452 = vdwg.mxu0
      %9453 = vmatpush.bf16.msra.mxu0 %v8028
      %9454 = vmatpush.bf16.msra.mxu0 %v7996
      %9455 = vmatpush.bf16.msra.mxu0 %v7964
      %9456 = vmatpush.bf16.msra.mxu0 %v7932
      %9457 = vmatpush.bf16.msra.mxu0 %v7900
      %9458 = vmatpush.bf16.msra.mxu0 %v7868
      %9459 = vmatpush.bf16.msra.mxu0 %v7836
      %9460 = vmatpush.bf16.msra.mxu0 %v7804
      %9461 = vmatmul.bf16.gmra.mxu0 %v5729
      %v9462 = vpop.f32.mrf.mxu0
      %v9463 = vadd.f32 0.0, %v9462
      %v9464 = vpop.f32.mrf.mxu0
      %9465 = vdwg.mxu0
      %9466 = vmatpush.bf16.msra.mxu0 %v8284
      %9467 = vmatpush.bf16.msra.mxu0 %v8252
      %9468 = vmatpush.bf16.msra.mxu0 %v8220
      %9469 = vmatpush.bf16.msra.mxu0 %v8188
      %9470 = vmatpush.bf16.msra.mxu0 %v8156
      %9471 = vmatpush.bf16.msra.mxu0 %v8124
      %9472 = vmatpush.bf16.msra.mxu0 %v8092
      %9473 = vmatpush.bf16.msra.mxu0 %v8060
      %9474 = vmatmul.bf16.gmra.mxu0 %v5730
      %v9475 = vpop.f32.mrf.mxu0
      %v9476 = vadd.f32 %v9463, %v9475
      %v9477 = vpop.f32.mrf.mxu0
      %9478 = vdwg.mxu0
      %9479 = vmatpush.bf16.msra.mxu0 %v8029
      %9480 = vmatpush.bf16.msra.mxu0 %v7997
      %9481 = vmatpush.bf16.msra.mxu0 %v7965
      %9482 = vmatpush.bf16.msra.mxu0 %v7933
      %9483 = vmatpush.bf16.msra.mxu0 %v7901
      %9484 = vmatpush.bf16.msra.mxu0 %v7869
      %9485 = vmatpush.bf16.msra.mxu0 %v7837
      %9486 = vmatpush.bf16.msra.mxu0 %v7805
      %9487 = vmatmul.bf16.gmra.mxu0 %v5729
      %v9488 = vpop.f32.mrf.mxu0
      %v9489 = vadd.f32 0.0, %v9488
      %v9490 = vpop.f32.mrf.mxu0
      %9491 = vdwg.mxu0
      %9492 = vmatpush.bf16.msra.mxu0 %v8285
      %9493 = vmatpush.bf16.msra.mxu0 %v8253
      %9494 = vmatpush.bf16.msra.mxu0 %v8221
      %9495 = vmatpush.bf16.msra.mxu0 %v8189
      %9496 = vmatpush.bf16.msra.mxu0 %v8157
      %9497 = vmatpush.bf16.msra.mxu0 %v8125
      %9498 = vmatpush.bf16.msra.mxu0 %v8093
      %9499 = vmatpush.bf16.msra.mxu0 %v8061
      %9500 = vmatmul.bf16.gmra.mxu0 %v5730
      %v9501 = vpop.f32.mrf.mxu0
      %v9502 = vadd.f32 %v9489, %v9501
      %v9503 = vpop.f32.mrf.mxu0
      %9504 = vdwg.mxu0
      %9505 = vmatpush.bf16.msra.mxu0 %v8030
      %9506 = vmatpush.bf16.msra.mxu0 %v7998
      %9507 = vmatpush.bf16.msra.mxu0 %v7966
      %9508 = vmatpush.bf16.msra.mxu0 %v7934
      %9509 = vmatpush.bf16.msra.mxu0 %v7902
      %9510 = vmatpush.bf16.msra.mxu0 %v7870
      %9511 = vmatpush.bf16.msra.mxu0 %v7838
      %9512 = vmatpush.bf16.msra.mxu0 %v7806
      %9513 = vmatmul.bf16.gmra.mxu0 %v5729
      %v9514 = vpop.f32.mrf.mxu0
      %v9515 = vadd.f32 0.0, %v9514
      %v9516 = vpop.f32.mrf.mxu0
      %9517 = vdwg.mxu0
      %9518 = vmatpush.bf16.msra.mxu0 %v8286
      %9519 = vmatpush.bf16.msra.mxu0 %v8254
      %9520 = vmatpush.bf16.msra.mxu0 %v8222
      %9521 = vmatpush.bf16.msra.mxu0 %v8190
      %9522 = vmatpush.bf16.msra.mxu0 %v8158
      %9523 = vmatpush.bf16.msra.mxu0 %v8126
      %9524 = vmatpush.bf16.msra.mxu0 %v8094
      %9525 = vmatpush.bf16.msra.mxu0 %v8062
      %9526 = vmatmul.bf16.gmra.mxu0 %v5730
      %v9527 = vpop.f32.mrf.mxu0
      %v9528 = vadd.f32 %v9515, %v9527
      %v9529 = vpop.f32.mrf.mxu0
      %9530 = vdwg.mxu0
      %9531 = vmatpush.bf16.msra.mxu0 %v8031
      %9532 = vmatpush.bf16.msra.mxu0 %v7999
      %9533 = vmatpush.bf16.msra.mxu0 %v7967
      %9534 = vmatpush.bf16.msra.mxu0 %v7935
      %9535 = vmatpush.bf16.msra.mxu0 %v7903
      %9536 = vmatpush.bf16.msra.mxu0 %v7871
      %9537 = vmatpush.bf16.msra.mxu0 %v7839
      %9538 = vmatpush.bf16.msra.mxu0 %v7807
      %9539 = vmatmul.bf16.gmra.mxu0 %v5729
      %v9540 = vpop.f32.mrf.mxu0
      %v9541 = vadd.f32 0.0, %v9540
      %v9542 = vpop.f32.mrf.mxu0
      %9543 = vdwg.mxu0
      %9544 = vmatpush.bf16.msra.mxu0 %v8287
      %9545 = vmatpush.bf16.msra.mxu0 %v8255
      %9546 = vmatpush.bf16.msra.mxu0 %v8223
      %9547 = vmatpush.bf16.msra.mxu0 %v8191
      %9548 = vmatpush.bf16.msra.mxu0 %v8159
      %9549 = vmatpush.bf16.msra.mxu0 %v8127
      %9550 = vmatpush.bf16.msra.mxu0 %v8095
      %9551 = vmatpush.bf16.msra.mxu0 %v8063
      %9552 = vmatmul.bf16.gmra.mxu0 %v5730
      %v9553 = vpop.f32.mrf.mxu0
      %v9554 = vadd.f32 %v9541, %v9553
      %v9555 = vpop.f32.mrf.mxu0
      %9556 = vdwg.mxu0
      %9557 = vmatpush.bf16.msra.mxu0 %v8032
      %9558 = vmatpush.bf16.msra.mxu0 %v8000
      %9559 = vmatpush.bf16.msra.mxu0 %v7968
      %9560 = vmatpush.bf16.msra.mxu0 %v7936
      %9561 = vmatpush.bf16.msra.mxu0 %v7904
      %9562 = vmatpush.bf16.msra.mxu0 %v7872
      %9563 = vmatpush.bf16.msra.mxu0 %v7840
      %9564 = vmatpush.bf16.msra.mxu0 %v7808
      %9565 = vmatmul.bf16.gmra.mxu0 %v5729
      %v9566 = vpop.f32.mrf.mxu0
      %v9567 = vadd.f32 0.0, %v9566
      %v9568 = vpop.f32.mrf.mxu0
      %9569 = vdwg.mxu0
      %9570 = vmatpush.bf16.msra.mxu0 %v8288
      %9571 = vmatpush.bf16.msra.mxu0 %v8256
      %9572 = vmatpush.bf16.msra.mxu0 %v8224
      %9573 = vmatpush.bf16.msra.mxu0 %v8192
      %9574 = vmatpush.bf16.msra.mxu0 %v8160
      %9575 = vmatpush.bf16.msra.mxu0 %v8128
      %9576 = vmatpush.bf16.msra.mxu0 %v8096
      %9577 = vmatpush.bf16.msra.mxu0 %v8064
      %9578 = vmatmul.bf16.gmra.mxu0 %v5730
      %v9579 = vpop.f32.mrf.mxu0
      %v9580 = vadd.f32 %v9567, %v9579
      %v9581 = vpop.f32.mrf.mxu0
      %9582 = vdwg.mxu0
      %9583 = vmatpush.bf16.msra.mxu0 %v8033
      %9584 = vmatpush.bf16.msra.mxu0 %v8001
      %9585 = vmatpush.bf16.msra.mxu0 %v7969
      %9586 = vmatpush.bf16.msra.mxu0 %v7937
      %9587 = vmatpush.bf16.msra.mxu0 %v7905
      %9588 = vmatpush.bf16.msra.mxu0 %v7873
      %9589 = vmatpush.bf16.msra.mxu0 %v7841
      %9590 = vmatpush.bf16.msra.mxu0 %v7809
      %9591 = vmatmul.bf16.gmra.mxu0 %v5729
      %v9592 = vpop.f32.mrf.mxu0
      %v9593 = vadd.f32 0.0, %v9592
      %v9594 = vpop.f32.mrf.mxu0
      %9595 = vdwg.mxu0
      %9596 = vmatpush.bf16.msra.mxu0 %v8289
      %9597 = vmatpush.bf16.msra.mxu0 %v8257
      %9598 = vmatpush.bf16.msra.mxu0 %v8225
      %9599 = vmatpush.bf16.msra.mxu0 %v8193
      %9600 = vmatpush.bf16.msra.mxu0 %v8161
      %9601 = vmatpush.bf16.msra.mxu0 %v8129
      %9602 = vmatpush.bf16.msra.mxu0 %v8097
      %9603 = vmatpush.bf16.msra.mxu0 %v8065
      %9604 = vmatmul.bf16.gmra.mxu0 %v5730
      %v9605 = vpop.f32.mrf.mxu0
      %v9606 = vadd.f32 %v9593, %v9605
      %v9607 = vpop.f32.mrf.mxu0
      %9608 = vdwg.mxu0
      %9609 = vmatpush.bf16.msra.mxu0 %v8034
      %9610 = vmatpush.bf16.msra.mxu0 %v8002
      %9611 = vmatpush.bf16.msra.mxu0 %v7970
      %9612 = vmatpush.bf16.msra.mxu0 %v7938
      %9613 = vmatpush.bf16.msra.mxu0 %v7906
      %9614 = vmatpush.bf16.msra.mxu0 %v7874
      %9615 = vmatpush.bf16.msra.mxu0 %v7842
      %9616 = vmatpush.bf16.msra.mxu0 %v7810
      %9617 = vmatmul.bf16.gmra.mxu0 %v5729
      %v9618 = vpop.f32.mrf.mxu0
      %v9619 = vadd.f32 0.0, %v9618
      %v9620 = vpop.f32.mrf.mxu0
      %9621 = vdwg.mxu0
      %9622 = vmatpush.bf16.msra.mxu0 %v8290
      %9623 = vmatpush.bf16.msra.mxu0 %v8258
      %9624 = vmatpush.bf16.msra.mxu0 %v8226
      %9625 = vmatpush.bf16.msra.mxu0 %v8194
      %9626 = vmatpush.bf16.msra.mxu0 %v8162
      %9627 = vmatpush.bf16.msra.mxu0 %v8130
      %9628 = vmatpush.bf16.msra.mxu0 %v8098
      %9629 = vmatpush.bf16.msra.mxu0 %v8066
      %9630 = vmatmul.bf16.gmra.mxu0 %v5730
      %v9631 = vpop.f32.mrf.mxu0
      %v9632 = vadd.f32 %v9619, %v9631
      %v9633 = vpop.f32.mrf.mxu0
      %9634 = vdwg.mxu0
      %v9667 = vrot.slane %v8852, 7
      %v9668 = vrot.slane %v8878, 6
      %v9669 = vrot.slane %v8904, 5
      %v9670 = vrot.slane %v8930, 4
      %v9671 = vrot.slane %v8956, 3
      %v9672 = vrot.slane %v8982, 2
      %v9673 = vrot.slane %v9008, 1
      %v9674 = vrot.slane %v9060, 7
      %v9675 = vrot.slane %v9086, 6
      %v9676 = vrot.slane %v9112, 5
      %v9677 = vrot.slane %v9138, 4
      %v9678 = vrot.slane %v9164, 3
      %v9679 = vrot.slane %v9190, 2
      %v9680 = vrot.slane %v9216, 1
      %v9681 = vrot.slane %v9268, 7
      %v9682 = vrot.slane %v9294, 6
      %v9683 = vrot.slane %v9320, 5
      %v9684 = vrot.slane %v9346, 4
      %v9685 = vrot.slane %v9372, 3
      %v9686 = vrot.slane %v9398, 2
      %v9687 = vrot.slane %v9424, 1
      %v9688 = vrot.slane %v9476, 7
      %v9689 = vrot.slane %v9502, 6
      %v9690 = vrot.slane %v9528, 5
      %v9691 = vrot.slane %v9554, 4
      %v9692 = vrot.slane %v9580, 3
      %v9693 = vrot.slane %v9606, 2
      %v9694 = vrot.slane %v9632, 1
      %vm9695 = vcmask 1040384
      %v9696 = vsel %vm9695, %v8826, %v9667
      %vm9697 = vcmask 1042434
      %v9698 = vsel %vm9697, %v9668, %v9669
      %v9699 = vsel %vm4455, %v9696, %v9698
      %vm9700 = vcmask 1044484
      %v9701 = vsel %vm9700, %v9670, %v9671
      %vm9702 = vcmask 1046534
      %v9703 = vsel %vm9702, %v9672, %v9673
      %vm9704 = vcmask 1045508
      %v9705 = vsel %vm9704, %v9701, %v9703
      %v9706 = vsel %vm3953, %v9699, %v9705
      %v9707 = vsel %vm9695, %v9034, %v9674
      %v9708 = vsel %vm9697, %v9675, %v9676
      %v9709 = vsel %vm4455, %v9707, %v9708
      %v9710 = vsel %vm9700, %v9677, %v9678
      %v9711 = vsel %vm9702, %v9679, %v9680
      %v9712 = vsel %vm9704, %v9710, %v9711
      %v9713 = vsel %vm3953, %v9709, %v9712
      %v9714 = vsel %vm9695, %v9242, %v9681
      %v9715 = vsel %vm9697, %v9682, %v9683
      %v9716 = vsel %vm4455, %v9714, %v9715
      %v9717 = vsel %vm9700, %v9684, %v9685
      %v9718 = vsel %vm9702, %v9686, %v9687
      %v9719 = vsel %vm9704, %v9717, %v9718
      %v9720 = vsel %vm3953, %v9716, %v9719
      %v9721 = vsel %vm9695, %v9450, %v9688
      %v9722 = vsel %vm9697, %v9689, %v9690
      %v9723 = vsel %vm4455, %v9721, %v9722
      %v9724 = vsel %vm9700, %v9691, %v9692
      %v9725 = vsel %vm9702, %v9693, %v9694
      %v9726 = vsel %vm9704, %v9724, %v9725
      %v9727 = vsel %vm3953, %v9723, %v9726
      %9732 = vst [vmem:[%s417] sm:$0xff] %v9706
      %9733 = vst [vmem:[%s417 + $0x8] sm:$0xff] %v9713
      %9734 = vst [vmem:[%s417 + $0x10] sm:$0xff] %v9720
      %9735 = vst [vmem:[%s417 + $0x18] sm:$0xff] %v9727
      %p9736 = scmp.lt.s32.totalorder %s21, 1
      %s9737 = scalar_select %p9736, %s21, 1
      %s9738 = smul.addr %s9737, 32
      %s9739 = scalar_lea.vmem %s10, %s9738
      // Predicated region
      $region61: #{medlightnet_forward.1} parent=59 // pred_check
        %p9740 = pneg %p269
      $region62: #{medlightnet_forward.1} parent=59 // pred_check_branch
        %9742 = sbr.rel (%p9740) target = $region64
      $region63: #{medlightnet_forward.1} parent=59 // pred_region
        _
      $region64: #{medlightnet_forward.1} parent=59 // pred_fallthru
        _
    $region60: #{medlightnet_forward.1} parent=5 // pred_fallthru
      _
    %p9743 = scmp.le.s32.totalorder 2, %s16
    // Predicated region
    $region65: #{medlightnet_forward.1} parent=5 // pred_check
      %p9744 = pneg %p9743
    $region66: #{medlightnet_forward.1} parent=5 // pred_check_branch
      %9746 = sbr.rel (%p9744) target = $region68
    $region67: #{medlightnet_forward.1} parent=5 // pred_region
      %s9747 = ssub.s32 %s16, 2
      // Predicated region
      $region69: #{medlightnet_forward.1} parent=67 // pred_check
        %p9748 = pneg %p275
      $region70: #{medlightnet_forward.1} parent=67 // pred_check_branch
        %9750 = sbr.rel (%p9748) target = $region72
      $region71: #{medlightnet_forward.1} parent=67 // pred_region
        %p9751 = scmp.lt.s32.totalorder %s22, 1
        %s9752 = scalar_select %p9751, %s22, 1
        %s9753 = smul.addr %s9752, 32
        %s9754 = scalar_lea.vmem %s10, %s9753
      $region72: #{medlightnet_forward.1} parent=67 // pred_fallthru
        _
    $region68: #{medlightnet_forward.1} parent=5 // pred_fallthru
      _
  $region6: #{medlightnet_forward.1} parent=0 // loop_footer
    %s20 = sadd.s32 1, %s16
  $region7: #{medlightnet_forward.1} parent=0 // loop_footer_branch
    %15 = sbr.rel target = $region3
  $region8: #{medlightnet_forward.1} parent=0 // loop_exit
    _

</llo_original>
